<compile_context>
chip_gen: v7x
topology: tpu7x:2x2x1
jax: 0.10.0
libtpu: 0.0.40
codegen_flags: <defaults>
</compile_context>

<pallas_src>
import functools

import jax
import jax.numpy as jnp
from jax.experimental import pallas as pl
from jax.experimental.pallas import tpu as pltpu

BN_EPS = 1e-5
LANE = 128


def _hw_defaults():
    """Generation-dependent VMEM limit and row-tile target."""
    try:
        kind = jax.devices()[0].device_kind.lower()
    except Exception:
        kind = ""
    if "v7" in kind:                      # v7x: 64 MiB per-TensorCore VMEM
        return 48 * 1024 * 1024, 512
    return 96 * 1024 * 1024, 1024        # v5e / v6e: 128 MiB physical VMEM


VMEM_LIMIT, ROW_TILE_TARGET = _hw_defaults()


# ------------------------------------------------------------------ helpers --

def _round_up(x, m):
    return ((x + m - 1) // m) * m


def _pad_to(a, axis, size):
    pad = size - a.shape[axis]
    if pad == 0:
        return a
    widths = [(0, 0)] * a.ndim
    widths[axis] = (0, pad)
    return jnp.pad(a, widths)


def _pick_row_tile(m, target=ROW_TILE_TARGET):
    """Largest divisor of m that is <= target and a multiple of 8 sublanes."""
    t = min(target, m)
    for cand in range(t, 7, -1):
        if m % cand == 0 and cand % 8 == 0:
            return cand
    return m          # fallback: single tile (fine for small problems)


def _pick_h_tile(h, w, target_rows=ROW_TILE_TARGET):
    """Image-row block so that h_tile * w is ~target_rows and divides h."""
    t = max(1, min(h, target_rows // max(1, w)))
    for cand in range(t, 0, -1):
        if h % cand == 0:
            return cand
    return h


def _cparams(semantics):
    return pltpu.CompilerParams(dimension_semantics=semantics,
                                vmem_limit_bytes=VMEM_LIMIT)


# ------------------------------------------------------------------ kernels --

def _matmul_stats_kernel(*refs, pre_affine):
    """[optional fused bn+relu on input] -> bf16 matmul (f32 MXU acc) ->
    pre-BN bf16 output tile + per-tile per-channel (sum, sum_sq) partials."""
    if pre_affine:
        x_ref, scale_ref, bias_ref, w_ref, out_ref, stats_ref = refs
    else:
        x_ref, w_ref, out_ref, stats_ref = refs

    x = x_ref[...]
    if pre_affine:
        x = jnp.maximum(x.astype(jnp.float32) * scale_ref[...] + bias_ref[...], 0.0)
    acc = jnp.dot(x.astype(jnp.bfloat16), w_ref[...],
                  preferred_element_type=jnp.float32)

    out_bf = acc.astype(out_ref.dtype)
    out_ref[...] = out_bf
    # Stats over the values actually stored (bf16-rounded) so the later
    # normalization exactly matches the data it describes.
    q = out_bf.astype(jnp.float32)
    stats_ref[0] = jnp.concatenate(
        [jnp.sum(q, axis=0, keepdims=True),
         jnp.sum(q * q, axis=0, keepdims=True)], axis=0)


def _conv3x3_fused_kernel(x_ref, sc1_ref, bi1_ref, w2_ref, out_ref, stats_ref,
                          xpad_ref):
    """Fused bn1+ReLU + ZeroPad2d(1) + 3x3 conv + BN2 stat partials.

    x_ref   : (1, H, W, Cp_in)  un-padded pre-BN conv1 output for one batch
    w2_ref  : (9, Cp_in, Cp_out) per-tap weights
    out_ref : (1, th, W, Cp_out) pre-BN conv2 output row-block
    xpad_ref: VMEM scratch (th+2, W+2, Cp_in) holding the zero-padded tile
    """
    th = out_ref.shape[1]
    iw = out_ref.shape[2]
    h = x_ref.shape[1]
    cp_in = x_ref.shape[3]
    cp_out = w2_ref.shape[2]

    hb = pl.program_id(1)
    y0 = pl.multiple_of(hb * th, th)

    sc = sc1_ref[...].reshape(1, 1, cp_in)
    bi = bi1_ref[...].reshape(1, 1, cp_in)

    def bn_relu(v):
        return jnp.maximum(v.astype(jnp.float32) * sc + bi, 0.0)

    # Build the zero-padded input tile in VMEM.  Left/right zero columns and
    # unmasked halo rows come from the memset; core + valid halo rows are
    # written over it with bn1+ReLU applied on load.
    xpad_ref[...] = jnp.zeros(xpad_ref.shape, dtype=xpad_ref.dtype)

    core = bn_relu(x_ref[0, pl.ds(y0, th), :, :])
    xpad_ref[1:th + 1, 1:iw + 1, :] = core.astype(xpad_ref.dtype)

    top = bn_relu(x_ref[0, pl.ds(jnp.maximum(y0 - 1, 0), 1), :, :])
    top = top * (y0 > 0).astype(jnp.float32)
    xpad_ref[0:1, 1:iw + 1, :] = top.astype(xpad_ref.dtype)

    bot = bn_relu(x_ref[0, pl.ds(jnp.minimum(y0 + th, h - 1), 1), :, :])
    bot = bot * (y0 + th < h).astype(jnp.float32)
    xpad_ref[th + 1:th + 2, 1:iw + 1, :] = bot.astype(xpad_ref.dtype)

    # 9 accumulating K=Cp_in matmuls — no lane-concat / K-fused operand copy.
    acc = jnp.zeros((th * iw, cp_out), jnp.float32)
    for dy in range(3):
        for dx in range(3):
            tap = xpad_ref[dy:dy + th, dx:dx + iw, :].reshape(th * iw, cp_in)
            acc = acc + jnp.dot(tap, w2_ref[dy * 3 + dx],
                                preferred_element_type=jnp.float32)

    out_bf = acc.astype(out_ref.dtype)
    out_ref[0] = out_bf.reshape(th, iw, cp_out)
    q = out_bf.astype(jnp.float32)
    stats_ref[0] = jnp.concatenate(
        [jnp.sum(q, axis=0, keepdims=True),
         jnp.sum(q * q, axis=0, keepdims=True)], axis=0)


def _bn_add_relu_kernel(x_ref, res_ref, scale_ref, bias_ref, o_ref):
    """bn3 + residual add + ReLU, lane-dense (full coutp-wide slab)."""
    y = (x_ref[...].astype(jnp.float32) * scale_ref[...] + bias_ref[...]
         + res_ref[...])
    o_ref[...] = jnp.maximum(y, 0.0).astype(o_ref.dtype)


# ----------------------------------------------------------- pallas wrappers --

def _conv1x1_stats(x, w, scale=None, bias=None, *, row_tile):
    m, k = x.shape
    cp = w.shape[1]
    mt = m // row_tile
    pre = scale is not None

    args = [x]
    in_specs = [pl.BlockSpec((row_tile, k), lambda i: (i, 0))]
    if pre:
        args += [scale, bias]
        in_specs += [pl.BlockSpec((1, k), lambda i: (0, 0)),
                     pl.BlockSpec((1, k), lambda i: (0, 0))]
    args.append(w)
    in_specs.append(pl.BlockSpec((k, cp), lambda i: (0, 0)))

    return pl.pallas_call(
        functools.partial(_matmul_stats_kernel, pre_affine=pre),
        grid=(mt,),
        in_specs=in_specs,
        out_specs=[pl.BlockSpec((row_tile, cp), lambda i: (i, 0)),
                   pl.BlockSpec((1, 2, cp), lambda i: (i, 0, 0))],
        out_shape=[jax.ShapeDtypeStruct((m, cp), jnp.bfloat16),
                   jax.ShapeDtypeStruct((mt, 2, cp), jnp.float32)],
        compiler_params=_cparams(("parallel",)),
    )(*args)


def _conv3x3_bn_relu(out1_img, sc1, bi1, w2, *, h_tile):
    n, h, w, cp_in = out1_img.shape
    cp_out = w2.shape[2]
    hb = h // h_tile

    return pl.pallas_call(
        _conv3x3_fused_kernel,
        grid=(n, hb),
        in_specs=[
            # Full per-batch image: index depends only on the batch axis, so it
            # is DMA'd once per batch (hb axis is "arbitrary" -> not split).
            pl.BlockSpec((1, h, w, cp_in), lambda ni, hi: (ni, 0, 0, 0)),
            pl.BlockSpec((1, cp_in), lambda ni, hi: (0, 0)),
            pl.BlockSpec((1, cp_in), lambda ni, hi: (0, 0)),
            pl.BlockSpec((9, cp_in, cp_out), lambda ni, hi: (0, 0, 0)),
        ],
        out_specs=[
            pl.BlockSpec((1, h_tile, w, cp_out), lambda ni, hi: (ni, hi, 0, 0)),
            pl.BlockSpec((1, 2, cp_out), lambda ni, hi: (ni * hb + hi, 0, 0)),
        ],
        out_shape=[jax.ShapeDtypeStruct((n, h, w, cp_out), jnp.bfloat16),
                   jax.ShapeDtypeStruct((n * hb, 2, cp_out), jnp.float32)],
        scratch_shapes=[pltpu.VMEM((h_tile + 2, w + 2, cp_in), jnp.bfloat16)],
        compiler_params=_cparams(("parallel", "arbitrary")),
    )(out1_img, sc1, bi1, w2)


def _bn_add_relu(x, res, scale, bias, *, row_tile):
    m, cp = x.shape
    mt = m // row_tile
    return pl.pallas_call(
        _bn_add_relu_kernel,
        grid=(mt,),
        in_specs=[pl.BlockSpec((row_tile, cp), lambda i: (i, 0)),
                  pl.BlockSpec((row_tile, cp), lambda i: (i, 0)),
                  pl.BlockSpec((1, cp), lambda i: (0, 0)),
                  pl.BlockSpec((1, cp), lambda i: (0, 0))],
        out_specs=pl.BlockSpec((row_tile, cp), lambda i: (i, 0)),
        out_shape=jax.ShapeDtypeStruct((m, cp), jnp.float32),
        compiler_params=_cparams(("parallel",)),
    )(x, res, scale, bias)


def _bn_scale_bias(stats, count, gamma, beta, eps=BN_EPS):
    """Reduce per-tile (sum, sum_sq) partials into per-channel BN affine.
    Tiny (C-sized) computation kept in plain JAX.  var clamped >= 0 to guard
    cancellation of the E[x^2]-E[x]^2 form."""
    stats = stats.reshape(-1, 2, stats.shape[-1])
    s = jnp.sum(stats[:, 0, :], axis=0)
    ss = jnp.sum(stats[:, 1, :], axis=0)
    mean = s / count
    var = jnp.maximum(ss / count - mean * mean, 0.0)   # biased variance
    inv = jax.lax.rsqrt(var + eps)
    scale = gamma * inv
    bias = beta - mean * scale
    return scale.reshape(1, -1), bias.reshape(1, -1)


# ---------------------------------------------------------------- params -----

def init_bottleneck_params(key, inplanes, planes, base_width=64, groups=1):
    """Deterministic synthetic parameters with the same shapes as the PyTorch module."""
    width = int(planes * (base_width / 64.0)) * groups
    cout = planes * 4  # expansion = 4
    ks = jax.random.split(key, 9)
    s = 0.1
    return {
        "w1": s * jax.random.normal(ks[0], (width, inplanes, 1, 1), jnp.float32),
        "w2": s * jax.random.normal(ks[1], (width, width, 3, 3), jnp.float32),
        "w3": s * jax.random.normal(ks[2], (cout, width, 1, 1), jnp.float32),
        "g1": 1.0 + 0.1 * jax.random.normal(ks[3], (width,), jnp.float32),
        "b1": 0.1 * jax.random.normal(ks[4], (width,), jnp.float32),
        "g2": 1.0 + 0.1 * jax.random.normal(ks[5], (width,), jnp.float32),
        "b2": 0.1 * jax.random.normal(ks[6], (width,), jnp.float32),
        "g3": 1.0 + 0.1 * jax.random.normal(ks[7], (cout,), jnp.float32),
        "b3": 0.1 * jax.random.normal(ks[8], (cout,), jnp.float32),
    }


def pack_bottleneck_params(params):
    """One-time weight packing: channel padding to 128-lane multiples, bf16
    MXU layout, per-tap (9, Cin_p, Cout_p) 3x3 weights.  Hoisted out of the
    forward pass so it does not re-run every call."""
    width = params["w1"].shape[0]
    cout = params["w3"].shape[0]
    widthp = _round_up(width, LANE)
    coutp = _round_up(cout, LANE)

    w1 = _pad_to(params["w1"][:, :, 0, 0].T, 1, widthp).astype(jnp.bfloat16)
    w2 = jnp.transpose(params["w2"], (2, 3, 1, 0)).reshape(9, width, width)
    w2 = _pad_to(_pad_to(w2, 1, widthp), 2, widthp).astype(jnp.bfloat16)
    w3 = _pad_to(_pad_to(params["w3"][:, :, 0, 0].T, 0, widthp), 1, coutp)
    w3 = w3.astype(jnp.bfloat16)

    return {
        "w1": w1, "w2": w2, "w3": w3,
        "g1": _pad_to(params["g1"], 0, widthp), "b1": _pad_to(params["b1"], 0, widthp),
        "g2": _pad_to(params["g2"], 0, widthp), "b2": _pad_to(params["b2"], 0, widthp),
        "g3": _pad_to(params["g3"], 0, coutp), "b3": _pad_to(params["b3"], 0, coutp),
    }


# ---------------------------------------------------------------- forward ----

@jax.jit
def bottleneck_forward(x_nchw, packed):
    n, cin, h, w = x_nchw.shape
    widthp = packed["w1"].shape[1]
    coutp = packed["w3"].shape[1]
    cout = cin   # downsample is None -> inplanes == planes * expansion
    m = n * h * w
    tm = _pick_row_tile(m)
    th = _pick_h_tile(h, w)

    # NCHW -> NHWC rows (channels on lanes for the matmul layout).
    x_rows = jnp.transpose(x_nchw, (0, 2, 3, 1)).reshape(m, cin).astype(jnp.float32)
    x_bf = x_rows.astype(jnp.bfloat16)
    res = _pad_to(x_rows, 1, coutp)          # lane-dense residual for epilogue

    # --- conv1 (1x1) + single-pass BN1 stat partials --------------------------
    out1, st1 = _conv1x1_stats(x_bf, packed["w1"], row_tile=tm)
    sc1, bi1 = _bn_scale_bias(st1, m, packed["g1"], packed["b1"])

    # --- conv2 (3x3): bn1+ReLU and the ZeroPad2d(1) halo fused in-kernel ------
    # TODO(synk): newPad2d is not defined in the provided source; assuming it
    # is a zero padding of 1 (nn.ZeroPad2d(1)-equivalent).
    out2, st2 = _conv3x3_bn_relu(out1.reshape(n, h, w, widthp), sc1, bi1,
                                 packed["w2"], h_tile=th)
    sc2, bi2 = _bn_scale_bias(st2, m, packed["g2"], packed["b2"])

    # --- conv3 (1x1) with bn2+ReLU fused into its input load ------------------
    out3, st3 = _conv1x1_stats(out2.reshape(m, widthp), packed["w3"], sc2, bi2,
                               row_tile=tm)
    sc3, bi3 = _bn_scale_bias(st3, m, packed["g3"], packed["b3"])

    # --- bn3 + residual add + ReLU (lane-dense coutp-wide stores) -------------
    y = _bn_add_relu(out3, res, sc3, bi3, row_tile=tm)

    # Slice off channel padding and return NCHW.
    return jnp.transpose(y[:, :cout].reshape(n, h, w, cout), (0, 3, 1, 2))


if __name__ == "__main__":
    key = jax.random.PRNGKey(0)
    kx, kp = jax.random.split(key)

    # Small shapes consistent with the module: inplanes = planes * expansion.
    N, planes, H, W = 2, 4, 16, 16
    inplanes = planes * 4  # 16

    x = jax.random.normal(kx, (N, inplanes, H, W), jnp.float32)
    params = init_bottleneck_params(kp, inplanes, planes)
    packed = pack_bottleneck_params(params)     # one-time weight packing

    out = bottleneck_forward(x, packed)
    jax.block_until_ready(out)

    assert out.shape == (N, planes * 4, H, W)
    assert bool(jnp.all(jnp.isfinite(out)))
    assert bool(jnp.all(out >= 0.0))  # final ReLU
    print("KERNEL_OK")
</pallas_src>

<mosaic_0001>
module attributes {stable_mosaic.version = 11 : i64} {
  func.func @_matmul_stats_kernel(%arg0: i32, %arg1: memref<512x16xbf16, #tpu.memory_space<vmem>>, %arg2: memref<16x128xbf16, #tpu.memory_space<vmem>>, %arg3: memref<512x128xbf16, #tpu.memory_space<vmem>>, %arg4: memref<1x2x128xf32, #tpu.memory_space<vmem>>) attributes {dimension_semantics = [#tpu.dimension_semantics<parallel>], iteration_bounds = array<i64: 1>, scalar_prefetch = 0 : i64, scratch_operands = 0 : i64, tpu.core_type = #tpu.core_type<tc>, window_params = [{transform_indices = @transform_0, window_bounds = array<i64: 512, 16>}, {pipeline_mode = #tpu.pipeline_mode<synchronous>, transform_indices = @transform_1, window_bounds = array<i64: 16, 128>}, {transform_indices = @transform_2, window_bounds = array<i64: 512, 128>}, {transform_indices = @transform_3, window_bounds = array<i64: 1, 2, 128>}]} {
    %c0 = arith.constant 0 : index
    %c0_0 = arith.constant 0 : index
    %0 = vector.load %arg1[%c0, %c0_0] : memref<512x16xbf16, #tpu.memory_space<vmem>>, vector<512x16xbf16>
    %c0_1 = arith.constant 0 : index
    %c0_2 = arith.constant 0 : index
    %1 = vector.load %arg2[%c0_1, %c0_2] : memref<16x128xbf16, #tpu.memory_space<vmem>>, vector<16x128xbf16>
    %cst = arith.constant dense<0.000000e+00> : vector<512x128xf32>
    %2 = tpu.matmul %0, %1, %cst {dimension_numbers = #tpu.dot_dimension_numbers<[1], [0], [0], [1], [0, 0, 1, 1], [], []>} : vector<512x16xbf16>, vector<16x128xbf16>, vector<512x128xf32> -> vector<512x128xf32>
    %3 = arith.truncf %2 : vector<512x128xf32> to vector<512x128xbf16>
    %c0_3 = arith.constant 0 : index
    %c0_4 = arith.constant 0 : index
    %4 = vector.load %arg3[%c0_3, %c0_4] : memref<512x128xbf16, #tpu.memory_space<vmem>>, vector<512x128xbf16>
    tpu.vector_store %arg3[%c0_3, %c0_4], %3 {strides = array<i32>} : memref<512x128xbf16, #tpu.memory_space<vmem>>, vector<512x128xbf16>,
    %5 = arith.extf %3 : vector<512x128xbf16> to vector<512x128xf32>
    %cst_5 = arith.constant dense<0.000000e+00> : vector<128xf32>
    %6 = vector.multi_reduction <add>, %5, %cst_5 [0] : vector<512x128xf32> to vector<128xf32>
    %7 = vector.shape_cast %6 : vector<128xf32> to vector<1x128xf32>
    %8 = arith.mulf %5, %5 : vector<512x128xf32>
    %cst_6 = arith.constant dense<0.000000e+00> : vector<128xf32>
    %9 = vector.multi_reduction <add>, %8, %cst_6 [0] : vector<512x128xf32> to vector<128xf32>
    %10 = vector.shape_cast %9 : vector<128xf32> to vector<1x128xf32>
    %11 = tpu.concatenate %7, %10 in 0 : vector<1x128xf32>, vector<1x128xf32> -> vector<2x128xf32>
    %c0_7 = arith.constant 0 : index
    %c0_8 = arith.constant 0 : index
    %c0_9 = arith.constant 0 : index
    %12 = vector.load %arg4[%c0_7, %c0_8, %c0_9] : memref<1x2x128xf32, #tpu.memory_space<vmem>>, vector<1x2x128xf32>
    %13 = vector.shape_cast %12 : vector<1x2x128xf32> to vector<2x128xf32>
    %14 = vector.shape_cast %11 : vector<2x128xf32> to vector<1x2x128xf32>
    tpu.vector_store %arg4[%c0_7, %c0_8, %c0_9], %14 {strides = array<i32>} : memref<1x2x128xf32, #tpu.memory_space<vmem>>, vector<1x2x128xf32>,
    return
  }
  func.func @transform_0(%arg0: i32) -> (i32, i32) {
    %c0_i32 = arith.constant 0 : i32
    %c0_i32_0 = arith.constant 0 : i32
    return %arg0, %c0_i32 : i32, i32
  }
  func.func @transform_1(%arg0: i32) -> (i32, i32) {
    %c0_i32 = arith.constant 0 : i32
    %c0_i32_0 = arith.constant 0 : i32
    %c0_i32_1 = arith.constant 0 : i32
    return %c0_i32, %c0_i32_0 : i32, i32
  }
  func.func @transform_2(%arg0: i32) -> (i32, i32) {
    %c0_i32 = arith.constant 0 : i32
    %c0_i32_0 = arith.constant 0 : i32
    return %arg0, %c0_i32 : i32, i32
  }
  func.func @transform_3(%arg0: i32) -> (i32, i32, i32) {
    %c0_i32 = arith.constant 0 : i32
    %c0_i32_0 = arith.constant 0 : i32
    %c0_i32_1 = arith.constant 0 : i32
    return %arg0, %c0_i32, %c0_i32_0 : i32, i32, i32
  }
}

module attributes {stable_mosaic.version = 11 : i64} {
  func.func @_conv3x3_fused_kernel(%arg0: i32, %arg1: i32, %arg2: memref<1x16x16x128xbf16, #tpu.memory_space<vmem>>, %arg3: memref<1x128xf32, #tpu.memory_space<vmem>>, %arg4: memref<1x128xf32, #tpu.memory_space<vmem>>, %arg5: memref<9x128x128xbf16, #tpu.memory_space<vmem>>, %arg6: memref<1x16x16x128xbf16, #tpu.memory_space<vmem>>, %arg7: memref<1x2x128xf32, #tpu.memory_space<vmem>>, %arg8: memref<18x18x128xbf16, #tpu.memory_space<vmem>>) attributes {dimension_semantics = [#tpu.dimension_semantics<parallel>, #tpu.dimension_semantics<arbitrary>], iteration_bounds = array<i64: 2, 1>, scalar_prefetch = 0 : i64, scratch_operands = 1 : i64, tpu.core_type = #tpu.core_type<tc>, window_params = [{transform_indices = @transform_0, window_bounds = array<i64: 1, 16, 16, 128>}, {pipeline_mode = #tpu.pipeline_mode<synchronous>, transform_indices = @transform_1, window_bounds = array<i64: 1, 128>}, {pipeline_mode = #tpu.pipeline_mode<synchronous>, transform_indices = @transform_2, window_bounds = array<i64: 1, 128>}, {pipeline_mode = #tpu.pipeline_mode<synchronous>, transform_indices = @transform_3, window_bounds = array<i64: 9, 128, 128>}, {transform_indices = @transform_4, window_bounds = array<i64: 1, 16, 16, 128>}, {transform_indices = @transform_5, window_bounds = array<i64: 1, 2, 128>}]} {
    %c16_i32 = arith.constant 16 : i32
    %0 = arith.muli %arg1, %c16_i32 : i32
    %1 = tpu.assume_multiple %0, 16 : i32
    %c0 = arith.constant 0 : index
    %c0_0 = arith.constant 0 : index
    %2 = vector.load %arg3[%c0, %c0_0] : memref<1x128xf32, #tpu.memory_space<vmem>>, vector<1x128xf32>
    %3 = vector.shape_cast %2 : vector<1x128xf32> to vector<1x1x128xf32>
    %c0_1 = arith.constant 0 : index
    %c0_2 = arith.constant 0 : index
    %4 = vector.load %arg4[%c0_1, %c0_2] : memref<1x128xf32, #tpu.memory_space<vmem>>, vector<1x128xf32>
    %5 = vector.shape_cast %4 : vector<1x128xf32> to vector<1x1x128xf32>
    %cst = arith.constant 0.000000e+00 : bf16
    %6 = vector.broadcast %cst : bf16 to vector<18x18x128xbf16>
    %c0_3 = arith.constant 0 : index
    %c0_4 = arith.constant 0 : index
    %c0_5 = arith.constant 0 : index
    %7 = vector.load %arg8[%c0_3, %c0_4, %c0_5] : memref<18x18x128xbf16, #tpu.memory_space<vmem>>, vector<18x18x128xbf16>
    tpu.vector_store %arg8[%c0_3, %c0_4, %c0_5], %6 {strides = array<i32>} : memref<18x18x128xbf16, #tpu.memory_space<vmem>>, vector<18x18x128xbf16>,
    %c0_6 = arith.constant 0 : index
    %8 = arith.index_cast %1 : i32 to index
    %c0_7 = arith.constant 0 : index
    %c0_8 = arith.constant 0 : index
    %9 = vector.load %arg2[%c0_6, %8, %c0_7, %c0_8] : memref<1x16x16x128xbf16, #tpu.memory_space<vmem>>, vector<1x16x16x128xbf16>
    %10 = vector.shape_cast %9 : vector<1x16x16x128xbf16> to vector<16x16x128xbf16>
    %11 = arith.extf %10 : vector<16x16x128xbf16> to vector<16x16x128xf32>
    %12 = vector.broadcast %3 : vector<1x1x128xf32> to vector<16x16x128xf32>
    %13 = arith.mulf %11, %12 : vector<16x16x128xf32>
    %14 = vector.broadcast %5 : vector<1x1x128xf32> to vector<16x16x128xf32>
    %15 = arith.addf %13, %14 : vector<16x16x128xf32>
    %cst_9 = arith.constant 0.000000e+00 : f32
    %16 = vector.broadcast %cst_9 : f32 to vector<16x16x128xf32>
    %17 = arith.maximumf %15, %16 : vector<16x16x128xf32>
    %18 = arith.truncf %17 : vector<16x16x128xf32> to vector<16x16x128xbf16>
    %c1 = arith.constant 1 : index
    %c1_10 = arith.constant 1 : index
    %c0_11 = arith.constant 0 : index
    %19 = vector.load %arg8[%c1, %c1_10, %c0_11] : memref<18x18x128xbf16, #tpu.memory_space<vmem>>, vector<16x16x128xbf16>
    tpu.vector_store %arg8[%c1, %c1_10, %c0_11], %18 {strides = array<i32>} : memref<18x18x128xbf16, #tpu.memory_space<vmem>>, vector<16x16x128xbf16>,
    %c1_i32 = arith.constant 1 : i32
    %20 = arith.subi %1, %c1_i32 : i32
    %c0_i32 = arith.constant 0 : i32
    %21 = arith.maxsi %20, %c0_i32 : i32
    %c0_12 = arith.constant 0 : index
    %22 = arith.index_cast %21 : i32 to index
    %c0_13 = arith.constant 0 : index
    %c0_14 = arith.constant 0 : index
    %23 = vector.load %arg2[%c0_12, %22, %c0_13, %c0_14] : memref<1x16x16x128xbf16, #tpu.memory_space<vmem>>, vector<1x1x16x128xbf16>
    %24 = vector.shape_cast %23 : vector<1x1x16x128xbf16> to vector<1x16x128xbf16>
    %25 = arith.extf %24 : vector<1x16x128xbf16> to vector<1x16x128xf32>
    %26 = vector.broadcast %3 : vector<1x1x128xf32> to vector<1x16x128xf32>
    %27 = arith.mulf %25, %26 : vector<1x16x128xf32>
    %28 = vector.broadcast %5 : vector<1x1x128xf32> to vector<1x16x128xf32>
    %29 = arith.addf %27, %28 : vector<1x16x128xf32>
    %cst_15 = arith.constant 0.000000e+00 : f32
    %30 = vector.broadcast %cst_15 : f32 to vector<1x16x128xf32>
    %31 = arith.maximumf %29, %30 : vector<1x16x128xf32>
    %c0_i32_16 = arith.constant 0 : i32
    %32 = arith.cmpi sgt, %1, %c0_i32_16 : i32
    %33 = arith.extui %32 : i1 to i32
    %34 = arith.sitofp %33 : i32 to f32
    %35 = vector.broadcast %34 : f32 to vector<1x16x128xf32>
    %36 = arith.mulf %31, %35 : vector<1x16x128xf32>
    %37 = arith.truncf %36 : vector<1x16x128xf32> to vector<1x16x128xbf16>
    %c0_17 = arith.constant 0 : index
    %c1_18 = arith.constant 1 : index
    %c0_19 = arith.constant 0 : index
    %38 = vector.load %arg8[%c0_17, %c1_18, %c0_19] : memref<18x18x128xbf16, #tpu.memory_space<vmem>>, vector<1x16x128xbf16>
    tpu.vector_store %arg8[%c0_17, %c1_18, %c0_19], %37 {strides = array<i32>} : memref<18x18x128xbf16, #tpu.memory_space<vmem>>, vector<1x16x128xbf16>,
    %c16_i32_20 = arith.constant 16 : i32
    %39 = arith.addi %1, %c16_i32_20 : i32
    %c15_i32 = arith.constant 15 : i32
    %40 = arith.minsi %39, %c15_i32 : i32
    %c0_21 = arith.constant 0 : index
    %41 = arith.index_cast %40 : i32 to index
    %c0_22 = arith.constant 0 : index
    %c0_23 = arith.constant 0 : index
    %42 = vector.load %arg2[%c0_21, %41, %c0_22, %c0_23] : memref<1x16x16x128xbf16, #tpu.memory_space<vmem>>, vector<1x1x16x128xbf16>
    %43 = vector.shape_cast %42 : vector<1x1x16x128xbf16> to vector<1x16x128xbf16>
    %44 = arith.extf %43 : vector<1x16x128xbf16> to vector<1x16x128xf32>
    %45 = vector.broadcast %3 : vector<1x1x128xf32> to vector<1x16x128xf32>
    %46 = arith.mulf %44, %45 : vector<1x16x128xf32>
    %47 = vector.broadcast %5 : vector<1x1x128xf32> to vector<1x16x128xf32>
    %48 = arith.addf %46, %47 : vector<1x16x128xf32>
    %cst_24 = arith.constant 0.000000e+00 : f32
    %49 = vector.broadcast %cst_24 : f32 to vector<1x16x128xf32>
    %50 = arith.maximumf %48, %49 : vector<1x16x128xf32>
    %c16_i32_25 = arith.constant 16 : i32
    %51 = arith.addi %1, %c16_i32_25 : i32
    %c16_i32_26 = arith.constant 16 : i32
    %52 = arith.cmpi slt, %51, %c16_i32_26 : i32
    %53 = arith.extui %52 : i1 to i32
    %54 = arith.sitofp %53 : i32 to f32
    %55 = vector.broadcast %54 : f32 to vector<1x16x128xf32>
    %56 = arith.mulf %50, %55 : vector<1x16x128xf32>
    %57 = arith.truncf %56 : vector<1x16x128xf32> to vector<1x16x128xbf16>
    %c17 = arith.constant 17 : index
    %c1_27 = arith.constant 1 : index
    %c0_28 = arith.constant 0 : index
    %58 = vector.load %arg8[%c17, %c1_27, %c0_28] : memref<18x18x128xbf16, #tpu.memory_space<vmem>>, vector<1x16x128xbf16>
    tpu.vector_store %arg8[%c17, %c1_27, %c0_28], %57 {strides = array<i32>} : memref<18x18x128xbf16, #tpu.memory_space<vmem>>, vector<1x16x128xbf16>,
    %cst_29 = arith.constant 0.000000e+00 : f32
    %59 = vector.broadcast %cst_29 : f32 to vector<256x128xf32>
    %c0_30 = arith.constant 0 : index
    %c0_31 = arith.constant 0 : index
    %c0_32 = arith.constant 0 : index
    %60 = vector.load %arg8[%c0_30, %c0_31, %c0_32] : memref<18x18x128xbf16, #tpu.memory_space<vmem>>, vector<16x16x128xbf16>
    %61 = vector.shape_cast %60 : vector<16x16x128xbf16> to vector<256x128xbf16>
    %c0_33 = arith.constant 0 : index
    %c0_34 = arith.constant 0 : index
    %c0_35 = arith.constant 0 : index
    %62 = vector.load %arg5[%c0_33, %c0_34, %c0_35] : memref<9x128x128xbf16, #tpu.memory_space<vmem>>, vector<1x128x128xbf16>
    %63 = vector.shape_cast %62 : vector<1x128x128xbf16> to vector<128x128xbf16>
    %cst_36 = arith.constant dense<0.000000e+00> : vector<256x128xf32>
    %64 = tpu.matmul %61, %63, %cst_36 {dimension_numbers = #tpu.dot_dimension_numbers<[1], [0], [0], [1], [0, 0, 1, 1], [], []>} : vector<256x128xbf16>, vector<128x128xbf16>, vector<256x128xf32> -> vector<256x128xf32>
    %65 = arith.addf %59, %64 : vector<256x128xf32>
    %c0_37 = arith.constant 0 : index
    %c1_38 = arith.constant 1 : index
    %c0_39 = arith.constant 0 : index
    %66 = vector.load %arg8[%c0_37, %c1_38, %c0_39] : memref<18x18x128xbf16, #tpu.memory_space<vmem>>, vector<16x16x128xbf16>
    %67 = vector.shape_cast %66 : vector<16x16x128xbf16> to vector<256x128xbf16>
    %c1_40 = arith.constant 1 : index
    %c0_41 = arith.constant 0 : index
    %c0_42 = arith.constant 0 : index
    %68 = vector.load %arg5[%c1_40, %c0_41, %c0_42] : memref<9x128x128xbf16, #tpu.memory_space<vmem>>, vector<1x128x128xbf16>
    %69 = vector.shape_cast %68 : vector<1x128x128xbf16> to vector<128x128xbf16>
    %cst_43 = arith.constant dense<0.000000e+00> : vector<256x128xf32>
    %70 = tpu.matmul %67, %69, %cst_43 {dimension_numbers = #tpu.dot_dimension_numbers<[1], [0], [0], [1], [0, 0, 1, 1], [], []>} : vector<256x128xbf16>, vector<128x128xbf16>, vector<256x128xf32> -> vector<256x128xf32>
    %71 = arith.addf %65, %70 : vector<256x128xf32>
    %c0_44 = arith.constant 0 : index
    %c2 = arith.constant 2 : index
    %c0_45 = arith.constant 0 : index
    %72 = vector.load %arg8[%c0_44, %c2, %c0_45] : memref<18x18x128xbf16, #tpu.memory_space<vmem>>, vector<16x16x128xbf16>
    %73 = vector.shape_cast %72 : vector<16x16x128xbf16> to vector<256x128xbf16>
    %c2_46 = arith.constant 2 : index
    %c0_47 = arith.constant 0 : index
    %c0_48 = arith.constant 0 : index
    %74 = vector.load %arg5[%c2_46, %c0_47, %c0_48] : memref<9x128x128xbf16, #tpu.memory_space<vmem>>, vector<1x128x128xbf16>
    %75 = vector.shape_cast %74 : vector<1x128x128xbf16> to vector<128x128xbf16>
    %cst_49 = arith.constant dense<0.000000e+00> : vector<256x128xf32>
    %76 = tpu.matmul %73, %75, %cst_49 {dimension_numbers = #tpu.dot_dimension_numbers<[1], [0], [0], [1], [0, 0, 1, 1], [], []>} : vector<256x128xbf16>, vector<128x128xbf16>, vector<256x128xf32> -> vector<256x128xf32>
    %77 = arith.addf %71, %76 : vector<256x128xf32>
    %c1_50 = arith.constant 1 : index
    %c0_51 = arith.constant 0 : index
    %c0_52 = arith.constant 0 : index
    %78 = vector.load %arg8[%c1_50, %c0_51, %c0_52] : memref<18x18x128xbf16, #tpu.memory_space<vmem>>, vector<16x16x128xbf16>
    %79 = vector.shape_cast %78 : vector<16x16x128xbf16> to vector<256x128xbf16>
    %c3 = arith.constant 3 : index
    %c0_53 = arith.constant 0 : index
    %c0_54 = arith.constant 0 : index
    %80 = vector.load %arg5[%c3, %c0_53, %c0_54] : memref<9x128x128xbf16, #tpu.memory_space<vmem>>, vector<1x128x128xbf16>
    %81 = vector.shape_cast %80 : vector<1x128x128xbf16> to vector<128x128xbf16>
    %cst_55 = arith.constant dense<0.000000e+00> : vector<256x128xf32>
    %82 = tpu.matmul %79, %81, %cst_55 {dimension_numbers = #tpu.dot_dimension_numbers<[1], [0], [0], [1], [0, 0, 1, 1], [], []>} : vector<256x128xbf16>, vector<128x128xbf16>, vector<256x128xf32> -> vector<256x128xf32>
    %83 = arith.addf %77, %82 : vector<256x128xf32>
    %c1_56 = arith.constant 1 : index
    %c1_57 = arith.constant 1 : index
    %c0_58 = arith.constant 0 : index
    %84 = vector.load %arg8[%c1_56, %c1_57, %c0_58] : memref<18x18x128xbf16, #tpu.memory_space<vmem>>, vector<16x16x128xbf16>
    %85 = vector.shape_cast %84 : vector<16x16x128xbf16> to vector<256x128xbf16>
    %c4 = arith.constant 4 : index
    %c0_59 = arith.constant 0 : index
    %c0_60 = arith.constant 0 : index
    %86 = vector.load %arg5[%c4, %c0_59, %c0_60] : memref<9x128x128xbf16, #tpu.memory_space<vmem>>, vector<1x128x128xbf16>
    %87 = vector.shape_cast %86 : vector<1x128x128xbf16> to vector<128x128xbf16>
    %cst_61 = arith.constant dense<0.000000e+00> : vector<256x128xf32>
    %88 = tpu.matmul %85, %87, %cst_61 {dimension_numbers = #tpu.dot_dimension_numbers<[1], [0], [0], [1], [0, 0, 1, 1], [], []>} : vector<256x128xbf16>, vector<128x128xbf16>, vector<256x128xf32> -> vector<256x128xf32>
    %89 = arith.addf %83, %88 : vector<256x128xf32>
    %c1_62 = arith.constant 1 : index
    %c2_63 = arith.constant 2 : index
    %c0_64 = arith.constant 0 : index
    %90 = vector.load %arg8[%c1_62, %c2_63, %c0_64] : memref<18x18x128xbf16, #tpu.memory_space<vmem>>, vector<16x16x128xbf16>
    %91 = vector.shape_cast %90 : vector<16x16x128xbf16> to vector<256x128xbf16>
    %c5 = arith.constant 5 : index
    %c0_65 = arith.constant 0 : index
    %c0_66 = arith.constant 0 : index
    %92 = vector.load %arg5[%c5, %c0_65, %c0_66] : memref<9x128x128xbf16, #tpu.memory_space<vmem>>, vector<1x128x128xbf16>
    %93 = vector.shape_cast %92 : vector<1x128x128xbf16> to vector<128x128xbf16>
    %cst_67 = arith.constant dense<0.000000e+00> : vector<256x128xf32>
    %94 = tpu.matmul %91, %93, %cst_67 {dimension_numbers = #tpu.dot_dimension_numbers<[1], [0], [0], [1], [0, 0, 1, 1], [], []>} : vector<256x128xbf16>, vector<128x128xbf16>, vector<256x128xf32> -> vector<256x128xf32>
    %95 = arith.addf %89, %94 : vector<256x128xf32>
    %c2_68 = arith.constant 2 : index
    %c0_69 = arith.constant 0 : index
    %c0_70 = arith.constant 0 : index
    %96 = vector.load %arg8[%c2_68, %c0_69, %c0_70] : memref<18x18x128xbf16, #tpu.memory_space<vmem>>, vector<16x16x128xbf16>
    %97 = vector.shape_cast %96 : vector<16x16x128xbf16> to vector<256x128xbf16>
    %c6 = arith.constant 6 : index
    %c0_71 = arith.constant 0 : index
    %c0_72 = arith.constant 0 : index
    %98 = vector.load %arg5[%c6, %c0_71, %c0_72] : memref<9x128x128xbf16, #tpu.memory_space<vmem>>, vector<1x128x128xbf16>
    %99 = vector.shape_cast %98 : vector<1x128x128xbf16> to vector<128x128xbf16>
    %cst_73 = arith.constant dense<0.000000e+00> : vector<256x128xf32>
    %100 = tpu.matmul %97, %99, %cst_73 {dimension_numbers = #tpu.dot_dimension_numbers<[1], [0], [0], [1], [0, 0, 1, 1], [], []>} : vector<256x128xbf16>, vector<128x128xbf16>, vector<256x128xf32> -> vector<256x128xf32>
    %101 = arith.addf %95, %100 : vector<256x128xf32>
    %c2_74 = arith.constant 2 : index
    %c1_75 = arith.constant 1 : index
    %c0_76 = arith.constant 0 : index
    %102 = vector.load %arg8[%c2_74, %c1_75, %c0_76] : memref<18x18x128xbf16, #tpu.memory_space<vmem>>, vector<16x16x128xbf16>
    %103 = vector.shape_cast %102 : vector<16x16x128xbf16> to vector<256x128xbf16>
    %c7 = arith.constant 7 : index
    %c0_77 = arith.constant 0 : index
    %c0_78 = arith.constant 0 : index
    %104 = vector.load %arg5[%c7, %c0_77, %c0_78] : memref<9x128x128xbf16, #tpu.memory_space<vmem>>, vector<1x128x128xbf16>
    %105 = vector.shape_cast %104 : vector<1x128x128xbf16> to vector<128x128xbf16>
    %cst_79 = arith.constant dense<0.000000e+00> : vector<256x128xf32>
    %106 = tpu.matmul %103, %105, %cst_79 {dimension_numbers = #tpu.dot_dimension_numbers<[1], [0], [0], [1], [0, 0, 1, 1], [], []>} : vector<256x128xbf16>, vector<128x128xbf16>, vector<256x128xf32> -> vector<256x128xf32>
    %107 = arith.addf %101, %106 : vector<256x128xf32>
    %c2_80 = arith.constant 2 : index
    %c2_81 = arith.constant 2 : index
    %c0_82 = arith.constant 0 : index
    %108 = vector.load %arg8[%c2_80, %c2_81, %c0_82] : memref<18x18x128xbf16, #tpu.memory_space<vmem>>, vector<16x16x128xbf16>
    %109 = vector.shape_cast %108 : vector<16x16x128xbf16> to vector<256x128xbf16>
    %c8 = arith.constant 8 : index
    %c0_83 = arith.constant 0 : index
    %c0_84 = arith.constant 0 : index
    %110 = vector.load %arg5[%c8, %c0_83, %c0_84] : memref<9x128x128xbf16, #tpu.memory_space<vmem>>, vector<1x128x128xbf16>
    %111 = vector.shape_cast %110 : vector<1x128x128xbf16> to vector<128x128xbf16>
    %cst_85 = arith.constant dense<0.000000e+00> : vector<256x128xf32>
    %112 = tpu.matmul %109, %111, %cst_85 {dimension_numbers = #tpu.dot_dimension_numbers<[1], [0], [0], [1], [0, 0, 1, 1], [], []>} : vector<256x128xbf16>, vector<128x128xbf16>, vector<256x128xf32> -> vector<256x128xf32>
    %113 = arith.addf %107, %112 : vector<256x128xf32>
    %114 = arith.truncf %113 : vector<256x128xf32> to vector<256x128xbf16>
    %115 = vector.shape_cast %114 : vector<256x128xbf16> to vector<16x16x128xbf16>
    %c0_86 = arith.constant 0 : index
    %c0_87 = arith.constant 0 : index
    %c0_88 = arith.constant 0 : index
    %c0_89 = arith.constant 0 : index
    %116 = vector.load %arg6[%c0_86, %c0_87, %c0_88, %c0_89] : memref<1x16x16x128xbf16, #tpu.memory_space<vmem>>, vector<1x16x16x128xbf16>
    %117 = vector.shape_cast %116 : vector<1x16x16x128xbf16> to vector<16x16x128xbf16>
    %118 = vector.shape_cast %115 : vector<16x16x128xbf16> to vector<1x16x16x128xbf16>
    tpu.vector_store %arg6[%c0_86, %c0_87, %c0_88, %c0_89], %118 {strides = array<i32>} : memref<1x16x16x128xbf16, #tpu.memory_space<vmem>>, vector<1x16x16x128xbf16>,
    %119 = arith.extf %114 : vector<256x128xbf16> to vector<256x128xf32>
    %cst_90 = arith.constant dense<0.000000e+00> : vector<128xf32>
    %120 = vector.multi_reduction <add>, %119, %cst_90 [0] : vector<256x128xf32> to vector<128xf32>
    %121 = vector.shape_cast %120 : vector<128xf32> to vector<1x128xf32>
    %122 = arith.mulf %119, %119 : vector<256x128xf32>
    %cst_91 = arith.constant dense<0.000000e+00> : vector<128xf32>
    %123 = vector.multi_reduction <add>, %122, %cst_91 [0] : vector<256x128xf32> to vector<128xf32>
    %124 = vector.shape_cast %123 : vector<128xf32> to vector<1x128xf32>
    %125 = tpu.concatenate %121, %124 in 0 : vector<1x128xf32>, vector<1x128xf32> -> vector<2x128xf32>
    %c0_92 = arith.constant 0 : index
    %c0_93 = arith.constant 0 : index
    %c0_94 = arith.constant 0 : index
    %126 = vector.load %arg7[%c0_92, %c0_93, %c0_94] : memref<1x2x128xf32, #tpu.memory_space<vmem>>, vector<1x2x128xf32>
    %127 = vector.shape_cast %126 : vector<1x2x128xf32> to vector<2x128xf32>
    %128 = vector.shape_cast %125 : vector<2x128xf32> to vector<1x2x128xf32>
    tpu.vector_store %arg7[%c0_92, %c0_93, %c0_94], %128 {strides = array<i32>} : memref<1x2x128xf32, #tpu.memory_space<vmem>>, vector<1x2x128xf32>,
    return
  }
  func.func @transform_0(%arg0: i32, %arg1: i32) -> (i32, i32, i32, i32) {
    %c0_i32 = arith.constant 0 : i32
    %c0_i32_0 = arith.constant 0 : i32
    %c0_i32_1 = arith.constant 0 : i32
    %c0_i32_2 = arith.constant 0 : i32
    return %arg0, %c0_i32, %c0_i32_0, %c0_i32_1 : i32, i32, i32, i32
  }
  func.func @transform_1(%arg0: i32, %arg1: i32) -> (i32, i32) {
    %c0_i32 = arith.constant 0 : i32
    %c0_i32_0 = arith.constant 0 : i32
    %c0_i32_1 = arith.constant 0 : i32
    return %c0_i32, %c0_i32_0 : i32, i32
  }
  func.func @transform_2(%arg0: i32, %arg1: i32) -> (i32, i32) {
    %c0_i32 = arith.constant 0 : i32
    %c0_i32_0 = arith.constant 0 : i32
    %c0_i32_1 = arith.constant 0 : i32
    return %c0_i32, %c0_i32_0 : i32, i32
  }
  func.func @transform_3(%arg0: i32, %arg1: i32) -> (i32, i32, i32) {
    %c0_i32 = arith.constant 0 : i32
    %c0_i32_0 = arith.constant 0 : i32
    %c0_i32_1 = arith.constant 0 : i32
    %c0_i32_2 = arith.constant 0 : i32
    return %c0_i32, %c0_i32_0, %c0_i32_1 : i32, i32, i32
  }
  func.func @transform_4(%arg0: i32, %arg1: i32) -> (i32, i32, i32, i32) {
    %c0_i32 = arith.constant 0 : i32
    %c0_i32_0 = arith.constant 0 : i32
    %c0_i32_1 = arith.constant 0 : i32
    return %arg0, %arg1, %c0_i32, %c0_i32_0 : i32, i32, i32, i32
  }
  func.func @transform_5(%arg0: i32, %arg1: i32) -> (i32, i32, i32) {
    %c1_i32 = arith.constant 1 : i32
    %0 = arith.muli %arg0, %c1_i32 : i32
    %1 = arith.addi %0, %arg1 : i32
    %c0_i32 = arith.constant 0 : i32
    %c0_i32_0 = arith.constant 0 : i32
    %c0_i32_1 = arith.constant 0 : i32
    return %1, %c0_i32, %c0_i32_0 : i32, i32, i32
  }
}

module attributes {stable_mosaic.version = 11 : i64} {
  func.func @_matmul_stats_kernel(%arg0: i32, %arg1: memref<512x128xbf16, #tpu.memory_space<vmem>>, %arg2: memref<1x128xf32, #tpu.memory_space<vmem>>, %arg3: memref<1x128xf32, #tpu.memory_space<vmem>>, %arg4: memref<128x128xbf16, #tpu.memory_space<vmem>>, %arg5: memref<512x128xbf16, #tpu.memory_space<vmem>>, %arg6: memref<1x2x128xf32, #tpu.memory_space<vmem>>) attributes {dimension_semantics = [#tpu.dimension_semantics<parallel>], iteration_bounds = array<i64: 1>, scalar_prefetch = 0 : i64, scratch_operands = 0 : i64, tpu.core_type = #tpu.core_type<tc>, window_params = [{transform_indices = @transform_0, window_bounds = array<i64: 512, 128>}, {pipeline_mode = #tpu.pipeline_mode<synchronous>, transform_indices = @transform_1, window_bounds = array<i64: 1, 128>}, {pipeline_mode = #tpu.pipeline_mode<synchronous>, transform_indices = @transform_2, window_bounds = array<i64: 1, 128>}, {pipeline_mode = #tpu.pipeline_mode<synchronous>, transform_indices = @transform_3, window_bounds = array<i64: 128, 128>}, {transform_indices = @transform_4, window_bounds = array<i64: 512, 128>}, {transform_indices = @transform_5, window_bounds = array<i64: 1, 2, 128>}]} {
    %c0 = arith.constant 0 : index
    %c0_0 = arith.constant 0 : index
    %0 = vector.load %arg1[%c0, %c0_0] : memref<512x128xbf16, #tpu.memory_space<vmem>>, vector<512x128xbf16>
    %1 = arith.extf %0 : vector<512x128xbf16> to vector<512x128xf32>
    %c0_1 = arith.constant 0 : index
    %c0_2 = arith.constant 0 : index
    %2 = vector.load %arg2[%c0_1, %c0_2] : memref<1x128xf32, #tpu.memory_space<vmem>>, vector<1x128xf32>
    %3 = vector.broadcast %2 : vector<1x128xf32> to vector<512x128xf32>
    %4 = arith.mulf %1, %3 : vector<512x128xf32>
    %c0_3 = arith.constant 0 : index
    %c0_4 = arith.constant 0 : index
    %5 = vector.load %arg3[%c0_3, %c0_4] : memref<1x128xf32, #tpu.memory_space<vmem>>, vector<1x128xf32>
    %6 = vector.broadcast %5 : vector<1x128xf32> to vector<512x128xf32>
    %7 = arith.addf %4, %6 : vector<512x128xf32>
    %cst = arith.constant 0.000000e+00 : f32
    %8 = vector.broadcast %cst : f32 to vector<512x128xf32>
    %9 = arith.maximumf %7, %8 : vector<512x128xf32>
    %10 = arith.truncf %9 : vector<512x128xf32> to vector<512x128xbf16>
    %c0_5 = arith.constant 0 : index
    %c0_6 = arith.constant 0 : index
    %11 = vector.load %arg4[%c0_5, %c0_6] : memref<128x128xbf16, #tpu.memory_space<vmem>>, vector<128x128xbf16>
    %cst_7 = arith.constant dense<0.000000e+00> : vector<512x128xf32>
    %12 = tpu.matmul %10, %11, %cst_7 {dimension_numbers = #tpu.dot_dimension_numbers<[1], [0], [0], [1], [0, 0, 1, 1], [], []>} : vector<512x128xbf16>, vector<128x128xbf16>, vector<512x128xf32> -> vector<512x128xf32>
    %13 = arith.truncf %12 : vector<512x128xf32> to vector<512x128xbf16>
    %c0_8 = arith.constant 0 : index
    %c0_9 = arith.constant 0 : index
    %14 = vector.load %arg5[%c0_8, %c0_9] : memref<512x128xbf16, #tpu.memory_space<vmem>>, vector<512x128xbf16>
    tpu.vector_store %arg5[%c0_8, %c0_9], %13 {strides = array<i32>} : memref<512x128xbf16, #tpu.memory_space<vmem>>, vector<512x128xbf16>,
    %15 = arith.extf %13 : vector<512x128xbf16> to vector<512x128xf32>
    %cst_10 = arith.constant dense<0.000000e+00> : vector<128xf32>
    %16 = vector.multi_reduction <add>, %15, %cst_10 [0] : vector<512x128xf32> to vector<128xf32>
    %17 = vector.shape_cast %16 : vector<128xf32> to vector<1x128xf32>
    %18 = arith.mulf %15, %15 : vector<512x128xf32>
    %cst_11 = arith.constant dense<0.000000e+00> : vector<128xf32>
    %19 = vector.multi_reduction <add>, %18, %cst_11 [0] : vector<512x128xf32> to vector<128xf32>
    %20 = vector.shape_cast %19 : vector<128xf32> to vector<1x128xf32>
    %21 = tpu.concatenate %17, %20 in 0 : vector<1x128xf32>, vector<1x128xf32> -> vector<2x128xf32>
    %c0_12 = arith.constant 0 : index
    %c0_13 = arith.constant 0 : index
    %c0_14 = arith.constant 0 : index
    %22 = vector.load %arg6[%c0_12, %c0_13, %c0_14] : memref<1x2x128xf32, #tpu.memory_space<vmem>>, vector<1x2x128xf32>
    %23 = vector.shape_cast %22 : vector<1x2x128xf32> to vector<2x128xf32>
    %24 = vector.shape_cast %21 : vector<2x128xf32> to vector<1x2x128xf32>
    tpu.vector_store %arg6[%c0_12, %c0_13, %c0_14], %24 {strides = array<i32>} : memref<1x2x128xf32, #tpu.memory_space<vmem>>, vector<1x2x128xf32>,
    return
  }
  func.func @transform_0(%arg0: i32) -> (i32, i32) {
    %c0_i32 = arith.constant 0 : i32
    %c0_i32_0 = arith.constant 0 : i32
    return %arg0, %c0_i32 : i32, i32
  }
  func.func @transform_1(%arg0: i32) -> (i32, i32) {
    %c0_i32 = arith.constant 0 : i32
    %c0_i32_0 = arith.constant 0 : i32
    %c0_i32_1 = arith.constant 0 : i32
    return %c0_i32, %c0_i32_0 : i32, i32
  }
  func.func @transform_2(%arg0: i32) -> (i32, i32) {
    %c0_i32 = arith.constant 0 : i32
    %c0_i32_0 = arith.constant 0 : i32
    %c0_i32_1 = arith.constant 0 : i32
    return %c0_i32, %c0_i32_0 : i32, i32
  }
  func.func @transform_3(%arg0: i32) -> (i32, i32) {
    %c0_i32 = arith.constant 0 : i32
    %c0_i32_0 = arith.constant 0 : i32
    %c0_i32_1 = arith.constant 0 : i32
    return %c0_i32, %c0_i32_0 : i32, i32
  }
  func.func @transform_4(%arg0: i32) -> (i32, i32) {
    %c0_i32 = arith.constant 0 : i32
    %c0_i32_0 = arith.constant 0 : i32
    return %arg0, %c0_i32 : i32, i32
  }
  func.func @transform_5(%arg0: i32) -> (i32, i32, i32) {
    %c0_i32 = arith.constant 0 : i32
    %c0_i32_0 = arith.constant 0 : i32
    %c0_i32_1 = arith.constant 0 : i32
    return %arg0, %c0_i32, %c0_i32_0 : i32, i32, i32
  }
}

module attributes {stable_mosaic.version = 11 : i64} {
  func.func @_bn_add_relu_kernel(%arg0: i32, %arg1: memref<512x128xbf16, #tpu.memory_space<vmem>>, %arg2: memref<512x128xf32, #tpu.memory_space<vmem>>, %arg3: memref<1x128xf32, #tpu.memory_space<vmem>>, %arg4: memref<1x128xf32, #tpu.memory_space<vmem>>, %arg5: memref<512x128xf32, #tpu.memory_space<vmem>>) attributes {dimension_semantics = [#tpu.dimension_semantics<parallel>], iteration_bounds = array<i64: 1>, scalar_prefetch = 0 : i64, scratch_operands = 0 : i64, tpu.core_type = #tpu.core_type<tc>, window_params = [{transform_indices = @transform_0, window_bounds = array<i64: 512, 128>}, {transform_indices = @transform_1, window_bounds = array<i64: 512, 128>}, {pipeline_mode = #tpu.pipeline_mode<synchronous>, transform_indices = @transform_2, window_bounds = array<i64: 1, 128>}, {pipeline_mode = #tpu.pipeline_mode<synchronous>, transform_indices = @transform_3, window_bounds = array<i64: 1, 128>}, {transform_indices = @transform_4, window_bounds = array<i64: 512, 128>}]} {
    %c0 = arith.constant 0 : index
    %c0_0 = arith.constant 0 : index
    %0 = vector.load %arg1[%c0, %c0_0] : memref<512x128xbf16, #tpu.memory_space<vmem>>, vector<512x128xbf16>
    %1 = arith.extf %0 : vector<512x128xbf16> to vector<512x128xf32>
    %c0_1 = arith.constant 0 : index
    %c0_2 = arith.constant 0 : index
    %2 = vector.load %arg3[%c0_1, %c0_2] : memref<1x128xf32, #tpu.memory_space<vmem>>, vector<1x128xf32>
    %3 = vector.broadcast %2 : vector<1x128xf32> to vector<512x128xf32>
    %4 = arith.mulf %1, %3 : vector<512x128xf32>
    %c0_3 = arith.constant 0 : index
    %c0_4 = arith.constant 0 : index
    %5 = vector.load %arg4[%c0_3, %c0_4] : memref<1x128xf32, #tpu.memory_space<vmem>>, vector<1x128xf32>
    %6 = vector.broadcast %5 : vector<1x128xf32> to vector<512x128xf32>
    %7 = arith.addf %4, %6 : vector<512x128xf32>
    %c0_5 = arith.constant 0 : index
    %c0_6 = arith.constant 0 : index
    %8 = vector.load %arg2[%c0_5, %c0_6] : memref<512x128xf32, #tpu.memory_space<vmem>>, vector<512x128xf32>
    %9 = arith.addf %7, %8 : vector<512x128xf32>
    %cst = arith.constant 0.000000e+00 : f32
    %10 = vector.broadcast %cst : f32 to vector<512x128xf32>
    %11 = arith.maximumf %9, %10 : vector<512x128xf32>
    %c0_7 = arith.constant 0 : index
    %c0_8 = arith.constant 0 : index
    %12 = vector.load %arg5[%c0_7, %c0_8] : memref<512x128xf32, #tpu.memory_space<vmem>>, vector<512x128xf32>
    tpu.vector_store %arg5[%c0_7, %c0_8], %11 {strides = array<i32>} : memref<512x128xf32, #tpu.memory_space<vmem>>, vector<512x128xf32>,
    return
  }
  func.func @transform_0(%arg0: i32) -> (i32, i32) {
    %c0_i32 = arith.constant 0 : i32
    %c0_i32_0 = arith.constant 0 : i32
    return %arg0, %c0_i32 : i32, i32
  }
  func.func @transform_1(%arg0: i32) -> (i32, i32) {
    %c0_i32 = arith.constant 0 : i32
    %c0_i32_0 = arith.constant 0 : i32
    return %arg0, %c0_i32 : i32, i32
  }
  func.func @transform_2(%arg0: i32) -> (i32, i32) {
    %c0_i32 = arith.constant 0 : i32
    %c0_i32_0 = arith.constant 0 : i32
    %c0_i32_1 = arith.constant 0 : i32
    return %c0_i32, %c0_i32_0 : i32, i32
  }
  func.func @transform_3(%arg0: i32) -> (i32, i32) {
    %c0_i32 = arith.constant 0 : i32
    %c0_i32_0 = arith.constant 0 : i32
    %c0_i32_1 = arith.constant 0 : i32
    return %c0_i32, %c0_i32_0 : i32, i32
  }
  func.func @transform_4(%arg0: i32) -> (i32, i32) {
    %c0_i32 = arith.constant 0 : i32
    %c0_i32_0 = arith.constant 0 : i32
    return %arg0, %c0_i32 : i32, i32
  }
}

</mosaic_0001>

<llo_original>
// kernel: bottleneck_forward.4
$region0: #{bottleneck_forward.4}
  #allocation0 [shape = 'u32[]', space=smem, size = 0x4, offset = 0x4, fixed_abs, tag = 'smem constant byte address 0x4 - core index']
  #allocation1 [shape = 'u32[144,128]{1,0:T(1,128)}', space=vmem, size = 0x12000, scoped, tag = 'internal scratch']
  %s0 = inlined_call_operand.hbm [shape: bf16[512,16], index: 0, kind: input, shape index: {}]
  %s1 = inlined_call_operand.hbm [shape: bf16[16,128], index: 1, kind: input, shape index: {}]
  %s2 = inlined_call_operand.hbm [shape: bf16[512,128], index: 2, kind: output, shape index: {0}]
  %s3 = inlined_call_operand.hbm [shape: f32[1,2,128], index: 3, kind: output, shape index: {1}]
  %4 = xla_tuple %s2, %s3
  %s5 = sld [smem:[#allocation0]]
  $region34: #{bottleneck_forward.4} parent=0
    _
  %s7 = ssub.s32 1, %s5
  %s8 = scalar_select 0, %s7, %s5
  $region1: #{bottleneck_forward.4} parent=0
    #allocation2 [shape = 'u8[131072]{0}', space=vmem, size = 0x20000, scoped, tag = 'input window, operand 0, single buffered']
    #allocation3 [shape = 's32[1]{0}', space=sflag, size = 0x4, scoped, tag = 'scoped memory for bottleneck_forward.4']
    #allocation4 [shape = 's32[1]{0}', space=sflag, size = 0x4, scoped, tag = 'scoped memory for bottleneck_forward.4']
    #allocation5 [shape = 'u8[4096]{0}', space=vmem, size = 0x1000, scoped, tag = 'input window, operand 1, single buffered']
    #allocation6 [shape = 's32[1]{0}', space=sflag, size = 0x4, scoped, tag = 'scoped memory for bottleneck_forward.4']
    #allocation7 [shape = 'u8[131072]{0}', space=vmem, size = 0x20000, scoped, tag = 'output window, operand 0, single buffered']
    #allocation8 [shape = 'u8[1024]{0}', space=vmem, size = 0x400, scoped, tag = 'output window, operand 1, single buffered']
    #allocation9 [shape = 's32[1]{0}', space=sflag, size = 0x4, scoped, tag = 'scoped memory for bottleneck_forward.4']
    %9 = vsyncpa [#allocation3], 0
    %10 = vsyncpa [#allocation6], 0
    %11 = vsyncpa [#allocation4], 0
    %12 = vsyncpa [#allocation9], 0
    // Predicated region
    $region2: #{bottleneck_forward.4} parent=1 // pred_check
      _
    $region3: #{bottleneck_forward.4} parent=1 // pred_check_branch
      %14 = sbr.rel (0) target = $region5
    $region4: #{bottleneck_forward.4} parent=1 // pred_region
      %s16 = ssub.s32 4096, 4096
      %17 = vsyncadd [#allocation3], %s16
      %s18 = sshll.u32 [#allocation2], 4
      %s19 = int_to_ptr.vmem [resolvable:$true] %s18
      %24 = dma.hbm_to_vmem [thread:$0]  %s0, 4096, %s19, [#allocation3], 64, 64, 4
    $region5: #{bottleneck_forward.4} parent=1 // pred_fallthru
      _
    // Predicated region
    $region6: #{bottleneck_forward.4} parent=1 // pred_check
      _
    $region7: #{bottleneck_forward.4} parent=1 // pred_check_branch
      %26 = sbr.rel (0) target = $region9
    $region8: #{bottleneck_forward.4} parent=1 // pred_region
      %s28 = ssub.s32 128, 128
      %29 = vsyncadd [#allocation6], %s28
      %s30 = sshll.u32 [#allocation5], 4
      %s31 = int_to_ptr.vmem [resolvable:$true] %s30
      %36 = dma.hbm_to_vmem [thread:$0]  %s1, 128, %s31, [#allocation6], 64, 64, 4
    $region9: #{bottleneck_forward.4} parent=1 // pred_fallthru
      _
    // Predicated region
    $region10: #{bottleneck_forward.4} parent=1 // pred_check
      _
    $region11: #{bottleneck_forward.4} parent=1 // pred_check_branch
      %38 = sbr.rel (0) target = $region13
    $region12: #{bottleneck_forward.4} parent=1 // pred_region
      %39 = dma.done [#allocation3], 4096
    $region13: #{bottleneck_forward.4} parent=1 // pred_fallthru
      _
    // Predicated region
    $region14: #{bottleneck_forward.4} parent=1 // pred_check
      _
    $region15: #{bottleneck_forward.4} parent=1 // pred_check_branch
      %41 = sbr.rel (0) target = $region17
    $region16: #{bottleneck_forward.4} parent=1 // pred_region
      %42 = dma.done [#allocation6], 128
    $region17: #{bottleneck_forward.4} parent=1 // pred_fallthru
      _
    %v44 = vld [vmem:[#allocation2] sm:$0xf]
    %v45 = vld [vmem:[#allocation2 + $0x4] sm:$0xf]
    %v46 = vld [vmem:[#allocation2 + $0x8] sm:$0xf]
    %v47 = vld [vmem:[#allocation2 + $0xc] sm:$0xf]
    %v48 = vld [vmem:[#allocation2 + $0x10] sm:$0xf]
    %v49 = vld [vmem:[#allocation2 + $0x14] sm:$0xf]
    %v50 = vld [vmem:[#allocation2 + $0x18] sm:$0xf]
    %v51 = vld [vmem:[#allocation2 + $0x1c] sm:$0xf]
    %v52 = vld [vmem:[#allocation2 + $0x20] sm:$0xf]
    %v53 = vld [vmem:[#allocation2 + $0x24] sm:$0xf]
    %v54 = vld [vmem:[#allocation2 + $0x28] sm:$0xf]
    %v55 = vld [vmem:[#allocation2 + $0x2c] sm:$0xf]
    %v56 = vld [vmem:[#allocation2 + $0x30] sm:$0xf]
    %v57 = vld [vmem:[#allocation2 + $0x34] sm:$0xf]
    %v58 = vld [vmem:[#allocation2 + $0x38] sm:$0xf]
    %v59 = vld [vmem:[#allocation2 + $0x3c] sm:$0xf]
    %v60 = vld [vmem:[#allocation2 + $0x40] sm:$0xf]
    %v61 = vld [vmem:[#allocation2 + $0x44] sm:$0xf]
    %v62 = vld [vmem:[#allocation2 + $0x48] sm:$0xf]
    %v63 = vld [vmem:[#allocation2 + $0x4c] sm:$0xf]
    %v64 = vld [vmem:[#allocation2 + $0x50] sm:$0xf]
    %v65 = vld [vmem:[#allocation2 + $0x54] sm:$0xf]
    %v66 = vld [vmem:[#allocation2 + $0x58] sm:$0xf]
    %v67 = vld [vmem:[#allocation2 + $0x5c] sm:$0xf]
    %v68 = vld [vmem:[#allocation2 + $0x60] sm:$0xf]
    %v69 = vld [vmem:[#allocation2 + $0x64] sm:$0xf]
    %v70 = vld [vmem:[#allocation2 + $0x68] sm:$0xf]
    %v71 = vld [vmem:[#allocation2 + $0x6c] sm:$0xf]
    %v72 = vld [vmem:[#allocation2 + $0x70] sm:$0xf]
    %v73 = vld [vmem:[#allocation2 + $0x74] sm:$0xf]
    %v74 = vld [vmem:[#allocation2 + $0x78] sm:$0xf]
    %v75 = vld [vmem:[#allocation2 + $0x7c] sm:$0xf]
    %v76 = vld [vmem:[#allocation2 + $0x80] sm:$0xf]
    %v77 = vld [vmem:[#allocation2 + $0x84] sm:$0xf]
    %v78 = vld [vmem:[#allocation2 + $0x88] sm:$0xf]
    %v79 = vld [vmem:[#allocation2 + $0x8c] sm:$0xf]
    %v80 = vld [vmem:[#allocation2 + $0x90] sm:$0xf]
    %v81 = vld [vmem:[#allocation2 + $0x94] sm:$0xf]
    %v82 = vld [vmem:[#allocation2 + $0x98] sm:$0xf]
    %v83 = vld [vmem:[#allocation2 + $0x9c] sm:$0xf]
    %v84 = vld [vmem:[#allocation2 + $0xa0] sm:$0xf]
    %v85 = vld [vmem:[#allocation2 + $0xa4] sm:$0xf]
    %v86 = vld [vmem:[#allocation2 + $0xa8] sm:$0xf]
    %v87 = vld [vmem:[#allocation2 + $0xac] sm:$0xf]
    %v88 = vld [vmem:[#allocation2 + $0xb0] sm:$0xf]
    %v89 = vld [vmem:[#allocation2 + $0xb4] sm:$0xf]
    %v90 = vld [vmem:[#allocation2 + $0xb8] sm:$0xf]
    %v91 = vld [vmem:[#allocation2 + $0xbc] sm:$0xf]
    %v92 = vld [vmem:[#allocation2 + $0xc0] sm:$0xf]
    %v93 = vld [vmem:[#allocation2 + $0xc4] sm:$0xf]
    %v94 = vld [vmem:[#allocation2 + $0xc8] sm:$0xf]
    %v95 = vld [vmem:[#allocation2 + $0xcc] sm:$0xf]
    %v96 = vld [vmem:[#allocation2 + $0xd0] sm:$0xf]
    %v97 = vld [vmem:[#allocation2 + $0xd4] sm:$0xf]
    %v98 = vld [vmem:[#allocation2 + $0xd8] sm:$0xf]
    %v99 = vld [vmem:[#allocation2 + $0xdc] sm:$0xf]
    %v100 = vld [vmem:[#allocation2 + $0xe0] sm:$0xf]
    %v101 = vld [vmem:[#allocation2 + $0xe4] sm:$0xf]
    %v102 = vld [vmem:[#allocation2 + $0xe8] sm:$0xf]
    %v103 = vld [vmem:[#allocation2 + $0xec] sm:$0xf]
    %v104 = vld [vmem:[#allocation2 + $0xf0] sm:$0xf]
    %v105 = vld [vmem:[#allocation2 + $0xf4] sm:$0xf]
    %v106 = vld [vmem:[#allocation2 + $0xf8] sm:$0xf]
    %v107 = vld [vmem:[#allocation2 + $0xfc] sm:$0xf]
    %v108 = vld [vmem:[#allocation5] sm:$0xf]
    %v109 = vld [vmem:[#allocation5 + $0x4] sm:$0xf]
    %v174 = vunpack.c.l.b16 %v44
    %v175 = vunpack.c.l.b16 %v45
    %v176 = vunpack.c.l.b16 %v46
    %v177 = vunpack.c.l.b16 %v47
    %v178 = vunpack.c.l.b16 %v48
    %v179 = vunpack.c.l.b16 %v49
    %v180 = vunpack.c.l.b16 %v50
    %v181 = vunpack.c.l.b16 %v51
    %v182 = vunpack.c.l.b16 %v52
    %v183 = vunpack.c.l.b16 %v53
    %v184 = vunpack.c.l.b16 %v54
    %v185 = vunpack.c.l.b16 %v55
    %v186 = vunpack.c.l.b16 %v56
    %v187 = vunpack.c.l.b16 %v57
    %v188 = vunpack.c.l.b16 %v58
    %v189 = vunpack.c.l.b16 %v59
    %v190 = vunpack.c.l.b16 %v60
    %v191 = vunpack.c.l.b16 %v61
    %v192 = vunpack.c.l.b16 %v62
    %v193 = vunpack.c.l.b16 %v63
    %v194 = vunpack.c.l.b16 %v64
    %v195 = vunpack.c.l.b16 %v65
    %v196 = vunpack.c.l.b16 %v66
    %v197 = vunpack.c.l.b16 %v67
    %v198 = vunpack.c.l.b16 %v68
    %v199 = vunpack.c.l.b16 %v69
    %v200 = vunpack.c.l.b16 %v70
    %v201 = vunpack.c.l.b16 %v71
    %v202 = vunpack.c.l.b16 %v72
    %v203 = vunpack.c.l.b16 %v73
    %v204 = vunpack.c.l.b16 %v74
    %v205 = vunpack.c.l.b16 %v75
    %v206 = vunpack.c.l.b16 %v76
    %v207 = vunpack.c.l.b16 %v77
    %v208 = vunpack.c.l.b16 %v78
    %v209 = vunpack.c.l.b16 %v79
    %v210 = vunpack.c.l.b16 %v80
    %v211 = vunpack.c.l.b16 %v81
    %v212 = vunpack.c.l.b16 %v82
    %v213 = vunpack.c.l.b16 %v83
    %v214 = vunpack.c.l.b16 %v84
    %v215 = vunpack.c.l.b16 %v85
    %v216 = vunpack.c.l.b16 %v86
    %v217 = vunpack.c.l.b16 %v87
    %v218 = vunpack.c.l.b16 %v88
    %v219 = vunpack.c.l.b16 %v89
    %v220 = vunpack.c.l.b16 %v90
    %v221 = vunpack.c.l.b16 %v91
    %v222 = vunpack.c.l.b16 %v92
    %v223 = vunpack.c.l.b16 %v93
    %v224 = vunpack.c.l.b16 %v94
    %v225 = vunpack.c.l.b16 %v95
    %v226 = vunpack.c.l.b16 %v96
    %v227 = vunpack.c.l.b16 %v97
    %v228 = vunpack.c.l.b16 %v98
    %v229 = vunpack.c.l.b16 %v99
    %v230 = vunpack.c.l.b16 %v100
    %v231 = vunpack.c.l.b16 %v101
    %v232 = vunpack.c.l.b16 %v102
    %v233 = vunpack.c.l.b16 %v103
    %v234 = vunpack.c.l.b16 %v104
    %v235 = vunpack.c.l.b16 %v105
    %v236 = vunpack.c.l.b16 %v106
    %v237 = vunpack.c.l.b16 %v107
    %v238 = vpack.c.b16 %v175, %v174
    %v239 = vpack.c.b16 %v177, %v176
    %v240 = vpack.c.b16 %v179, %v178
    %v241 = vpack.c.b16 %v181, %v180
    %v242 = vpack.c.b16 %v183, %v182
    %v243 = vpack.c.b16 %v185, %v184
    %v244 = vpack.c.b16 %v187, %v186
    %v245 = vpack.c.b16 %v189, %v188
    %v246 = vpack.c.b16 %v191, %v190
    %v247 = vpack.c.b16 %v193, %v192
    %v248 = vpack.c.b16 %v195, %v194
    %v249 = vpack.c.b16 %v197, %v196
    %v250 = vpack.c.b16 %v199, %v198
    %v251 = vpack.c.b16 %v201, %v200
    %v252 = vpack.c.b16 %v203, %v202
    %v253 = vpack.c.b16 %v205, %v204
    %v254 = vpack.c.b16 %v207, %v206
    %v255 = vpack.c.b16 %v209, %v208
    %v256 = vpack.c.b16 %v211, %v210
    %v257 = vpack.c.b16 %v213, %v212
    %v258 = vpack.c.b16 %v215, %v214
    %v259 = vpack.c.b16 %v217, %v216
    %v260 = vpack.c.b16 %v219, %v218
    %v261 = vpack.c.b16 %v221, %v220
    %v262 = vpack.c.b16 %v223, %v222
    %v263 = vpack.c.b16 %v225, %v224
    %v264 = vpack.c.b16 %v227, %v226
    %v265 = vpack.c.b16 %v229, %v228
    %v266 = vpack.c.b16 %v231, %v230
    %v267 = vpack.c.b16 %v233, %v232
    %v268 = vpack.c.b16 %v235, %v234
    %v269 = vpack.c.b16 %v237, %v236
    %v272 = vunpack.c.l.b16 %v108
    %v273 = vunpack.c.l.b16 %v109
    %v274 = vpack.c.b16 %v273, %v272
    %vm276 = vcmask 130048
    %v278 = vsel %vm276, %v238, 0
    %v281 = vsel %vm276, %v239, 0
    %v284 = vsel %vm276, %v240, 0
    %v287 = vsel %vm276, %v241, 0
    %v290 = vsel %vm276, %v242, 0
    %v293 = vsel %vm276, %v243, 0
    %v296 = vsel %vm276, %v244, 0
    %v299 = vsel %vm276, %v245, 0
    %v302 = vsel %vm276, %v246, 0
    %v305 = vsel %vm276, %v247, 0
    %v308 = vsel %vm276, %v248, 0
    %v311 = vsel %vm276, %v249, 0
    %v314 = vsel %vm276, %v250, 0
    %v317 = vsel %vm276, %v251, 0
    %v320 = vsel %vm276, %v252, 0
    %v323 = vsel %vm276, %v253, 0
    %v326 = vsel %vm276, %v254, 0
    %v329 = vsel %vm276, %v255, 0
    %v332 = vsel %vm276, %v256, 0
    %v335 = vsel %vm276, %v257, 0
    %v338 = vsel %vm276, %v258, 0
    %v341 = vsel %vm276, %v259, 0
    %v344 = vsel %vm276, %v260, 0
    %v347 = vsel %vm276, %v261, 0
    %v350 = vsel %vm276, %v262, 0
    %v353 = vsel %vm276, %v263, 0
    %v356 = vsel %vm276, %v264, 0
    %v359 = vsel %vm276, %v265, 0
    %v362 = vsel %vm276, %v266, 0
    %v365 = vsel %vm276, %v267, 0
    %v368 = vsel %vm276, %v268, 0
    %v371 = vsel %vm276, %v269, 0
    %373 = vmatprep.subr.bf16.mxu0 0
    %374 = vmatpush1.bf16.msra.mxu0 %v274
    %375 = vmatprep.subr.bf16.mxu0 0
    %376 = vmatpush1.bf16.msra.mxu0 0
    %377 = vmatprep.subr.bf16.mxu0 0
    %378 = vmatpush1.bf16.msra.mxu0 0
    %379 = vmatprep.subr.bf16.mxu0 0
    %380 = vmatpush1.bf16.msra.mxu0 0
    %381 = vmatprep.subr.bf16.mxu0 0
    %382 = vmatpush1.bf16.msra.mxu0 0
    %383 = vmatprep.subr.bf16.mxu0 0
    %384 = vmatpush1.bf16.msra.mxu0 0
    %385 = vmatprep.subr.bf16.mxu0 0
    %386 = vmatpush1.bf16.msra.mxu0 0
    %387 = vmatprep.subr.bf16.mxu0 0
    %388 = vmatpush1.bf16.msra.mxu0 0
    %389 = vmatprep.subr.bf16.mxu0 0
    %390 = vmatpush1.bf16.msra.mxu0 0
    %391 = vmatprep.subr.bf16.mxu0 0
    %392 = vmatpush1.bf16.msra.mxu0 0
    %393 = vmatprep.subr.bf16.mxu0 0
    %394 = vmatpush1.bf16.msra.mxu0 0
    %395 = vmatprep.subr.bf16.mxu0 0
    %396 = vmatpush1.bf16.msra.mxu0 0
    %397 = vmatprep.subr.bf16.mxu0 0
    %398 = vmatpush1.bf16.msra.mxu0 0
    %399 = vmatprep.subr.bf16.mxu0 0
    %400 = vmatpush1.bf16.msra.mxu0 0
    %401 = vmatprep.subr.bf16.mxu0 0
    %402 = vmatpush1.bf16.msra.mxu0 0
    %403 = vmatprep.subr.bf16.mxu0 0
    %404 = vmatpush1.bf16.msra.mxu0 0
    %405 = vmatprep.mubr.bf16.mxu0 0
    %406 = vmatmul.mubr.bf16.gmra.mrb[0].mxu0 %v278
    %v407 = vpop.f32.mrb[0].mxu0
    %v408 = vadd.f32 0.0, %v407
    %v409 = vpop.f32.mrb[0].mxu0
    %v410 = vpop.f32.mrb[0].mxu0
    %v411 = vadd.f32 0.0, %v410
    %v412 = vpop.f32.mrb[0].mxu0
    %413 = vmatprep.mubr.bf16.mxu0 0
    %414 = vmatmul.mubr.bf16.gmra.mrb[0].mxu0 %v281
    %v415 = vpop.f32.mrb[0].mxu0
    %v416 = vadd.f32 0.0, %v415
    %v417 = vpop.f32.mrb[0].mxu0
    %v418 = vpop.f32.mrb[0].mxu0
    %v419 = vadd.f32 0.0, %v418
    %v420 = vpop.f32.mrb[0].mxu0
    %421 = vmatprep.mubr.bf16.mxu0 0
    %422 = vmatmul.mubr.bf16.gmra.mrb[0].mxu0 %v284
    %v423 = vpop.f32.mrb[0].mxu0
    %v424 = vadd.f32 0.0, %v423
    %v425 = vpop.f32.mrb[0].mxu0
    %v426 = vpop.f32.mrb[0].mxu0
    %v427 = vadd.f32 0.0, %v426
    %v428 = vpop.f32.mrb[0].mxu0
    %429 = vmatprep.mubr.bf16.mxu0 0
    %430 = vmatmul.mubr.bf16.gmra.mrb[0].mxu0 %v287
    %v431 = vpop.f32.mrb[0].mxu0
    %v432 = vadd.f32 0.0, %v431
    %v433 = vpop.f32.mrb[0].mxu0
    %v434 = vpop.f32.mrb[0].mxu0
    %v435 = vadd.f32 0.0, %v434
    %v436 = vpop.f32.mrb[0].mxu0
    %437 = vmatprep.mubr.bf16.mxu0 0
    %438 = vmatmul.mubr.bf16.gmra.mrb[0].mxu0 %v290
    %v439 = vpop.f32.mrb[0].mxu0
    %v440 = vadd.f32 0.0, %v439
    %v441 = vpop.f32.mrb[0].mxu0
    %v442 = vpop.f32.mrb[0].mxu0
    %v443 = vadd.f32 0.0, %v442
    %v444 = vpop.f32.mrb[0].mxu0
    %445 = vmatprep.mubr.bf16.mxu0 0
    %446 = vmatmul.mubr.bf16.gmra.mrb[0].mxu0 %v293
    %v447 = vpop.f32.mrb[0].mxu0
    %v448 = vadd.f32 0.0, %v447
    %v449 = vpop.f32.mrb[0].mxu0
    %v450 = vpop.f32.mrb[0].mxu0
    %v451 = vadd.f32 0.0, %v450
    %v452 = vpop.f32.mrb[0].mxu0
    %453 = vmatprep.mubr.bf16.mxu0 0
    %454 = vmatmul.mubr.bf16.gmra.mrb[0].mxu0 %v296
    %v455 = vpop.f32.mrb[0].mxu0
    %v456 = vadd.f32 0.0, %v455
    %v457 = vpop.f32.mrb[0].mxu0
    %v458 = vpop.f32.mrb[0].mxu0
    %v459 = vadd.f32 0.0, %v458
    %v460 = vpop.f32.mrb[0].mxu0
    %461 = vmatprep.mubr.bf16.mxu0 0
    %462 = vmatmul.mubr.bf16.gmra.mrb[0].mxu0 %v299
    %v463 = vpop.f32.mrb[0].mxu0
    %v464 = vadd.f32 0.0, %v463
    %v465 = vpop.f32.mrb[0].mxu0
    %v466 = vpop.f32.mrb[0].mxu0
    %v467 = vadd.f32 0.0, %v466
    %v468 = vpop.f32.mrb[0].mxu0
    %469 = vmatprep.mubr.bf16.mxu0 0
    %470 = vmatmul.mubr.bf16.gmra.mrb[0].mxu0 %v302
    %v471 = vpop.f32.mrb[0].mxu0
    %v472 = vadd.f32 0.0, %v471
    %v473 = vpop.f32.mrb[0].mxu0
    %v474 = vpop.f32.mrb[0].mxu0
    %v475 = vadd.f32 0.0, %v474
    %v476 = vpop.f32.mrb[0].mxu0
    %477 = vmatprep.mubr.bf16.mxu0 0
    %478 = vmatmul.mubr.bf16.gmra.mrb[0].mxu0 %v305
    %v479 = vpop.f32.mrb[0].mxu0
    %v480 = vadd.f32 0.0, %v479
    %v481 = vpop.f32.mrb[0].mxu0
    %v482 = vpop.f32.mrb[0].mxu0
    %v483 = vadd.f32 0.0, %v482
    %v484 = vpop.f32.mrb[0].mxu0
    %485 = vmatprep.mubr.bf16.mxu0 0
    %486 = vmatmul.mubr.bf16.gmra.mrb[0].mxu0 %v308
    %v487 = vpop.f32.mrb[0].mxu0
    %v488 = vadd.f32 0.0, %v487
    %v489 = vpop.f32.mrb[0].mxu0
    %v490 = vpop.f32.mrb[0].mxu0
    %v491 = vadd.f32 0.0, %v490
    %v492 = vpop.f32.mrb[0].mxu0
    %493 = vmatprep.mubr.bf16.mxu0 0
    %494 = vmatmul.mubr.bf16.gmra.mrb[0].mxu0 %v311
    %v495 = vpop.f32.mrb[0].mxu0
    %v496 = vadd.f32 0.0, %v495
    %v497 = vpop.f32.mrb[0].mxu0
    %v498 = vpop.f32.mrb[0].mxu0
    %v499 = vadd.f32 0.0, %v498
    %v500 = vpop.f32.mrb[0].mxu0
    %501 = vmatprep.mubr.bf16.mxu0 0
    %502 = vmatmul.mubr.bf16.gmra.mrb[0].mxu0 %v314
    %v503 = vpop.f32.mrb[0].mxu0
    %v504 = vadd.f32 0.0, %v503
    %v505 = vpop.f32.mrb[0].mxu0
    %v506 = vpop.f32.mrb[0].mxu0
    %v507 = vadd.f32 0.0, %v506
    %v508 = vpop.f32.mrb[0].mxu0
    %509 = vmatprep.mubr.bf16.mxu0 0
    %510 = vmatmul.mubr.bf16.gmra.mrb[0].mxu0 %v317
    %v511 = vpop.f32.mrb[0].mxu0
    %v512 = vadd.f32 0.0, %v511
    %v513 = vpop.f32.mrb[0].mxu0
    %v514 = vpop.f32.mrb[0].mxu0
    %v515 = vadd.f32 0.0, %v514
    %v516 = vpop.f32.mrb[0].mxu0
    %517 = vmatprep.mubr.bf16.mxu0 0
    %518 = vmatmul.mubr.bf16.gmra.mrb[0].mxu0 %v320
    %v519 = vpop.f32.mrb[0].mxu0
    %v520 = vadd.f32 0.0, %v519
    %v521 = vpop.f32.mrb[0].mxu0
    %v522 = vpop.f32.mrb[0].mxu0
    %v523 = vadd.f32 0.0, %v522
    %v524 = vpop.f32.mrb[0].mxu0
    %525 = vmatprep.mubr.bf16.mxu0 0
    %526 = vmatmul.mubr.bf16.gmra.mrb[0].mxu0 %v323
    %v527 = vpop.f32.mrb[0].mxu0
    %v528 = vadd.f32 0.0, %v527
    %v529 = vpop.f32.mrb[0].mxu0
    %v530 = vpop.f32.mrb[0].mxu0
    %v531 = vadd.f32 0.0, %v530
    %v532 = vpop.f32.mrb[0].mxu0
    %533 = vmatprep.mubr.bf16.mxu0 0
    %534 = vmatmul.mubr.bf16.gmra.mrb[0].mxu0 %v326
    %v535 = vpop.f32.mrb[0].mxu0
    %v536 = vadd.f32 0.0, %v535
    %v537 = vpop.f32.mrb[0].mxu0
    %v538 = vpop.f32.mrb[0].mxu0
    %v539 = vadd.f32 0.0, %v538
    %v540 = vpop.f32.mrb[0].mxu0
    %541 = vmatprep.mubr.bf16.mxu0 0
    %542 = vmatmul.mubr.bf16.gmra.mrb[0].mxu0 %v329
    %v543 = vpop.f32.mrb[0].mxu0
    %v544 = vadd.f32 0.0, %v543
    %v545 = vpop.f32.mrb[0].mxu0
    %v546 = vpop.f32.mrb[0].mxu0
    %v547 = vadd.f32 0.0, %v546
    %v548 = vpop.f32.mrb[0].mxu0
    %549 = vmatprep.mubr.bf16.mxu0 0
    %550 = vmatmul.mubr.bf16.gmra.mrb[0].mxu0 %v332
    %v551 = vpop.f32.mrb[0].mxu0
    %v552 = vadd.f32 0.0, %v551
    %v553 = vpop.f32.mrb[0].mxu0
    %v554 = vpop.f32.mrb[0].mxu0
    %v555 = vadd.f32 0.0, %v554
    %v556 = vpop.f32.mrb[0].mxu0
    %557 = vmatprep.mubr.bf16.mxu0 0
    %558 = vmatmul.mubr.bf16.gmra.mrb[0].mxu0 %v335
    %v559 = vpop.f32.mrb[0].mxu0
    %v560 = vadd.f32 0.0, %v559
    %v561 = vpop.f32.mrb[0].mxu0
    %v562 = vpop.f32.mrb[0].mxu0
    %v563 = vadd.f32 0.0, %v562
    %v564 = vpop.f32.mrb[0].mxu0
    %565 = vmatprep.mubr.bf16.mxu0 0
    %566 = vmatmul.mubr.bf16.gmra.mrb[0].mxu0 %v338
    %v567 = vpop.f32.mrb[0].mxu0
    %v568 = vadd.f32 0.0, %v567
    %v569 = vpop.f32.mrb[0].mxu0
    %v570 = vpop.f32.mrb[0].mxu0
    %v571 = vadd.f32 0.0, %v570
    %v572 = vpop.f32.mrb[0].mxu0
    %573 = vmatprep.mubr.bf16.mxu0 0
    %574 = vmatmul.mubr.bf16.gmra.mrb[0].mxu0 %v341
    %v575 = vpop.f32.mrb[0].mxu0
    %v576 = vadd.f32 0.0, %v575
    %v577 = vpop.f32.mrb[0].mxu0
    %v578 = vpop.f32.mrb[0].mxu0
    %v579 = vadd.f32 0.0, %v578
    %v580 = vpop.f32.mrb[0].mxu0
    %581 = vmatprep.mubr.bf16.mxu0 0
    %582 = vmatmul.mubr.bf16.gmra.mrb[0].mxu0 %v344
    %v583 = vpop.f32.mrb[0].mxu0
    %v584 = vadd.f32 0.0, %v583
    %v585 = vpop.f32.mrb[0].mxu0
    %v586 = vpop.f32.mrb[0].mxu0
    %v587 = vadd.f32 0.0, %v586
    %v588 = vpop.f32.mrb[0].mxu0
    %589 = vmatprep.mubr.bf16.mxu0 0
    %590 = vmatmul.mubr.bf16.gmra.mrb[0].mxu0 %v347
    %v591 = vpop.f32.mrb[0].mxu0
    %v592 = vadd.f32 0.0, %v591
    %v593 = vpop.f32.mrb[0].mxu0
    %v594 = vpop.f32.mrb[0].mxu0
    %v595 = vadd.f32 0.0, %v594
    %v596 = vpop.f32.mrb[0].mxu0
    %597 = vmatprep.mubr.bf16.mxu0 0
    %598 = vmatmul.mubr.bf16.gmra.mrb[0].mxu0 %v350
    %v599 = vpop.f32.mrb[0].mxu0
    %v600 = vadd.f32 0.0, %v599
    %v601 = vpop.f32.mrb[0].mxu0
    %v602 = vpop.f32.mrb[0].mxu0
    %v603 = vadd.f32 0.0, %v602
    %v604 = vpop.f32.mrb[0].mxu0
    %605 = vmatprep.mubr.bf16.mxu0 0
    %606 = vmatmul.mubr.bf16.gmra.mrb[0].mxu0 %v353
    %v607 = vpop.f32.mrb[0].mxu0
    %v608 = vadd.f32 0.0, %v607
    %v609 = vpop.f32.mrb[0].mxu0
    %v610 = vpop.f32.mrb[0].mxu0
    %v611 = vadd.f32 0.0, %v610
    %v612 = vpop.f32.mrb[0].mxu0
    %613 = vmatprep.mubr.bf16.mxu0 0
    %614 = vmatmul.mubr.bf16.gmra.mrb[0].mxu0 %v356
    %v615 = vpop.f32.mrb[0].mxu0
    %v616 = vadd.f32 0.0, %v615
    %v617 = vpop.f32.mrb[0].mxu0
    %v618 = vpop.f32.mrb[0].mxu0
    %v619 = vadd.f32 0.0, %v618
    %v620 = vpop.f32.mrb[0].mxu0
    %621 = vmatprep.mubr.bf16.mxu0 0
    %622 = vmatmul.mubr.bf16.gmra.mrb[0].mxu0 %v359
    %v623 = vpop.f32.mrb[0].mxu0
    %v624 = vadd.f32 0.0, %v623
    %v625 = vpop.f32.mrb[0].mxu0
    %v626 = vpop.f32.mrb[0].mxu0
    %v627 = vadd.f32 0.0, %v626
    %v628 = vpop.f32.mrb[0].mxu0
    %629 = vmatprep.mubr.bf16.mxu0 0
    %630 = vmatmul.mubr.bf16.gmra.mrb[0].mxu0 %v362
    %v631 = vpop.f32.mrb[0].mxu0
    %v632 = vadd.f32 0.0, %v631
    %v633 = vpop.f32.mrb[0].mxu0
    %v634 = vpop.f32.mrb[0].mxu0
    %v635 = vadd.f32 0.0, %v634
    %v636 = vpop.f32.mrb[0].mxu0
    %637 = vmatprep.mubr.bf16.mxu0 0
    %638 = vmatmul.mubr.bf16.gmra.mrb[0].mxu0 %v365
    %v639 = vpop.f32.mrb[0].mxu0
    %v640 = vadd.f32 0.0, %v639
    %v641 = vpop.f32.mrb[0].mxu0
    %v642 = vpop.f32.mrb[0].mxu0
    %v643 = vadd.f32 0.0, %v642
    %v644 = vpop.f32.mrb[0].mxu0
    %645 = vmatprep.mubr.bf16.mxu0 0
    %646 = vmatmul.mubr.bf16.gmra.mrb[0].mxu0 %v368
    %v647 = vpop.f32.mrb[0].mxu0
    %v648 = vadd.f32 0.0, %v647
    %v649 = vpop.f32.mrb[0].mxu0
    %v650 = vpop.f32.mrb[0].mxu0
    %v651 = vadd.f32 0.0, %v650
    %v652 = vpop.f32.mrb[0].mxu0
    %653 = vmatprep.mubr.bf16.mxu0 0
    %654 = vmatmul.mubr.bf16.gmra.mrb[0].mxu0 %v371
    %v655 = vpop.f32.mrb[0].mxu0
    %v656 = vadd.f32 0.0, %v655
    %v657 = vpop.f32.mrb[0].mxu0
    %v658 = vpop.f32.mrb[0].mxu0
    %v659 = vadd.f32 0.0, %v658
    %v660 = vpop.f32.mrb[0].mxu0
    %661 = vdwg.mxu0
    %v662 = vpack.c.bf16 %v411, %v408
    %v663 = vpack.c.bf16 %v419, %v416
    %v664 = vpack.c.bf16 %v427, %v424
    %v665 = vpack.c.bf16 %v435, %v432
    %v666 = vpack.c.bf16 %v443, %v440
    %v667 = vpack.c.bf16 %v451, %v448
    %v668 = vpack.c.bf16 %v459, %v456
    %v669 = vpack.c.bf16 %v467, %v464
    %v670 = vpack.c.bf16 %v475, %v472
    %v671 = vpack.c.bf16 %v483, %v480
    %v672 = vpack.c.bf16 %v491, %v488
    %v673 = vpack.c.bf16 %v499, %v496
    %v674 = vpack.c.bf16 %v507, %v504
    %v675 = vpack.c.bf16 %v515, %v512
    %v676 = vpack.c.bf16 %v523, %v520
    %v677 = vpack.c.bf16 %v531, %v528
    %v678 = vpack.c.bf16 %v539, %v536
    %v679 = vpack.c.bf16 %v547, %v544
    %v680 = vpack.c.bf16 %v555, %v552
    %v681 = vpack.c.bf16 %v563, %v560
    %v682 = vpack.c.bf16 %v571, %v568
    %v683 = vpack.c.bf16 %v579, %v576
    %v684 = vpack.c.bf16 %v587, %v584
    %v685 = vpack.c.bf16 %v595, %v592
    %v686 = vpack.c.bf16 %v603, %v600
    %v687 = vpack.c.bf16 %v611, %v608
    %v688 = vpack.c.bf16 %v619, %v616
    %v689 = vpack.c.bf16 %v627, %v624
    %v690 = vpack.c.bf16 %v635, %v632
    %v691 = vpack.c.bf16 %v643, %v640
    %v692 = vpack.c.bf16 %v651, %v648
    %v693 = vpack.c.bf16 %v659, %v656
    %v726 = vunpack.c.l.b16 %v662
    %v727 = vunpack.c.h.b16 %v662
    %v728 = vunpack.c.l.b16 %v663
    %v729 = vunpack.c.h.b16 %v663
    %v730 = vunpack.c.l.b16 %v664
    %v731 = vunpack.c.h.b16 %v664
    %v732 = vunpack.c.l.b16 %v665
    %v733 = vunpack.c.h.b16 %v665
    %v734 = vunpack.c.l.b16 %v666
    %v735 = vunpack.c.h.b16 %v666
    %v736 = vunpack.c.l.b16 %v667
    %v737 = vunpack.c.h.b16 %v667
    %v738 = vunpack.c.l.b16 %v668
    %v739 = vunpack.c.h.b16 %v668
    %v740 = vunpack.c.l.b16 %v669
    %v741 = vunpack.c.h.b16 %v669
    %v742 = vunpack.c.l.b16 %v670
    %v743 = vunpack.c.h.b16 %v670
    %v744 = vunpack.c.l.b16 %v671
    %v745 = vunpack.c.h.b16 %v671
    %v746 = vunpack.c.l.b16 %v672
    %v747 = vunpack.c.h.b16 %v672
    %v748 = vunpack.c.l.b16 %v673
    %v749 = vunpack.c.h.b16 %v673
    %v750 = vunpack.c.l.b16 %v674
    %v751 = vunpack.c.h.b16 %v674
    %v752 = vunpack.c.l.b16 %v675
    %v753 = vunpack.c.h.b16 %v675
    %v754 = vunpack.c.l.b16 %v676
    %v755 = vunpack.c.h.b16 %v676
    %v756 = vunpack.c.l.b16 %v677
    %v757 = vunpack.c.h.b16 %v677
    %v758 = vunpack.c.l.b16 %v678
    %v759 = vunpack.c.h.b16 %v678
    %v760 = vunpack.c.l.b16 %v679
    %v761 = vunpack.c.h.b16 %v679
    %v762 = vunpack.c.l.b16 %v680
    %v763 = vunpack.c.h.b16 %v680
    %v764 = vunpack.c.l.b16 %v681
    %v765 = vunpack.c.h.b16 %v681
    %v766 = vunpack.c.l.b16 %v682
    %v767 = vunpack.c.h.b16 %v682
    %v768 = vunpack.c.l.b16 %v683
    %v769 = vunpack.c.h.b16 %v683
    %v770 = vunpack.c.l.b16 %v684
    %v771 = vunpack.c.h.b16 %v684
    %v772 = vunpack.c.l.b16 %v685
    %v773 = vunpack.c.h.b16 %v685
    %v774 = vunpack.c.l.b16 %v686
    %v775 = vunpack.c.h.b16 %v686
    %v776 = vunpack.c.l.b16 %v687
    %v777 = vunpack.c.h.b16 %v687
    %v778 = vunpack.c.l.b16 %v688
    %v779 = vunpack.c.h.b16 %v688
    %v780 = vunpack.c.l.b16 %v689
    %v781 = vunpack.c.h.b16 %v689
    %v782 = vunpack.c.l.b16 %v690
    %v783 = vunpack.c.h.b16 %v690
    %v784 = vunpack.c.l.b16 %v691
    %v785 = vunpack.c.h.b16 %v691
    %v786 = vunpack.c.l.b16 %v692
    %v787 = vunpack.c.h.b16 %v692
    %v788 = vunpack.c.l.b16 %v693
    %v789 = vunpack.c.h.b16 %v693
    %v790 = vpack.c.b16 %v726, %v726
    %v791 = vpack.c.b16 %v727, %v727
    %v792 = vpack.c.b16 %v728, %v728
    %v793 = vpack.c.b16 %v729, %v729
    %v794 = vpack.c.b16 %v730, %v730
    %v795 = vpack.c.b16 %v731, %v731
    %v796 = vpack.c.b16 %v732, %v732
    %v797 = vpack.c.b16 %v733, %v733
    %v798 = vpack.c.b16 %v734, %v734
    %v799 = vpack.c.b16 %v735, %v735
    %v800 = vpack.c.b16 %v736, %v736
    %v801 = vpack.c.b16 %v737, %v737
    %v802 = vpack.c.b16 %v738, %v738
    %v803 = vpack.c.b16 %v739, %v739
    %v804 = vpack.c.b16 %v740, %v740
    %v805 = vpack.c.b16 %v741, %v741
    %v806 = vpack.c.b16 %v742, %v742
    %v807 = vpack.c.b16 %v743, %v743
    %v808 = vpack.c.b16 %v744, %v744
    %v809 = vpack.c.b16 %v745, %v745
    %v810 = vpack.c.b16 %v746, %v746
    %v811 = vpack.c.b16 %v747, %v747
    %v812 = vpack.c.b16 %v748, %v748
    %v813 = vpack.c.b16 %v749, %v749
    %v814 = vpack.c.b16 %v750, %v750
    %v815 = vpack.c.b16 %v751, %v751
    %v816 = vpack.c.b16 %v752, %v752
    %v817 = vpack.c.b16 %v753, %v753
    %v818 = vpack.c.b16 %v754, %v754
    %v819 = vpack.c.b16 %v755, %v755
    %v820 = vpack.c.b16 %v756, %v756
    %v821 = vpack.c.b16 %v757, %v757
    %v822 = vpack.c.b16 %v758, %v758
    %v823 = vpack.c.b16 %v759, %v759
    %v824 = vpack.c.b16 %v760, %v760
    %v825 = vpack.c.b16 %v761, %v761
    %v826 = vpack.c.b16 %v762, %v762
    %v827 = vpack.c.b16 %v763, %v763
    %v828 = vpack.c.b16 %v764, %v764
    %v829 = vpack.c.b16 %v765, %v765
    %v830 = vpack.c.b16 %v766, %v766
    %v831 = vpack.c.b16 %v767, %v767
    %v832 = vpack.c.b16 %v768, %v768
    %v833 = vpack.c.b16 %v769, %v769
    %v834 = vpack.c.b16 %v770, %v770
    %v835 = vpack.c.b16 %v771, %v771
    %v836 = vpack.c.b16 %v772, %v772
    %v837 = vpack.c.b16 %v773, %v773
    %v838 = vpack.c.b16 %v774, %v774
    %v839 = vpack.c.b16 %v775, %v775
    %v840 = vpack.c.b16 %v776, %v776
    %v841 = vpack.c.b16 %v777, %v777
    %v842 = vpack.c.b16 %v778, %v778
    %v843 = vpack.c.b16 %v779, %v779
    %v844 = vpack.c.b16 %v780, %v780
    %v845 = vpack.c.b16 %v781, %v781
    %v846 = vpack.c.b16 %v782, %v782
    %v847 = vpack.c.b16 %v783, %v783
    %v848 = vpack.c.b16 %v784, %v784
    %v849 = vpack.c.b16 %v785, %v785
    %v850 = vpack.c.b16 %v786, %v786
    %v851 = vpack.c.b16 %v787, %v787
    %v852 = vpack.c.b16 %v788, %v788
    %v853 = vpack.c.b16 %v789, %v789
    %918 = vst [vmem:[#allocation7] sm:$0xf] %v790
    %919 = vst [vmem:[#allocation7 + $0x4] sm:$0xf] %v791
    %920 = vst [vmem:[#allocation7 + $0x8] sm:$0xf] %v792
    %921 = vst [vmem:[#allocation7 + $0xc] sm:$0xf] %v793
    %922 = vst [vmem:[#allocation7 + $0x10] sm:$0xf] %v794
    %923 = vst [vmem:[#allocation7 + $0x14] sm:$0xf] %v795
    %924 = vst [vmem:[#allocation7 + $0x18] sm:$0xf] %v796
    %925 = vst [vmem:[#allocation7 + $0x1c] sm:$0xf] %v797
    %926 = vst [vmem:[#allocation7 + $0x20] sm:$0xf] %v798
    %927 = vst [vmem:[#allocation7 + $0x24] sm:$0xf] %v799
    %928 = vst [vmem:[#allocation7 + $0x28] sm:$0xf] %v800
    %929 = vst [vmem:[#allocation7 + $0x2c] sm:$0xf] %v801
    %930 = vst [vmem:[#allocation7 + $0x30] sm:$0xf] %v802
    %931 = vst [vmem:[#allocation7 + $0x34] sm:$0xf] %v803
    %932 = vst [vmem:[#allocation7 + $0x38] sm:$0xf] %v804
    %933 = vst [vmem:[#allocation7 + $0x3c] sm:$0xf] %v805
    %934 = vst [vmem:[#allocation7 + $0x40] sm:$0xf] %v806
    %935 = vst [vmem:[#allocation7 + $0x44] sm:$0xf] %v807
    %936 = vst [vmem:[#allocation7 + $0x48] sm:$0xf] %v808
    %937 = vst [vmem:[#allocation7 + $0x4c] sm:$0xf] %v809
    %938 = vst [vmem:[#allocation7 + $0x50] sm:$0xf] %v810
    %939 = vst [vmem:[#allocation7 + $0x54] sm:$0xf] %v811
    %940 = vst [vmem:[#allocation7 + $0x58] sm:$0xf] %v812
    %941 = vst [vmem:[#allocation7 + $0x5c] sm:$0xf] %v813
    %942 = vst [vmem:[#allocation7 + $0x60] sm:$0xf] %v814
    %943 = vst [vmem:[#allocation7 + $0x64] sm:$0xf] %v815
    %944 = vst [vmem:[#allocation7 + $0x68] sm:$0xf] %v816
    %945 = vst [vmem:[#allocation7 + $0x6c] sm:$0xf] %v817
    %946 = vst [vmem:[#allocation7 + $0x70] sm:$0xf] %v818
    %947 = vst [vmem:[#allocation7 + $0x74] sm:$0xf] %v819
    %948 = vst [vmem:[#allocation7 + $0x78] sm:$0xf] %v820
    %949 = vst [vmem:[#allocation7 + $0x7c] sm:$0xf] %v821
    %950 = vst [vmem:[#allocation7 + $0x80] sm:$0xf] %v822
    %951 = vst [vmem:[#allocation7 + $0x84] sm:$0xf] %v823
    %952 = vst [vmem:[#allocation7 + $0x88] sm:$0xf] %v824
    %953 = vst [vmem:[#allocation7 + $0x8c] sm:$0xf] %v825
    %954 = vst [vmem:[#allocation7 + $0x90] sm:$0xf] %v826
    %955 = vst [vmem:[#allocation7 + $0x94] sm:$0xf] %v827
    %956 = vst [vmem:[#allocation7 + $0x98] sm:$0xf] %v828
    %957 = vst [vmem:[#allocation7 + $0x9c] sm:$0xf] %v829
    %958 = vst [vmem:[#allocation7 + $0xa0] sm:$0xf] %v830
    %959 = vst [vmem:[#allocation7 + $0xa4] sm:$0xf] %v831
    %960 = vst [vmem:[#allocation7 + $0xa8] sm:$0xf] %v832
    %961 = vst [vmem:[#allocation7 + $0xac] sm:$0xf] %v833
    %962 = vst [vmem:[#allocation7 + $0xb0] sm:$0xf] %v834
    %963 = vst [vmem:[#allocation7 + $0xb4] sm:$0xf] %v835
    %964 = vst [vmem:[#allocation7 + $0xb8] sm:$0xf] %v836
    %965 = vst [vmem:[#allocation7 + $0xbc] sm:$0xf] %v837
    %966 = vst [vmem:[#allocation7 + $0xc0] sm:$0xf] %v838
    %967 = vst [vmem:[#allocation7 + $0xc4] sm:$0xf] %v839
    %968 = vst [vmem:[#allocation7 + $0xc8] sm:$0xf] %v840
    %969 = vst [vmem:[#allocation7 + $0xcc] sm:$0xf] %v841
    %970 = vst [vmem:[#allocation7 + $0xd0] sm:$0xf] %v842
    %971 = vst [vmem:[#allocation7 + $0xd4] sm:$0xf] %v843
    %972 = vst [vmem:[#allocation7 + $0xd8] sm:$0xf] %v844
    %973 = vst [vmem:[#allocation7 + $0xdc] sm:$0xf] %v845
    %974 = vst [vmem:[#allocation7 + $0xe0] sm:$0xf] %v846
    %975 = vst [vmem:[#allocation7 + $0xe4] sm:$0xf] %v847
    %976 = vst [vmem:[#allocation7 + $0xe8] sm:$0xf] %v848
    %977 = vst [vmem:[#allocation7 + $0xec] sm:$0xf] %v849
    %978 = vst [vmem:[#allocation7 + $0xf0] sm:$0xf] %v850
    %979 = vst [vmem:[#allocation7 + $0xf4] sm:$0xf] %v851
    %980 = vst [vmem:[#allocation7 + $0xf8] sm:$0xf] %v852
    %981 = vst [vmem:[#allocation7 + $0xfc] sm:$0xf] %v853
    %v982 = vunpack.c.l.bf16 %v662
    %v983 = vunpack.c.h.bf16 %v662
    %v984 = vunpack.c.l.bf16 %v663
    %v985 = vunpack.c.h.bf16 %v663
    %v986 = vunpack.c.l.bf16 %v664
    %v987 = vunpack.c.h.bf16 %v664
    %v988 = vunpack.c.l.bf16 %v665
    %v989 = vunpack.c.h.bf16 %v665
    %v990 = vunpack.c.l.bf16 %v666
    %v991 = vunpack.c.h.bf16 %v666
    %v992 = vunpack.c.l.bf16 %v667
    %v993 = vunpack.c.h.bf16 %v667
    %v994 = vunpack.c.l.bf16 %v668
    %v995 = vunpack.c.h.bf16 %v668
    %v996 = vunpack.c.l.bf16 %v669
    %v997 = vunpack.c.h.bf16 %v669
    %v998 = vunpack.c.l.bf16 %v670
    %v999 = vunpack.c.h.bf16 %v670
    %v1000 = vunpack.c.l.bf16 %v671
    %v1001 = vunpack.c.h.bf16 %v671
    %v1002 = vunpack.c.l.bf16 %v672
    %v1003 = vunpack.c.h.bf16 %v672
    %v1004 = vunpack.c.l.bf16 %v673
    %v1005 = vunpack.c.h.bf16 %v673
    %v1006 = vunpack.c.l.bf16 %v674
    %v1007 = vunpack.c.h.bf16 %v674
    %v1008 = vunpack.c.l.bf16 %v675
    %v1009 = vunpack.c.h.bf16 %v675
    %v1010 = vunpack.c.l.bf16 %v676
    %v1011 = vunpack.c.h.bf16 %v676
    %v1012 = vunpack.c.l.bf16 %v677
    %v1013 = vunpack.c.h.bf16 %v677
    %v1014 = vunpack.c.l.bf16 %v678
    %v1015 = vunpack.c.h.bf16 %v678
    %v1016 = vunpack.c.l.bf16 %v679
    %v1017 = vunpack.c.h.bf16 %v679
    %v1018 = vunpack.c.l.bf16 %v680
    %v1019 = vunpack.c.h.bf16 %v680
    %v1020 = vunpack.c.l.bf16 %v681
    %v1021 = vunpack.c.h.bf16 %v681
    %v1022 = vunpack.c.l.bf16 %v682
    %v1023 = vunpack.c.h.bf16 %v682
    %v1024 = vunpack.c.l.bf16 %v683
    %v1025 = vunpack.c.h.bf16 %v683
    %v1026 = vunpack.c.l.bf16 %v684
    %v1027 = vunpack.c.h.bf16 %v684
    %v1028 = vunpack.c.l.bf16 %v685
    %v1029 = vunpack.c.h.bf16 %v685
    %v1030 = vunpack.c.l.bf16 %v686
    %v1031 = vunpack.c.h.bf16 %v686
    %v1032 = vunpack.c.l.bf16 %v687
    %v1033 = vunpack.c.h.bf16 %v687
    %v1034 = vunpack.c.l.bf16 %v688
    %v1035 = vunpack.c.h.bf16 %v688
    %v1036 = vunpack.c.l.bf16 %v689
    %v1037 = vunpack.c.h.bf16 %v689
    %v1038 = vunpack.c.l.bf16 %v690
    %v1039 = vunpack.c.h.bf16 %v690
    %v1040 = vunpack.c.l.bf16 %v691
    %v1041 = vunpack.c.h.bf16 %v691
    %v1042 = vunpack.c.l.bf16 %v692
    %v1043 = vunpack.c.h.bf16 %v692
    %v1044 = vunpack.c.l.bf16 %v693
    %v1045 = vunpack.c.h.bf16 %v693
    %v1046 = vadd.f32 %v982, %v983
    %v1047 = vadd.f32 %v1046, %v984
    %v1048 = vadd.f32 %v1047, %v985
    %v1049 = vadd.f32 %v1048, %v986
    %v1050 = vadd.f32 %v1049, %v987
    %v1051 = vadd.f32 %v1050, %v988
    %v1052 = vadd.f32 %v1051, %v989
    %v1053 = vadd.f32 %v1052, %v990
    %v1054 = vadd.f32 %v1053, %v991
    %v1055 = vadd.f32 %v1054, %v992
    %v1056 = vadd.f32 %v1055, %v993
    %v1057 = vadd.f32 %v1056, %v994
    %v1058 = vadd.f32 %v1057, %v995
    %v1059 = vadd.f32 %v1058, %v996
    %v1060 = vadd.f32 %v1059, %v997
    %v1061 = vadd.f32 %v1060, %v998
    %v1062 = vadd.f32 %v1061, %v999
    %v1063 = vadd.f32 %v1062, %v1000
    %v1064 = vadd.f32 %v1063, %v1001
    %v1065 = vadd.f32 %v1064, %v1002
    %v1066 = vadd.f32 %v1065, %v1003
    %v1067 = vadd.f32 %v1066, %v1004
    %v1068 = vadd.f32 %v1067, %v1005
    %v1069 = vadd.f32 %v1068, %v1006
    %v1070 = vadd.f32 %v1069, %v1007
    %v1071 = vadd.f32 %v1070, %v1008
    %v1072 = vadd.f32 %v1071, %v1009
    %v1073 = vadd.f32 %v1072, %v1010
    %v1074 = vadd.f32 %v1073, %v1011
    %v1075 = vadd.f32 %v1074, %v1012
    %v1076 = vadd.f32 %v1075, %v1013
    %v1077 = vadd.f32 %v1076, %v1014
    %v1078 = vadd.f32 %v1077, %v1015
    %v1079 = vadd.f32 %v1078, %v1016
    %v1080 = vadd.f32 %v1079, %v1017
    %v1081 = vadd.f32 %v1080, %v1018
    %v1082 = vadd.f32 %v1081, %v1019
    %v1083 = vadd.f32 %v1082, %v1020
    %v1084 = vadd.f32 %v1083, %v1021
    %v1085 = vadd.f32 %v1084, %v1022
    %v1086 = vadd.f32 %v1085, %v1023
    %v1087 = vadd.f32 %v1086, %v1024
    %v1088 = vadd.f32 %v1087, %v1025
    %v1089 = vadd.f32 %v1088, %v1026
    %v1090 = vadd.f32 %v1089, %v1027
    %v1091 = vadd.f32 %v1090, %v1028
    %v1092 = vadd.f32 %v1091, %v1029
    %v1093 = vadd.f32 %v1092, %v1030
    %v1094 = vadd.f32 %v1093, %v1031
    %v1095 = vadd.f32 %v1094, %v1032
    %v1096 = vadd.f32 %v1095, %v1033
    %v1097 = vadd.f32 %v1096, %v1034
    %v1098 = vadd.f32 %v1097, %v1035
    %v1099 = vadd.f32 %v1098, %v1036
    %v1100 = vadd.f32 %v1099, %v1037
    %v1101 = vadd.f32 %v1100, %v1038
    %v1102 = vadd.f32 %v1101, %v1039
    %v1103 = vadd.f32 %v1102, %v1040
    %v1104 = vadd.f32 %v1103, %v1041
    %v1105 = vadd.f32 %v1104, %v1042
    %v1106 = vadd.f32 %v1105, %v1043
    %v1107 = vadd.f32 %v1106, %v1044
    %v1108 = vadd.f32 %v1107, %v1045
    %v1109 = vrot.slane %v1108, 4
    %v1110 = vadd.f32 %v1108, %v1109
    %v1111 = vrot.slane %v1110, 2
    %v1112 = vadd.f32 %v1110, %v1111
    %v1113 = vrot.slane %v1112, 1
    %v1114 = vadd.f32 %v1112, %v1113
    %v1115 = vmul.f32 %v982, %v982
    %v1116 = vmul.f32 %v983, %v983
    %v1117 = vmul.f32 %v984, %v984
    %v1118 = vmul.f32 %v985, %v985
    %v1119 = vmul.f32 %v986, %v986
    %v1120 = vmul.f32 %v987, %v987
    %v1121 = vmul.f32 %v988, %v988
    %v1122 = vmul.f32 %v989, %v989
    %v1123 = vmul.f32 %v990, %v990
    %v1124 = vmul.f32 %v991, %v991
    %v1125 = vmul.f32 %v992, %v992
    %v1126 = vmul.f32 %v993, %v993
    %v1127 = vmul.f32 %v994, %v994
    %v1128 = vmul.f32 %v995, %v995
    %v1129 = vmul.f32 %v996, %v996
    %v1130 = vmul.f32 %v997, %v997
    %v1131 = vmul.f32 %v998, %v998
    %v1132 = vmul.f32 %v999, %v999
    %v1133 = vmul.f32 %v1000, %v1000
    %v1134 = vmul.f32 %v1001, %v1001
    %v1135 = vmul.f32 %v1002, %v1002
    %v1136 = vmul.f32 %v1003, %v1003
    %v1137 = vmul.f32 %v1004, %v1004
    %v1138 = vmul.f32 %v1005, %v1005
    %v1139 = vmul.f32 %v1006, %v1006
    %v1140 = vmul.f32 %v1007, %v1007
    %v1141 = vmul.f32 %v1008, %v1008
    %v1142 = vmul.f32 %v1009, %v1009
    %v1143 = vmul.f32 %v1010, %v1010
    %v1144 = vmul.f32 %v1011, %v1011
    %v1145 = vmul.f32 %v1012, %v1012
    %v1146 = vmul.f32 %v1013, %v1013
    %v1147 = vmul.f32 %v1014, %v1014
    %v1148 = vmul.f32 %v1015, %v1015
    %v1149 = vmul.f32 %v1016, %v1016
    %v1150 = vmul.f32 %v1017, %v1017
    %v1151 = vmul.f32 %v1018, %v1018
    %v1152 = vmul.f32 %v1019, %v1019
    %v1153 = vmul.f32 %v1020, %v1020
    %v1154 = vmul.f32 %v1021, %v1021
    %v1155 = vmul.f32 %v1022, %v1022
    %v1156 = vmul.f32 %v1023, %v1023
    %v1157 = vmul.f32 %v1024, %v1024
    %v1158 = vmul.f32 %v1025, %v1025
    %v1159 = vmul.f32 %v1026, %v1026
    %v1160 = vmul.f32 %v1027, %v1027
    %v1161 = vmul.f32 %v1028, %v1028
    %v1162 = vmul.f32 %v1029, %v1029
    %v1163 = vmul.f32 %v1030, %v1030
    %v1164 = vmul.f32 %v1031, %v1031
    %v1165 = vmul.f32 %v1032, %v1032
    %v1166 = vmul.f32 %v1033, %v1033
    %v1167 = vmul.f32 %v1034, %v1034
    %v1168 = vmul.f32 %v1035, %v1035
    %v1169 = vmul.f32 %v1036, %v1036
    %v1170 = vmul.f32 %v1037, %v1037
    %v1171 = vmul.f32 %v1038, %v1038
    %v1172 = vmul.f32 %v1039, %v1039
    %v1173 = vmul.f32 %v1040, %v1040
    %v1174 = vmul.f32 %v1041, %v1041
    %v1175 = vmul.f32 %v1042, %v1042
    %v1176 = vmul.f32 %v1043, %v1043
    %v1177 = vmul.f32 %v1044, %v1044
    %v1178 = vmul.f32 %v1045, %v1045
    %v1179 = vadd.f32 %v1115, %v1116
    %v1180 = vadd.f32 %v1179, %v1117
    %v1181 = vadd.f32 %v1180, %v1118
    %v1182 = vadd.f32 %v1181, %v1119
    %v1183 = vadd.f32 %v1182, %v1120
    %v1184 = vadd.f32 %v1183, %v1121
    %v1185 = vadd.f32 %v1184, %v1122
    %v1186 = vadd.f32 %v1185, %v1123
    %v1187 = vadd.f32 %v1186, %v1124
    %v1188 = vadd.f32 %v1187, %v1125
    %v1189 = vadd.f32 %v1188, %v1126
    %v1190 = vadd.f32 %v1189, %v1127
    %v1191 = vadd.f32 %v1190, %v1128
    %v1192 = vadd.f32 %v1191, %v1129
    %v1193 = vadd.f32 %v1192, %v1130
    %v1194 = vadd.f32 %v1193, %v1131
    %v1195 = vadd.f32 %v1194, %v1132
    %v1196 = vadd.f32 %v1195, %v1133
    %v1197 = vadd.f32 %v1196, %v1134
    %v1198 = vadd.f32 %v1197, %v1135
    %v1199 = vadd.f32 %v1198, %v1136
    %v1200 = vadd.f32 %v1199, %v1137
    %v1201 = vadd.f32 %v1200, %v1138
    %v1202 = vadd.f32 %v1201, %v1139
    %v1203 = vadd.f32 %v1202, %v1140
    %v1204 = vadd.f32 %v1203, %v1141
    %v1205 = vadd.f32 %v1204, %v1142
    %v1206 = vadd.f32 %v1205, %v1143
    %v1207 = vadd.f32 %v1206, %v1144
    %v1208 = vadd.f32 %v1207, %v1145
    %v1209 = vadd.f32 %v1208, %v1146
    %v1210 = vadd.f32 %v1209, %v1147
    %v1211 = vadd.f32 %v1210, %v1148
    %v1212 = vadd.f32 %v1211, %v1149
    %v1213 = vadd.f32 %v1212, %v1150
    %v1214 = vadd.f32 %v1213, %v1151
    %v1215 = vadd.f32 %v1214, %v1152
    %v1216 = vadd.f32 %v1215, %v1153
    %v1217 = vadd.f32 %v1216, %v1154
    %v1218 = vadd.f32 %v1217, %v1155
    %v1219 = vadd.f32 %v1218, %v1156
    %v1220 = vadd.f32 %v1219, %v1157
    %v1221 = vadd.f32 %v1220, %v1158
    %v1222 = vadd.f32 %v1221, %v1159
    %v1223 = vadd.f32 %v1222, %v1160
    %v1224 = vadd.f32 %v1223, %v1161
    %v1225 = vadd.f32 %v1224, %v1162
    %v1226 = vadd.f32 %v1225, %v1163
    %v1227 = vadd.f32 %v1226, %v1164
    %v1228 = vadd.f32 %v1227, %v1165
    %v1229 = vadd.f32 %v1228, %v1166
    %v1230 = vadd.f32 %v1229, %v1167
    %v1231 = vadd.f32 %v1230, %v1168
    %v1232 = vadd.f32 %v1231, %v1169
    %v1233 = vadd.f32 %v1232, %v1170
    %v1234 = vadd.f32 %v1233, %v1171
    %v1235 = vadd.f32 %v1234, %v1172
    %v1236 = vadd.f32 %v1235, %v1173
    %v1237 = vadd.f32 %v1236, %v1174
    %v1238 = vadd.f32 %v1237, %v1175
    %v1239 = vadd.f32 %v1238, %v1176
    %v1240 = vadd.f32 %v1239, %v1177
    %v1241 = vadd.f32 %v1240, %v1178
    %v1242 = vrot.slane %v1241, 4
    %v1243 = vadd.f32 %v1241, %v1242
    %v1244 = vrot.slane %v1243, 2
    %v1245 = vadd.f32 %v1243, %v1244
    %v1246 = vrot.slane %v1245, 1
    %v1247 = vadd.f32 %v1245, %v1246
    %vm1248 = vcmask 1040384
    %v1249 = vsel %vm1248, %v1114, %v1247
    %1250 = vst [vmem:[#allocation8] sm:$0x3] %v1249
    // Predicated region
    $region18: #{bottleneck_forward.4} parent=1 // pred_check
      _
    $region19: #{bottleneck_forward.4} parent=1 // pred_check_branch
      %1252 = sbr.rel (0) target = $region21
    $region20: #{bottleneck_forward.4} parent=1 // pred_region
      %s1254 = ssub.s32 4096, 4096
      %1255 = vsyncadd [#allocation4], %s1254
      %s1256 = sshll.u32 [#allocation7], 4
      %s1257 = int_to_ptr.vmem [resolvable:$true] %s1256
      %1262 = dma.vmem_to_hbm [thread:$0]  %s1257, 4096, %s2, [#allocation4], 64, 64, 4
    $region21: #{bottleneck_forward.4} parent=1 // pred_fallthru
      _
    // Predicated region
    $region22: #{bottleneck_forward.4} parent=1 // pred_check
      _
    $region23: #{bottleneck_forward.4} parent=1 // pred_check_branch
      %1264 = sbr.rel (0) target = $region25
    $region24: #{bottleneck_forward.4} parent=1 // pred_region
      %s1266 = ssub.s32 32, 32
      %1267 = vsyncadd [#allocation9], %s1266
      %s1269 = sshll.u32 [#allocation8], 4
      %s1270 = int_to_ptr.vmem [resolvable:$true] %s1269
      %1272 = dma.vmem_to_hbm [thread:$0]  %s1270, 32, %s3, [#allocation9]
    $region25: #{bottleneck_forward.4} parent=1 // pred_fallthru
      _
    // Predicated region
    $region26: #{bottleneck_forward.4} parent=1 // pred_check
      _
    $region27: #{bottleneck_forward.4} parent=1 // pred_check_branch
      %1274 = sbr.rel (0) target = $region29
    $region28: #{bottleneck_forward.4} parent=1 // pred_region
      %1275 = dma.done [#allocation4], 4096
    $region29: #{bottleneck_forward.4} parent=1 // pred_fallthru
      _
    // Predicated region
    $region30: #{bottleneck_forward.4} parent=1 // pred_check
      _
    $region31: #{bottleneck_forward.4} parent=1 // pred_check_branch
      %1277 = sbr.rel (0) target = $region33
    $region32: #{bottleneck_forward.4} parent=1 // pred_region
      %1278 = dma.done [#allocation9], 32
    $region33: #{bottleneck_forward.4} parent=1 // pred_fallthru
      _
    %1279 = vsyncpa [#allocation3], 1
    %1280 = vsyncpa [#allocation6], 1
    %1281 = vsyncpa [#allocation4], 1
    %1282 = vsyncpa [#allocation9], 1

// kernel: bottleneck_forward.7
$region0: #{bottleneck_forward.7}
  #allocation0 [shape = 'u32[]', space=smem, size = 0x4, offset = 0x4, fixed_abs, tag = 'smem constant byte address 0x4 - core index']
  #allocation1 [shape = 'u32[144,128]{1,0:T(1,128)}', space=vmem, size = 0x12000, scoped, tag = 'internal scratch']
  %s0 = inlined_call_operand.hbm [shape: bf16[512,128], index: 0, kind: input, shape index: {}]
  %s1 = inlined_call_operand.hbm [shape: f32[512,128], index: 1, kind: input, shape index: {}]
  %s2 = inlined_call_operand.hbm [shape: f32[1,128], index: 2, kind: input, shape index: {}]
  %s3 = inlined_call_operand.hbm [shape: f32[1,128], index: 3, kind: input, shape index: {}]
  %s4 = inlined_call_operand.hbm [shape: f32[512,128], index: 4, kind: output, shape index: {}]
  %s5 = sld [smem:[#allocation0]]
  $region42: #{bottleneck_forward.7} parent=0
    _
  %s7 = ssub.s32 1, %s5
  %s8 = scalar_select 0, %s7, %s5
  $region1: #{bottleneck_forward.7} parent=0
    #allocation2 [shape = 'u8[131072]{0}', space=vmem, size = 0x20000, scoped, tag = 'input window, operand 0, single buffered']
    #allocation3 [shape = 's32[1]{0}', space=sflag, size = 0x4, scoped, tag = 'scoped memory for bottleneck_forward.7']
    #allocation4 [shape = 's32[1]{0}', space=sflag, size = 0x4, scoped, tag = 'scoped memory for bottleneck_forward.7']
    #allocation5 [shape = 'u8[262144]{0}', space=vmem, size = 0x40000, scoped, tag = 'input window, operand 1, single buffered']
    #allocation6 [shape = 's32[1]{0}', space=sflag, size = 0x4, scoped, tag = 'scoped memory for bottleneck_forward.7']
    #allocation7 [shape = 'u8[512]{0}', space=vmem, size = 0x400, scoped, tag = 'input window, operand 2, single buffered']
    #allocation8 [shape = 'u8[512]{0}', space=vmem, size = 0x400, scoped, tag = 'input window, operand 3, single buffered']
    #allocation9 [shape = 's32[1]{0}', space=sflag, size = 0x4, scoped, tag = 'scoped memory for bottleneck_forward.7']
    #allocation10 [shape = 'u8[262144]{0}', space=vmem, size = 0x40000, scoped, tag = 'output window, operand 0, single buffered']
    %9 = vsyncpa [#allocation3], 0
    %10 = vsyncpa [#allocation6], 0
    %11 = vsyncpa [#allocation9], 0
    %12 = vsyncpa [#allocation4], 0
    // Predicated region
    $region2: #{bottleneck_forward.7} parent=1 // pred_check
      _
    $region3: #{bottleneck_forward.7} parent=1 // pred_check_branch
      %14 = sbr.rel (0) target = $region5
    $region4: #{bottleneck_forward.7} parent=1 // pred_region
      %s16 = ssub.s32 4096, 4096
      %17 = vsyncadd [#allocation3], %s16
      %s18 = sshll.u32 [#allocation2], 4
      %s19 = int_to_ptr.vmem [resolvable:$true] %s18
      %24 = dma.hbm_to_vmem [thread:$0]  %s0, 4096, %s19, [#allocation3], 64, 64, 4
    $region5: #{bottleneck_forward.7} parent=1 // pred_fallthru
      _
    // Predicated region
    $region6: #{bottleneck_forward.7} parent=1 // pred_check
      _
    $region7: #{bottleneck_forward.7} parent=1 // pred_check_branch
      %26 = sbr.rel (0) target = $region9
    $region8: #{bottleneck_forward.7} parent=1 // pred_region
      %s28 = ssub.s32 8192, 8192
      %29 = vsyncadd [#allocation6], %s28
      %s30 = sshll.u32 [#allocation5], 4
      %s31 = int_to_ptr.vmem [resolvable:$true] %s30
      %36 = dma.hbm_to_vmem [thread:$0]  %s1, 8192, %s31, [#allocation6], 128, 128, 8
    $region9: #{bottleneck_forward.7} parent=1 // pred_fallthru
      _
    // Predicated region
    $region10: #{bottleneck_forward.7} parent=1 // pred_check
      _
    $region11: #{bottleneck_forward.7} parent=1 // pred_check_branch
      %38 = sbr.rel (0) target = $region13
    $region12: #{bottleneck_forward.7} parent=1 // pred_region
      %s40 = ssub.s32 16, 16
      %41 = vsyncadd [#allocation6], %s40
      %s43 = sshll.u32 [#allocation7], 4
      %s44 = int_to_ptr.vmem [resolvable:$true] %s43
      %46 = dma.hbm_to_vmem [thread:$0]  %s2, 16, %s44, [#allocation6]
    $region13: #{bottleneck_forward.7} parent=1 // pred_fallthru
      _
    // Predicated region
    $region14: #{bottleneck_forward.7} parent=1 // pred_check
      _
    $region15: #{bottleneck_forward.7} parent=1 // pred_check_branch
      %48 = sbr.rel (0) target = $region17
    $region16: #{bottleneck_forward.7} parent=1 // pred_region
      %s50 = ssub.s32 16, 16
      %51 = vsyncadd [#allocation9], %s50
      %s53 = sshll.u32 [#allocation8], 4
      %s54 = int_to_ptr.vmem [resolvable:$true] %s53
      %56 = dma.hbm_to_vmem [thread:$0]  %s3, 16, %s54, [#allocation9]
    $region17: #{bottleneck_forward.7} parent=1 // pred_fallthru
      _
    // Predicated region
    $region18: #{bottleneck_forward.7} parent=1 // pred_check
      _
    $region19: #{bottleneck_forward.7} parent=1 // pred_check_branch
      %58 = sbr.rel (0) target = $region21
    $region20: #{bottleneck_forward.7} parent=1 // pred_region
      %59 = dma.done [#allocation3], 4096
    $region21: #{bottleneck_forward.7} parent=1 // pred_fallthru
      _
    // Predicated region
    $region22: #{bottleneck_forward.7} parent=1 // pred_check
      _
    $region23: #{bottleneck_forward.7} parent=1 // pred_check_branch
      %61 = sbr.rel (0) target = $region25
    $region24: #{bottleneck_forward.7} parent=1 // pred_region
      %62 = dma.done [#allocation6], 8192
    $region25: #{bottleneck_forward.7} parent=1 // pred_fallthru
      _
    // Predicated region
    $region26: #{bottleneck_forward.7} parent=1 // pred_check
      _
    $region27: #{bottleneck_forward.7} parent=1 // pred_check_branch
      %64 = sbr.rel (0) target = $region29
    $region28: #{bottleneck_forward.7} parent=1 // pred_region
      %65 = dma.done [#allocation6], 16
    $region29: #{bottleneck_forward.7} parent=1 // pred_fallthru
      _
    // Predicated region
    $region30: #{bottleneck_forward.7} parent=1 // pred_check
      _
    $region31: #{bottleneck_forward.7} parent=1 // pred_check_branch
      %67 = sbr.rel (0) target = $region33
    $region32: #{bottleneck_forward.7} parent=1 // pred_region
      %68 = dma.done [#allocation9], 16
    $region33: #{bottleneck_forward.7} parent=1 // pred_fallthru
      _
    %v69 = vld [vmem:[#allocation2] sm:$0xf]
    %v70 = vld [vmem:[#allocation2 + $0x4] sm:$0xf]
    %v71 = vld [vmem:[#allocation2 + $0x8] sm:$0xf]
    %v72 = vld [vmem:[#allocation2 + $0xc] sm:$0xf]
    %v73 = vld [vmem:[#allocation2 + $0x10] sm:$0xf]
    %v74 = vld [vmem:[#allocation2 + $0x14] sm:$0xf]
    %v75 = vld [vmem:[#allocation2 + $0x18] sm:$0xf]
    %v76 = vld [vmem:[#allocation2 + $0x1c] sm:$0xf]
    %v77 = vld [vmem:[#allocation2 + $0x20] sm:$0xf]
    %v78 = vld [vmem:[#allocation2 + $0x24] sm:$0xf]
    %v79 = vld [vmem:[#allocation2 + $0x28] sm:$0xf]
    %v80 = vld [vmem:[#allocation2 + $0x2c] sm:$0xf]
    %v81 = vld [vmem:[#allocation2 + $0x30] sm:$0xf]
    %v82 = vld [vmem:[#allocation2 + $0x34] sm:$0xf]
    %v83 = vld [vmem:[#allocation2 + $0x38] sm:$0xf]
    %v84 = vld [vmem:[#allocation2 + $0x3c] sm:$0xf]
    %v85 = vld [vmem:[#allocation2 + $0x40] sm:$0xf]
    %v86 = vld [vmem:[#allocation2 + $0x44] sm:$0xf]
    %v87 = vld [vmem:[#allocation2 + $0x48] sm:$0xf]
    %v88 = vld [vmem:[#allocation2 + $0x4c] sm:$0xf]
    %v89 = vld [vmem:[#allocation2 + $0x50] sm:$0xf]
    %v90 = vld [vmem:[#allocation2 + $0x54] sm:$0xf]
    %v91 = vld [vmem:[#allocation2 + $0x58] sm:$0xf]
    %v92 = vld [vmem:[#allocation2 + $0x5c] sm:$0xf]
    %v93 = vld [vmem:[#allocation2 + $0x60] sm:$0xf]
    %v94 = vld [vmem:[#allocation2 + $0x64] sm:$0xf]
    %v95 = vld [vmem:[#allocation2 + $0x68] sm:$0xf]
    %v96 = vld [vmem:[#allocation2 + $0x6c] sm:$0xf]
    %v97 = vld [vmem:[#allocation2 + $0x70] sm:$0xf]
    %v98 = vld [vmem:[#allocation2 + $0x74] sm:$0xf]
    %v99 = vld [vmem:[#allocation2 + $0x78] sm:$0xf]
    %v100 = vld [vmem:[#allocation2 + $0x7c] sm:$0xf]
    %v101 = vld [vmem:[#allocation2 + $0x80] sm:$0xf]
    %v102 = vld [vmem:[#allocation2 + $0x84] sm:$0xf]
    %v103 = vld [vmem:[#allocation2 + $0x88] sm:$0xf]
    %v104 = vld [vmem:[#allocation2 + $0x8c] sm:$0xf]
    %v105 = vld [vmem:[#allocation2 + $0x90] sm:$0xf]
    %v106 = vld [vmem:[#allocation2 + $0x94] sm:$0xf]
    %v107 = vld [vmem:[#allocation2 + $0x98] sm:$0xf]
    %v108 = vld [vmem:[#allocation2 + $0x9c] sm:$0xf]
    %v109 = vld [vmem:[#allocation2 + $0xa0] sm:$0xf]
    %v110 = vld [vmem:[#allocation2 + $0xa4] sm:$0xf]
    %v111 = vld [vmem:[#allocation2 + $0xa8] sm:$0xf]
    %v112 = vld [vmem:[#allocation2 + $0xac] sm:$0xf]
    %v113 = vld [vmem:[#allocation2 + $0xb0] sm:$0xf]
    %v114 = vld [vmem:[#allocation2 + $0xb4] sm:$0xf]
    %v115 = vld [vmem:[#allocation2 + $0xb8] sm:$0xf]
    %v116 = vld [vmem:[#allocation2 + $0xbc] sm:$0xf]
    %v117 = vld [vmem:[#allocation2 + $0xc0] sm:$0xf]
    %v118 = vld [vmem:[#allocation2 + $0xc4] sm:$0xf]
    %v119 = vld [vmem:[#allocation2 + $0xc8] sm:$0xf]
    %v120 = vld [vmem:[#allocation2 + $0xcc] sm:$0xf]
    %v121 = vld [vmem:[#allocation2 + $0xd0] sm:$0xf]
    %v122 = vld [vmem:[#allocation2 + $0xd4] sm:$0xf]
    %v123 = vld [vmem:[#allocation2 + $0xd8] sm:$0xf]
    %v124 = vld [vmem:[#allocation2 + $0xdc] sm:$0xf]
    %v125 = vld [vmem:[#allocation2 + $0xe0] sm:$0xf]
    %v126 = vld [vmem:[#allocation2 + $0xe4] sm:$0xf]
    %v127 = vld [vmem:[#allocation2 + $0xe8] sm:$0xf]
    %v128 = vld [vmem:[#allocation2 + $0xec] sm:$0xf]
    %v129 = vld [vmem:[#allocation2 + $0xf0] sm:$0xf]
    %v130 = vld [vmem:[#allocation2 + $0xf4] sm:$0xf]
    %v131 = vld [vmem:[#allocation2 + $0xf8] sm:$0xf]
    %v132 = vld [vmem:[#allocation2 + $0xfc] sm:$0xf]
    %v133 = vunpack.c.l.bf16 %v69
    %v134 = vunpack.c.l.bf16 %v70
    %v135 = vunpack.c.l.bf16 %v71
    %v136 = vunpack.c.l.bf16 %v72
    %v137 = vunpack.c.l.bf16 %v73
    %v138 = vunpack.c.l.bf16 %v74
    %v139 = vunpack.c.l.bf16 %v75
    %v140 = vunpack.c.l.bf16 %v76
    %v141 = vunpack.c.l.bf16 %v77
    %v142 = vunpack.c.l.bf16 %v78
    %v143 = vunpack.c.l.bf16 %v79
    %v144 = vunpack.c.l.bf16 %v80
    %v145 = vunpack.c.l.bf16 %v81
    %v146 = vunpack.c.l.bf16 %v82
    %v147 = vunpack.c.l.bf16 %v83
    %v148 = vunpack.c.l.bf16 %v84
    %v149 = vunpack.c.l.bf16 %v85
    %v150 = vunpack.c.l.bf16 %v86
    %v151 = vunpack.c.l.bf16 %v87
    %v152 = vunpack.c.l.bf16 %v88
    %v153 = vunpack.c.l.bf16 %v89
    %v154 = vunpack.c.l.bf16 %v90
    %v155 = vunpack.c.l.bf16 %v91
    %v156 = vunpack.c.l.bf16 %v92
    %v157 = vunpack.c.l.bf16 %v93
    %v158 = vunpack.c.l.bf16 %v94
    %v159 = vunpack.c.l.bf16 %v95
    %v160 = vunpack.c.l.bf16 %v96
    %v161 = vunpack.c.l.bf16 %v97
    %v162 = vunpack.c.l.bf16 %v98
    %v163 = vunpack.c.l.bf16 %v99
    %v164 = vunpack.c.l.bf16 %v100
    %v165 = vunpack.c.l.bf16 %v101
    %v166 = vunpack.c.l.bf16 %v102
    %v167 = vunpack.c.l.bf16 %v103
    %v168 = vunpack.c.l.bf16 %v104
    %v169 = vunpack.c.l.bf16 %v105
    %v170 = vunpack.c.l.bf16 %v106
    %v171 = vunpack.c.l.bf16 %v107
    %v172 = vunpack.c.l.bf16 %v108
    %v173 = vunpack.c.l.bf16 %v109
    %v174 = vunpack.c.l.bf16 %v110
    %v175 = vunpack.c.l.bf16 %v111
    %v176 = vunpack.c.l.bf16 %v112
    %v177 = vunpack.c.l.bf16 %v113
    %v178 = vunpack.c.l.bf16 %v114
    %v179 = vunpack.c.l.bf16 %v115
    %v180 = vunpack.c.l.bf16 %v116
    %v181 = vunpack.c.l.bf16 %v117
    %v182 = vunpack.c.l.bf16 %v118
    %v183 = vunpack.c.l.bf16 %v119
    %v184 = vunpack.c.l.bf16 %v120
    %v185 = vunpack.c.l.bf16 %v121
    %v186 = vunpack.c.l.bf16 %v122
    %v187 = vunpack.c.l.bf16 %v123
    %v188 = vunpack.c.l.bf16 %v124
    %v189 = vunpack.c.l.bf16 %v125
    %v190 = vunpack.c.l.bf16 %v126
    %v191 = vunpack.c.l.bf16 %v127
    %v192 = vunpack.c.l.bf16 %v128
    %v193 = vunpack.c.l.bf16 %v129
    %v194 = vunpack.c.l.bf16 %v130
    %v195 = vunpack.c.l.bf16 %v131
    %v196 = vunpack.c.l.bf16 %v132
    %v197 = vld [vmem:[#allocation7] sm:$0x1]
    %v199 = vlaneseq
    %v200 = vshrl.u32 %v199, 7
    %v201 = vsub.s32 0, %v200
    %v202 = vrot.slane %v197, %v201
    %v204 = vmul.f32 %v133, %v202
    %v205 = vmul.f32 %v134, %v202
    %v206 = vmul.f32 %v135, %v202
    %v207 = vmul.f32 %v136, %v202
    %v208 = vmul.f32 %v137, %v202
    %v209 = vmul.f32 %v138, %v202
    %v210 = vmul.f32 %v139, %v202
    %v211 = vmul.f32 %v140, %v202
    %v212 = vmul.f32 %v141, %v202
    %v213 = vmul.f32 %v142, %v202
    %v214 = vmul.f32 %v143, %v202
    %v215 = vmul.f32 %v144, %v202
    %v216 = vmul.f32 %v145, %v202
    %v217 = vmul.f32 %v146, %v202
    %v218 = vmul.f32 %v147, %v202
    %v219 = vmul.f32 %v148, %v202
    %v220 = vmul.f32 %v149, %v202
    %v221 = vmul.f32 %v150, %v202
    %v222 = vmul.f32 %v151, %v202
    %v223 = vmul.f32 %v152, %v202
    %v224 = vmul.f32 %v153, %v202
    %v225 = vmul.f32 %v154, %v202
    %v226 = vmul.f32 %v155, %v202
    %v227 = vmul.f32 %v156, %v202
    %v228 = vmul.f32 %v157, %v202
    %v229 = vmul.f32 %v158, %v202
    %v230 = vmul.f32 %v159, %v202
    %v231 = vmul.f32 %v160, %v202
    %v232 = vmul.f32 %v161, %v202
    %v233 = vmul.f32 %v162, %v202
    %v234 = vmul.f32 %v163, %v202
    %v235 = vmul.f32 %v164, %v202
    %v236 = vmul.f32 %v165, %v202
    %v237 = vmul.f32 %v166, %v202
    %v238 = vmul.f32 %v167, %v202
    %v239 = vmul.f32 %v168, %v202
    %v240 = vmul.f32 %v169, %v202
    %v241 = vmul.f32 %v170, %v202
    %v242 = vmul.f32 %v171, %v202
    %v243 = vmul.f32 %v172, %v202
    %v244 = vmul.f32 %v173, %v202
    %v245 = vmul.f32 %v174, %v202
    %v246 = vmul.f32 %v175, %v202
    %v247 = vmul.f32 %v176, %v202
    %v248 = vmul.f32 %v177, %v202
    %v249 = vmul.f32 %v178, %v202
    %v250 = vmul.f32 %v179, %v202
    %v251 = vmul.f32 %v180, %v202
    %v252 = vmul.f32 %v181, %v202
    %v253 = vmul.f32 %v182, %v202
    %v254 = vmul.f32 %v183, %v202
    %v255 = vmul.f32 %v184, %v202
    %v256 = vmul.f32 %v185, %v202
    %v257 = vmul.f32 %v186, %v202
    %v258 = vmul.f32 %v187, %v202
    %v259 = vmul.f32 %v188, %v202
    %v260 = vmul.f32 %v189, %v202
    %v261 = vmul.f32 %v190, %v202
    %v262 = vmul.f32 %v191, %v202
    %v263 = vmul.f32 %v192, %v202
    %v264 = vmul.f32 %v193, %v202
    %v265 = vmul.f32 %v194, %v202
    %v266 = vmul.f32 %v195, %v202
    %v267 = vmul.f32 %v196, %v202
    %v268 = vld [vmem:[#allocation8] sm:$0x1]
    %v270 = vlaneseq
    %v271 = vshrl.u32 %v270, 7
    %v272 = vsub.s32 0, %v271
    %v273 = vrot.slane %v268, %v272
    %v275 = vadd.f32 %v204, %v273
    %v276 = vadd.f32 %v205, %v273
    %v277 = vadd.f32 %v206, %v273
    %v278 = vadd.f32 %v207, %v273
    %v279 = vadd.f32 %v208, %v273
    %v280 = vadd.f32 %v209, %v273
    %v281 = vadd.f32 %v210, %v273
    %v282 = vadd.f32 %v211, %v273
    %v283 = vadd.f32 %v212, %v273
    %v284 = vadd.f32 %v213, %v273
    %v285 = vadd.f32 %v214, %v273
    %v286 = vadd.f32 %v215, %v273
    %v287 = vadd.f32 %v216, %v273
    %v288 = vadd.f32 %v217, %v273
    %v289 = vadd.f32 %v218, %v273
    %v290 = vadd.f32 %v219, %v273
    %v291 = vadd.f32 %v220, %v273
    %v292 = vadd.f32 %v221, %v273
    %v293 = vadd.f32 %v222, %v273
    %v294 = vadd.f32 %v223, %v273
    %v295 = vadd.f32 %v224, %v273
    %v296 = vadd.f32 %v225, %v273
    %v297 = vadd.f32 %v226, %v273
    %v298 = vadd.f32 %v227, %v273
    %v299 = vadd.f32 %v228, %v273
    %v300 = vadd.f32 %v229, %v273
    %v301 = vadd.f32 %v230, %v273
    %v302 = vadd.f32 %v231, %v273
    %v303 = vadd.f32 %v232, %v273
    %v304 = vadd.f32 %v233, %v273
    %v305 = vadd.f32 %v234, %v273
    %v306 = vadd.f32 %v235, %v273
    %v307 = vadd.f32 %v236, %v273
    %v308 = vadd.f32 %v237, %v273
    %v309 = vadd.f32 %v238, %v273
    %v310 = vadd.f32 %v239, %v273
    %v311 = vadd.f32 %v240, %v273
    %v312 = vadd.f32 %v241, %v273
    %v313 = vadd.f32 %v242, %v273
    %v314 = vadd.f32 %v243, %v273
    %v315 = vadd.f32 %v244, %v273
    %v316 = vadd.f32 %v245, %v273
    %v317 = vadd.f32 %v246, %v273
    %v318 = vadd.f32 %v247, %v273
    %v319 = vadd.f32 %v248, %v273
    %v320 = vadd.f32 %v249, %v273
    %v321 = vadd.f32 %v250, %v273
    %v322 = vadd.f32 %v251, %v273
    %v323 = vadd.f32 %v252, %v273
    %v324 = vadd.f32 %v253, %v273
    %v325 = vadd.f32 %v254, %v273
    %v326 = vadd.f32 %v255, %v273
    %v327 = vadd.f32 %v256, %v273
    %v328 = vadd.f32 %v257, %v273
    %v329 = vadd.f32 %v258, %v273
    %v330 = vadd.f32 %v259, %v273
    %v331 = vadd.f32 %v260, %v273
    %v332 = vadd.f32 %v261, %v273
    %v333 = vadd.f32 %v262, %v273
    %v334 = vadd.f32 %v263, %v273
    %v335 = vadd.f32 %v264, %v273
    %v336 = vadd.f32 %v265, %v273
    %v337 = vadd.f32 %v266, %v273
    %v338 = vadd.f32 %v267, %v273
    %v339 = vld [vmem:[#allocation5] sm:$0xff]
    %v340 = vld [vmem:[#allocation5 + $0x8] sm:$0xff]
    %v341 = vld [vmem:[#allocation5 + $0x10] sm:$0xff]
    %v342 = vld [vmem:[#allocation5 + $0x18] sm:$0xff]
    %v343 = vld [vmem:[#allocation5 + $0x20] sm:$0xff]
    %v344 = vld [vmem:[#allocation5 + $0x28] sm:$0xff]
    %v345 = vld [vmem:[#allocation5 + $0x30] sm:$0xff]
    %v346 = vld [vmem:[#allocation5 + $0x38] sm:$0xff]
    %v347 = vld [vmem:[#allocation5 + $0x40] sm:$0xff]
    %v348 = vld [vmem:[#allocation5 + $0x48] sm:$0xff]
    %v349 = vld [vmem:[#allocation5 + $0x50] sm:$0xff]
    %v350 = vld [vmem:[#allocation5 + $0x58] sm:$0xff]
    %v351 = vld [vmem:[#allocation5 + $0x60] sm:$0xff]
    %v352 = vld [vmem:[#allocation5 + $0x68] sm:$0xff]
    %v353 = vld [vmem:[#allocation5 + $0x70] sm:$0xff]
    %v354 = vld [vmem:[#allocation5 + $0x78] sm:$0xff]
    %v355 = vld [vmem:[#allocation5 + $0x80] sm:$0xff]
    %v356 = vld [vmem:[#allocation5 + $0x88] sm:$0xff]
    %v357 = vld [vmem:[#allocation5 + $0x90] sm:$0xff]
    %v358 = vld [vmem:[#allocation5 + $0x98] sm:$0xff]
    %v359 = vld [vmem:[#allocation5 + $0xa0] sm:$0xff]
    %v360 = vld [vmem:[#allocation5 + $0xa8] sm:$0xff]
    %v361 = vld [vmem:[#allocation5 + $0xb0] sm:$0xff]
    %v362 = vld [vmem:[#allocation5 + $0xb8] sm:$0xff]
    %v363 = vld [vmem:[#allocation5 + $0xc0] sm:$0xff]
    %v364 = vld [vmem:[#allocation5 + $0xc8] sm:$0xff]
    %v365 = vld [vmem:[#allocation5 + $0xd0] sm:$0xff]
    %v366 = vld [vmem:[#allocation5 + $0xd8] sm:$0xff]
    %v367 = vld [vmem:[#allocation5 + $0xe0] sm:$0xff]
    %v368 = vld [vmem:[#allocation5 + $0xe8] sm:$0xff]
    %v369 = vld [vmem:[#allocation5 + $0xf0] sm:$0xff]
    %v370 = vld [vmem:[#allocation5 + $0xf8] sm:$0xff]
    %v371 = vld [vmem:[#allocation5 + $0x100] sm:$0xff]
    %v372 = vld [vmem:[#allocation5 + $0x108] sm:$0xff]
    %v373 = vld [vmem:[#allocation5 + $0x110] sm:$0xff]
    %v374 = vld [vmem:[#allocation5 + $0x118] sm:$0xff]
    %v375 = vld [vmem:[#allocation5 + $0x120] sm:$0xff]
    %v376 = vld [vmem:[#allocation5 + $0x128] sm:$0xff]
    %v377 = vld [vmem:[#allocation5 + $0x130] sm:$0xff]
    %v378 = vld [vmem:[#allocation5 + $0x138] sm:$0xff]
    %v379 = vld [vmem:[#allocation5 + $0x140] sm:$0xff]
    %v380 = vld [vmem:[#allocation5 + $0x148] sm:$0xff]
    %v381 = vld [vmem:[#allocation5 + $0x150] sm:$0xff]
    %v382 = vld [vmem:[#allocation5 + $0x158] sm:$0xff]
    %v383 = vld [vmem:[#allocation5 + $0x160] sm:$0xff]
    %v384 = vld [vmem:[#allocation5 + $0x168] sm:$0xff]
    %v385 = vld [vmem:[#allocation5 + $0x170] sm:$0xff]
    %v386 = vld [vmem:[#allocation5 + $0x178] sm:$0xff]
    %v387 = vld [vmem:[#allocation5 + $0x180] sm:$0xff]
    %v388 = vld [vmem:[#allocation5 + $0x188] sm:$0xff]
    %v389 = vld [vmem:[#allocation5 + $0x190] sm:$0xff]
    %v390 = vld [vmem:[#allocation5 + $0x198] sm:$0xff]
    %v391 = vld [vmem:[#allocation5 + $0x1a0] sm:$0xff]
    %v392 = vld [vmem:[#allocation5 + $0x1a8] sm:$0xff]
    %v393 = vld [vmem:[#allocation5 + $0x1b0] sm:$0xff]
    %v394 = vld [vmem:[#allocation5 + $0x1b8] sm:$0xff]
    %v395 = vld [vmem:[#allocation5 + $0x1c0] sm:$0xff]
    %v396 = vld [vmem:[#allocation5 + $0x1c8] sm:$0xff]
    %v397 = vld [vmem:[#allocation5 + $0x1d0] sm:$0xff]
    %v398 = vld [vmem:[#allocation5 + $0x1d8] sm:$0xff]
    %v399 = vld [vmem:[#allocation5 + $0x1e0] sm:$0xff]
    %v400 = vld [vmem:[#allocation5 + $0x1e8] sm:$0xff]
    %v401 = vld [vmem:[#allocation5 + $0x1f0] sm:$0xff]
    %v402 = vld [vmem:[#allocation5 + $0x1f8] sm:$0xff]
    %v403 = vadd.f32 %v275, %v339
    %v404 = vadd.f32 %v276, %v340
    %v405 = vadd.f32 %v277, %v341
    %v406 = vadd.f32 %v278, %v342
    %v407 = vadd.f32 %v279, %v343
    %v408 = vadd.f32 %v280, %v344
    %v409 = vadd.f32 %v281, %v345
    %v410 = vadd.f32 %v282, %v346
    %v411 = vadd.f32 %v283, %v347
    %v412 = vadd.f32 %v284, %v348
    %v413 = vadd.f32 %v285, %v349
    %v414 = vadd.f32 %v286, %v350
    %v415 = vadd.f32 %v287, %v351
    %v416 = vadd.f32 %v288, %v352
    %v417 = vadd.f32 %v289, %v353
    %v418 = vadd.f32 %v290, %v354
    %v419 = vadd.f32 %v291, %v355
    %v420 = vadd.f32 %v292, %v356
    %v421 = vadd.f32 %v293, %v357
    %v422 = vadd.f32 %v294, %v358
    %v423 = vadd.f32 %v295, %v359
    %v424 = vadd.f32 %v296, %v360
    %v425 = vadd.f32 %v297, %v361
    %v426 = vadd.f32 %v298, %v362
    %v427 = vadd.f32 %v299, %v363
    %v428 = vadd.f32 %v300, %v364
    %v429 = vadd.f32 %v301, %v365
    %v430 = vadd.f32 %v302, %v366
    %v431 = vadd.f32 %v303, %v367
    %v432 = vadd.f32 %v304, %v368
    %v433 = vadd.f32 %v305, %v369
    %v434 = vadd.f32 %v306, %v370
    %v435 = vadd.f32 %v307, %v371
    %v436 = vadd.f32 %v308, %v372
    %v437 = vadd.f32 %v309, %v373
    %v438 = vadd.f32 %v310, %v374
    %v439 = vadd.f32 %v311, %v375
    %v440 = vadd.f32 %v312, %v376
    %v441 = vadd.f32 %v313, %v377
    %v442 = vadd.f32 %v314, %v378
    %v443 = vadd.f32 %v315, %v379
    %v444 = vadd.f32 %v316, %v380
    %v445 = vadd.f32 %v317, %v381
    %v446 = vadd.f32 %v318, %v382
    %v447 = vadd.f32 %v319, %v383
    %v448 = vadd.f32 %v320, %v384
    %v449 = vadd.f32 %v321, %v385
    %v450 = vadd.f32 %v322, %v386
    %v451 = vadd.f32 %v323, %v387
    %v452 = vadd.f32 %v324, %v388
    %v453 = vadd.f32 %v325, %v389
    %v454 = vadd.f32 %v326, %v390
    %v455 = vadd.f32 %v327, %v391
    %v456 = vadd.f32 %v328, %v392
    %v457 = vadd.f32 %v329, %v393
    %v458 = vadd.f32 %v330, %v394
    %v459 = vadd.f32 %v331, %v395
    %v460 = vadd.f32 %v332, %v396
    %v461 = vadd.f32 %v333, %v397
    %v462 = vadd.f32 %v334, %v398
    %v463 = vadd.f32 %v335, %v399
    %v464 = vadd.f32 %v336, %v400
    %v465 = vadd.f32 %v337, %v401
    %v466 = vadd.f32 %v338, %v402
    %v467 = vmax.f32 %v403, 0.0
    %v468 = vmax.f32 %v404, 0.0
    %v469 = vmax.f32 %v405, 0.0
    %v470 = vmax.f32 %v406, 0.0
    %v471 = vmax.f32 %v407, 0.0
    %v472 = vmax.f32 %v408, 0.0
    %v473 = vmax.f32 %v409, 0.0
    %v474 = vmax.f32 %v410, 0.0
    %v475 = vmax.f32 %v411, 0.0
    %v476 = vmax.f32 %v412, 0.0
    %v477 = vmax.f32 %v413, 0.0
    %v478 = vmax.f32 %v414, 0.0
    %v479 = vmax.f32 %v415, 0.0
    %v480 = vmax.f32 %v416, 0.0
    %v481 = vmax.f32 %v417, 0.0
    %v482 = vmax.f32 %v418, 0.0
    %v483 = vmax.f32 %v419, 0.0
    %v484 = vmax.f32 %v420, 0.0
    %v485 = vmax.f32 %v421, 0.0
    %v486 = vmax.f32 %v422, 0.0
    %v487 = vmax.f32 %v423, 0.0
    %v488 = vmax.f32 %v424, 0.0
    %v489 = vmax.f32 %v425, 0.0
    %v490 = vmax.f32 %v426, 0.0
    %v491 = vmax.f32 %v427, 0.0
    %v492 = vmax.f32 %v428, 0.0
    %v493 = vmax.f32 %v429, 0.0
    %v494 = vmax.f32 %v430, 0.0
    %v495 = vmax.f32 %v431, 0.0
    %v496 = vmax.f32 %v432, 0.0
    %v497 = vmax.f32 %v433, 0.0
    %v498 = vmax.f32 %v434, 0.0
    %v499 = vmax.f32 %v435, 0.0
    %v500 = vmax.f32 %v436, 0.0
    %v501 = vmax.f32 %v437, 0.0
    %v502 = vmax.f32 %v438, 0.0
    %v503 = vmax.f32 %v439, 0.0
    %v504 = vmax.f32 %v440, 0.0
    %v505 = vmax.f32 %v441, 0.0
    %v506 = vmax.f32 %v442, 0.0
    %v507 = vmax.f32 %v443, 0.0
    %v508 = vmax.f32 %v444, 0.0
    %v509 = vmax.f32 %v445, 0.0
    %v510 = vmax.f32 %v446, 0.0
    %v511 = vmax.f32 %v447, 0.0
    %v512 = vmax.f32 %v448, 0.0
    %v513 = vmax.f32 %v449, 0.0
    %v514 = vmax.f32 %v450, 0.0
    %v515 = vmax.f32 %v451, 0.0
    %v516 = vmax.f32 %v452, 0.0
    %v517 = vmax.f32 %v453, 0.0
    %v518 = vmax.f32 %v454, 0.0
    %v519 = vmax.f32 %v455, 0.0
    %v520 = vmax.f32 %v456, 0.0
    %v521 = vmax.f32 %v457, 0.0
    %v522 = vmax.f32 %v458, 0.0
    %v523 = vmax.f32 %v459, 0.0
    %v524 = vmax.f32 %v460, 0.0
    %v525 = vmax.f32 %v461, 0.0
    %v526 = vmax.f32 %v462, 0.0
    %v527 = vmax.f32 %v463, 0.0
    %v528 = vmax.f32 %v464, 0.0
    %v529 = vmax.f32 %v465, 0.0
    %v530 = vmax.f32 %v466, 0.0
    %531 = vst [vmem:[#allocation10] sm:$0xff] %v467
    %532 = vst [vmem:[#allocation10 + $0x8] sm:$0xff] %v468
    %533 = vst [vmem:[#allocation10 + $0x10] sm:$0xff] %v469
    %534 = vst [vmem:[#allocation10 + $0x18] sm:$0xff] %v470
    %535 = vst [vmem:[#allocation10 + $0x20] sm:$0xff] %v471
    %536 = vst [vmem:[#allocation10 + $0x28] sm:$0xff] %v472
    %537 = vst [vmem:[#allocation10 + $0x30] sm:$0xff] %v473
    %538 = vst [vmem:[#allocation10 + $0x38] sm:$0xff] %v474
    %539 = vst [vmem:[#allocation10 + $0x40] sm:$0xff] %v475
    %540 = vst [vmem:[#allocation10 + $0x48] sm:$0xff] %v476
    %541 = vst [vmem:[#allocation10 + $0x50] sm:$0xff] %v477
    %542 = vst [vmem:[#allocation10 + $0x58] sm:$0xff] %v478
    %543 = vst [vmem:[#allocation10 + $0x60] sm:$0xff] %v479
    %544 = vst [vmem:[#allocation10 + $0x68] sm:$0xff] %v480
    %545 = vst [vmem:[#allocation10 + $0x70] sm:$0xff] %v481
    %546 = vst [vmem:[#allocation10 + $0x78] sm:$0xff] %v482
    %547 = vst [vmem:[#allocation10 + $0x80] sm:$0xff] %v483
    %548 = vst [vmem:[#allocation10 + $0x88] sm:$0xff] %v484
    %549 = vst [vmem:[#allocation10 + $0x90] sm:$0xff] %v485
    %550 = vst [vmem:[#allocation10 + $0x98] sm:$0xff] %v486
    %551 = vst [vmem:[#allocation10 + $0xa0] sm:$0xff] %v487
    %552 = vst [vmem:[#allocation10 + $0xa8] sm:$0xff] %v488
    %553 = vst [vmem:[#allocation10 + $0xb0] sm:$0xff] %v489
    %554 = vst [vmem:[#allocation10 + $0xb8] sm:$0xff] %v490
    %555 = vst [vmem:[#allocation10 + $0xc0] sm:$0xff] %v491
    %556 = vst [vmem:[#allocation10 + $0xc8] sm:$0xff] %v492
    %557 = vst [vmem:[#allocation10 + $0xd0] sm:$0xff] %v493
    %558 = vst [vmem:[#allocation10 + $0xd8] sm:$0xff] %v494
    %559 = vst [vmem:[#allocation10 + $0xe0] sm:$0xff] %v495
    %560 = vst [vmem:[#allocation10 + $0xe8] sm:$0xff] %v496
    %561 = vst [vmem:[#allocation10 + $0xf0] sm:$0xff] %v497
    %562 = vst [vmem:[#allocation10 + $0xf8] sm:$0xff] %v498
    %563 = vst [vmem:[#allocation10 + $0x100] sm:$0xff] %v499
    %564 = vst [vmem:[#allocation10 + $0x108] sm:$0xff] %v500
    %565 = vst [vmem:[#allocation10 + $0x110] sm:$0xff] %v501
    %566 = vst [vmem:[#allocation10 + $0x118] sm:$0xff] %v502
    %567 = vst [vmem:[#allocation10 + $0x120] sm:$0xff] %v503
    %568 = vst [vmem:[#allocation10 + $0x128] sm:$0xff] %v504
    %569 = vst [vmem:[#allocation10 + $0x130] sm:$0xff] %v505
    %570 = vst [vmem:[#allocation10 + $0x138] sm:$0xff] %v506
    %571 = vst [vmem:[#allocation10 + $0x140] sm:$0xff] %v507
    %572 = vst [vmem:[#allocation10 + $0x148] sm:$0xff] %v508
    %573 = vst [vmem:[#allocation10 + $0x150] sm:$0xff] %v509
    %574 = vst [vmem:[#allocation10 + $0x158] sm:$0xff] %v510
    %575 = vst [vmem:[#allocation10 + $0x160] sm:$0xff] %v511
    %576 = vst [vmem:[#allocation10 + $0x168] sm:$0xff] %v512
    %577 = vst [vmem:[#allocation10 + $0x170] sm:$0xff] %v513
    %578 = vst [vmem:[#allocation10 + $0x178] sm:$0xff] %v514
    %579 = vst [vmem:[#allocation10 + $0x180] sm:$0xff] %v515
    %580 = vst [vmem:[#allocation10 + $0x188] sm:$0xff] %v516
    %581 = vst [vmem:[#allocation10 + $0x190] sm:$0xff] %v517
    %582 = vst [vmem:[#allocation10 + $0x198] sm:$0xff] %v518
    %583 = vst [vmem:[#allocation10 + $0x1a0] sm:$0xff] %v519
    %584 = vst [vmem:[#allocation10 + $0x1a8] sm:$0xff] %v520
    %585 = vst [vmem:[#allocation10 + $0x1b0] sm:$0xff] %v521
    %586 = vst [vmem:[#allocation10 + $0x1b8] sm:$0xff] %v522
    %587 = vst [vmem:[#allocation10 + $0x1c0] sm:$0xff] %v523
    %588 = vst [vmem:[#allocation10 + $0x1c8] sm:$0xff] %v524
    %589 = vst [vmem:[#allocation10 + $0x1d0] sm:$0xff] %v525
    %590 = vst [vmem:[#allocation10 + $0x1d8] sm:$0xff] %v526
    %591 = vst [vmem:[#allocation10 + $0x1e0] sm:$0xff] %v527
    %592 = vst [vmem:[#allocation10 + $0x1e8] sm:$0xff] %v528
    %593 = vst [vmem:[#allocation10 + $0x1f0] sm:$0xff] %v529
    %594 = vst [vmem:[#allocation10 + $0x1f8] sm:$0xff] %v530
    // Predicated region
    $region34: #{bottleneck_forward.7} parent=1 // pred_check
      _
    $region35: #{bottleneck_forward.7} parent=1 // pred_check_branch
      %596 = sbr.rel (0) target = $region37
    $region36: #{bottleneck_forward.7} parent=1 // pred_region
      %s598 = ssub.s32 8192, 8192
      %599 = vsyncadd [#allocation4], %s598
      %s600 = sshll.u32 [#allocation10], 4
      %s601 = int_to_ptr.vmem [resolvable:$true] %s600
      %606 = dma.vmem_to_hbm [thread:$0]  %s601, 8192, %s4, [#allocation4], 128, 128, 8
    $region37: #{bottleneck_forward.7} parent=1 // pred_fallthru
      _
    // Predicated region
    $region38: #{bottleneck_forward.7} parent=1 // pred_check
      _
    $region39: #{bottleneck_forward.7} parent=1 // pred_check_branch
      %608 = sbr.rel (0) target = $region41
    $region40: #{bottleneck_forward.7} parent=1 // pred_region
      %609 = dma.done [#allocation4], 8192
    $region41: #{bottleneck_forward.7} parent=1 // pred_fallthru
      _
    %610 = vsyncpa [#allocation3], 1
    %611 = vsyncpa [#allocation6], 1
    %612 = vsyncpa [#allocation9], 1
    %613 = vsyncpa [#allocation4], 1

// kernel: bottleneck_forward.6
$region0: #{bottleneck_forward.6}
  #allocation0 [shape = 'u32[]', space=smem, size = 0x4, offset = 0x4, fixed_abs, tag = 'smem constant byte address 0x4 - core index']
  #allocation1 [shape = 'u32[144,128]{1,0:T(1,128)}', space=vmem, size = 0x12000, scoped, tag = 'internal scratch']
  %s0 = inlined_call_operand.hbm [shape: bf16[512,128], index: 0, kind: input, shape index: {}]
  %s1 = inlined_call_operand.hbm [shape: f32[1,128], index: 1, kind: input, shape index: {}]
  %s2 = inlined_call_operand.hbm [shape: f32[1,128], index: 2, kind: input, shape index: {}]
  %s3 = inlined_call_operand.hbm [shape: bf16[128,128], index: 3, kind: input, shape index: {}]
  %s4 = inlined_call_operand.hbm [shape: bf16[512,128], index: 4, kind: output, shape index: {0}]
  %s5 = inlined_call_operand.hbm [shape: f32[1,2,128], index: 5, kind: output, shape index: {1}]
  %6 = xla_tuple %s4, %s5
  %s7 = sld [smem:[#allocation0]]
  $region50: #{bottleneck_forward.6} parent=0
    _
  %s9 = ssub.s32 1, %s7
  %s10 = scalar_select 0, %s9, %s7
  $region1: #{bottleneck_forward.6} parent=0
    #allocation2 [shape = 'u8[131072]{0}', space=vmem, size = 0x20000, scoped, tag = 'input window, operand 0, single buffered']
    #allocation3 [shape = 's32[1]{0}', space=sflag, size = 0x4, scoped, tag = 'scoped memory for bottleneck_forward.6']
    #allocation4 [shape = 's32[1]{0}', space=sflag, size = 0x4, scoped, tag = 'scoped memory for bottleneck_forward.6']
    #allocation5 [shape = 'u8[512]{0}', space=vmem, size = 0x400, scoped, tag = 'input window, operand 1, single buffered']
    #allocation6 [shape = 's32[1]{0}', space=sflag, size = 0x4, scoped, tag = 'scoped memory for bottleneck_forward.6']
    #allocation7 [shape = 'u8[512]{0}', space=vmem, size = 0x400, scoped, tag = 'input window, operand 2, single buffered']
    #allocation8 [shape = 'u8[32768]{0}', space=vmem, size = 0x8000, scoped, tag = 'input window, operand 3, single buffered']
    #allocation9 [shape = 's32[1]{0}', space=sflag, size = 0x4, scoped, tag = 'scoped memory for bottleneck_forward.6']
    #allocation10 [shape = 'u8[131072]{0}', space=vmem, size = 0x20000, scoped, tag = 'output window, operand 0, single buffered']
    #allocation11 [shape = 'u8[1024]{0}', space=vmem, size = 0x400, scoped, tag = 'output window, operand 1, single buffered']
    #allocation12 [shape = 's32[1]{0}', space=sflag, size = 0x4, scoped, tag = 'scoped memory for bottleneck_forward.6']
    %11 = vsyncpa [#allocation3], 0
    %12 = vsyncpa [#allocation6], 0
    %13 = vsyncpa [#allocation9], 0
    %14 = vsyncpa [#allocation4], 0
    %15 = vsyncpa [#allocation12], 0
    // Predicated region
    $region2: #{bottleneck_forward.6} parent=1 // pred_check
      _
    $region3: #{bottleneck_forward.6} parent=1 // pred_check_branch
      %17 = sbr.rel (0) target = $region5
    $region4: #{bottleneck_forward.6} parent=1 // pred_region
      %s19 = ssub.s32 4096, 4096
      %20 = vsyncadd [#allocation3], %s19
      %s21 = sshll.u32 [#allocation2], 4
      %s22 = int_to_ptr.vmem [resolvable:$true] %s21
      %27 = dma.hbm_to_vmem [thread:$0]  %s0, 4096, %s22, [#allocation3], 64, 64, 4
    $region5: #{bottleneck_forward.6} parent=1 // pred_fallthru
      _
    // Predicated region
    $region6: #{bottleneck_forward.6} parent=1 // pred_check
      _
    $region7: #{bottleneck_forward.6} parent=1 // pred_check_branch
      %29 = sbr.rel (0) target = $region9
    $region8: #{bottleneck_forward.6} parent=1 // pred_region
      %s31 = ssub.s32 16, 16
      %32 = vsyncadd [#allocation6], %s31
      %s34 = sshll.u32 [#allocation5], 4
      %s35 = int_to_ptr.vmem [resolvable:$true] %s34
      %37 = dma.hbm_to_vmem [thread:$0]  %s1, 16, %s35, [#allocation6]
    $region9: #{bottleneck_forward.6} parent=1 // pred_fallthru
      _
    // Predicated region
    $region10: #{bottleneck_forward.6} parent=1 // pred_check
      _
    $region11: #{bottleneck_forward.6} parent=1 // pred_check_branch
      %39 = sbr.rel (0) target = $region13
    $region12: #{bottleneck_forward.6} parent=1 // pred_region
      %s41 = ssub.s32 16, 16
      %42 = vsyncadd [#allocation6], %s41
      %s44 = sshll.u32 [#allocation7], 4
      %s45 = int_to_ptr.vmem [resolvable:$true] %s44
      %47 = dma.hbm_to_vmem [thread:$0]  %s2, 16, %s45, [#allocation6]
    $region13: #{bottleneck_forward.6} parent=1 // pred_fallthru
      _
    // Predicated region
    $region14: #{bottleneck_forward.6} parent=1 // pred_check
      _
    $region15: #{bottleneck_forward.6} parent=1 // pred_check_branch
      %49 = sbr.rel (0) target = $region17
    $region16: #{bottleneck_forward.6} parent=1 // pred_region
      %s51 = ssub.s32 1024, 1024
      %52 = vsyncadd [#allocation9], %s51
      %s53 = sshll.u32 [#allocation8], 4
      %s54 = int_to_ptr.vmem [resolvable:$true] %s53
      %59 = dma.hbm_to_vmem [thread:$0]  %s3, 1024, %s54, [#allocation9], 64, 64, 4
    $region17: #{bottleneck_forward.6} parent=1 // pred_fallthru
      _
    // Predicated region
    $region18: #{bottleneck_forward.6} parent=1 // pred_check
      _
    $region19: #{bottleneck_forward.6} parent=1 // pred_check_branch
      %61 = sbr.rel (0) target = $region21
    $region20: #{bottleneck_forward.6} parent=1 // pred_region
      %62 = dma.done [#allocation3], 4096
    $region21: #{bottleneck_forward.6} parent=1 // pred_fallthru
      _
    // Predicated region
    $region22: #{bottleneck_forward.6} parent=1 // pred_check
      _
    $region23: #{bottleneck_forward.6} parent=1 // pred_check_branch
      %64 = sbr.rel (0) target = $region25
    $region24: #{bottleneck_forward.6} parent=1 // pred_region
      %65 = dma.done [#allocation6], 16
    $region25: #{bottleneck_forward.6} parent=1 // pred_fallthru
      _
    // Predicated region
    $region26: #{bottleneck_forward.6} parent=1 // pred_check
      _
    $region27: #{bottleneck_forward.6} parent=1 // pred_check_branch
      %67 = sbr.rel (0) target = $region29
    $region28: #{bottleneck_forward.6} parent=1 // pred_region
      %68 = dma.done [#allocation6], 16
    $region29: #{bottleneck_forward.6} parent=1 // pred_fallthru
      _
    // Predicated region
    $region30: #{bottleneck_forward.6} parent=1 // pred_check
      _
    $region31: #{bottleneck_forward.6} parent=1 // pred_check_branch
      %70 = sbr.rel (0) target = $region33
    $region32: #{bottleneck_forward.6} parent=1 // pred_region
      %71 = dma.done [#allocation9], 1024
    $region33: #{bottleneck_forward.6} parent=1 // pred_fallthru
      _
    %v73 = vld [vmem:[#allocation2] sm:$0xf]
    %v74 = vld [vmem:[#allocation2 + $0x4] sm:$0xf]
    %v75 = vld [vmem:[#allocation2 + $0x8] sm:$0xf]
    %v76 = vld [vmem:[#allocation2 + $0xc] sm:$0xf]
    %v77 = vld [vmem:[#allocation2 + $0x10] sm:$0xf]
    %v78 = vld [vmem:[#allocation2 + $0x14] sm:$0xf]
    %v79 = vld [vmem:[#allocation2 + $0x18] sm:$0xf]
    %v80 = vld [vmem:[#allocation2 + $0x1c] sm:$0xf]
    %v81 = vld [vmem:[#allocation2 + $0x20] sm:$0xf]
    %v82 = vld [vmem:[#allocation2 + $0x24] sm:$0xf]
    %v83 = vld [vmem:[#allocation2 + $0x28] sm:$0xf]
    %v84 = vld [vmem:[#allocation2 + $0x2c] sm:$0xf]
    %v85 = vld [vmem:[#allocation2 + $0x30] sm:$0xf]
    %v86 = vld [vmem:[#allocation2 + $0x34] sm:$0xf]
    %v87 = vld [vmem:[#allocation2 + $0x38] sm:$0xf]
    %v88 = vld [vmem:[#allocation2 + $0x3c] sm:$0xf]
    %v89 = vld [vmem:[#allocation2 + $0x40] sm:$0xf]
    %v90 = vld [vmem:[#allocation2 + $0x44] sm:$0xf]
    %v91 = vld [vmem:[#allocation2 + $0x48] sm:$0xf]
    %v92 = vld [vmem:[#allocation2 + $0x4c] sm:$0xf]
    %v93 = vld [vmem:[#allocation2 + $0x50] sm:$0xf]
    %v94 = vld [vmem:[#allocation2 + $0x54] sm:$0xf]
    %v95 = vld [vmem:[#allocation2 + $0x58] sm:$0xf]
    %v96 = vld [vmem:[#allocation2 + $0x5c] sm:$0xf]
    %v97 = vld [vmem:[#allocation2 + $0x60] sm:$0xf]
    %v98 = vld [vmem:[#allocation2 + $0x64] sm:$0xf]
    %v99 = vld [vmem:[#allocation2 + $0x68] sm:$0xf]
    %v100 = vld [vmem:[#allocation2 + $0x6c] sm:$0xf]
    %v101 = vld [vmem:[#allocation2 + $0x70] sm:$0xf]
    %v102 = vld [vmem:[#allocation2 + $0x74] sm:$0xf]
    %v103 = vld [vmem:[#allocation2 + $0x78] sm:$0xf]
    %v104 = vld [vmem:[#allocation2 + $0x7c] sm:$0xf]
    %v105 = vld [vmem:[#allocation2 + $0x80] sm:$0xf]
    %v106 = vld [vmem:[#allocation2 + $0x84] sm:$0xf]
    %v107 = vld [vmem:[#allocation2 + $0x88] sm:$0xf]
    %v108 = vld [vmem:[#allocation2 + $0x8c] sm:$0xf]
    %v109 = vld [vmem:[#allocation2 + $0x90] sm:$0xf]
    %v110 = vld [vmem:[#allocation2 + $0x94] sm:$0xf]
    %v111 = vld [vmem:[#allocation2 + $0x98] sm:$0xf]
    %v112 = vld [vmem:[#allocation2 + $0x9c] sm:$0xf]
    %v113 = vld [vmem:[#allocation2 + $0xa0] sm:$0xf]
    %v114 = vld [vmem:[#allocation2 + $0xa4] sm:$0xf]
    %v115 = vld [vmem:[#allocation2 + $0xa8] sm:$0xf]
    %v116 = vld [vmem:[#allocation2 + $0xac] sm:$0xf]
    %v117 = vld [vmem:[#allocation2 + $0xb0] sm:$0xf]
    %v118 = vld [vmem:[#allocation2 + $0xb4] sm:$0xf]
    %v119 = vld [vmem:[#allocation2 + $0xb8] sm:$0xf]
    %v120 = vld [vmem:[#allocation2 + $0xbc] sm:$0xf]
    %v121 = vld [vmem:[#allocation2 + $0xc0] sm:$0xf]
    %v122 = vld [vmem:[#allocation2 + $0xc4] sm:$0xf]
    %v123 = vld [vmem:[#allocation2 + $0xc8] sm:$0xf]
    %v124 = vld [vmem:[#allocation2 + $0xcc] sm:$0xf]
    %v125 = vld [vmem:[#allocation2 + $0xd0] sm:$0xf]
    %v126 = vld [vmem:[#allocation2 + $0xd4] sm:$0xf]
    %v127 = vld [vmem:[#allocation2 + $0xd8] sm:$0xf]
    %v128 = vld [vmem:[#allocation2 + $0xdc] sm:$0xf]
    %v129 = vld [vmem:[#allocation2 + $0xe0] sm:$0xf]
    %v130 = vld [vmem:[#allocation2 + $0xe4] sm:$0xf]
    %v131 = vld [vmem:[#allocation2 + $0xe8] sm:$0xf]
    %v132 = vld [vmem:[#allocation2 + $0xec] sm:$0xf]
    %v133 = vld [vmem:[#allocation2 + $0xf0] sm:$0xf]
    %v134 = vld [vmem:[#allocation2 + $0xf4] sm:$0xf]
    %v135 = vld [vmem:[#allocation2 + $0xf8] sm:$0xf]
    %v136 = vld [vmem:[#allocation2 + $0xfc] sm:$0xf]
    %v137 = vunpack.c.l.bf16 %v73
    %v138 = vunpack.c.l.bf16 %v74
    %v139 = vunpack.c.l.bf16 %v75
    %v140 = vunpack.c.l.bf16 %v76
    %v141 = vunpack.c.l.bf16 %v77
    %v142 = vunpack.c.l.bf16 %v78
    %v143 = vunpack.c.l.bf16 %v79
    %v144 = vunpack.c.l.bf16 %v80
    %v145 = vunpack.c.l.bf16 %v81
    %v146 = vunpack.c.l.bf16 %v82
    %v147 = vunpack.c.l.bf16 %v83
    %v148 = vunpack.c.l.bf16 %v84
    %v149 = vunpack.c.l.bf16 %v85
    %v150 = vunpack.c.l.bf16 %v86
    %v151 = vunpack.c.l.bf16 %v87
    %v152 = vunpack.c.l.bf16 %v88
    %v153 = vunpack.c.l.bf16 %v89
    %v154 = vunpack.c.l.bf16 %v90
    %v155 = vunpack.c.l.bf16 %v91
    %v156 = vunpack.c.l.bf16 %v92
    %v157 = vunpack.c.l.bf16 %v93
    %v158 = vunpack.c.l.bf16 %v94
    %v159 = vunpack.c.l.bf16 %v95
    %v160 = vunpack.c.l.bf16 %v96
    %v161 = vunpack.c.l.bf16 %v97
    %v162 = vunpack.c.l.bf16 %v98
    %v163 = vunpack.c.l.bf16 %v99
    %v164 = vunpack.c.l.bf16 %v100
    %v165 = vunpack.c.l.bf16 %v101
    %v166 = vunpack.c.l.bf16 %v102
    %v167 = vunpack.c.l.bf16 %v103
    %v168 = vunpack.c.l.bf16 %v104
    %v169 = vunpack.c.l.bf16 %v105
    %v170 = vunpack.c.l.bf16 %v106
    %v171 = vunpack.c.l.bf16 %v107
    %v172 = vunpack.c.l.bf16 %v108
    %v173 = vunpack.c.l.bf16 %v109
    %v174 = vunpack.c.l.bf16 %v110
    %v175 = vunpack.c.l.bf16 %v111
    %v176 = vunpack.c.l.bf16 %v112
    %v177 = vunpack.c.l.bf16 %v113
    %v178 = vunpack.c.l.bf16 %v114
    %v179 = vunpack.c.l.bf16 %v115
    %v180 = vunpack.c.l.bf16 %v116
    %v181 = vunpack.c.l.bf16 %v117
    %v182 = vunpack.c.l.bf16 %v118
    %v183 = vunpack.c.l.bf16 %v119
    %v184 = vunpack.c.l.bf16 %v120
    %v185 = vunpack.c.l.bf16 %v121
    %v186 = vunpack.c.l.bf16 %v122
    %v187 = vunpack.c.l.bf16 %v123
    %v188 = vunpack.c.l.bf16 %v124
    %v189 = vunpack.c.l.bf16 %v125
    %v190 = vunpack.c.l.bf16 %v126
    %v191 = vunpack.c.l.bf16 %v127
    %v192 = vunpack.c.l.bf16 %v128
    %v193 = vunpack.c.l.bf16 %v129
    %v194 = vunpack.c.l.bf16 %v130
    %v195 = vunpack.c.l.bf16 %v131
    %v196 = vunpack.c.l.bf16 %v132
    %v197 = vunpack.c.l.bf16 %v133
    %v198 = vunpack.c.l.bf16 %v134
    %v199 = vunpack.c.l.bf16 %v135
    %v200 = vunpack.c.l.bf16 %v136
    %v201 = vld [vmem:[#allocation5] sm:$0x1]
    %v203 = vlaneseq
    %v204 = vshrl.u32 %v203, 7
    %v205 = vsub.s32 0, %v204
    %v206 = vrot.slane %v201, %v205
    %v208 = vmul.f32 %v137, %v206
    %v209 = vmul.f32 %v138, %v206
    %v210 = vmul.f32 %v139, %v206
    %v211 = vmul.f32 %v140, %v206
    %v212 = vmul.f32 %v141, %v206
    %v213 = vmul.f32 %v142, %v206
    %v214 = vmul.f32 %v143, %v206
    %v215 = vmul.f32 %v144, %v206
    %v216 = vmul.f32 %v145, %v206
    %v217 = vmul.f32 %v146, %v206
    %v218 = vmul.f32 %v147, %v206
    %v219 = vmul.f32 %v148, %v206
    %v220 = vmul.f32 %v149, %v206
    %v221 = vmul.f32 %v150, %v206
    %v222 = vmul.f32 %v151, %v206
    %v223 = vmul.f32 %v152, %v206
    %v224 = vmul.f32 %v153, %v206
    %v225 = vmul.f32 %v154, %v206
    %v226 = vmul.f32 %v155, %v206
    %v227 = vmul.f32 %v156, %v206
    %v228 = vmul.f32 %v157, %v206
    %v229 = vmul.f32 %v158, %v206
    %v230 = vmul.f32 %v159, %v206
    %v231 = vmul.f32 %v160, %v206
    %v232 = vmul.f32 %v161, %v206
    %v233 = vmul.f32 %v162, %v206
    %v234 = vmul.f32 %v163, %v206
    %v235 = vmul.f32 %v164, %v206
    %v236 = vmul.f32 %v165, %v206
    %v237 = vmul.f32 %v166, %v206
    %v238 = vmul.f32 %v167, %v206
    %v239 = vmul.f32 %v168, %v206
    %v240 = vmul.f32 %v169, %v206
    %v241 = vmul.f32 %v170, %v206
    %v242 = vmul.f32 %v171, %v206
    %v243 = vmul.f32 %v172, %v206
    %v244 = vmul.f32 %v173, %v206
    %v245 = vmul.f32 %v174, %v206
    %v246 = vmul.f32 %v175, %v206
    %v247 = vmul.f32 %v176, %v206
    %v248 = vmul.f32 %v177, %v206
    %v249 = vmul.f32 %v178, %v206
    %v250 = vmul.f32 %v179, %v206
    %v251 = vmul.f32 %v180, %v206
    %v252 = vmul.f32 %v181, %v206
    %v253 = vmul.f32 %v182, %v206
    %v254 = vmul.f32 %v183, %v206
    %v255 = vmul.f32 %v184, %v206
    %v256 = vmul.f32 %v185, %v206
    %v257 = vmul.f32 %v186, %v206
    %v258 = vmul.f32 %v187, %v206
    %v259 = vmul.f32 %v188, %v206
    %v260 = vmul.f32 %v189, %v206
    %v261 = vmul.f32 %v190, %v206
    %v262 = vmul.f32 %v191, %v206
    %v263 = vmul.f32 %v192, %v206
    %v264 = vmul.f32 %v193, %v206
    %v265 = vmul.f32 %v194, %v206
    %v266 = vmul.f32 %v195, %v206
    %v267 = vmul.f32 %v196, %v206
    %v268 = vmul.f32 %v197, %v206
    %v269 = vmul.f32 %v198, %v206
    %v270 = vmul.f32 %v199, %v206
    %v271 = vmul.f32 %v200, %v206
    %v272 = vld [vmem:[#allocation7] sm:$0x1]
    %v274 = vlaneseq
    %v275 = vshrl.u32 %v274, 7
    %v276 = vsub.s32 0, %v275
    %v277 = vrot.slane %v272, %v276
    %v279 = vadd.f32 %v208, %v277
    %v280 = vadd.f32 %v209, %v277
    %v281 = vadd.f32 %v210, %v277
    %v282 = vadd.f32 %v211, %v277
    %v283 = vadd.f32 %v212, %v277
    %v284 = vadd.f32 %v213, %v277
    %v285 = vadd.f32 %v214, %v277
    %v286 = vadd.f32 %v215, %v277
    %v287 = vadd.f32 %v216, %v277
    %v288 = vadd.f32 %v217, %v277
    %v289 = vadd.f32 %v218, %v277
    %v290 = vadd.f32 %v219, %v277
    %v291 = vadd.f32 %v220, %v277
    %v292 = vadd.f32 %v221, %v277
    %v293 = vadd.f32 %v222, %v277
    %v294 = vadd.f32 %v223, %v277
    %v295 = vadd.f32 %v224, %v277
    %v296 = vadd.f32 %v225, %v277
    %v297 = vadd.f32 %v226, %v277
    %v298 = vadd.f32 %v227, %v277
    %v299 = vadd.f32 %v228, %v277
    %v300 = vadd.f32 %v229, %v277
    %v301 = vadd.f32 %v230, %v277
    %v302 = vadd.f32 %v231, %v277
    %v303 = vadd.f32 %v232, %v277
    %v304 = vadd.f32 %v233, %v277
    %v305 = vadd.f32 %v234, %v277
    %v306 = vadd.f32 %v235, %v277
    %v307 = vadd.f32 %v236, %v277
    %v308 = vadd.f32 %v237, %v277
    %v309 = vadd.f32 %v238, %v277
    %v310 = vadd.f32 %v239, %v277
    %v311 = vadd.f32 %v240, %v277
    %v312 = vadd.f32 %v241, %v277
    %v313 = vadd.f32 %v242, %v277
    %v314 = vadd.f32 %v243, %v277
    %v315 = vadd.f32 %v244, %v277
    %v316 = vadd.f32 %v245, %v277
    %v317 = vadd.f32 %v246, %v277
    %v318 = vadd.f32 %v247, %v277
    %v319 = vadd.f32 %v248, %v277
    %v320 = vadd.f32 %v249, %v277
    %v321 = vadd.f32 %v250, %v277
    %v322 = vadd.f32 %v251, %v277
    %v323 = vadd.f32 %v252, %v277
    %v324 = vadd.f32 %v253, %v277
    %v325 = vadd.f32 %v254, %v277
    %v326 = vadd.f32 %v255, %v277
    %v327 = vadd.f32 %v256, %v277
    %v328 = vadd.f32 %v257, %v277
    %v329 = vadd.f32 %v258, %v277
    %v330 = vadd.f32 %v259, %v277
    %v331 = vadd.f32 %v260, %v277
    %v332 = vadd.f32 %v261, %v277
    %v333 = vadd.f32 %v262, %v277
    %v334 = vadd.f32 %v263, %v277
    %v335 = vadd.f32 %v264, %v277
    %v336 = vadd.f32 %v265, %v277
    %v337 = vadd.f32 %v266, %v277
    %v338 = vadd.f32 %v267, %v277
    %v339 = vadd.f32 %v268, %v277
    %v340 = vadd.f32 %v269, %v277
    %v341 = vadd.f32 %v270, %v277
    %v342 = vadd.f32 %v271, %v277
    %v343 = vmax.f32 %v279, 0.0
    %v344 = vmax.f32 %v280, 0.0
    %v345 = vmax.f32 %v281, 0.0
    %v346 = vmax.f32 %v282, 0.0
    %v347 = vmax.f32 %v283, 0.0
    %v348 = vmax.f32 %v284, 0.0
    %v349 = vmax.f32 %v285, 0.0
    %v350 = vmax.f32 %v286, 0.0
    %v351 = vmax.f32 %v287, 0.0
    %v352 = vmax.f32 %v288, 0.0
    %v353 = vmax.f32 %v289, 0.0
    %v354 = vmax.f32 %v290, 0.0
    %v355 = vmax.f32 %v291, 0.0
    %v356 = vmax.f32 %v292, 0.0
    %v357 = vmax.f32 %v293, 0.0
    %v358 = vmax.f32 %v294, 0.0
    %v359 = vmax.f32 %v295, 0.0
    %v360 = vmax.f32 %v296, 0.0
    %v361 = vmax.f32 %v297, 0.0
    %v362 = vmax.f32 %v298, 0.0
    %v363 = vmax.f32 %v299, 0.0
    %v364 = vmax.f32 %v300, 0.0
    %v365 = vmax.f32 %v301, 0.0
    %v366 = vmax.f32 %v302, 0.0
    %v367 = vmax.f32 %v303, 0.0
    %v368 = vmax.f32 %v304, 0.0
    %v369 = vmax.f32 %v305, 0.0
    %v370 = vmax.f32 %v306, 0.0
    %v371 = vmax.f32 %v307, 0.0
    %v372 = vmax.f32 %v308, 0.0
    %v373 = vmax.f32 %v309, 0.0
    %v374 = vmax.f32 %v310, 0.0
    %v375 = vmax.f32 %v311, 0.0
    %v376 = vmax.f32 %v312, 0.0
    %v377 = vmax.f32 %v313, 0.0
    %v378 = vmax.f32 %v314, 0.0
    %v379 = vmax.f32 %v315, 0.0
    %v380 = vmax.f32 %v316, 0.0
    %v381 = vmax.f32 %v317, 0.0
    %v382 = vmax.f32 %v318, 0.0
    %v383 = vmax.f32 %v319, 0.0
    %v384 = vmax.f32 %v320, 0.0
    %v385 = vmax.f32 %v321, 0.0
    %v386 = vmax.f32 %v322, 0.0
    %v387 = vmax.f32 %v323, 0.0
    %v388 = vmax.f32 %v324, 0.0
    %v389 = vmax.f32 %v325, 0.0
    %v390 = vmax.f32 %v326, 0.0
    %v391 = vmax.f32 %v327, 0.0
    %v392 = vmax.f32 %v328, 0.0
    %v393 = vmax.f32 %v329, 0.0
    %v394 = vmax.f32 %v330, 0.0
    %v395 = vmax.f32 %v331, 0.0
    %v396 = vmax.f32 %v332, 0.0
    %v397 = vmax.f32 %v333, 0.0
    %v398 = vmax.f32 %v334, 0.0
    %v399 = vmax.f32 %v335, 0.0
    %v400 = vmax.f32 %v336, 0.0
    %v401 = vmax.f32 %v337, 0.0
    %v402 = vmax.f32 %v338, 0.0
    %v403 = vmax.f32 %v339, 0.0
    %v404 = vmax.f32 %v340, 0.0
    %v405 = vmax.f32 %v341, 0.0
    %v406 = vmax.f32 %v342, 0.0
    %v407 = vpack.c.bf16 %v344, %v343
    %v408 = vpack.c.bf16 %v346, %v345
    %v409 = vpack.c.bf16 %v348, %v347
    %v410 = vpack.c.bf16 %v350, %v349
    %v411 = vpack.c.bf16 %v352, %v351
    %v412 = vpack.c.bf16 %v354, %v353
    %v413 = vpack.c.bf16 %v356, %v355
    %v414 = vpack.c.bf16 %v358, %v357
    %v415 = vpack.c.bf16 %v360, %v359
    %v416 = vpack.c.bf16 %v362, %v361
    %v417 = vpack.c.bf16 %v364, %v363
    %v418 = vpack.c.bf16 %v366, %v365
    %v419 = vpack.c.bf16 %v368, %v367
    %v420 = vpack.c.bf16 %v370, %v369
    %v421 = vpack.c.bf16 %v372, %v371
    %v422 = vpack.c.bf16 %v374, %v373
    %v423 = vpack.c.bf16 %v376, %v375
    %v424 = vpack.c.bf16 %v378, %v377
    %v425 = vpack.c.bf16 %v380, %v379
    %v426 = vpack.c.bf16 %v382, %v381
    %v427 = vpack.c.bf16 %v384, %v383
    %v428 = vpack.c.bf16 %v386, %v385
    %v429 = vpack.c.bf16 %v388, %v387
    %v430 = vpack.c.bf16 %v390, %v389
    %v431 = vpack.c.bf16 %v392, %v391
    %v432 = vpack.c.bf16 %v394, %v393
    %v433 = vpack.c.bf16 %v396, %v395
    %v434 = vpack.c.bf16 %v398, %v397
    %v435 = vpack.c.bf16 %v400, %v399
    %v436 = vpack.c.bf16 %v402, %v401
    %v437 = vpack.c.bf16 %v404, %v403
    %v438 = vpack.c.bf16 %v406, %v405
    %v439 = vld [vmem:[#allocation8] sm:$0xf]
    %v440 = vld [vmem:[#allocation8 + $0x4] sm:$0xf]
    %v441 = vld [vmem:[#allocation8 + $0x8] sm:$0xf]
    %v442 = vld [vmem:[#allocation8 + $0xc] sm:$0xf]
    %v443 = vld [vmem:[#allocation8 + $0x10] sm:$0xf]
    %v444 = vld [vmem:[#allocation8 + $0x14] sm:$0xf]
    %v445 = vld [vmem:[#allocation8 + $0x18] sm:$0xf]
    %v446 = vld [vmem:[#allocation8 + $0x1c] sm:$0xf]
    %v447 = vld [vmem:[#allocation8 + $0x20] sm:$0xf]
    %v448 = vld [vmem:[#allocation8 + $0x24] sm:$0xf]
    %v449 = vld [vmem:[#allocation8 + $0x28] sm:$0xf]
    %v450 = vld [vmem:[#allocation8 + $0x2c] sm:$0xf]
    %v451 = vld [vmem:[#allocation8 + $0x30] sm:$0xf]
    %v452 = vld [vmem:[#allocation8 + $0x34] sm:$0xf]
    %v453 = vld [vmem:[#allocation8 + $0x38] sm:$0xf]
    %v454 = vld [vmem:[#allocation8 + $0x3c] sm:$0xf]
    %v471 = vunpack.c.l.b16 %v439
    %v472 = vunpack.c.l.b16 %v440
    %v473 = vunpack.c.l.b16 %v441
    %v474 = vunpack.c.l.b16 %v442
    %v475 = vunpack.c.l.b16 %v443
    %v476 = vunpack.c.l.b16 %v444
    %v477 = vunpack.c.l.b16 %v445
    %v478 = vunpack.c.l.b16 %v446
    %v479 = vunpack.c.l.b16 %v447
    %v480 = vunpack.c.l.b16 %v448
    %v481 = vunpack.c.l.b16 %v449
    %v482 = vunpack.c.l.b16 %v450
    %v483 = vunpack.c.l.b16 %v451
    %v484 = vunpack.c.l.b16 %v452
    %v485 = vunpack.c.l.b16 %v453
    %v486 = vunpack.c.l.b16 %v454
    %v487 = vpack.c.b16 %v472, %v471
    %v488 = vpack.c.b16 %v474, %v473
    %v489 = vpack.c.b16 %v476, %v475
    %v490 = vpack.c.b16 %v478, %v477
    %v491 = vpack.c.b16 %v480, %v479
    %v492 = vpack.c.b16 %v482, %v481
    %v493 = vpack.c.b16 %v484, %v483
    %v494 = vpack.c.b16 %v486, %v485
    %503 = vmatprep.subr.bf16.mxu0 0
    %504 = vmatpush1.bf16.msra.mxu0 %v487
    %505 = vmatprep.subr.bf16.mxu0 0
    %506 = vmatpush1.bf16.msra.mxu0 %v488
    %507 = vmatprep.subr.bf16.mxu0 0
    %508 = vmatpush1.bf16.msra.mxu0 %v489
    %509 = vmatprep.subr.bf16.mxu0 0
    %510 = vmatpush1.bf16.msra.mxu0 %v490
    %511 = vmatprep.subr.bf16.mxu0 0
    %512 = vmatpush1.bf16.msra.mxu0 %v491
    %513 = vmatprep.subr.bf16.mxu0 0
    %514 = vmatpush1.bf16.msra.mxu0 %v492
    %515 = vmatprep.subr.bf16.mxu0 0
    %516 = vmatpush1.bf16.msra.mxu0 %v493
    %517 = vmatprep.subr.bf16.mxu0 0
    %518 = vmatpush1.bf16.msra.mxu0 %v494
    %519 = vmatprep.subr.bf16.mxu0 0
    %520 = vmatpush1.bf16.msra.mxu0 0
    %521 = vmatprep.subr.bf16.mxu0 0
    %522 = vmatpush1.bf16.msra.mxu0 0
    %523 = vmatprep.subr.bf16.mxu0 0
    %524 = vmatpush1.bf16.msra.mxu0 0
    %525 = vmatprep.subr.bf16.mxu0 0
    %526 = vmatpush1.bf16.msra.mxu0 0
    %527 = vmatprep.subr.bf16.mxu0 0
    %528 = vmatpush1.bf16.msra.mxu0 0
    %529 = vmatprep.subr.bf16.mxu0 0
    %530 = vmatpush1.bf16.msra.mxu0 0
    %531 = vmatprep.subr.bf16.mxu0 0
    %532 = vmatpush1.bf16.msra.mxu0 0
    %533 = vmatprep.subr.bf16.mxu0 0
    %534 = vmatpush1.bf16.msra.mxu0 0
    %535 = vmatprep.mubr.bf16.mxu0 0
    %536 = vmatmul.mubr.bf16.gmra.mrb[0].mxu0 %v407
    %v537 = vpop.f32.mrb[0].mxu0
    %v538 = vadd.f32 0.0, %v537
    %v539 = vpop.f32.mrb[0].mxu0
    %v540 = vpop.f32.mrb[0].mxu0
    %v541 = vadd.f32 0.0, %v540
    %v542 = vpop.f32.mrb[0].mxu0
    %543 = vmatprep.mubr.bf16.mxu0 0
    %544 = vmatmul.mubr.bf16.gmra.mrb[0].mxu0 %v408
    %v545 = vpop.f32.mrb[0].mxu0
    %v546 = vadd.f32 0.0, %v545
    %v547 = vpop.f32.mrb[0].mxu0
    %v548 = vpop.f32.mrb[0].mxu0
    %v549 = vadd.f32 0.0, %v548
    %v550 = vpop.f32.mrb[0].mxu0
    %551 = vmatprep.mubr.bf16.mxu0 0
    %552 = vmatmul.mubr.bf16.gmra.mrb[0].mxu0 %v409
    %v553 = vpop.f32.mrb[0].mxu0
    %v554 = vadd.f32 0.0, %v553
    %v555 = vpop.f32.mrb[0].mxu0
    %v556 = vpop.f32.mrb[0].mxu0
    %v557 = vadd.f32 0.0, %v556
    %v558 = vpop.f32.mrb[0].mxu0
    %559 = vmatprep.mubr.bf16.mxu0 0
    %560 = vmatmul.mubr.bf16.gmra.mrb[0].mxu0 %v410
    %v561 = vpop.f32.mrb[0].mxu0
    %v562 = vadd.f32 0.0, %v561
    %v563 = vpop.f32.mrb[0].mxu0
    %v564 = vpop.f32.mrb[0].mxu0
    %v565 = vadd.f32 0.0, %v564
    %v566 = vpop.f32.mrb[0].mxu0
    %567 = vmatprep.mubr.bf16.mxu0 0
    %568 = vmatmul.mubr.bf16.gmra.mrb[0].mxu0 %v411
    %v569 = vpop.f32.mrb[0].mxu0
    %v570 = vadd.f32 0.0, %v569
    %v571 = vpop.f32.mrb[0].mxu0
    %v572 = vpop.f32.mrb[0].mxu0
    %v573 = vadd.f32 0.0, %v572
    %v574 = vpop.f32.mrb[0].mxu0
    %575 = vmatprep.mubr.bf16.mxu0 0
    %576 = vmatmul.mubr.bf16.gmra.mrb[0].mxu0 %v412
    %v577 = vpop.f32.mrb[0].mxu0
    %v578 = vadd.f32 0.0, %v577
    %v579 = vpop.f32.mrb[0].mxu0
    %v580 = vpop.f32.mrb[0].mxu0
    %v581 = vadd.f32 0.0, %v580
    %v582 = vpop.f32.mrb[0].mxu0
    %583 = vmatprep.mubr.bf16.mxu0 0
    %584 = vmatmul.mubr.bf16.gmra.mrb[0].mxu0 %v413
    %v585 = vpop.f32.mrb[0].mxu0
    %v586 = vadd.f32 0.0, %v585
    %v587 = vpop.f32.mrb[0].mxu0
    %v588 = vpop.f32.mrb[0].mxu0
    %v589 = vadd.f32 0.0, %v588
    %v590 = vpop.f32.mrb[0].mxu0
    %591 = vmatprep.mubr.bf16.mxu0 0
    %592 = vmatmul.mubr.bf16.gmra.mrb[0].mxu0 %v414
    %v593 = vpop.f32.mrb[0].mxu0
    %v594 = vadd.f32 0.0, %v593
    %v595 = vpop.f32.mrb[0].mxu0
    %v596 = vpop.f32.mrb[0].mxu0
    %v597 = vadd.f32 0.0, %v596
    %v598 = vpop.f32.mrb[0].mxu0
    %599 = vmatprep.mubr.bf16.mxu0 0
    %600 = vmatmul.mubr.bf16.gmra.mrb[0].mxu0 %v415
    %v601 = vpop.f32.mrb[0].mxu0
    %v602 = vadd.f32 0.0, %v601
    %v603 = vpop.f32.mrb[0].mxu0
    %v604 = vpop.f32.mrb[0].mxu0
    %v605 = vadd.f32 0.0, %v604
    %v606 = vpop.f32.mrb[0].mxu0
    %607 = vmatprep.mubr.bf16.mxu0 0
    %608 = vmatmul.mubr.bf16.gmra.mrb[0].mxu0 %v416
    %v609 = vpop.f32.mrb[0].mxu0
    %v610 = vadd.f32 0.0, %v609
    %v611 = vpop.f32.mrb[0].mxu0
    %v612 = vpop.f32.mrb[0].mxu0
    %v613 = vadd.f32 0.0, %v612
    %v614 = vpop.f32.mrb[0].mxu0
    %615 = vmatprep.mubr.bf16.mxu0 0
    %616 = vmatmul.mubr.bf16.gmra.mrb[0].mxu0 %v417
    %v617 = vpop.f32.mrb[0].mxu0
    %v618 = vadd.f32 0.0, %v617
    %v619 = vpop.f32.mrb[0].mxu0
    %v620 = vpop.f32.mrb[0].mxu0
    %v621 = vadd.f32 0.0, %v620
    %v622 = vpop.f32.mrb[0].mxu0
    %623 = vmatprep.mubr.bf16.mxu0 0
    %624 = vmatmul.mubr.bf16.gmra.mrb[0].mxu0 %v418
    %v625 = vpop.f32.mrb[0].mxu0
    %v626 = vadd.f32 0.0, %v625
    %v627 = vpop.f32.mrb[0].mxu0
    %v628 = vpop.f32.mrb[0].mxu0
    %v629 = vadd.f32 0.0, %v628
    %v630 = vpop.f32.mrb[0].mxu0
    %631 = vmatprep.mubr.bf16.mxu0 0
    %632 = vmatmul.mubr.bf16.gmra.mrb[0].mxu0 %v419
    %v633 = vpop.f32.mrb[0].mxu0
    %v634 = vadd.f32 0.0, %v633
    %v635 = vpop.f32.mrb[0].mxu0
    %v636 = vpop.f32.mrb[0].mxu0
    %v637 = vadd.f32 0.0, %v636
    %v638 = vpop.f32.mrb[0].mxu0
    %639 = vmatprep.mubr.bf16.mxu0 0
    %640 = vmatmul.mubr.bf16.gmra.mrb[0].mxu0 %v420
    %v641 = vpop.f32.mrb[0].mxu0
    %v642 = vadd.f32 0.0, %v641
    %v643 = vpop.f32.mrb[0].mxu0
    %v644 = vpop.f32.mrb[0].mxu0
    %v645 = vadd.f32 0.0, %v644
    %v646 = vpop.f32.mrb[0].mxu0
    %647 = vmatprep.mubr.bf16.mxu0 0
    %648 = vmatmul.mubr.bf16.gmra.mrb[0].mxu0 %v421
    %v649 = vpop.f32.mrb[0].mxu0
    %v650 = vadd.f32 0.0, %v649
    %v651 = vpop.f32.mrb[0].mxu0
    %v652 = vpop.f32.mrb[0].mxu0
    %v653 = vadd.f32 0.0, %v652
    %v654 = vpop.f32.mrb[0].mxu0
    %655 = vmatprep.mubr.bf16.mxu0 0
    %656 = vmatmul.mubr.bf16.gmra.mrb[0].mxu0 %v422
    %v657 = vpop.f32.mrb[0].mxu0
    %v658 = vadd.f32 0.0, %v657
    %v659 = vpop.f32.mrb[0].mxu0
    %v660 = vpop.f32.mrb[0].mxu0
    %v661 = vadd.f32 0.0, %v660
    %v662 = vpop.f32.mrb[0].mxu0
    %663 = vmatprep.mubr.bf16.mxu0 0
    %664 = vmatmul.mubr.bf16.gmra.mrb[0].mxu0 %v423
    %v665 = vpop.f32.mrb[0].mxu0
    %v666 = vadd.f32 0.0, %v665
    %v667 = vpop.f32.mrb[0].mxu0
    %v668 = vpop.f32.mrb[0].mxu0
    %v669 = vadd.f32 0.0, %v668
    %v670 = vpop.f32.mrb[0].mxu0
    %671 = vmatprep.mubr.bf16.mxu0 0
    %672 = vmatmul.mubr.bf16.gmra.mrb[0].mxu0 %v424
    %v673 = vpop.f32.mrb[0].mxu0
    %v674 = vadd.f32 0.0, %v673
    %v675 = vpop.f32.mrb[0].mxu0
    %v676 = vpop.f32.mrb[0].mxu0
    %v677 = vadd.f32 0.0, %v676
    %v678 = vpop.f32.mrb[0].mxu0
    %679 = vmatprep.mubr.bf16.mxu0 0
    %680 = vmatmul.mubr.bf16.gmra.mrb[0].mxu0 %v425
    %v681 = vpop.f32.mrb[0].mxu0
    %v682 = vadd.f32 0.0, %v681
    %v683 = vpop.f32.mrb[0].mxu0
    %v684 = vpop.f32.mrb[0].mxu0
    %v685 = vadd.f32 0.0, %v684
    %v686 = vpop.f32.mrb[0].mxu0
    %687 = vmatprep.mubr.bf16.mxu0 0
    %688 = vmatmul.mubr.bf16.gmra.mrb[0].mxu0 %v426
    %v689 = vpop.f32.mrb[0].mxu0
    %v690 = vadd.f32 0.0, %v689
    %v691 = vpop.f32.mrb[0].mxu0
    %v692 = vpop.f32.mrb[0].mxu0
    %v693 = vadd.f32 0.0, %v692
    %v694 = vpop.f32.mrb[0].mxu0
    %695 = vmatprep.mubr.bf16.mxu0 0
    %696 = vmatmul.mubr.bf16.gmra.mrb[0].mxu0 %v427
    %v697 = vpop.f32.mrb[0].mxu0
    %v698 = vadd.f32 0.0, %v697
    %v699 = vpop.f32.mrb[0].mxu0
    %v700 = vpop.f32.mrb[0].mxu0
    %v701 = vadd.f32 0.0, %v700
    %v702 = vpop.f32.mrb[0].mxu0
    %703 = vmatprep.mubr.bf16.mxu0 0
    %704 = vmatmul.mubr.bf16.gmra.mrb[0].mxu0 %v428
    %v705 = vpop.f32.mrb[0].mxu0
    %v706 = vadd.f32 0.0, %v705
    %v707 = vpop.f32.mrb[0].mxu0
    %v708 = vpop.f32.mrb[0].mxu0
    %v709 = vadd.f32 0.0, %v708
    %v710 = vpop.f32.mrb[0].mxu0
    %711 = vmatprep.mubr.bf16.mxu0 0
    %712 = vmatmul.mubr.bf16.gmra.mrb[0].mxu0 %v429
    %v713 = vpop.f32.mrb[0].mxu0
    %v714 = vadd.f32 0.0, %v713
    %v715 = vpop.f32.mrb[0].mxu0
    %v716 = vpop.f32.mrb[0].mxu0
    %v717 = vadd.f32 0.0, %v716
    %v718 = vpop.f32.mrb[0].mxu0
    %719 = vmatprep.mubr.bf16.mxu0 0
    %720 = vmatmul.mubr.bf16.gmra.mrb[0].mxu0 %v430
    %v721 = vpop.f32.mrb[0].mxu0
    %v722 = vadd.f32 0.0, %v721
    %v723 = vpop.f32.mrb[0].mxu0
    %v724 = vpop.f32.mrb[0].mxu0
    %v725 = vadd.f32 0.0, %v724
    %v726 = vpop.f32.mrb[0].mxu0
    %727 = vmatprep.mubr.bf16.mxu0 0
    %728 = vmatmul.mubr.bf16.gmra.mrb[0].mxu0 %v431
    %v729 = vpop.f32.mrb[0].mxu0
    %v730 = vadd.f32 0.0, %v729
    %v731 = vpop.f32.mrb[0].mxu0
    %v732 = vpop.f32.mrb[0].mxu0
    %v733 = vadd.f32 0.0, %v732
    %v734 = vpop.f32.mrb[0].mxu0
    %735 = vmatprep.mubr.bf16.mxu0 0
    %736 = vmatmul.mubr.bf16.gmra.mrb[0].mxu0 %v432
    %v737 = vpop.f32.mrb[0].mxu0
    %v738 = vadd.f32 0.0, %v737
    %v739 = vpop.f32.mrb[0].mxu0
    %v740 = vpop.f32.mrb[0].mxu0
    %v741 = vadd.f32 0.0, %v740
    %v742 = vpop.f32.mrb[0].mxu0
    %743 = vmatprep.mubr.bf16.mxu0 0
    %744 = vmatmul.mubr.bf16.gmra.mrb[0].mxu0 %v433
    %v745 = vpop.f32.mrb[0].mxu0
    %v746 = vadd.f32 0.0, %v745
    %v747 = vpop.f32.mrb[0].mxu0
    %v748 = vpop.f32.mrb[0].mxu0
    %v749 = vadd.f32 0.0, %v748
    %v750 = vpop.f32.mrb[0].mxu0
    %751 = vmatprep.mubr.bf16.mxu0 0
    %752 = vmatmul.mubr.bf16.gmra.mrb[0].mxu0 %v434
    %v753 = vpop.f32.mrb[0].mxu0
    %v754 = vadd.f32 0.0, %v753
    %v755 = vpop.f32.mrb[0].mxu0
    %v756 = vpop.f32.mrb[0].mxu0
    %v757 = vadd.f32 0.0, %v756
    %v758 = vpop.f32.mrb[0].mxu0
    %759 = vmatprep.mubr.bf16.mxu0 0
    %760 = vmatmul.mubr.bf16.gmra.mrb[0].mxu0 %v435
    %v761 = vpop.f32.mrb[0].mxu0
    %v762 = vadd.f32 0.0, %v761
    %v763 = vpop.f32.mrb[0].mxu0
    %v764 = vpop.f32.mrb[0].mxu0
    %v765 = vadd.f32 0.0, %v764
    %v766 = vpop.f32.mrb[0].mxu0
    %767 = vmatprep.mubr.bf16.mxu0 0
    %768 = vmatmul.mubr.bf16.gmra.mrb[0].mxu0 %v436
    %v769 = vpop.f32.mrb[0].mxu0
    %v770 = vadd.f32 0.0, %v769
    %v771 = vpop.f32.mrb[0].mxu0
    %v772 = vpop.f32.mrb[0].mxu0
    %v773 = vadd.f32 0.0, %v772
    %v774 = vpop.f32.mrb[0].mxu0
    %775 = vmatprep.mubr.bf16.mxu0 0
    %776 = vmatmul.mubr.bf16.gmra.mrb[0].mxu0 %v437
    %v777 = vpop.f32.mrb[0].mxu0
    %v778 = vadd.f32 0.0, %v777
    %v779 = vpop.f32.mrb[0].mxu0
    %v780 = vpop.f32.mrb[0].mxu0
    %v781 = vadd.f32 0.0, %v780
    %v782 = vpop.f32.mrb[0].mxu0
    %783 = vmatprep.mubr.bf16.mxu0 0
    %784 = vmatmul.mubr.bf16.gmra.mrb[0].mxu0 %v438
    %v785 = vpop.f32.mrb[0].mxu0
    %v786 = vadd.f32 0.0, %v785
    %v787 = vpop.f32.mrb[0].mxu0
    %v788 = vpop.f32.mrb[0].mxu0
    %v789 = vadd.f32 0.0, %v788
    %v790 = vpop.f32.mrb[0].mxu0
    %791 = vdwg.mxu0
    %v792 = vpack.c.bf16 %v541, %v538
    %v793 = vpack.c.bf16 %v549, %v546
    %v794 = vpack.c.bf16 %v557, %v554
    %v795 = vpack.c.bf16 %v565, %v562
    %v796 = vpack.c.bf16 %v573, %v570
    %v797 = vpack.c.bf16 %v581, %v578
    %v798 = vpack.c.bf16 %v589, %v586
    %v799 = vpack.c.bf16 %v597, %v594
    %v800 = vpack.c.bf16 %v605, %v602
    %v801 = vpack.c.bf16 %v613, %v610
    %v802 = vpack.c.bf16 %v621, %v618
    %v803 = vpack.c.bf16 %v629, %v626
    %v804 = vpack.c.bf16 %v637, %v634
    %v805 = vpack.c.bf16 %v645, %v642
    %v806 = vpack.c.bf16 %v653, %v650
    %v807 = vpack.c.bf16 %v661, %v658
    %v808 = vpack.c.bf16 %v669, %v666
    %v809 = vpack.c.bf16 %v677, %v674
    %v810 = vpack.c.bf16 %v685, %v682
    %v811 = vpack.c.bf16 %v693, %v690
    %v812 = vpack.c.bf16 %v701, %v698
    %v813 = vpack.c.bf16 %v709, %v706
    %v814 = vpack.c.bf16 %v717, %v714
    %v815 = vpack.c.bf16 %v725, %v722
    %v816 = vpack.c.bf16 %v733, %v730
    %v817 = vpack.c.bf16 %v741, %v738
    %v818 = vpack.c.bf16 %v749, %v746
    %v819 = vpack.c.bf16 %v757, %v754
    %v820 = vpack.c.bf16 %v765, %v762
    %v821 = vpack.c.bf16 %v773, %v770
    %v822 = vpack.c.bf16 %v781, %v778
    %v823 = vpack.c.bf16 %v789, %v786
    %v856 = vunpack.c.l.b16 %v792
    %v857 = vunpack.c.h.b16 %v792
    %v858 = vunpack.c.l.b16 %v793
    %v859 = vunpack.c.h.b16 %v793
    %v860 = vunpack.c.l.b16 %v794
    %v861 = vunpack.c.h.b16 %v794
    %v862 = vunpack.c.l.b16 %v795
    %v863 = vunpack.c.h.b16 %v795
    %v864 = vunpack.c.l.b16 %v796
    %v865 = vunpack.c.h.b16 %v796
    %v866 = vunpack.c.l.b16 %v797
    %v867 = vunpack.c.h.b16 %v797
    %v868 = vunpack.c.l.b16 %v798
    %v869 = vunpack.c.h.b16 %v798
    %v870 = vunpack.c.l.b16 %v799
    %v871 = vunpack.c.h.b16 %v799
    %v872 = vunpack.c.l.b16 %v800
    %v873 = vunpack.c.h.b16 %v800
    %v874 = vunpack.c.l.b16 %v801
    %v875 = vunpack.c.h.b16 %v801
    %v876 = vunpack.c.l.b16 %v802
    %v877 = vunpack.c.h.b16 %v802
    %v878 = vunpack.c.l.b16 %v803
    %v879 = vunpack.c.h.b16 %v803
    %v880 = vunpack.c.l.b16 %v804
    %v881 = vunpack.c.h.b16 %v804
    %v882 = vunpack.c.l.b16 %v805
    %v883 = vunpack.c.h.b16 %v805
    %v884 = vunpack.c.l.b16 %v806
    %v885 = vunpack.c.h.b16 %v806
    %v886 = vunpack.c.l.b16 %v807
    %v887 = vunpack.c.h.b16 %v807
    %v888 = vunpack.c.l.b16 %v808
    %v889 = vunpack.c.h.b16 %v808
    %v890 = vunpack.c.l.b16 %v809
    %v891 = vunpack.c.h.b16 %v809
    %v892 = vunpack.c.l.b16 %v810
    %v893 = vunpack.c.h.b16 %v810
    %v894 = vunpack.c.l.b16 %v811
    %v895 = vunpack.c.h.b16 %v811
    %v896 = vunpack.c.l.b16 %v812
    %v897 = vunpack.c.h.b16 %v812
    %v898 = vunpack.c.l.b16 %v813
    %v899 = vunpack.c.h.b16 %v813
    %v900 = vunpack.c.l.b16 %v814
    %v901 = vunpack.c.h.b16 %v814
    %v902 = vunpack.c.l.b16 %v815
    %v903 = vunpack.c.h.b16 %v815
    %v904 = vunpack.c.l.b16 %v816
    %v905 = vunpack.c.h.b16 %v816
    %v906 = vunpack.c.l.b16 %v817
    %v907 = vunpack.c.h.b16 %v817
    %v908 = vunpack.c.l.b16 %v818
    %v909 = vunpack.c.h.b16 %v818
    %v910 = vunpack.c.l.b16 %v819
    %v911 = vunpack.c.h.b16 %v819
    %v912 = vunpack.c.l.b16 %v820
    %v913 = vunpack.c.h.b16 %v820
    %v914 = vunpack.c.l.b16 %v821
    %v915 = vunpack.c.h.b16 %v821
    %v916 = vunpack.c.l.b16 %v822
    %v917 = vunpack.c.h.b16 %v822
    %v918 = vunpack.c.l.b16 %v823
    %v919 = vunpack.c.h.b16 %v823
    %v920 = vpack.c.b16 %v856, %v856
    %v921 = vpack.c.b16 %v857, %v857
    %v922 = vpack.c.b16 %v858, %v858
    %v923 = vpack.c.b16 %v859, %v859
    %v924 = vpack.c.b16 %v860, %v860
    %v925 = vpack.c.b16 %v861, %v861
    %v926 = vpack.c.b16 %v862, %v862
    %v927 = vpack.c.b16 %v863, %v863
    %v928 = vpack.c.b16 %v864, %v864
    %v929 = vpack.c.b16 %v865, %v865
    %v930 = vpack.c.b16 %v866, %v866
    %v931 = vpack.c.b16 %v867, %v867
    %v932 = vpack.c.b16 %v868, %v868
    %v933 = vpack.c.b16 %v869, %v869
    %v934 = vpack.c.b16 %v870, %v870
    %v935 = vpack.c.b16 %v871, %v871
    %v936 = vpack.c.b16 %v872, %v872
    %v937 = vpack.c.b16 %v873, %v873
    %v938 = vpack.c.b16 %v874, %v874
    %v939 = vpack.c.b16 %v875, %v875
    %v940 = vpack.c.b16 %v876, %v876
    %v941 = vpack.c.b16 %v877, %v877
    %v942 = vpack.c.b16 %v878, %v878
    %v943 = vpack.c.b16 %v879, %v879
    %v944 = vpack.c.b16 %v880, %v880
    %v945 = vpack.c.b16 %v881, %v881
    %v946 = vpack.c.b16 %v882, %v882
    %v947 = vpack.c.b16 %v883, %v883
    %v948 = vpack.c.b16 %v884, %v884
    %v949 = vpack.c.b16 %v885, %v885
    %v950 = vpack.c.b16 %v886, %v886
    %v951 = vpack.c.b16 %v887, %v887
    %v952 = vpack.c.b16 %v888, %v888
    %v953 = vpack.c.b16 %v889, %v889
    %v954 = vpack.c.b16 %v890, %v890
    %v955 = vpack.c.b16 %v891, %v891
    %v956 = vpack.c.b16 %v892, %v892
    %v957 = vpack.c.b16 %v893, %v893
    %v958 = vpack.c.b16 %v894, %v894
    %v959 = vpack.c.b16 %v895, %v895
    %v960 = vpack.c.b16 %v896, %v896
    %v961 = vpack.c.b16 %v897, %v897
    %v962 = vpack.c.b16 %v898, %v898
    %v963 = vpack.c.b16 %v899, %v899
    %v964 = vpack.c.b16 %v900, %v900
    %v965 = vpack.c.b16 %v901, %v901
    %v966 = vpack.c.b16 %v902, %v902
    %v967 = vpack.c.b16 %v903, %v903
    %v968 = vpack.c.b16 %v904, %v904
    %v969 = vpack.c.b16 %v905, %v905
    %v970 = vpack.c.b16 %v906, %v906
    %v971 = vpack.c.b16 %v907, %v907
    %v972 = vpack.c.b16 %v908, %v908
    %v973 = vpack.c.b16 %v909, %v909
    %v974 = vpack.c.b16 %v910, %v910
    %v975 = vpack.c.b16 %v911, %v911
    %v976 = vpack.c.b16 %v912, %v912
    %v977 = vpack.c.b16 %v913, %v913
    %v978 = vpack.c.b16 %v914, %v914
    %v979 = vpack.c.b16 %v915, %v915
    %v980 = vpack.c.b16 %v916, %v916
    %v981 = vpack.c.b16 %v917, %v917
    %v982 = vpack.c.b16 %v918, %v918
    %v983 = vpack.c.b16 %v919, %v919
    %1048 = vst [vmem:[#allocation10] sm:$0xf] %v920
    %1049 = vst [vmem:[#allocation10 + $0x4] sm:$0xf] %v921
    %1050 = vst [vmem:[#allocation10 + $0x8] sm:$0xf] %v922
    %1051 = vst [vmem:[#allocation10 + $0xc] sm:$0xf] %v923
    %1052 = vst [vmem:[#allocation10 + $0x10] sm:$0xf] %v924
    %1053 = vst [vmem:[#allocation10 + $0x14] sm:$0xf] %v925
    %1054 = vst [vmem:[#allocation10 + $0x18] sm:$0xf] %v926
    %1055 = vst [vmem:[#allocation10 + $0x1c] sm:$0xf] %v927
    %1056 = vst [vmem:[#allocation10 + $0x20] sm:$0xf] %v928
    %1057 = vst [vmem:[#allocation10 + $0x24] sm:$0xf] %v929
    %1058 = vst [vmem:[#allocation10 + $0x28] sm:$0xf] %v930
    %1059 = vst [vmem:[#allocation10 + $0x2c] sm:$0xf] %v931
    %1060 = vst [vmem:[#allocation10 + $0x30] sm:$0xf] %v932
    %1061 = vst [vmem:[#allocation10 + $0x34] sm:$0xf] %v933
    %1062 = vst [vmem:[#allocation10 + $0x38] sm:$0xf] %v934
    %1063 = vst [vmem:[#allocation10 + $0x3c] sm:$0xf] %v935
    %1064 = vst [vmem:[#allocation10 + $0x40] sm:$0xf] %v936
    %1065 = vst [vmem:[#allocation10 + $0x44] sm:$0xf] %v937
    %1066 = vst [vmem:[#allocation10 + $0x48] sm:$0xf] %v938
    %1067 = vst [vmem:[#allocation10 + $0x4c] sm:$0xf] %v939
    %1068 = vst [vmem:[#allocation10 + $0x50] sm:$0xf] %v940
    %1069 = vst [vmem:[#allocation10 + $0x54] sm:$0xf] %v941
    %1070 = vst [vmem:[#allocation10 + $0x58] sm:$0xf] %v942
    %1071 = vst [vmem:[#allocation10 + $0x5c] sm:$0xf] %v943
    %1072 = vst [vmem:[#allocation10 + $0x60] sm:$0xf] %v944
    %1073 = vst [vmem:[#allocation10 + $0x64] sm:$0xf] %v945
    %1074 = vst [vmem:[#allocation10 + $0x68] sm:$0xf] %v946
    %1075 = vst [vmem:[#allocation10 + $0x6c] sm:$0xf] %v947
    %1076 = vst [vmem:[#allocation10 + $0x70] sm:$0xf] %v948
    %1077 = vst [vmem:[#allocation10 + $0x74] sm:$0xf] %v949
    %1078 = vst [vmem:[#allocation10 + $0x78] sm:$0xf] %v950
    %1079 = vst [vmem:[#allocation10 + $0x7c] sm:$0xf] %v951
    %1080 = vst [vmem:[#allocation10 + $0x80] sm:$0xf] %v952
    %1081 = vst [vmem:[#allocation10 + $0x84] sm:$0xf] %v953
    %1082 = vst [vmem:[#allocation10 + $0x88] sm:$0xf] %v954
    %1083 = vst [vmem:[#allocation10 + $0x8c] sm:$0xf] %v955
    %1084 = vst [vmem:[#allocation10 + $0x90] sm:$0xf] %v956
    %1085 = vst [vmem:[#allocation10 + $0x94] sm:$0xf] %v957
    %1086 = vst [vmem:[#allocation10 + $0x98] sm:$0xf] %v958
    %1087 = vst [vmem:[#allocation10 + $0x9c] sm:$0xf] %v959
    %1088 = vst [vmem:[#allocation10 + $0xa0] sm:$0xf] %v960
    %1089 = vst [vmem:[#allocation10 + $0xa4] sm:$0xf] %v961
    %1090 = vst [vmem:[#allocation10 + $0xa8] sm:$0xf] %v962
    %1091 = vst [vmem:[#allocation10 + $0xac] sm:$0xf] %v963
    %1092 = vst [vmem:[#allocation10 + $0xb0] sm:$0xf] %v964
    %1093 = vst [vmem:[#allocation10 + $0xb4] sm:$0xf] %v965
    %1094 = vst [vmem:[#allocation10 + $0xb8] sm:$0xf] %v966
    %1095 = vst [vmem:[#allocation10 + $0xbc] sm:$0xf] %v967
    %1096 = vst [vmem:[#allocation10 + $0xc0] sm:$0xf] %v968
    %1097 = vst [vmem:[#allocation10 + $0xc4] sm:$0xf] %v969
    %1098 = vst [vmem:[#allocation10 + $0xc8] sm:$0xf] %v970
    %1099 = vst [vmem:[#allocation10 + $0xcc] sm:$0xf] %v971
    %1100 = vst [vmem:[#allocation10 + $0xd0] sm:$0xf] %v972
    %1101 = vst [vmem:[#allocation10 + $0xd4] sm:$0xf] %v973
    %1102 = vst [vmem:[#allocation10 + $0xd8] sm:$0xf] %v974
    %1103 = vst [vmem:[#allocation10 + $0xdc] sm:$0xf] %v975
    %1104 = vst [vmem:[#allocation10 + $0xe0] sm:$0xf] %v976
    %1105 = vst [vmem:[#allocation10 + $0xe4] sm:$0xf] %v977
    %1106 = vst [vmem:[#allocation10 + $0xe8] sm:$0xf] %v978
    %1107 = vst [vmem:[#allocation10 + $0xec] sm:$0xf] %v979
    %1108 = vst [vmem:[#allocation10 + $0xf0] sm:$0xf] %v980
    %1109 = vst [vmem:[#allocation10 + $0xf4] sm:$0xf] %v981
    %1110 = vst [vmem:[#allocation10 + $0xf8] sm:$0xf] %v982
    %1111 = vst [vmem:[#allocation10 + $0xfc] sm:$0xf] %v983
    %v1112 = vunpack.c.l.bf16 %v792
    %v1113 = vunpack.c.h.bf16 %v792
    %v1114 = vunpack.c.l.bf16 %v793
    %v1115 = vunpack.c.h.bf16 %v793
    %v1116 = vunpack.c.l.bf16 %v794
    %v1117 = vunpack.c.h.bf16 %v794
    %v1118 = vunpack.c.l.bf16 %v795
    %v1119 = vunpack.c.h.bf16 %v795
    %v1120 = vunpack.c.l.bf16 %v796
    %v1121 = vunpack.c.h.bf16 %v796
    %v1122 = vunpack.c.l.bf16 %v797
    %v1123 = vunpack.c.h.bf16 %v797
    %v1124 = vunpack.c.l.bf16 %v798
    %v1125 = vunpack.c.h.bf16 %v798
    %v1126 = vunpack.c.l.bf16 %v799
    %v1127 = vunpack.c.h.bf16 %v799
    %v1128 = vunpack.c.l.bf16 %v800
    %v1129 = vunpack.c.h.bf16 %v800
    %v1130 = vunpack.c.l.bf16 %v801
    %v1131 = vunpack.c.h.bf16 %v801
    %v1132 = vunpack.c.l.bf16 %v802
    %v1133 = vunpack.c.h.bf16 %v802
    %v1134 = vunpack.c.l.bf16 %v803
    %v1135 = vunpack.c.h.bf16 %v803
    %v1136 = vunpack.c.l.bf16 %v804
    %v1137 = vunpack.c.h.bf16 %v804
    %v1138 = vunpack.c.l.bf16 %v805
    %v1139 = vunpack.c.h.bf16 %v805
    %v1140 = vunpack.c.l.bf16 %v806
    %v1141 = vunpack.c.h.bf16 %v806
    %v1142 = vunpack.c.l.bf16 %v807
    %v1143 = vunpack.c.h.bf16 %v807
    %v1144 = vunpack.c.l.bf16 %v808
    %v1145 = vunpack.c.h.bf16 %v808
    %v1146 = vunpack.c.l.bf16 %v809
    %v1147 = vunpack.c.h.bf16 %v809
    %v1148 = vunpack.c.l.bf16 %v810
    %v1149 = vunpack.c.h.bf16 %v810
    %v1150 = vunpack.c.l.bf16 %v811
    %v1151 = vunpack.c.h.bf16 %v811
    %v1152 = vunpack.c.l.bf16 %v812
    %v1153 = vunpack.c.h.bf16 %v812
    %v1154 = vunpack.c.l.bf16 %v813
    %v1155 = vunpack.c.h.bf16 %v813
    %v1156 = vunpack.c.l.bf16 %v814
    %v1157 = vunpack.c.h.bf16 %v814
    %v1158 = vunpack.c.l.bf16 %v815
    %v1159 = vunpack.c.h.bf16 %v815
    %v1160 = vunpack.c.l.bf16 %v816
    %v1161 = vunpack.c.h.bf16 %v816
    %v1162 = vunpack.c.l.bf16 %v817
    %v1163 = vunpack.c.h.bf16 %v817
    %v1164 = vunpack.c.l.bf16 %v818
    %v1165 = vunpack.c.h.bf16 %v818
    %v1166 = vunpack.c.l.bf16 %v819
    %v1167 = vunpack.c.h.bf16 %v819
    %v1168 = vunpack.c.l.bf16 %v820
    %v1169 = vunpack.c.h.bf16 %v820
    %v1170 = vunpack.c.l.bf16 %v821
    %v1171 = vunpack.c.h.bf16 %v821
    %v1172 = vunpack.c.l.bf16 %v822
    %v1173 = vunpack.c.h.bf16 %v822
    %v1174 = vunpack.c.l.bf16 %v823
    %v1175 = vunpack.c.h.bf16 %v823
    %v1176 = vadd.f32 %v1112, %v1113
    %v1177 = vadd.f32 %v1176, %v1114
    %v1178 = vadd.f32 %v1177, %v1115
    %v1179 = vadd.f32 %v1178, %v1116
    %v1180 = vadd.f32 %v1179, %v1117
    %v1181 = vadd.f32 %v1180, %v1118
    %v1182 = vadd.f32 %v1181, %v1119
    %v1183 = vadd.f32 %v1182, %v1120
    %v1184 = vadd.f32 %v1183, %v1121
    %v1185 = vadd.f32 %v1184, %v1122
    %v1186 = vadd.f32 %v1185, %v1123
    %v1187 = vadd.f32 %v1186, %v1124
    %v1188 = vadd.f32 %v1187, %v1125
    %v1189 = vadd.f32 %v1188, %v1126
    %v1190 = vadd.f32 %v1189, %v1127
    %v1191 = vadd.f32 %v1190, %v1128
    %v1192 = vadd.f32 %v1191, %v1129
    %v1193 = vadd.f32 %v1192, %v1130
    %v1194 = vadd.f32 %v1193, %v1131
    %v1195 = vadd.f32 %v1194, %v1132
    %v1196 = vadd.f32 %v1195, %v1133
    %v1197 = vadd.f32 %v1196, %v1134
    %v1198 = vadd.f32 %v1197, %v1135
    %v1199 = vadd.f32 %v1198, %v1136
    %v1200 = vadd.f32 %v1199, %v1137
    %v1201 = vadd.f32 %v1200, %v1138
    %v1202 = vadd.f32 %v1201, %v1139
    %v1203 = vadd.f32 %v1202, %v1140
    %v1204 = vadd.f32 %v1203, %v1141
    %v1205 = vadd.f32 %v1204, %v1142
    %v1206 = vadd.f32 %v1205, %v1143
    %v1207 = vadd.f32 %v1206, %v1144
    %v1208 = vadd.f32 %v1207, %v1145
    %v1209 = vadd.f32 %v1208, %v1146
    %v1210 = vadd.f32 %v1209, %v1147
    %v1211 = vadd.f32 %v1210, %v1148
    %v1212 = vadd.f32 %v1211, %v1149
    %v1213 = vadd.f32 %v1212, %v1150
    %v1214 = vadd.f32 %v1213, %v1151
    %v1215 = vadd.f32 %v1214, %v1152
    %v1216 = vadd.f32 %v1215, %v1153
    %v1217 = vadd.f32 %v1216, %v1154
    %v1218 = vadd.f32 %v1217, %v1155
    %v1219 = vadd.f32 %v1218, %v1156
    %v1220 = vadd.f32 %v1219, %v1157
    %v1221 = vadd.f32 %v1220, %v1158
    %v1222 = vadd.f32 %v1221, %v1159
    %v1223 = vadd.f32 %v1222, %v1160
    %v1224 = vadd.f32 %v1223, %v1161
    %v1225 = vadd.f32 %v1224, %v1162
    %v1226 = vadd.f32 %v1225, %v1163
    %v1227 = vadd.f32 %v1226, %v1164
    %v1228 = vadd.f32 %v1227, %v1165
    %v1229 = vadd.f32 %v1228, %v1166
    %v1230 = vadd.f32 %v1229, %v1167
    %v1231 = vadd.f32 %v1230, %v1168
    %v1232 = vadd.f32 %v1231, %v1169
    %v1233 = vadd.f32 %v1232, %v1170
    %v1234 = vadd.f32 %v1233, %v1171
    %v1235 = vadd.f32 %v1234, %v1172
    %v1236 = vadd.f32 %v1235, %v1173
    %v1237 = vadd.f32 %v1236, %v1174
    %v1238 = vadd.f32 %v1237, %v1175
    %v1239 = vrot.slane %v1238, 4
    %v1240 = vadd.f32 %v1238, %v1239
    %v1241 = vrot.slane %v1240, 2
    %v1242 = vadd.f32 %v1240, %v1241
    %v1243 = vrot.slane %v1242, 1
    %v1244 = vadd.f32 %v1242, %v1243
    %v1245 = vmul.f32 %v1112, %v1112
    %v1246 = vmul.f32 %v1113, %v1113
    %v1247 = vmul.f32 %v1114, %v1114
    %v1248 = vmul.f32 %v1115, %v1115
    %v1249 = vmul.f32 %v1116, %v1116
    %v1250 = vmul.f32 %v1117, %v1117
    %v1251 = vmul.f32 %v1118, %v1118
    %v1252 = vmul.f32 %v1119, %v1119
    %v1253 = vmul.f32 %v1120, %v1120
    %v1254 = vmul.f32 %v1121, %v1121
    %v1255 = vmul.f32 %v1122, %v1122
    %v1256 = vmul.f32 %v1123, %v1123
    %v1257 = vmul.f32 %v1124, %v1124
    %v1258 = vmul.f32 %v1125, %v1125
    %v1259 = vmul.f32 %v1126, %v1126
    %v1260 = vmul.f32 %v1127, %v1127
    %v1261 = vmul.f32 %v1128, %v1128
    %v1262 = vmul.f32 %v1129, %v1129
    %v1263 = vmul.f32 %v1130, %v1130
    %v1264 = vmul.f32 %v1131, %v1131
    %v1265 = vmul.f32 %v1132, %v1132
    %v1266 = vmul.f32 %v1133, %v1133
    %v1267 = vmul.f32 %v1134, %v1134
    %v1268 = vmul.f32 %v1135, %v1135
    %v1269 = vmul.f32 %v1136, %v1136
    %v1270 = vmul.f32 %v1137, %v1137
    %v1271 = vmul.f32 %v1138, %v1138
    %v1272 = vmul.f32 %v1139, %v1139
    %v1273 = vmul.f32 %v1140, %v1140
    %v1274 = vmul.f32 %v1141, %v1141
    %v1275 = vmul.f32 %v1142, %v1142
    %v1276 = vmul.f32 %v1143, %v1143
    %v1277 = vmul.f32 %v1144, %v1144
    %v1278 = vmul.f32 %v1145, %v1145
    %v1279 = vmul.f32 %v1146, %v1146
    %v1280 = vmul.f32 %v1147, %v1147
    %v1281 = vmul.f32 %v1148, %v1148
    %v1282 = vmul.f32 %v1149, %v1149
    %v1283 = vmul.f32 %v1150, %v1150
    %v1284 = vmul.f32 %v1151, %v1151
    %v1285 = vmul.f32 %v1152, %v1152
    %v1286 = vmul.f32 %v1153, %v1153
    %v1287 = vmul.f32 %v1154, %v1154
    %v1288 = vmul.f32 %v1155, %v1155
    %v1289 = vmul.f32 %v1156, %v1156
    %v1290 = vmul.f32 %v1157, %v1157
    %v1291 = vmul.f32 %v1158, %v1158
    %v1292 = vmul.f32 %v1159, %v1159
    %v1293 = vmul.f32 %v1160, %v1160
    %v1294 = vmul.f32 %v1161, %v1161
    %v1295 = vmul.f32 %v1162, %v1162
    %v1296 = vmul.f32 %v1163, %v1163
    %v1297 = vmul.f32 %v1164, %v1164
    %v1298 = vmul.f32 %v1165, %v1165
    %v1299 = vmul.f32 %v1166, %v1166
    %v1300 = vmul.f32 %v1167, %v1167
    %v1301 = vmul.f32 %v1168, %v1168
    %v1302 = vmul.f32 %v1169, %v1169
    %v1303 = vmul.f32 %v1170, %v1170
    %v1304 = vmul.f32 %v1171, %v1171
    %v1305 = vmul.f32 %v1172, %v1172
    %v1306 = vmul.f32 %v1173, %v1173
    %v1307 = vmul.f32 %v1174, %v1174
    %v1308 = vmul.f32 %v1175, %v1175
    %v1309 = vadd.f32 %v1245, %v1246
    %v1310 = vadd.f32 %v1309, %v1247
    %v1311 = vadd.f32 %v1310, %v1248
    %v1312 = vadd.f32 %v1311, %v1249
    %v1313 = vadd.f32 %v1312, %v1250
    %v1314 = vadd.f32 %v1313, %v1251
    %v1315 = vadd.f32 %v1314, %v1252
    %v1316 = vadd.f32 %v1315, %v1253
    %v1317 = vadd.f32 %v1316, %v1254
    %v1318 = vadd.f32 %v1317, %v1255
    %v1319 = vadd.f32 %v1318, %v1256
    %v1320 = vadd.f32 %v1319, %v1257
    %v1321 = vadd.f32 %v1320, %v1258
    %v1322 = vadd.f32 %v1321, %v1259
    %v1323 = vadd.f32 %v1322, %v1260
    %v1324 = vadd.f32 %v1323, %v1261
    %v1325 = vadd.f32 %v1324, %v1262
    %v1326 = vadd.f32 %v1325, %v1263
    %v1327 = vadd.f32 %v1326, %v1264
    %v1328 = vadd.f32 %v1327, %v1265
    %v1329 = vadd.f32 %v1328, %v1266
    %v1330 = vadd.f32 %v1329, %v1267
    %v1331 = vadd.f32 %v1330, %v1268
    %v1332 = vadd.f32 %v1331, %v1269
    %v1333 = vadd.f32 %v1332, %v1270
    %v1334 = vadd.f32 %v1333, %v1271
    %v1335 = vadd.f32 %v1334, %v1272
    %v1336 = vadd.f32 %v1335, %v1273
    %v1337 = vadd.f32 %v1336, %v1274
    %v1338 = vadd.f32 %v1337, %v1275
    %v1339 = vadd.f32 %v1338, %v1276
    %v1340 = vadd.f32 %v1339, %v1277
    %v1341 = vadd.f32 %v1340, %v1278
    %v1342 = vadd.f32 %v1341, %v1279
    %v1343 = vadd.f32 %v1342, %v1280
    %v1344 = vadd.f32 %v1343, %v1281
    %v1345 = vadd.f32 %v1344, %v1282
    %v1346 = vadd.f32 %v1345, %v1283
    %v1347 = vadd.f32 %v1346, %v1284
    %v1348 = vadd.f32 %v1347, %v1285
    %v1349 = vadd.f32 %v1348, %v1286
    %v1350 = vadd.f32 %v1349, %v1287
    %v1351 = vadd.f32 %v1350, %v1288
    %v1352 = vadd.f32 %v1351, %v1289
    %v1353 = vadd.f32 %v1352, %v1290
    %v1354 = vadd.f32 %v1353, %v1291
    %v1355 = vadd.f32 %v1354, %v1292
    %v1356 = vadd.f32 %v1355, %v1293
    %v1357 = vadd.f32 %v1356, %v1294
    %v1358 = vadd.f32 %v1357, %v1295
    %v1359 = vadd.f32 %v1358, %v1296
    %v1360 = vadd.f32 %v1359, %v1297
    %v1361 = vadd.f32 %v1360, %v1298
    %v1362 = vadd.f32 %v1361, %v1299
    %v1363 = vadd.f32 %v1362, %v1300
    %v1364 = vadd.f32 %v1363, %v1301
    %v1365 = vadd.f32 %v1364, %v1302
    %v1366 = vadd.f32 %v1365, %v1303
    %v1367 = vadd.f32 %v1366, %v1304
    %v1368 = vadd.f32 %v1367, %v1305
    %v1369 = vadd.f32 %v1368, %v1306
    %v1370 = vadd.f32 %v1369, %v1307
    %v1371 = vadd.f32 %v1370, %v1308
    %v1372 = vrot.slane %v1371, 4
    %v1373 = vadd.f32 %v1371, %v1372
    %v1374 = vrot.slane %v1373, 2
    %v1375 = vadd.f32 %v1373, %v1374
    %v1376 = vrot.slane %v1375, 1
    %v1377 = vadd.f32 %v1375, %v1376
    %vm1378 = vcmask 1040384
    %v1379 = vsel %vm1378, %v1244, %v1377
    %1380 = vst [vmem:[#allocation11] sm:$0x3] %v1379
    // Predicated region
    $region34: #{bottleneck_forward.6} parent=1 // pred_check
      _
    $region35: #{bottleneck_forward.6} parent=1 // pred_check_branch
      %1382 = sbr.rel (0) target = $region37
    $region36: #{bottleneck_forward.6} parent=1 // pred_region
      %s1384 = ssub.s32 4096, 4096
      %1385 = vsyncadd [#allocation4], %s1384
      %s1386 = sshll.u32 [#allocation10], 4
      %s1387 = int_to_ptr.vmem [resolvable:$true] %s1386
      %1392 = dma.vmem_to_hbm [thread:$0]  %s1387, 4096, %s4, [#allocation4], 64, 64, 4
    $region37: #{bottleneck_forward.6} parent=1 // pred_fallthru
      _
    // Predicated region
    $region38: #{bottleneck_forward.6} parent=1 // pred_check
      _
    $region39: #{bottleneck_forward.6} parent=1 // pred_check_branch
      %1394 = sbr.rel (0) target = $region41
    $region40: #{bottleneck_forward.6} parent=1 // pred_region
      %s1396 = ssub.s32 32, 32
      %1397 = vsyncadd [#allocation12], %s1396
      %s1399 = sshll.u32 [#allocation11], 4
      %s1400 = int_to_ptr.vmem [resolvable:$true] %s1399
      %1402 = dma.vmem_to_hbm [thread:$0]  %s1400, 32, %s5, [#allocation12]
    $region41: #{bottleneck_forward.6} parent=1 // pred_fallthru
      _
    // Predicated region
    $region42: #{bottleneck_forward.6} parent=1 // pred_check
      _
    $region43: #{bottleneck_forward.6} parent=1 // pred_check_branch
      %1404 = sbr.rel (0) target = $region45
    $region44: #{bottleneck_forward.6} parent=1 // pred_region
      %1405 = dma.done [#allocation4], 4096
    $region45: #{bottleneck_forward.6} parent=1 // pred_fallthru
      _
    // Predicated region
    $region46: #{bottleneck_forward.6} parent=1 // pred_check
      _
    $region47: #{bottleneck_forward.6} parent=1 // pred_check_branch
      %1407 = sbr.rel (0) target = $region49
    $region48: #{bottleneck_forward.6} parent=1 // pred_region
      %1408 = dma.done [#allocation12], 32
    $region49: #{bottleneck_forward.6} parent=1 // pred_fallthru
      _
    %1409 = vsyncpa [#allocation3], 1
    %1410 = vsyncpa [#allocation6], 1
    %1411 = vsyncpa [#allocation9], 1
    %1412 = vsyncpa [#allocation4], 1
    %1413 = vsyncpa [#allocation12], 1

// kernel: bottleneck_forward.5
$region0: #{bottleneck_forward.5}
  #allocation0 [shape = 'u32[]', space=smem, size = 0x4, offset = 0x4, fixed_abs, tag = 'smem constant byte address 0x4 - core index']
  #allocation1 [shape = 'u32[144,128]{1,0:T(1,128)}', space=vmem, size = 0x12000, scoped, tag = 'internal scratch']
  #allocation2 [shape = 'bf16[18,18,128]{2,1,0:T(8,128)(2,1)}', space=vmem, size = 0x1b000, scoped, tag = 'scratch operand']
  %s0 = inlined_call_operand.hbm [shape: bf16[2,16,16,128], index: 0, kind: input, shape index: {}]
  %s1 = inlined_call_operand.hbm [shape: f32[1,128], index: 1, kind: input, shape index: {}]
  %s2 = inlined_call_operand.hbm [shape: f32[1,128], index: 2, kind: input, shape index: {}]
  %s3 = inlined_call_operand.hbm [shape: bf16[9,128,128], index: 3, kind: input, shape index: {}]
  %s4 = inlined_call_operand.hbm [shape: bf16[2,16,16,128], index: 4, kind: output, shape index: {0}]
  %s5 = inlined_call_operand.hbm [shape: f32[2,2,128], index: 5, kind: output, shape index: {1}]
  %6 = xla_tuple %s4, %s5
  %s7 = sld [smem:[#allocation0]]
  $region73: #{bottleneck_forward.5} parent=0
    _
  %s9 = ssub.s32 1, %s7
  %s10 = scalar_select 0, %s9, %s7
  $region1: #{bottleneck_forward.5} parent=0
    #allocation3 [shape = 'u8[131072]{0}', space=vmem, size = 0x20000, scoped, tag = 'input window, operand 0']
    #allocation4 [shape = 's32[2]{0}', space=sflag, size = 0x8, scoped, tag = 'scoped memory for bottleneck_forward.5']
    #allocation5 [shape = 's32[2]{0}', space=sflag, size = 0x8, scoped, tag = 'scoped memory for bottleneck_forward.5']
    #allocation6 [shape = 'u8[512]{0}', space=vmem, size = 0x400, scoped, tag = 'input window, operand 1, single buffered']
    #allocation7 [shape = 's32[1]{0}', space=sflag, size = 0x4, scoped, tag = 'scoped memory for bottleneck_forward.5']
    #allocation8 [shape = 'u8[512]{0}', space=vmem, size = 0x400, scoped, tag = 'input window, operand 2, single buffered']
    #allocation9 [shape = 'u8[294912]{0}', space=vmem, size = 0x48000, scoped, tag = 'input window, operand 3, single buffered']
    #allocation10 [shape = 's32[1]{0}', space=sflag, size = 0x4, scoped, tag = 'scoped memory for bottleneck_forward.5']
    #allocation11 [shape = 'u8[131072]{0}', space=vmem, size = 0x20000, scoped, tag = 'output window, operand 0']
    #allocation12 [shape = 'u8[2048]{0}', space=vmem, size = 0x800, scoped, tag = 'output window, operand 1']
    #allocation13 [shape = 's32[2]{0}', space=sflag, size = 0x8, scoped, tag = 'scoped memory for bottleneck_forward.5']
    %11 = vsyncpa [#allocation4], 0
    %s12 = scalar_lea.sflag [#allocation4], 1
    %13 = vsyncpa %s12, 0
    %14 = vsyncpa [#allocation7], 0
    %15 = vsyncpa [#allocation10], 0
    %16 = vsyncpa [#allocation5], 0
    %s17 = scalar_lea.sflag [#allocation5], 1
    %18 = vsyncpa %s17, 0
    %19 = vsyncpa [#allocation13], 0
    %s20 = scalar_lea.sflag [#allocation13], 1
    %21 = vsyncpa %s20, 0
    loop: start=0, step=1, limit=4
    $region2: #{bottleneck_forward.5} parent=1 // loop_pre_header
      _
    $region3: #{bottleneck_forward.5} parent=1 // loop_header
      %s23 = sphi 0, %s27
      %p24 = scmp.ge.s32.totalorder %s23, 4
      %s30 = sphi 0, %s42
      %s31 = sphi 0, %s38
      %s32 = sphi 0, %s30
      %s33 = sphi 0, %s31
      %s34 = sphi 0, %s32
      %s35 = sphi 0, %s33
      %s45 = sphi 0, %s47
      %s48 = sphi 0, %s45
      %s49 = sphi 0, %s48
      %s65 = sphi 0, %s49
      %s69 = sphi 0, %s69
      %s71 = sphi 0, %s69
      %s72 = sphi 0, %s71
      %s86 = sphi 0, %s72
      %s90 = sphi 0, %s90
      %s92 = sphi 0, %s90
      %s93 = sphi 0, %s92
      %s107 = sphi 0, %s93
      %s111 = sphi 0, %s111
      %s113 = sphi 0, %s111
      %s114 = sphi 0, %s113
      %s128 = sphi 0, %s114
      %s136 = sphi 0, %s138
      %s139 = sphi 0, %s136
      %s140 = sphi 0, %s139
      %s156 = sphi 0, %s140
      %s164 = sphi 0, %s166
      %s167 = sphi 0, %s164
      %s168 = sphi 0, %s167
      %s184 = sphi 0, %s168
    $region4: #{bottleneck_forward.5} parent=1 // loop_header_branch
      %26 = sbr.rel (%p24) target = $region8
    $region5: #{bottleneck_forward.5} parent=1 // loop_body
      %s28 = ssub.s32 %s23, 1
      %s29 = ssub.s32 %s23, 2
      %s36 = sadd.s32 1, %s31
      %p37 = scmp.ge.s32.totalorder %s36, 1
      %s38 = scalar_select %p37, 0, %s36
      %s39 = sadd.s32 1, %s30
      %s40 = scalar_select %p37, %s39, %s30
      %p41 = scmp.ge.s32.totalorder %s40, 2
      %s42 = scalar_select %p41, 0, %s40
      %s43 = ssub.s32 %s30, %s42
      %p44 = scmp.eq.s32.totalorder %s43, 0
      %s46 = sadd.s32 %s45, 1
      %s47 = scalar_select %p44, %s45, %s46
      %p50 = pneg %p44
      %p51 = scmp.eq.s32.totalorder %s23, 1
      %p52 = por %p50, %p51
      %p53 = scmp.ne.s32.totalorder %s45, %s48
      %p54 = scmp.eq.s32.totalorder %s23, 0
      %p55 = por %p53, %p54
      %p56 = scmp.ne.s32.totalorder %s45, %s48
      %p57 = scmp.eq.s32.totalorder %s28, 1
      %p58 = por %p56, %p57
      %p59 = scmp.ne.s32.totalorder %s48, %s49
      %p60 = scmp.eq.s32.totalorder %s28, 0
      %p61 = por %p59, %p60
      %p62 = scmp.ne.s32.totalorder %s48, %s49
      %p63 = scmp.eq.s32.totalorder %s29, 1
      %p64 = por %p62, %p63
      %p66 = scmp.ne.s32.totalorder %s49, %s65
      %p67 = scmp.eq.s32.totalorder %s29, 0
      %p68 = por %p66, %p67
      %s70 = sadd.s32 %s69, 1
      %p73 = scmp.eq.s32.totalorder %s23, 1
      %p74 = scmp.ne.s32.totalorder %s69, %s71
      %p75 = scmp.eq.s32.totalorder %s23, 0
      %p76 = por %p74, %p75
      %p77 = scmp.ne.s32.totalorder %s69, %s71
      %p78 = scmp.eq.s32.totalorder %s28, 1
      %p79 = por %p77, %p78
      %p80 = scmp.ne.s32.totalorder %s71, %s72
      %p81 = scmp.eq.s32.totalorder %s28, 0
      %p82 = por %p80, %p81
      %p83 = scmp.ne.s32.totalorder %s71, %s72
      %p84 = scmp.eq.s32.totalorder %s29, 1
      %p85 = por %p83, %p84
      %p87 = scmp.ne.s32.totalorder %s72, %s86
      %p88 = scmp.eq.s32.totalorder %s29, 0
      %p89 = por %p87, %p88
      %s91 = sadd.s32 %s90, 1
      %p94 = scmp.eq.s32.totalorder %s23, 1
      %p95 = scmp.ne.s32.totalorder %s90, %s92
      %p96 = scmp.eq.s32.totalorder %s23, 0
      %p97 = por %p95, %p96
      %p98 = scmp.ne.s32.totalorder %s90, %s92
      %p99 = scmp.eq.s32.totalorder %s28, 1
      %p100 = por %p98, %p99
      %p101 = scmp.ne.s32.totalorder %s92, %s93
      %p102 = scmp.eq.s32.totalorder %s28, 0
      %p103 = por %p101, %p102
      %p104 = scmp.ne.s32.totalorder %s92, %s93
      %p105 = scmp.eq.s32.totalorder %s29, 1
      %p106 = por %p104, %p105
      %p108 = scmp.ne.s32.totalorder %s93, %s107
      %p109 = scmp.eq.s32.totalorder %s29, 0
      %p110 = por %p108, %p109
      %s112 = sadd.s32 %s111, 1
      %p115 = scmp.eq.s32.totalorder %s23, 1
      %p116 = scmp.ne.s32.totalorder %s111, %s113
      %p117 = scmp.eq.s32.totalorder %s23, 0
      %p118 = por %p116, %p117
      %p119 = scmp.ne.s32.totalorder %s111, %s113
      %p120 = scmp.eq.s32.totalorder %s28, 1
      %p121 = por %p119, %p120
      %p122 = scmp.ne.s32.totalorder %s113, %s114
      %p123 = scmp.eq.s32.totalorder %s28, 0
      %p124 = por %p122, %p123
      %p125 = scmp.ne.s32.totalorder %s113, %s114
      %p126 = scmp.eq.s32.totalorder %s29, 1
      %p127 = por %p125, %p126
      %p129 = scmp.ne.s32.totalorder %s114, %s128
      %p130 = scmp.eq.s32.totalorder %s29, 0
      %p131 = por %p129, %p130
      %s132 = ssub.s32 %s30, %s42
      %s133 = ssub.s32 %s31, %s38
      %s134 = sor.u32 %s132, %s133
      %p135 = scmp.eq.s32.totalorder %s134, 0
      %s137 = sadd.s32 %s136, 1
      %s138 = scalar_select %p135, %s136, %s137
      %p141 = pneg %p135
      %p142 = scmp.eq.s32.totalorder %s23, 1
      %p143 = por %p141, %p142
      %p144 = scmp.ne.s32.totalorder %s136, %s139
      %p145 = scmp.eq.s32.totalorder %s23, 0
      %p146 = por %p144, %p145
      %p147 = scmp.ne.s32.totalorder %s136, %s139
      %p148 = scmp.eq.s32.totalorder %s28, 1
      %p149 = por %p147, %p148
      %p150 = scmp.ne.s32.totalorder %s139, %s140
      %p151 = scmp.eq.s32.totalorder %s28, 0
      %p152 = por %p150, %p151
      %p153 = scmp.ne.s32.totalorder %s139, %s140
      %p154 = scmp.eq.s32.totalorder %s29, 1
      %p155 = por %p153, %p154
      %p157 = scmp.ne.s32.totalorder %s140, %s156
      %p158 = scmp.eq.s32.totalorder %s29, 0
      %p159 = por %p157, %p158
      %s160 = sadd.s32 %s30, %s31
      %s161 = sadd.s32 %s42, %s38
      %s162 = ssub.s32 %s160, %s161
      %p163 = scmp.eq.s32.totalorder %s162, 0
      %s165 = sadd.s32 %s164, 1
      %s166 = scalar_select %p163, %s164, %s165
      %p169 = pneg %p163
      %p170 = scmp.eq.s32.totalorder %s23, 1
      %p171 = por %p169, %p170
      %p172 = scmp.ne.s32.totalorder %s164, %s167
      %p173 = scmp.eq.s32.totalorder %s23, 0
      %p174 = por %p172, %p173
      %p175 = scmp.ne.s32.totalorder %s164, %s167
      %p176 = scmp.eq.s32.totalorder %s28, 1
      %p177 = por %p175, %p176
      %p178 = scmp.ne.s32.totalorder %s167, %s168
      %p179 = scmp.eq.s32.totalorder %s28, 0
      %p180 = por %p178, %p179
      %p181 = scmp.ne.s32.totalorder %s167, %s168
      %p182 = scmp.eq.s32.totalorder %s29, 1
      %p183 = por %p181, %p182
      %p185 = scmp.ne.s32.totalorder %s168, %s184
      %p186 = scmp.eq.s32.totalorder %s29, 0
      %p187 = por %p185, %p186
      %p188 = scmp.le.s32.totalorder 1, %s23
      %p189 = scmp.lt.s32.totalorder %s23, 3
      %p190 = pnand %p188, %p189
      %p191 = pneg %p190
      // Predicated region
      $region9: #{bottleneck_forward.5} parent=5 // pred_check
        _
      $region10: #{bottleneck_forward.5} parent=5 // pred_check_branch
        %193 = sbr.rel (%p190) target = $region12
      $region11: #{bottleneck_forward.5} parent=5 // pred_region
        %s194 = ssub.s32 %s23, 1
        // Predicated region
        $region13: #{bottleneck_forward.5} parent=11 // pred_check
          %p195 = pneg %p82
        $region14: #{bottleneck_forward.5} parent=11 // pred_check_branch
          %197 = sbr.rel (%p195) target = $region16
        $region15: #{bottleneck_forward.5} parent=11 // pred_region
          %s199 = ssub.s32 16, 16
          %200 = vsyncadd [#allocation7], %s199
          %s202 = sshll.u32 [#allocation6], 4
          %s203 = int_to_ptr.vmem [resolvable:$true] %s202
          %205 = dma.hbm_to_vmem [thread:$0]  %s1, 16, %s203, [#allocation7]
        $region16: #{bottleneck_forward.5} parent=11 // pred_fallthru
          _
        // Predicated region
        $region17: #{bottleneck_forward.5} parent=11 // pred_check
          %p206 = pneg %p103
        $region18: #{bottleneck_forward.5} parent=11 // pred_check_branch
          %208 = sbr.rel (%p206) target = $region20
        $region19: #{bottleneck_forward.5} parent=11 // pred_region
          %s210 = ssub.s32 16, 16
          %211 = vsyncadd [#allocation7], %s210
          %s213 = sshll.u32 [#allocation8], 4
          %s214 = int_to_ptr.vmem [resolvable:$true] %s213
          %216 = dma.hbm_to_vmem [thread:$0]  %s2, 16, %s214, [#allocation7]
        $region20: #{bottleneck_forward.5} parent=11 // pred_fallthru
          _
        // Predicated region
        $region21: #{bottleneck_forward.5} parent=11 // pred_check
          %p217 = pneg %p124
        $region22: #{bottleneck_forward.5} parent=11 // pred_check_branch
          %219 = sbr.rel (%p217) target = $region24
        $region23: #{bottleneck_forward.5} parent=11 // pred_region
          %s221 = ssub.s32 9216, 9216
          %222 = vsyncadd [#allocation10], %s221
          %s223 = sshll.u32 [#allocation9], 4
          %s224 = int_to_ptr.vmem [resolvable:$true] %s223
          %229 = dma.hbm_to_vmem [thread:$0]  %s3, 9216, %s224, [#allocation10], 64, 64, 4
        $region24: #{bottleneck_forward.5} parent=11 // pred_fallthru
          _
      $region12: #{bottleneck_forward.5} parent=5 // pred_fallthru
        _
      %p230 = scmp.lt.s32.totalorder %s23, 2
      // Predicated region
      $region25: #{bottleneck_forward.5} parent=5 // pred_check
        %p231 = pneg %p230
      $region26: #{bottleneck_forward.5} parent=5 // pred_check_branch
        %233 = sbr.rel (%p231) target = $region28
      $region27: #{bottleneck_forward.5} parent=5 // pred_region
        // Predicated region
        $region29: #{bottleneck_forward.5} parent=27 // pred_check
          %p234 = pneg %p55
        $region30: #{bottleneck_forward.5} parent=27 // pred_check_branch
          %236 = sbr.rel (%p234) target = $region32
        $region31: #{bottleneck_forward.5} parent=27 // pred_region
          %s237 = sand.u32 %s45, 1
          %s238 = scalar_lea.sflag [#allocation4], %s237
          %s239 = sand.u32 %s45, 1
          %s240 = smul.addr %s239, 128
          %s241 = scalar_lea.vmem [#allocation3], %s240
          %s243 = ssub.s32 2048, 2048
          %244 = vsyncadd %s238, %s243
          %s245 = smul.addr %s30, 32
          %s246 = smul.addr %s245, 64
          %s247 = scalar_lea.hbm %s0, %s246
          %s248 = sshll.u32 %s241, 4
          %s249 = int_to_ptr.vmem [resolvable:$true] %s248
          %254 = dma.hbm_to_vmem [thread:$0]  %s247, 2048, %s249, %s238, 64, 64, 4
        $region32: #{bottleneck_forward.5} parent=27 // pred_fallthru
          _
      $region28: #{bottleneck_forward.5} parent=5 // pred_fallthru
        _
      %p255 = scmp.le.s32.totalorder 1, %s23
      %p256 = scmp.lt.s32.totalorder %s23, 3
      %p257 = pnand %p255, %p256
      %p258 = pneg %p257
      // Predicated region
      $region33: #{bottleneck_forward.5} parent=5 // pred_check
        _
      $region34: #{bottleneck_forward.5} parent=5 // pred_check_branch
        %260 = sbr.rel (%p257) target = $region36
      $region35: #{bottleneck_forward.5} parent=5 // pred_region
        %s261 = ssub.s32 %s23, 1
        %s262 = sand.u32 %s48, 1
        %s263 = scalar_lea.sflag [#allocation4], %s262
        %s264 = sand.u32 %s48, 1
        %s265 = smul.addr %s264, 128
        %s266 = scalar_lea.vmem [#allocation3], %s265
        // Predicated region
        $region37: #{bottleneck_forward.5} parent=35 // pred_check
          %p267 = pneg %p61
        $region38: #{bottleneck_forward.5} parent=35 // pred_check_branch
          %269 = sbr.rel (%p267) target = $region40
        $region39: #{bottleneck_forward.5} parent=35 // pred_region
          %270 = dma.done %s263, 2048
        $region40: #{bottleneck_forward.5} parent=35 // pred_fallthru
          _
        // Predicated region
        $region41: #{bottleneck_forward.5} parent=35 // pred_check
          %p271 = pneg %p82
        $region42: #{bottleneck_forward.5} parent=35 // pred_check_branch
          %273 = sbr.rel (%p271) target = $region44
        $region43: #{bottleneck_forward.5} parent=35 // pred_region
          %274 = dma.done [#allocation7], 16
        $region44: #{bottleneck_forward.5} parent=35 // pred_fallthru
          _
        // Predicated region
        $region45: #{bottleneck_forward.5} parent=35 // pred_check
          %p275 = pneg %p103
        $region46: #{bottleneck_forward.5} parent=35 // pred_check_branch
          %277 = sbr.rel (%p275) target = $region48
        $region47: #{bottleneck_forward.5} parent=35 // pred_region
          %278 = dma.done [#allocation7], 16
        $region48: #{bottleneck_forward.5} parent=35 // pred_fallthru
          _
        // Predicated region
        $region49: #{bottleneck_forward.5} parent=35 // pred_check
          %p279 = pneg %p124
        $region50: #{bottleneck_forward.5} parent=35 // pred_check_branch
          %281 = sbr.rel (%p279) target = $region52
        $region51: #{bottleneck_forward.5} parent=35 // pred_region
          %282 = dma.done [#allocation10], 9216
        $region52: #{bottleneck_forward.5} parent=35 // pred_fallthru
          _
        %s283 = sand.u32 %s48, 1
        %s284 = scalar_lea.sflag [#allocation4], %s283
        %s285 = sand.u32 %s48, 1
        %s286 = smul.addr %s285, 128
        %s287 = scalar_lea.vmem [#allocation3], %s286
        %p288 = pneg %p61
        %p289 = pneg %p58
        %p290 = pneg %p82
        %p291 = pneg %p79
        %p292 = pneg %p103
        %p293 = pneg %p100
        %p294 = pneg %p124
        %p295 = pneg %p121
        %p296 = pneg %p152
        %p297 = pneg %p149
        %s298 = sand.u32 %s139, 1
        %s299 = scalar_lea.sflag [#allocation5], %s298
        %s300 = sand.u32 %s139, 1
        %s301 = smul.addr %s300, 128
        %s302 = scalar_lea.vmem [#allocation11], %s301
        %p303 = pneg %p180
        %p304 = pneg %p177
        %s305 = sand.u32 %s167, 1
        %s306 = scalar_lea.sflag [#allocation13], %s305
        %s307 = sand.u32 %s167, 1
        %s308 = smul.addr %s307, 2
        %s309 = scalar_lea.vmem [#allocation12], %s308
        %s310 = smul.u32 16, %s33
        %s311 = sadd.s32 %s32, %s33
        %s313 = smul.u32 %s33, 16
        %v314 = vld [vmem:[#allocation6] sm:$0x1]
        %v315 = vld [vmem:[#allocation8] sm:$0x1]
        %316 = vst [vmem:[#allocation2] sm:$0xf] 0
        %317 = vst [vmem:[#allocation2 + $0x4] sm:$0xf] 0
        %318 = vst [vmem:[#allocation2 + $0x8] sm:$0x1] 0
        %319 = vst [vmem:[#allocation2 + $0xc] sm:$0xf] 0
        %320 = vst [vmem:[#allocation2 + $0x10] sm:$0xf] 0
        %321 = vst [vmem:[#allocation2 + $0x14] sm:$0x1] 0
        %322 = vst [vmem:[#allocation2 + $0x18] sm:$0xf] 0
        %323 = vst [vmem:[#allocation2 + $0x1c] sm:$0xf] 0
        %324 = vst [vmem:[#allocation2 + $0x20] sm:$0x1] 0
        %325 = vst [vmem:[#allocation2 + $0x24] sm:$0xf] 0
        %326 = vst [vmem:[#allocation2 + $0x28] sm:$0xf] 0
        %327 = vst [vmem:[#allocation2 + $0x2c] sm:$0x1] 0
        %328 = vst [vmem:[#allocation2 + $0x30] sm:$0xf] 0
        %329 = vst [vmem:[#allocation2 + $0x34] sm:$0xf] 0
        %330 = vst [vmem:[#allocation2 + $0x38] sm:$0x1] 0
        %331 = vst [vmem:[#allocation2 + $0x3c] sm:$0xf] 0
        %332 = vst [vmem:[#allocation2 + $0x40] sm:$0xf] 0
        %333 = vst [vmem:[#allocation2 + $0x44] sm:$0x1] 0
        %334 = vst [vmem:[#allocation2 + $0x48] sm:$0xf] 0
        %335 = vst [vmem:[#allocation2 + $0x4c] sm:$0xf] 0
        %336 = vst [vmem:[#allocation2 + $0x50] sm:$0x1] 0
        %337 = vst [vmem:[#allocation2 + $0x54] sm:$0xf] 0
        %338 = vst [vmem:[#allocation2 + $0x58] sm:$0xf] 0
        %339 = vst [vmem:[#allocation2 + $0x5c] sm:$0x1] 0
        %340 = vst [vmem:[#allocation2 + $0x60] sm:$0xf] 0
        %341 = vst [vmem:[#allocation2 + $0x64] sm:$0xf] 0
        %342 = vst [vmem:[#allocation2 + $0x68] sm:$0x1] 0
        %343 = vst [vmem:[#allocation2 + $0x6c] sm:$0xf] 0
        %344 = vst [vmem:[#allocation2 + $0x70] sm:$0xf] 0
        %345 = vst [vmem:[#allocation2 + $0x74] sm:$0x1] 0
        %346 = vst [vmem:[#allocation2 + $0x78] sm:$0xf] 0
        %347 = vst [vmem:[#allocation2 + $0x7c] sm:$0xf] 0
        %348 = vst [vmem:[#allocation2 + $0x80] sm:$0x1] 0
        %349 = vst [vmem:[#allocation2 + $0x84] sm:$0xf] 0
        %350 = vst [vmem:[#allocation2 + $0x88] sm:$0xf] 0
        %351 = vst [vmem:[#allocation2 + $0x8c] sm:$0x1] 0
        %352 = vst [vmem:[#allocation2 + $0x90] sm:$0xf] 0
        %353 = vst [vmem:[#allocation2 + $0x94] sm:$0xf] 0
        %354 = vst [vmem:[#allocation2 + $0x98] sm:$0x1] 0
        %355 = vst [vmem:[#allocation2 + $0x9c] sm:$0xf] 0
        %356 = vst [vmem:[#allocation2 + $0xa0] sm:$0xf] 0
        %357 = vst [vmem:[#allocation2 + $0xa4] sm:$0x1] 0
        %358 = vst [vmem:[#allocation2 + $0xa8] sm:$0xf] 0
        %359 = vst [vmem:[#allocation2 + $0xac] sm:$0xf] 0
        %360 = vst [vmem:[#allocation2 + $0xb0] sm:$0x1] 0
        %361 = vst [vmem:[#allocation2 + $0xb4] sm:$0xf] 0
        %362 = vst [vmem:[#allocation2 + $0xb8] sm:$0xf] 0
        %363 = vst [vmem:[#allocation2 + $0xbc] sm:$0x1] 0
        %364 = vst [vmem:[#allocation2 + $0xc0] sm:$0xf] 0
        %365 = vst [vmem:[#allocation2 + $0xc4] sm:$0xf] 0
        %366 = vst [vmem:[#allocation2 + $0xc8] sm:$0x1] 0
        %367 = vst [vmem:[#allocation2 + $0xcc] sm:$0xf] 0
        %368 = vst [vmem:[#allocation2 + $0xd0] sm:$0xf] 0
        %369 = vst [vmem:[#allocation2 + $0xd4] sm:$0x1] 0
        %s370 = smul.u32 %s313, 2
        %s371 = smul.addr %s370, 4
        %s372 = scalar_lea.vmem %s266, %s371 [#allocation3]
        %v373 = vld [vmem:[%s372] sm:$0xf]
        %v374 = vld [vmem:[%s372 + $0x4] sm:$0xf]
        %v375 = vld [vmem:[%s372 + $0x8] sm:$0xf]
        %v376 = vld [vmem:[%s372 + $0xc] sm:$0xf]
        %v377 = vld [vmem:[%s372 + $0x10] sm:$0xf]
        %v378 = vld [vmem:[%s372 + $0x14] sm:$0xf]
        %v379 = vld [vmem:[%s372 + $0x18] sm:$0xf]
        %v380 = vld [vmem:[%s372 + $0x1c] sm:$0xf]
        %v381 = vld [vmem:[%s372 + $0x20] sm:$0xf]
        %v382 = vld [vmem:[%s372 + $0x24] sm:$0xf]
        %v383 = vld [vmem:[%s372 + $0x28] sm:$0xf]
        %v384 = vld [vmem:[%s372 + $0x2c] sm:$0xf]
        %v385 = vld [vmem:[%s372 + $0x30] sm:$0xf]
        %v386 = vld [vmem:[%s372 + $0x34] sm:$0xf]
        %v387 = vld [vmem:[%s372 + $0x38] sm:$0xf]
        %v388 = vld [vmem:[%s372 + $0x3c] sm:$0xf]
        %v389 = vld [vmem:[%s372 + $0x40] sm:$0xf]
        %v390 = vld [vmem:[%s372 + $0x44] sm:$0xf]
        %v391 = vld [vmem:[%s372 + $0x48] sm:$0xf]
        %v392 = vld [vmem:[%s372 + $0x4c] sm:$0xf]
        %v393 = vld [vmem:[%s372 + $0x50] sm:$0xf]
        %v394 = vld [vmem:[%s372 + $0x54] sm:$0xf]
        %v395 = vld [vmem:[%s372 + $0x58] sm:$0xf]
        %v396 = vld [vmem:[%s372 + $0x5c] sm:$0xf]
        %v397 = vld [vmem:[%s372 + $0x60] sm:$0xf]
        %v398 = vld [vmem:[%s372 + $0x64] sm:$0xf]
        %v399 = vld [vmem:[%s372 + $0x68] sm:$0xf]
        %v400 = vld [vmem:[%s372 + $0x6c] sm:$0xf]
        %v401 = vld [vmem:[%s372 + $0x70] sm:$0xf]
        %v402 = vld [vmem:[%s372 + $0x74] sm:$0xf]
        %v403 = vld [vmem:[%s372 + $0x78] sm:$0xf]
        %v404 = vld [vmem:[%s372 + $0x7c] sm:$0xf]
        %v405 = vunpack.c.l.bf16 %v373
        %v406 = vunpack.c.l.bf16 %v374
        %v407 = vunpack.c.l.bf16 %v375
        %v408 = vunpack.c.l.bf16 %v376
        %v409 = vunpack.c.l.bf16 %v377
        %v410 = vunpack.c.l.bf16 %v378
        %v411 = vunpack.c.l.bf16 %v379
        %v412 = vunpack.c.l.bf16 %v380
        %v413 = vunpack.c.l.bf16 %v381
        %v414 = vunpack.c.l.bf16 %v382
        %v415 = vunpack.c.l.bf16 %v383
        %v416 = vunpack.c.l.bf16 %v384
        %v417 = vunpack.c.l.bf16 %v385
        %v418 = vunpack.c.l.bf16 %v386
        %v419 = vunpack.c.l.bf16 %v387
        %v420 = vunpack.c.l.bf16 %v388
        %v421 = vunpack.c.l.bf16 %v389
        %v422 = vunpack.c.l.bf16 %v390
        %v423 = vunpack.c.l.bf16 %v391
        %v424 = vunpack.c.l.bf16 %v392
        %v425 = vunpack.c.l.bf16 %v393
        %v426 = vunpack.c.l.bf16 %v394
        %v427 = vunpack.c.l.bf16 %v395
        %v428 = vunpack.c.l.bf16 %v396
        %v429 = vunpack.c.l.bf16 %v397
        %v430 = vunpack.c.l.bf16 %v398
        %v431 = vunpack.c.l.bf16 %v399
        %v432 = vunpack.c.l.bf16 %v400
        %v433 = vunpack.c.l.bf16 %v401
        %v434 = vunpack.c.l.bf16 %v402
        %v435 = vunpack.c.l.bf16 %v403
        %v436 = vunpack.c.l.bf16 %v404
        %v438 = vlaneseq
        %v439 = vshrl.u32 %v438, 7
        %v440 = vsub.s32 0, %v439
        %v441 = vrot.slane %v314, %v440
        %v443 = vmul.f32 %v405, %v441
        %v444 = vmul.f32 %v406, %v441
        %v445 = vmul.f32 %v407, %v441
        %v446 = vmul.f32 %v408, %v441
        %v447 = vmul.f32 %v409, %v441
        %v448 = vmul.f32 %v410, %v441
        %v449 = vmul.f32 %v411, %v441
        %v450 = vmul.f32 %v412, %v441
        %v451 = vmul.f32 %v413, %v441
        %v452 = vmul.f32 %v414, %v441
        %v453 = vmul.f32 %v415, %v441
        %v454 = vmul.f32 %v416, %v441
        %v455 = vmul.f32 %v417, %v441
        %v456 = vmul.f32 %v418, %v441
        %v457 = vmul.f32 %v419, %v441
        %v458 = vmul.f32 %v420, %v441
        %v459 = vmul.f32 %v421, %v441
        %v460 = vmul.f32 %v422, %v441
        %v461 = vmul.f32 %v423, %v441
        %v462 = vmul.f32 %v424, %v441
        %v463 = vmul.f32 %v425, %v441
        %v464 = vmul.f32 %v426, %v441
        %v465 = vmul.f32 %v427, %v441
        %v466 = vmul.f32 %v428, %v441
        %v467 = vmul.f32 %v429, %v441
        %v468 = vmul.f32 %v430, %v441
        %v469 = vmul.f32 %v431, %v441
        %v470 = vmul.f32 %v432, %v441
        %v471 = vmul.f32 %v433, %v441
        %v472 = vmul.f32 %v434, %v441
        %v473 = vmul.f32 %v435, %v441
        %v474 = vmul.f32 %v436, %v441
        %v476 = vlaneseq
        %v477 = vshrl.u32 %v476, 7
        %v478 = vsub.s32 0, %v477
        %v479 = vrot.slane %v315, %v478
        %v481 = vadd.f32 %v443, %v479
        %v482 = vadd.f32 %v444, %v479
        %v483 = vadd.f32 %v445, %v479
        %v484 = vadd.f32 %v446, %v479
        %v485 = vadd.f32 %v447, %v479
        %v486 = vadd.f32 %v448, %v479
        %v487 = vadd.f32 %v449, %v479
        %v488 = vadd.f32 %v450, %v479
        %v489 = vadd.f32 %v451, %v479
        %v490 = vadd.f32 %v452, %v479
        %v491 = vadd.f32 %v453, %v479
        %v492 = vadd.f32 %v454, %v479
        %v493 = vadd.f32 %v455, %v479
        %v494 = vadd.f32 %v456, %v479
        %v495 = vadd.f32 %v457, %v479
        %v496 = vadd.f32 %v458, %v479
        %v497 = vadd.f32 %v459, %v479
        %v498 = vadd.f32 %v460, %v479
        %v499 = vadd.f32 %v461, %v479
        %v500 = vadd.f32 %v462, %v479
        %v501 = vadd.f32 %v463, %v479
        %v502 = vadd.f32 %v464, %v479
        %v503 = vadd.f32 %v465, %v479
        %v504 = vadd.f32 %v466, %v479
        %v505 = vadd.f32 %v467, %v479
        %v506 = vadd.f32 %v468, %v479
        %v507 = vadd.f32 %v469, %v479
        %v508 = vadd.f32 %v470, %v479
        %v509 = vadd.f32 %v471, %v479
        %v510 = vadd.f32 %v472, %v479
        %v511 = vadd.f32 %v473, %v479
        %v512 = vadd.f32 %v474, %v479
        %v513 = vmax.f32 %v481, 0.0
        %v514 = vmax.f32 %v482, 0.0
        %v515 = vmax.f32 %v483, 0.0
        %v516 = vmax.f32 %v484, 0.0
        %v517 = vmax.f32 %v485, 0.0
        %v518 = vmax.f32 %v486, 0.0
        %v519 = vmax.f32 %v487, 0.0
        %v520 = vmax.f32 %v488, 0.0
        %v521 = vmax.f32 %v489, 0.0
        %v522 = vmax.f32 %v490, 0.0
        %v523 = vmax.f32 %v491, 0.0
        %v524 = vmax.f32 %v492, 0.0
        %v525 = vmax.f32 %v493, 0.0
        %v526 = vmax.f32 %v494, 0.0
        %v527 = vmax.f32 %v495, 0.0
        %v528 = vmax.f32 %v496, 0.0
        %v529 = vmax.f32 %v497, 0.0
        %v530 = vmax.f32 %v498, 0.0
        %v531 = vmax.f32 %v499, 0.0
        %v532 = vmax.f32 %v500, 0.0
        %v533 = vmax.f32 %v501, 0.0
        %v534 = vmax.f32 %v502, 0.0
        %v535 = vmax.f32 %v503, 0.0
        %v536 = vmax.f32 %v504, 0.0
        %v537 = vmax.f32 %v505, 0.0
        %v538 = vmax.f32 %v506, 0.0
        %v539 = vmax.f32 %v507, 0.0
        %v540 = vmax.f32 %v508, 0.0
        %v541 = vmax.f32 %v509, 0.0
        %v542 = vmax.f32 %v510, 0.0
        %v543 = vmax.f32 %v511, 0.0
        %v544 = vmax.f32 %v512, 0.0
        %v545 = vpack.c.bf16 %v514, %v513
        %v546 = vpack.c.bf16 %v516, %v515
        %v547 = vpack.c.bf16 %v518, %v517
        %v548 = vpack.c.bf16 %v520, %v519
        %v549 = vpack.c.bf16 %v522, %v521
        %v550 = vpack.c.bf16 %v524, %v523
        %v551 = vpack.c.bf16 %v526, %v525
        %v552 = vpack.c.bf16 %v528, %v527
        %v553 = vpack.c.bf16 %v530, %v529
        %v554 = vpack.c.bf16 %v532, %v531
        %v555 = vpack.c.bf16 %v534, %v533
        %v556 = vpack.c.bf16 %v536, %v535
        %v557 = vpack.c.bf16 %v538, %v537
        %v558 = vpack.c.bf16 %v540, %v539
        %v559 = vpack.c.bf16 %v542, %v541
        %v560 = vpack.c.bf16 %v544, %v543
        %v577 = vunpack.c.l.b16 %v545
        %v578 = vunpack.c.h.b16 %v545
        %v579 = vunpack.c.l.b16 %v546
        %v580 = vunpack.c.h.b16 %v546
        %v581 = vunpack.c.l.b16 %v547
        %v582 = vunpack.c.h.b16 %v547
        %v583 = vunpack.c.l.b16 %v548
        %v584 = vunpack.c.h.b16 %v548
        %v585 = vunpack.c.l.b16 %v549
        %v586 = vunpack.c.h.b16 %v549
        %v587 = vunpack.c.l.b16 %v550
        %v588 = vunpack.c.h.b16 %v550
        %v589 = vunpack.c.l.b16 %v551
        %v590 = vunpack.c.h.b16 %v551
        %v591 = vunpack.c.l.b16 %v552
        %v592 = vunpack.c.h.b16 %v552
        %v593 = vunpack.c.l.b16 %v553
        %v594 = vunpack.c.h.b16 %v553
        %v595 = vunpack.c.l.b16 %v554
        %v596 = vunpack.c.h.b16 %v554
        %v597 = vunpack.c.l.b16 %v555
        %v598 = vunpack.c.h.b16 %v555
        %v599 = vunpack.c.l.b16 %v556
        %v600 = vunpack.c.h.b16 %v556
        %v601 = vunpack.c.l.b16 %v557
        %v602 = vunpack.c.h.b16 %v557
        %v603 = vunpack.c.l.b16 %v558
        %v604 = vunpack.c.h.b16 %v558
        %v605 = vunpack.c.l.b16 %v559
        %v606 = vunpack.c.h.b16 %v559
        %v607 = vunpack.c.l.b16 %v560
        %v608 = vunpack.c.h.b16 %v560
        %v609 = vpack.c.b16 %v577, %v577
        %v610 = vpack.c.b16 %v578, %v578
        %v611 = vpack.c.b16 %v579, %v579
        %v612 = vpack.c.b16 %v580, %v580
        %v613 = vpack.c.b16 %v581, %v581
        %v614 = vpack.c.b16 %v582, %v582
        %v615 = vpack.c.b16 %v583, %v583
        %v616 = vpack.c.b16 %v584, %v584
        %v617 = vpack.c.b16 %v585, %v585
        %v618 = vpack.c.b16 %v586, %v586
        %v619 = vpack.c.b16 %v587, %v587
        %v620 = vpack.c.b16 %v588, %v588
        %v621 = vpack.c.b16 %v589, %v589
        %v622 = vpack.c.b16 %v590, %v590
        %v623 = vpack.c.b16 %v591, %v591
        %v624 = vpack.c.b16 %v592, %v592
        %v625 = vpack.c.b16 %v593, %v593
        %v626 = vpack.c.b16 %v594, %v594
        %v627 = vpack.c.b16 %v595, %v595
        %v628 = vpack.c.b16 %v596, %v596
        %v629 = vpack.c.b16 %v597, %v597
        %v630 = vpack.c.b16 %v598, %v598
        %v631 = vpack.c.b16 %v599, %v599
        %v632 = vpack.c.b16 %v600, %v600
        %v633 = vpack.c.b16 %v601, %v601
        %v634 = vpack.c.b16 %v602, %v602
        %v635 = vpack.c.b16 %v603, %v603
        %v636 = vpack.c.b16 %v604, %v604
        %v637 = vpack.c.b16 %v605, %v605
        %v638 = vpack.c.b16 %v606, %v606
        %v639 = vpack.c.b16 %v607, %v607
        %v640 = vpack.c.b16 %v608, %v608
        %vm641 = vsmask.f32 256
        %vm642 = vsmask.f32 4368
        %vm643 = vmor %vm641, %vm642
        %v645 = vshrl.u32 %v609, 16
        %v647 = vrot.slane %v645, 7
        %v648 = vshll.u32 %v609, 16
        %v650 = vor.u32 %v647, %v648
        %v651 = vrot.slane %v647, 4
        %v653 = vshrl.u32 %v610, 16
        %v655 = vrot.slane %v653, 7
        %v656 = vshll.u32 %v610, 16
        %v658 = vor.u32 %v655, %v656
        %v659 = vsel %vm643, %v651, %v658
        %v660 = vrot.slane %v655, 4
        %v662 = vshrl.u32 %v611, 16
        %v664 = vrot.slane %v662, 7
        %v665 = vshll.u32 %v611, 16
        %v667 = vor.u32 %v664, %v665
        %v668 = vrot.slane %v664, 4
        %v670 = vshrl.u32 %v612, 16
        %v672 = vrot.slane %v670, 7
        %v673 = vshll.u32 %v612, 16
        %v675 = vor.u32 %v672, %v673
        %v676 = vsel %vm643, %v668, %v675
        %v677 = vrot.slane %v672, 4
        %v679 = vshrl.u32 %v613, 16
        %v681 = vrot.slane %v679, 7
        %v682 = vshll.u32 %v613, 16
        %v684 = vor.u32 %v681, %v682
        %v685 = vrot.slane %v681, 4
        %v687 = vshrl.u32 %v614, 16
        %v689 = vrot.slane %v687, 7
        %v690 = vshll.u32 %v614, 16
        %v692 = vor.u32 %v689, %v690
        %v693 = vsel %vm643, %v685, %v692
        %v694 = vrot.slane %v689, 4
        %v696 = vshrl.u32 %v615, 16
        %v698 = vrot.slane %v696, 7
        %v699 = vshll.u32 %v615, 16
        %v701 = vor.u32 %v698, %v699
        %v702 = vrot.slane %v698, 4
        %v704 = vshrl.u32 %v616, 16
        %v706 = vrot.slane %v704, 7
        %v707 = vshll.u32 %v616, 16
        %v709 = vor.u32 %v706, %v707
        %v710 = vsel %vm643, %v702, %v709
        %v711 = vrot.slane %v706, 4
        %v713 = vshrl.u32 %v617, 16
        %v715 = vrot.slane %v713, 7
        %v716 = vshll.u32 %v617, 16
        %v718 = vor.u32 %v715, %v716
        %v719 = vrot.slane %v715, 4
        %v721 = vshrl.u32 %v618, 16
        %v723 = vrot.slane %v721, 7
        %v724 = vshll.u32 %v618, 16
        %v726 = vor.u32 %v723, %v724
        %v727 = vsel %vm643, %v719, %v726
        %v728 = vrot.slane %v723, 4
        %v730 = vshrl.u32 %v619, 16
        %v732 = vrot.slane %v730, 7
        %v733 = vshll.u32 %v619, 16
        %v735 = vor.u32 %v732, %v733
        %v736 = vrot.slane %v732, 4
        %v738 = vshrl.u32 %v620, 16
        %v740 = vrot.slane %v738, 7
        %v741 = vshll.u32 %v620, 16
        %v743 = vor.u32 %v740, %v741
        %v744 = vsel %vm643, %v736, %v743
        %v745 = vrot.slane %v740, 4
        %v747 = vshrl.u32 %v621, 16
        %v749 = vrot.slane %v747, 7
        %v750 = vshll.u32 %v621, 16
        %v752 = vor.u32 %v749, %v750
        %v753 = vrot.slane %v749, 4
        %v755 = vshrl.u32 %v622, 16
        %v757 = vrot.slane %v755, 7
        %v758 = vshll.u32 %v622, 16
        %v760 = vor.u32 %v757, %v758
        %v761 = vsel %vm643, %v753, %v760
        %v762 = vrot.slane %v757, 4
        %v764 = vshrl.u32 %v623, 16
        %v766 = vrot.slane %v764, 7
        %v767 = vshll.u32 %v623, 16
        %v769 = vor.u32 %v766, %v767
        %v770 = vrot.slane %v766, 4
        %v772 = vshrl.u32 %v624, 16
        %v774 = vrot.slane %v772, 7
        %v775 = vshll.u32 %v624, 16
        %v777 = vor.u32 %v774, %v775
        %v778 = vsel %vm643, %v770, %v777
        %v779 = vrot.slane %v774, 4
        %v781 = vshrl.u32 %v625, 16
        %v783 = vrot.slane %v781, 7
        %v784 = vshll.u32 %v625, 16
        %v786 = vor.u32 %v783, %v784
        %v787 = vrot.slane %v783, 4
        %v789 = vshrl.u32 %v626, 16
        %v791 = vrot.slane %v789, 7
        %v792 = vshll.u32 %v626, 16
        %v794 = vor.u32 %v791, %v792
        %v795 = vsel %vm643, %v787, %v794
        %v796 = vrot.slane %v791, 4
        %v798 = vshrl.u32 %v627, 16
        %v800 = vrot.slane %v798, 7
        %v801 = vshll.u32 %v627, 16
        %v803 = vor.u32 %v800, %v801
        %v804 = vrot.slane %v800, 4
        %v806 = vshrl.u32 %v628, 16
        %v808 = vrot.slane %v806, 7
        %v809 = vshll.u32 %v628, 16
        %v811 = vor.u32 %v808, %v809
        %v812 = vsel %vm643, %v804, %v811
        %v813 = vrot.slane %v808, 4
        %v815 = vshrl.u32 %v629, 16
        %v817 = vrot.slane %v815, 7
        %v818 = vshll.u32 %v629, 16
        %v820 = vor.u32 %v817, %v818
        %v821 = vrot.slane %v817, 4
        %v823 = vshrl.u32 %v630, 16
        %v825 = vrot.slane %v823, 7
        %v826 = vshll.u32 %v630, 16
        %v828 = vor.u32 %v825, %v826
        %v829 = vsel %vm643, %v821, %v828
        %v830 = vrot.slane %v825, 4
        %v832 = vshrl.u32 %v631, 16
        %v834 = vrot.slane %v832, 7
        %v835 = vshll.u32 %v631, 16
        %v837 = vor.u32 %v834, %v835
        %v838 = vrot.slane %v834, 4
        %v840 = vshrl.u32 %v632, 16
        %v842 = vrot.slane %v840, 7
        %v843 = vshll.u32 %v632, 16
        %v845 = vor.u32 %v842, %v843
        %v846 = vsel %vm643, %v838, %v845
        %v847 = vrot.slane %v842, 4
        %v849 = vshrl.u32 %v633, 16
        %v851 = vrot.slane %v849, 7
        %v852 = vshll.u32 %v633, 16
        %v854 = vor.u32 %v851, %v852
        %v855 = vrot.slane %v851, 4
        %v857 = vshrl.u32 %v634, 16
        %v859 = vrot.slane %v857, 7
        %v860 = vshll.u32 %v634, 16
        %v862 = vor.u32 %v859, %v860
        %v863 = vsel %vm643, %v855, %v862
        %v864 = vrot.slane %v859, 4
        %v866 = vshrl.u32 %v635, 16
        %v868 = vrot.slane %v866, 7
        %v869 = vshll.u32 %v635, 16
        %v871 = vor.u32 %v868, %v869
        %v872 = vrot.slane %v868, 4
        %v874 = vshrl.u32 %v636, 16
        %v876 = vrot.slane %v874, 7
        %v877 = vshll.u32 %v636, 16
        %v879 = vor.u32 %v876, %v877
        %v880 = vsel %vm643, %v872, %v879
        %v881 = vrot.slane %v876, 4
        %v883 = vshrl.u32 %v637, 16
        %v885 = vrot.slane %v883, 7
        %v886 = vshll.u32 %v637, 16
        %v888 = vor.u32 %v885, %v886
        %v889 = vrot.slane %v885, 4
        %v891 = vshrl.u32 %v638, 16
        %v893 = vrot.slane %v891, 7
        %v894 = vshll.u32 %v638, 16
        %v896 = vor.u32 %v893, %v894
        %v897 = vsel %vm643, %v889, %v896
        %v898 = vrot.slane %v893, 4
        %v900 = vshrl.u32 %v639, 16
        %v902 = vrot.slane %v900, 7
        %v903 = vshll.u32 %v639, 16
        %v905 = vor.u32 %v902, %v903
        %v906 = vrot.slane %v902, 4
        %v908 = vshrl.u32 %v640, 16
        %v910 = vrot.slane %v908, 7
        %v911 = vshll.u32 %v640, 16
        %v913 = vor.u32 %v910, %v911
        %v914 = vsel %vm643, %v906, %v913
        %v915 = vrot.slane %v910, 4
        %s964 = scalar_lea.vmem [#allocation2], 12
        %vm965 = vcmask 1043456
        %vm966 = vsmask.f32 7938
        %vm967 = vmand %vm965, %vm966
        %v968 = vld [vmem:[%s964] sm:$0xf]
        %v969 = vsel %vm967, %v650, %v968
        %970 = vst [vmem:[%s964] sm:$0xf] %v969
        %971 = vst [vmem:[%s964 + $0x4] sm:$0xf] %v659
        %vm972 = vcmask 1040384
        %vm973 = vmand %vm972, %vm641
        %v974 = vld [vmem:[%s964 + $0x8] sm:$0x1]
        %v975 = vsel %vm973, %v660, %v974
        %976 = vst [vmem:[%s964 + $0x8] sm:$0x1] %v975
        %v977 = vld [vmem:[%s964 + $0xc] sm:$0xf]
        %v978 = vsel %vm967, %v667, %v977
        %979 = vst [vmem:[%s964 + $0xc] sm:$0xf] %v978
        %980 = vst [vmem:[%s964 + $0x10] sm:$0xf] %v676
        %v981 = vld [vmem:[%s964 + $0x14] sm:$0x1]
        %v982 = vsel %vm973, %v677, %v981
        %983 = vst [vmem:[%s964 + $0x14] sm:$0x1] %v982
        %v984 = vld [vmem:[%s964 + $0x18] sm:$0xf]
        %v985 = vsel %vm967, %v684, %v984
        %986 = vst [vmem:[%s964 + $0x18] sm:$0xf] %v985
        %987 = vst [vmem:[%s964 + $0x1c] sm:$0xf] %v693
        %v988 = vld [vmem:[%s964 + $0x20] sm:$0x1]
        %v989 = vsel %vm973, %v694, %v988
        %990 = vst [vmem:[%s964 + $0x20] sm:$0x1] %v989
        %v991 = vld [vmem:[%s964 + $0x24] sm:$0xf]
        %v992 = vsel %vm967, %v701, %v991
        %993 = vst [vmem:[%s964 + $0x24] sm:$0xf] %v992
        %994 = vst [vmem:[%s964 + $0x28] sm:$0xf] %v710
        %v995 = vld [vmem:[%s964 + $0x2c] sm:$0x1]
        %v996 = vsel %vm973, %v711, %v995
        %997 = vst [vmem:[%s964 + $0x2c] sm:$0x1] %v996
        %v998 = vld [vmem:[%s964 + $0x30] sm:$0xf]
        %v999 = vsel %vm967, %v718, %v998
        %1000 = vst [vmem:[%s964 + $0x30] sm:$0xf] %v999
        %1001 = vst [vmem:[%s964 + $0x34] sm:$0xf] %v727
        %v1002 = vld [vmem:[%s964 + $0x38] sm:$0x1]
        %v1003 = vsel %vm973, %v728, %v1002
        %1004 = vst [vmem:[%s964 + $0x38] sm:$0x1] %v1003
        %v1005 = vld [vmem:[%s964 + $0x3c] sm:$0xf]
        %v1006 = vsel %vm967, %v735, %v1005
        %1007 = vst [vmem:[%s964 + $0x3c] sm:$0xf] %v1006
        %1008 = vst [vmem:[%s964 + $0x40] sm:$0xf] %v744
        %v1009 = vld [vmem:[%s964 + $0x44] sm:$0x1]
        %v1010 = vsel %vm973, %v745, %v1009
        %1011 = vst [vmem:[%s964 + $0x44] sm:$0x1] %v1010
        %v1012 = vld [vmem:[%s964 + $0x48] sm:$0xf]
        %v1013 = vsel %vm967, %v752, %v1012
        %1014 = vst [vmem:[%s964 + $0x48] sm:$0xf] %v1013
        %1015 = vst [vmem:[%s964 + $0x4c] sm:$0xf] %v761
        %v1016 = vld [vmem:[%s964 + $0x50] sm:$0x1]
        %v1017 = vsel %vm973, %v762, %v1016
        %1018 = vst [vmem:[%s964 + $0x50] sm:$0x1] %v1017
        %v1019 = vld [vmem:[%s964 + $0x54] sm:$0xf]
        %v1020 = vsel %vm967, %v769, %v1019
        %1021 = vst [vmem:[%s964 + $0x54] sm:$0xf] %v1020
        %1022 = vst [vmem:[%s964 + $0x58] sm:$0xf] %v778
        %v1023 = vld [vmem:[%s964 + $0x5c] sm:$0x1]
        %v1024 = vsel %vm973, %v779, %v1023
        %1025 = vst [vmem:[%s964 + $0x5c] sm:$0x1] %v1024
        %v1026 = vld [vmem:[%s964 + $0x60] sm:$0xf]
        %v1027 = vsel %vm967, %v786, %v1026
        %1028 = vst [vmem:[%s964 + $0x60] sm:$0xf] %v1027
        %1029 = vst [vmem:[%s964 + $0x64] sm:$0xf] %v795
        %v1030 = vld [vmem:[%s964 + $0x68] sm:$0x1]
        %v1031 = vsel %vm973, %v796, %v1030
        %1032 = vst [vmem:[%s964 + $0x68] sm:$0x1] %v1031
        %v1033 = vld [vmem:[%s964 + $0x6c] sm:$0xf]
        %v1034 = vsel %vm967, %v803, %v1033
        %1035 = vst [vmem:[%s964 + $0x6c] sm:$0xf] %v1034
        %1036 = vst [vmem:[%s964 + $0x70] sm:$0xf] %v812
        %v1037 = vld [vmem:[%s964 + $0x74] sm:$0x1]
        %v1038 = vsel %vm973, %v813, %v1037
        %1039 = vst [vmem:[%s964 + $0x74] sm:$0x1] %v1038
        %v1040 = vld [vmem:[%s964 + $0x78] sm:$0xf]
        %v1041 = vsel %vm967, %v820, %v1040
        %1042 = vst [vmem:[%s964 + $0x78] sm:$0xf] %v1041
        %1043 = vst [vmem:[%s964 + $0x7c] sm:$0xf] %v829
        %v1044 = vld [vmem:[%s964 + $0x80] sm:$0x1]
        %v1045 = vsel %vm973, %v830, %v1044
        %1046 = vst [vmem:[%s964 + $0x80] sm:$0x1] %v1045
        %v1047 = vld [vmem:[%s964 + $0x84] sm:$0xf]
        %v1048 = vsel %vm967, %v837, %v1047
        %1049 = vst [vmem:[%s964 + $0x84] sm:$0xf] %v1048
        %1050 = vst [vmem:[%s964 + $0x88] sm:$0xf] %v846
        %v1051 = vld [vmem:[%s964 + $0x8c] sm:$0x1]
        %v1052 = vsel %vm973, %v847, %v1051
        %1053 = vst [vmem:[%s964 + $0x8c] sm:$0x1] %v1052
        %v1054 = vld [vmem:[%s964 + $0x90] sm:$0xf]
        %v1055 = vsel %vm967, %v854, %v1054
        %1056 = vst [vmem:[%s964 + $0x90] sm:$0xf] %v1055
        %1057 = vst [vmem:[%s964 + $0x94] sm:$0xf] %v863
        %v1058 = vld [vmem:[%s964 + $0x98] sm:$0x1]
        %v1059 = vsel %vm973, %v864, %v1058
        %1060 = vst [vmem:[%s964 + $0x98] sm:$0x1] %v1059
        %v1061 = vld [vmem:[%s964 + $0x9c] sm:$0xf]
        %v1062 = vsel %vm967, %v871, %v1061
        %1063 = vst [vmem:[%s964 + $0x9c] sm:$0xf] %v1062
        %1064 = vst [vmem:[%s964 + $0xa0] sm:$0xf] %v880
        %v1065 = vld [vmem:[%s964 + $0xa4] sm:$0x1]
        %v1066 = vsel %vm973, %v881, %v1065
        %1067 = vst [vmem:[%s964 + $0xa4] sm:$0x1] %v1066
        %v1068 = vld [vmem:[%s964 + $0xa8] sm:$0xf]
        %v1069 = vsel %vm967, %v888, %v1068
        %1070 = vst [vmem:[%s964 + $0xa8] sm:$0xf] %v1069
        %1071 = vst [vmem:[%s964 + $0xac] sm:$0xf] %v897
        %v1072 = vld [vmem:[%s964 + $0xb0] sm:$0x1]
        %v1073 = vsel %vm973, %v898, %v1072
        %1074 = vst [vmem:[%s964 + $0xb0] sm:$0x1] %v1073
        %v1075 = vld [vmem:[%s964 + $0xb4] sm:$0xf]
        %v1076 = vsel %vm967, %v905, %v1075
        %1077 = vst [vmem:[%s964 + $0xb4] sm:$0xf] %v1076
        %1078 = vst [vmem:[%s964 + $0xb8] sm:$0xf] %v914
        %v1079 = vld [vmem:[%s964 + $0xbc] sm:$0x1]
        %v1080 = vsel %vm973, %v915, %v1079
        %1081 = vst [vmem:[%s964 + $0xbc] sm:$0x1] %v1080
        %s1082 = ssub.s32 %s313, 1
        %p1083 = scmp.gt.s32.totalorder %s1082, 0
        %s1084 = scalar_select %p1083, %s1082, 0
        %s1085 = smul.u32 %s1084, 2
        %s1086 = smul.addr %s1085, 4
        %s1087 = scalar_lea.vmem %s266, %s1086 [#allocation3]
        %v1088 = vld [vmem:[%s1087] sm:$0xf]
        %v1089 = vld [vmem:[%s1087 + $0x4] sm:$0xf]
        %v1090 = vunpack.c.l.bf16 %v1088
        %v1091 = vunpack.c.l.bf16 %v1089
        %v1092 = vmul.f32 %v1090, %v441
        %v1093 = vmul.f32 %v1091, %v441
        %v1094 = vadd.f32 %v1092, %v479
        %v1095 = vadd.f32 %v1093, %v479
        %v1096 = vmax.f32 %v1094, 0.0
        %v1097 = vmax.f32 %v1095, 0.0
        %p1098 = scmp.gt.s32.totalorder %s313, 0
        %s1099 = scalar_select %p1098, 1, 0
        %s1100 = scvt.s32.f32 %s1099
        %v1101 = vstv %s1100
        %v1102 = vmul.f32 %v1096, %v1101
        %v1103 = vmul.f32 %v1097, %v1101
        %v1104 = vpack.c.bf16 %v1103, %v1102
        %v1106 = vunpack.c.l.b16 %v1104
        %v1107 = vunpack.c.h.b16 %v1104
        %v1108 = vpack.c.b16 %v1106, %v1106
        %v1109 = vpack.c.b16 %v1107, %v1107
        %v1111 = vshrl.u32 %v1108, 16
        %v1113 = vrot.slane %v1111, 7
        %v1114 = vshll.u32 %v1108, 16
        %v1116 = vor.u32 %v1113, %v1114
        %v1117 = vrot.slane %v1113, 4
        %v1119 = vshrl.u32 %v1109, 16
        %v1121 = vrot.slane %v1119, 7
        %v1122 = vshll.u32 %v1109, 16
        %v1124 = vor.u32 %v1121, %v1122
        %v1125 = vsel %vm643, %v1117, %v1124
        %v1126 = vrot.slane %v1121, 4
        %v1130 = vld [vmem:[#allocation2] sm:$0xf]
        %v1131 = vsel %vm967, %v1116, %v1130
        %1132 = vst [vmem:[#allocation2] sm:$0xf] %v1131
        %1133 = vst [vmem:[#allocation2 + $0x4] sm:$0xf] %v1125
        %v1134 = vld [vmem:[#allocation2 + $0x8] sm:$0x1]
        %v1135 = vsel %vm973, %v1126, %v1134
        %1136 = vst [vmem:[#allocation2 + $0x8] sm:$0x1] %v1135
        %s1137 = sadd.s32 %s313, 16
        %p1138 = scmp.lt.s32.totalorder %s1137, 15
        %s1139 = scalar_select %p1138, %s1137, 15
        %s1140 = smul.u32 %s1139, 2
        %s1141 = smul.addr %s1140, 4
        %s1142 = scalar_lea.vmem %s266, %s1141 [#allocation3]
        %v1143 = vld [vmem:[%s1142] sm:$0xf]
        %v1144 = vld [vmem:[%s1142 + $0x4] sm:$0xf]
        %v1145 = vunpack.c.l.bf16 %v1143
        %v1146 = vunpack.c.l.bf16 %v1144
        %v1147 = vmul.f32 %v1145, %v441
        %v1148 = vmul.f32 %v1146, %v441
        %v1149 = vadd.f32 %v1147, %v479
        %v1150 = vadd.f32 %v1148, %v479
        %v1151 = vmax.f32 %v1149, 0.0
        %v1152 = vmax.f32 %v1150, 0.0
        %p1153 = scmp.lt.s32.totalorder %s1137, 16
        %s1154 = scalar_select %p1153, 1, 0
        %s1155 = scvt.s32.f32 %s1154
        %v1156 = vstv %s1155
        %v1157 = vmul.f32 %v1151, %v1156
        %v1158 = vmul.f32 %v1152, %v1156
        %v1159 = vpack.c.bf16 %v1158, %v1157
        %v1161 = vunpack.c.l.b16 %v1159
        %v1162 = vunpack.c.h.b16 %v1159
        %v1163 = vpack.c.b16 %v1161, %v1161
        %v1164 = vpack.c.b16 %v1162, %v1162
        %v1166 = vshrl.u32 %v1163, 16
        %v1168 = vrot.slane %v1166, 7
        %v1169 = vshll.u32 %v1163, 16
        %v1171 = vor.u32 %v1168, %v1169
        %v1172 = vrot.slane %v1168, 4
        %v1174 = vshrl.u32 %v1164, 16
        %v1176 = vrot.slane %v1174, 7
        %v1177 = vshll.u32 %v1164, 16
        %v1179 = vor.u32 %v1176, %v1177
        %v1180 = vsel %vm643, %v1172, %v1179
        %v1181 = vrot.slane %v1176, 4
        %s1185 = scalar_lea.vmem [#allocation2], 204
        %v1186 = vld [vmem:[%s1185] sm:$0xf]
        %v1187 = vsel %vm967, %v1171, %v1186
        %1188 = vst [vmem:[%s1185] sm:$0xf] %v1187
        %1189 = vst [vmem:[%s1185 + $0x4] sm:$0xf] %v1180
        %v1190 = vld [vmem:[%s1185 + $0x8] sm:$0x1]
        %v1191 = vsel %vm973, %v1181, %v1190
        %1192 = vst [vmem:[%s1185 + $0x8] sm:$0x1] %v1191
        %v1193 = vld [vmem:[#allocation2] sm:$0xf]
        %v1194 = vld [vmem:[#allocation2 + $0x4] sm:$0xf]
        %v1195 = vld [vmem:[#allocation2 + $0xc] sm:$0xf]
        %v1196 = vld [vmem:[#allocation2 + $0x10] sm:$0xf]
        %v1197 = vld [vmem:[#allocation2 + $0x18] sm:$0xf]
        %v1198 = vld [vmem:[#allocation2 + $0x1c] sm:$0xf]
        %v1199 = vld [vmem:[#allocation2 + $0x24] sm:$0xf]
        %v1200 = vld [vmem:[#allocation2 + $0x28] sm:$0xf]
        %v1201 = vld [vmem:[#allocation2 + $0x30] sm:$0xf]
        %v1202 = vld [vmem:[#allocation2 + $0x34] sm:$0xf]
        %v1203 = vld [vmem:[#allocation2 + $0x3c] sm:$0xf]
        %v1204 = vld [vmem:[#allocation2 + $0x40] sm:$0xf]
        %v1205 = vld [vmem:[#allocation2 + $0x48] sm:$0xf]
        %v1206 = vld [vmem:[#allocation2 + $0x4c] sm:$0xf]
        %v1207 = vld [vmem:[#allocation2 + $0x54] sm:$0xf]
        %v1208 = vld [vmem:[#allocation2 + $0x58] sm:$0xf]
        %v1209 = vld [vmem:[#allocation2 + $0x60] sm:$0xf]
        %v1210 = vld [vmem:[#allocation2 + $0x64] sm:$0xf]
        %v1211 = vld [vmem:[#allocation2 + $0x6c] sm:$0xf]
        %v1212 = vld [vmem:[#allocation2 + $0x70] sm:$0xf]
        %v1213 = vld [vmem:[#allocation2 + $0x78] sm:$0xf]
        %v1214 = vld [vmem:[#allocation2 + $0x7c] sm:$0xf]
        %v1215 = vld [vmem:[#allocation2 + $0x84] sm:$0xf]
        %v1216 = vld [vmem:[#allocation2 + $0x88] sm:$0xf]
        %v1217 = vld [vmem:[#allocation2 + $0x90] sm:$0xf]
        %v1218 = vld [vmem:[#allocation2 + $0x94] sm:$0xf]
        %v1219 = vld [vmem:[#allocation2 + $0x9c] sm:$0xf]
        %v1220 = vld [vmem:[#allocation2 + $0xa0] sm:$0xf]
        %v1221 = vld [vmem:[#allocation2 + $0xa8] sm:$0xf]
        %v1222 = vld [vmem:[#allocation2 + $0xac] sm:$0xf]
        %v1223 = vld [vmem:[#allocation2 + $0xb4] sm:$0xf]
        %v1224 = vld [vmem:[#allocation2 + $0xb8] sm:$0xf]
        %v1225 = vld [vmem:[#allocation9] sm:$0xf]
        %v1226 = vld [vmem:[#allocation9 + $0x4] sm:$0xf]
        %v1227 = vld [vmem:[#allocation9 + $0x8] sm:$0xf]
        %v1228 = vld [vmem:[#allocation9 + $0xc] sm:$0xf]
        %v1229 = vld [vmem:[#allocation9 + $0x10] sm:$0xf]
        %v1230 = vld [vmem:[#allocation9 + $0x14] sm:$0xf]
        %v1231 = vld [vmem:[#allocation9 + $0x18] sm:$0xf]
        %v1232 = vld [vmem:[#allocation9 + $0x1c] sm:$0xf]
        %v1233 = vld [vmem:[#allocation9 + $0x20] sm:$0xf]
        %v1234 = vld [vmem:[#allocation9 + $0x24] sm:$0xf]
        %v1235 = vld [vmem:[#allocation9 + $0x28] sm:$0xf]
        %v1236 = vld [vmem:[#allocation9 + $0x2c] sm:$0xf]
        %v1237 = vld [vmem:[#allocation9 + $0x30] sm:$0xf]
        %v1238 = vld [vmem:[#allocation9 + $0x34] sm:$0xf]
        %v1239 = vld [vmem:[#allocation9 + $0x38] sm:$0xf]
        %v1240 = vld [vmem:[#allocation9 + $0x3c] sm:$0xf]
        %v1241 = vld [vmem:[#allocation2 + $0x8] sm:$0x1]
        %v1242 = vld [vmem:[#allocation2 + $0x14] sm:$0x1]
        %v1243 = vld [vmem:[#allocation2 + $0x20] sm:$0x1]
        %v1244 = vld [vmem:[#allocation2 + $0x2c] sm:$0x1]
        %v1245 = vld [vmem:[#allocation2 + $0x38] sm:$0x1]
        %v1246 = vld [vmem:[#allocation2 + $0x44] sm:$0x1]
        %v1247 = vld [vmem:[#allocation2 + $0x50] sm:$0x1]
        %v1248 = vld [vmem:[#allocation2 + $0x5c] sm:$0x1]
        %v1249 = vld [vmem:[#allocation2 + $0x68] sm:$0x1]
        %v1250 = vld [vmem:[#allocation2 + $0x74] sm:$0x1]
        %v1251 = vld [vmem:[#allocation2 + $0x80] sm:$0x1]
        %v1252 = vld [vmem:[#allocation2 + $0x8c] sm:$0x1]
        %v1253 = vld [vmem:[#allocation2 + $0x98] sm:$0x1]
        %v1254 = vld [vmem:[#allocation2 + $0xa4] sm:$0x1]
        %v1255 = vld [vmem:[#allocation2 + $0xb0] sm:$0x1]
        %v1256 = vld [vmem:[#allocation2 + $0xbc] sm:$0x1]
        %vm1257 = vsmask.f32 3328
        %vm1258 = vsmask.f32 7440
        %vm1259 = vmor %vm1257, %vm1258
        %v1261 = vshrl.u32 %v1193, 16
        %v1263 = vrot.slane %v1261, 4
        %v1264 = vshll.u32 %v1193, 16
        %v1266 = vrot.slane %v1264, 5
        %v1267 = vor.u32 %v1263, %v1266
        %v1268 = vrot.slane %v1267, 4
        %v1270 = vshll.u32 %v1194, 16
        %v1272 = vrot.slane %v1270, 5
        %v1273 = vsel %vm1259, %v1268, %v1272
        %v1274 = vshrl.u32 %v1194, 16
        %v1276 = vrot.slane %v1274, 4
        %v1277 = vor.u32 %v1276, %v1272
        %v1278 = vrot.slane %v1277, 4
        %v1280 = vshll.u32 %v1241, 16
        %v1282 = vrot.slane %v1280, 5
        %v1283 = vsel %vm1259, %v1278, %v1282
        %v1285 = vshrl.u32 %v1195, 16
        %v1287 = vrot.slane %v1285, 4
        %v1288 = vshll.u32 %v1195, 16
        %v1290 = vrot.slane %v1288, 5
        %v1291 = vor.u32 %v1287, %v1290
        %v1292 = vrot.slane %v1291, 4
        %v1294 = vshll.u32 %v1196, 16
        %v1296 = vrot.slane %v1294, 5
        %v1297 = vsel %vm1259, %v1292, %v1296
        %v1298 = vshrl.u32 %v1196, 16
        %v1300 = vrot.slane %v1298, 4
        %v1301 = vor.u32 %v1300, %v1296
        %v1302 = vrot.slane %v1301, 4
        %v1304 = vshll.u32 %v1242, 16
        %v1306 = vrot.slane %v1304, 5
        %v1307 = vsel %vm1259, %v1302, %v1306
        %v1309 = vshrl.u32 %v1197, 16
        %v1311 = vrot.slane %v1309, 4
        %v1312 = vshll.u32 %v1197, 16
        %v1314 = vrot.slane %v1312, 5
        %v1315 = vor.u32 %v1311, %v1314
        %v1316 = vrot.slane %v1315, 4
        %v1318 = vshll.u32 %v1198, 16
        %v1320 = vrot.slane %v1318, 5
        %v1321 = vsel %vm1259, %v1316, %v1320
        %v1322 = vshrl.u32 %v1198, 16
        %v1324 = vrot.slane %v1322, 4
        %v1325 = vor.u32 %v1324, %v1320
        %v1326 = vrot.slane %v1325, 4
        %v1328 = vshll.u32 %v1243, 16
        %v1330 = vrot.slane %v1328, 5
        %v1331 = vsel %vm1259, %v1326, %v1330
        %v1333 = vshrl.u32 %v1199, 16
        %v1335 = vrot.slane %v1333, 4
        %v1336 = vshll.u32 %v1199, 16
        %v1338 = vrot.slane %v1336, 5
        %v1339 = vor.u32 %v1335, %v1338
        %v1340 = vrot.slane %v1339, 4
        %v1342 = vshll.u32 %v1200, 16
        %v1344 = vrot.slane %v1342, 5
        %v1345 = vsel %vm1259, %v1340, %v1344
        %v1346 = vshrl.u32 %v1200, 16
        %v1348 = vrot.slane %v1346, 4
        %v1349 = vor.u32 %v1348, %v1344
        %v1350 = vrot.slane %v1349, 4
        %v1352 = vshll.u32 %v1244, 16
        %v1354 = vrot.slane %v1352, 5
        %v1355 = vsel %vm1259, %v1350, %v1354
        %v1357 = vshrl.u32 %v1201, 16
        %v1359 = vrot.slane %v1357, 4
        %v1360 = vshll.u32 %v1201, 16
        %v1362 = vrot.slane %v1360, 5
        %v1363 = vor.u32 %v1359, %v1362
        %v1364 = vrot.slane %v1363, 4
        %v1366 = vshll.u32 %v1202, 16
        %v1368 = vrot.slane %v1366, 5
        %v1369 = vsel %vm1259, %v1364, %v1368
        %v1370 = vshrl.u32 %v1202, 16
        %v1372 = vrot.slane %v1370, 4
        %v1373 = vor.u32 %v1372, %v1368
        %v1374 = vrot.slane %v1373, 4
        %v1376 = vshll.u32 %v1245, 16
        %v1378 = vrot.slane %v1376, 5
        %v1379 = vsel %vm1259, %v1374, %v1378
        %v1381 = vshrl.u32 %v1203, 16
        %v1383 = vrot.slane %v1381, 4
        %v1384 = vshll.u32 %v1203, 16
        %v1386 = vrot.slane %v1384, 5
        %v1387 = vor.u32 %v1383, %v1386
        %v1388 = vrot.slane %v1387, 4
        %v1390 = vshll.u32 %v1204, 16
        %v1392 = vrot.slane %v1390, 5
        %v1393 = vsel %vm1259, %v1388, %v1392
        %v1394 = vshrl.u32 %v1204, 16
        %v1396 = vrot.slane %v1394, 4
        %v1397 = vor.u32 %v1396, %v1392
        %v1398 = vrot.slane %v1397, 4
        %v1400 = vshll.u32 %v1246, 16
        %v1402 = vrot.slane %v1400, 5
        %v1403 = vsel %vm1259, %v1398, %v1402
        %v1405 = vshrl.u32 %v1205, 16
        %v1407 = vrot.slane %v1405, 4
        %v1408 = vshll.u32 %v1205, 16
        %v1410 = vrot.slane %v1408, 5
        %v1411 = vor.u32 %v1407, %v1410
        %v1412 = vrot.slane %v1411, 4
        %v1414 = vshll.u32 %v1206, 16
        %v1416 = vrot.slane %v1414, 5
        %v1417 = vsel %vm1259, %v1412, %v1416
        %v1418 = vshrl.u32 %v1206, 16
        %v1420 = vrot.slane %v1418, 4
        %v1421 = vor.u32 %v1420, %v1416
        %v1422 = vrot.slane %v1421, 4
        %v1424 = vshll.u32 %v1247, 16
        %v1426 = vrot.slane %v1424, 5
        %v1427 = vsel %vm1259, %v1422, %v1426
        %v1429 = vshrl.u32 %v1207, 16
        %v1431 = vrot.slane %v1429, 4
        %v1432 = vshll.u32 %v1207, 16
        %v1434 = vrot.slane %v1432, 5
        %v1435 = vor.u32 %v1431, %v1434
        %v1436 = vrot.slane %v1435, 4
        %v1438 = vshll.u32 %v1208, 16
        %v1440 = vrot.slane %v1438, 5
        %v1441 = vsel %vm1259, %v1436, %v1440
        %v1442 = vshrl.u32 %v1208, 16
        %v1444 = vrot.slane %v1442, 4
        %v1445 = vor.u32 %v1444, %v1440
        %v1446 = vrot.slane %v1445, 4
        %v1448 = vshll.u32 %v1248, 16
        %v1450 = vrot.slane %v1448, 5
        %v1451 = vsel %vm1259, %v1446, %v1450
        %v1453 = vshrl.u32 %v1209, 16
        %v1455 = vrot.slane %v1453, 4
        %v1456 = vshll.u32 %v1209, 16
        %v1458 = vrot.slane %v1456, 5
        %v1459 = vor.u32 %v1455, %v1458
        %v1460 = vrot.slane %v1459, 4
        %v1462 = vshll.u32 %v1210, 16
        %v1464 = vrot.slane %v1462, 5
        %v1465 = vsel %vm1259, %v1460, %v1464
        %v1466 = vshrl.u32 %v1210, 16
        %v1468 = vrot.slane %v1466, 4
        %v1469 = vor.u32 %v1468, %v1464
        %v1470 = vrot.slane %v1469, 4
        %v1472 = vshll.u32 %v1249, 16
        %v1474 = vrot.slane %v1472, 5
        %v1475 = vsel %vm1259, %v1470, %v1474
        %v1477 = vshrl.u32 %v1211, 16
        %v1479 = vrot.slane %v1477, 4
        %v1480 = vshll.u32 %v1211, 16
        %v1482 = vrot.slane %v1480, 5
        %v1483 = vor.u32 %v1479, %v1482
        %v1484 = vrot.slane %v1483, 4
        %v1486 = vshll.u32 %v1212, 16
        %v1488 = vrot.slane %v1486, 5
        %v1489 = vsel %vm1259, %v1484, %v1488
        %v1490 = vshrl.u32 %v1212, 16
        %v1492 = vrot.slane %v1490, 4
        %v1493 = vor.u32 %v1492, %v1488
        %v1494 = vrot.slane %v1493, 4
        %v1496 = vshll.u32 %v1250, 16
        %v1498 = vrot.slane %v1496, 5
        %v1499 = vsel %vm1259, %v1494, %v1498
        %v1501 = vshrl.u32 %v1213, 16
        %v1503 = vrot.slane %v1501, 4
        %v1504 = vshll.u32 %v1213, 16
        %v1506 = vrot.slane %v1504, 5
        %v1507 = vor.u32 %v1503, %v1506
        %v1508 = vrot.slane %v1507, 4
        %v1510 = vshll.u32 %v1214, 16
        %v1512 = vrot.slane %v1510, 5
        %v1513 = vsel %vm1259, %v1508, %v1512
        %v1514 = vshrl.u32 %v1214, 16
        %v1516 = vrot.slane %v1514, 4
        %v1517 = vor.u32 %v1516, %v1512
        %v1518 = vrot.slane %v1517, 4
        %v1520 = vshll.u32 %v1251, 16
        %v1522 = vrot.slane %v1520, 5
        %v1523 = vsel %vm1259, %v1518, %v1522
        %v1525 = vshrl.u32 %v1215, 16
        %v1527 = vrot.slane %v1525, 4
        %v1528 = vshll.u32 %v1215, 16
        %v1530 = vrot.slane %v1528, 5
        %v1531 = vor.u32 %v1527, %v1530
        %v1532 = vrot.slane %v1531, 4
        %v1534 = vshll.u32 %v1216, 16
        %v1536 = vrot.slane %v1534, 5
        %v1537 = vsel %vm1259, %v1532, %v1536
        %v1538 = vshrl.u32 %v1216, 16
        %v1540 = vrot.slane %v1538, 4
        %v1541 = vor.u32 %v1540, %v1536
        %v1542 = vrot.slane %v1541, 4
        %v1544 = vshll.u32 %v1252, 16
        %v1546 = vrot.slane %v1544, 5
        %v1547 = vsel %vm1259, %v1542, %v1546
        %v1549 = vshrl.u32 %v1217, 16
        %v1551 = vrot.slane %v1549, 4
        %v1552 = vshll.u32 %v1217, 16
        %v1554 = vrot.slane %v1552, 5
        %v1555 = vor.u32 %v1551, %v1554
        %v1556 = vrot.slane %v1555, 4
        %v1558 = vshll.u32 %v1218, 16
        %v1560 = vrot.slane %v1558, 5
        %v1561 = vsel %vm1259, %v1556, %v1560
        %v1562 = vshrl.u32 %v1218, 16
        %v1564 = vrot.slane %v1562, 4
        %v1565 = vor.u32 %v1564, %v1560
        %v1566 = vrot.slane %v1565, 4
        %v1568 = vshll.u32 %v1253, 16
        %v1570 = vrot.slane %v1568, 5
        %v1571 = vsel %vm1259, %v1566, %v1570
        %v1573 = vshrl.u32 %v1219, 16
        %v1575 = vrot.slane %v1573, 4
        %v1576 = vshll.u32 %v1219, 16
        %v1578 = vrot.slane %v1576, 5
        %v1579 = vor.u32 %v1575, %v1578
        %v1580 = vrot.slane %v1579, 4
        %v1582 = vshll.u32 %v1220, 16
        %v1584 = vrot.slane %v1582, 5
        %v1585 = vsel %vm1259, %v1580, %v1584
        %v1586 = vshrl.u32 %v1220, 16
        %v1588 = vrot.slane %v1586, 4
        %v1589 = vor.u32 %v1588, %v1584
        %v1590 = vrot.slane %v1589, 4
        %v1592 = vshll.u32 %v1254, 16
        %v1594 = vrot.slane %v1592, 5
        %v1595 = vsel %vm1259, %v1590, %v1594
        %v1597 = vshrl.u32 %v1221, 16
        %v1599 = vrot.slane %v1597, 4
        %v1600 = vshll.u32 %v1221, 16
        %v1602 = vrot.slane %v1600, 5
        %v1603 = vor.u32 %v1599, %v1602
        %v1604 = vrot.slane %v1603, 4
        %v1606 = vshll.u32 %v1222, 16
        %v1608 = vrot.slane %v1606, 5
        %v1609 = vsel %vm1259, %v1604, %v1608
        %v1610 = vshrl.u32 %v1222, 16
        %v1612 = vrot.slane %v1610, 4
        %v1613 = vor.u32 %v1612, %v1608
        %v1614 = vrot.slane %v1613, 4
        %v1616 = vshll.u32 %v1255, 16
        %v1618 = vrot.slane %v1616, 5
        %v1619 = vsel %vm1259, %v1614, %v1618
        %v1621 = vshrl.u32 %v1223, 16
        %v1623 = vrot.slane %v1621, 4
        %v1624 = vshll.u32 %v1223, 16
        %v1626 = vrot.slane %v1624, 5
        %v1627 = vor.u32 %v1623, %v1626
        %v1628 = vrot.slane %v1627, 4
        %v1630 = vshll.u32 %v1224, 16
        %v1632 = vrot.slane %v1630, 5
        %v1633 = vsel %vm1259, %v1628, %v1632
        %v1634 = vshrl.u32 %v1224, 16
        %v1636 = vrot.slane %v1634, 4
        %v1637 = vor.u32 %v1636, %v1632
        %v1638 = vrot.slane %v1637, 4
        %v1640 = vshll.u32 %v1256, 16
        %v1642 = vrot.slane %v1640, 5
        %v1643 = vsel %vm1259, %v1638, %v1642
        %s1644 = scalar_lea.vmem [#allocation9], 64
        %v1645 = vld [vmem:[%s1644] sm:$0xf]
        %v1646 = vld [vmem:[%s1644 + $0x4] sm:$0xf]
        %v1647 = vld [vmem:[%s1644 + $0x8] sm:$0xf]
        %v1648 = vld [vmem:[%s1644 + $0xc] sm:$0xf]
        %v1649 = vld [vmem:[%s1644 + $0x10] sm:$0xf]
        %v1650 = vld [vmem:[%s1644 + $0x14] sm:$0xf]
        %v1651 = vld [vmem:[%s1644 + $0x18] sm:$0xf]
        %v1652 = vld [vmem:[%s1644 + $0x1c] sm:$0xf]
        %v1653 = vld [vmem:[%s1644 + $0x20] sm:$0xf]
        %v1654 = vld [vmem:[%s1644 + $0x24] sm:$0xf]
        %v1655 = vld [vmem:[%s1644 + $0x28] sm:$0xf]
        %v1656 = vld [vmem:[%s1644 + $0x2c] sm:$0xf]
        %v1657 = vld [vmem:[%s1644 + $0x30] sm:$0xf]
        %v1658 = vld [vmem:[%s1644 + $0x34] sm:$0xf]
        %v1659 = vld [vmem:[%s1644 + $0x38] sm:$0xf]
        %v1660 = vld [vmem:[%s1644 + $0x3c] sm:$0xf]
        %v1661 = vunpack.c.l.b16 %v1273
        %v1662 = vunpack.c.l.b16 %v1283
        %v1663 = vunpack.c.l.b16 %v1297
        %v1664 = vunpack.c.l.b16 %v1307
        %v1665 = vunpack.c.l.b16 %v1321
        %v1666 = vunpack.c.l.b16 %v1331
        %v1667 = vunpack.c.l.b16 %v1345
        %v1668 = vunpack.c.l.b16 %v1355
        %v1669 = vunpack.c.l.b16 %v1369
        %v1670 = vunpack.c.l.b16 %v1379
        %v1671 = vunpack.c.l.b16 %v1393
        %v1672 = vunpack.c.l.b16 %v1403
        %v1673 = vunpack.c.l.b16 %v1417
        %v1674 = vunpack.c.l.b16 %v1427
        %v1675 = vunpack.c.l.b16 %v1441
        %v1676 = vunpack.c.l.b16 %v1451
        %v1677 = vunpack.c.l.b16 %v1465
        %v1678 = vunpack.c.l.b16 %v1475
        %v1679 = vunpack.c.l.b16 %v1489
        %v1680 = vunpack.c.l.b16 %v1499
        %v1681 = vunpack.c.l.b16 %v1513
        %v1682 = vunpack.c.l.b16 %v1523
        %v1683 = vunpack.c.l.b16 %v1537
        %v1684 = vunpack.c.l.b16 %v1547
        %v1685 = vunpack.c.l.b16 %v1561
        %v1686 = vunpack.c.l.b16 %v1571
        %v1687 = vunpack.c.l.b16 %v1585
        %v1688 = vunpack.c.l.b16 %v1595
        %v1689 = vunpack.c.l.b16 %v1609
        %v1690 = vunpack.c.l.b16 %v1619
        %v1691 = vunpack.c.l.b16 %v1633
        %v1692 = vunpack.c.l.b16 %v1643
        %v1693 = vpack.c.b16 %v1662, %v1661
        %v1694 = vpack.c.b16 %v1664, %v1663
        %v1695 = vpack.c.b16 %v1666, %v1665
        %v1696 = vpack.c.b16 %v1668, %v1667
        %v1697 = vpack.c.b16 %v1670, %v1669
        %v1698 = vpack.c.b16 %v1672, %v1671
        %v1699 = vpack.c.b16 %v1674, %v1673
        %v1700 = vpack.c.b16 %v1676, %v1675
        %v1701 = vpack.c.b16 %v1678, %v1677
        %v1702 = vpack.c.b16 %v1680, %v1679
        %v1703 = vpack.c.b16 %v1682, %v1681
        %v1704 = vpack.c.b16 %v1684, %v1683
        %v1705 = vpack.c.b16 %v1686, %v1685
        %v1706 = vpack.c.b16 %v1688, %v1687
        %v1707 = vpack.c.b16 %v1690, %v1689
        %v1708 = vpack.c.b16 %v1692, %v1691
        %v1741 = vunpack.c.l.b16 %v1645
        %v1742 = vunpack.c.l.b16 %v1646
        %v1743 = vunpack.c.l.b16 %v1647
        %v1744 = vunpack.c.l.b16 %v1648
        %v1745 = vunpack.c.l.b16 %v1649
        %v1746 = vunpack.c.l.b16 %v1650
        %v1747 = vunpack.c.l.b16 %v1651
        %v1748 = vunpack.c.l.b16 %v1652
        %v1749 = vunpack.c.l.b16 %v1653
        %v1750 = vunpack.c.l.b16 %v1654
        %v1751 = vunpack.c.l.b16 %v1655
        %v1752 = vunpack.c.l.b16 %v1656
        %v1753 = vunpack.c.l.b16 %v1657
        %v1754 = vunpack.c.l.b16 %v1658
        %v1755 = vunpack.c.l.b16 %v1659
        %v1756 = vunpack.c.l.b16 %v1660
        %v1757 = vpack.c.b16 %v1742, %v1741
        %v1758 = vpack.c.b16 %v1744, %v1743
        %v1759 = vpack.c.b16 %v1746, %v1745
        %v1760 = vpack.c.b16 %v1748, %v1747
        %v1761 = vpack.c.b16 %v1750, %v1749
        %v1762 = vpack.c.b16 %v1752, %v1751
        %v1763 = vpack.c.b16 %v1754, %v1753
        %v1764 = vpack.c.b16 %v1756, %v1755
        %1773 = vmatprep.subr.bf16.mxu0 0
        %1774 = vmatpush1.bf16.msra.mxu0 %v1757
        %1775 = vmatprep.subr.bf16.mxu0 0
        %1776 = vmatpush1.bf16.msra.mxu0 %v1758
        %1777 = vmatprep.subr.bf16.mxu0 0
        %1778 = vmatpush1.bf16.msra.mxu0 %v1759
        %1779 = vmatprep.subr.bf16.mxu0 0
        %1780 = vmatpush1.bf16.msra.mxu0 %v1760
        %1781 = vmatprep.subr.bf16.mxu0 0
        %1782 = vmatpush1.bf16.msra.mxu0 %v1761
        %1783 = vmatprep.subr.bf16.mxu0 0
        %1784 = vmatpush1.bf16.msra.mxu0 %v1762
        %1785 = vmatprep.subr.bf16.mxu0 0
        %1786 = vmatpush1.bf16.msra.mxu0 %v1763
        %1787 = vmatprep.subr.bf16.mxu0 0
        %1788 = vmatpush1.bf16.msra.mxu0 %v1764
        %1789 = vmatprep.subr.bf16.mxu0 0
        %1790 = vmatpush1.bf16.msra.mxu0 0
        %1791 = vmatprep.subr.bf16.mxu0 0
        %1792 = vmatpush1.bf16.msra.mxu0 0
        %1793 = vmatprep.subr.bf16.mxu0 0
        %1794 = vmatpush1.bf16.msra.mxu0 0
        %1795 = vmatprep.subr.bf16.mxu0 0
        %1796 = vmatpush1.bf16.msra.mxu0 0
        %1797 = vmatprep.subr.bf16.mxu0 0
        %1798 = vmatpush1.bf16.msra.mxu0 0
        %1799 = vmatprep.subr.bf16.mxu0 0
        %1800 = vmatpush1.bf16.msra.mxu0 0
        %1801 = vmatprep.subr.bf16.mxu0 0
        %1802 = vmatpush1.bf16.msra.mxu0 0
        %1803 = vmatprep.subr.bf16.mxu0 0
        %1804 = vmatpush1.bf16.msra.mxu0 0
        %1805 = vmatprep.mubr.bf16.mxu0 0
        %1806 = vmatmul.mubr.bf16.gmra.mrb[0].mxu0 %v1693
        %v1807 = vpop.f32.mrb[0].mxu0
        %v1808 = vadd.f32 0.0, %v1807
        %v1809 = vpop.f32.mrb[0].mxu0
        %v1810 = vpop.f32.mrb[0].mxu0
        %v1811 = vadd.f32 0.0, %v1810
        %v1812 = vpop.f32.mrb[0].mxu0
        %1813 = vmatprep.mubr.bf16.mxu0 0
        %1814 = vmatmul.mubr.bf16.gmra.mrb[0].mxu0 %v1694
        %v1815 = vpop.f32.mrb[0].mxu0
        %v1816 = vadd.f32 0.0, %v1815
        %v1817 = vpop.f32.mrb[0].mxu0
        %v1818 = vpop.f32.mrb[0].mxu0
        %v1819 = vadd.f32 0.0, %v1818
        %v1820 = vpop.f32.mrb[0].mxu0
        %1821 = vmatprep.mubr.bf16.mxu0 0
        %1822 = vmatmul.mubr.bf16.gmra.mrb[0].mxu0 %v1695
        %v1823 = vpop.f32.mrb[0].mxu0
        %v1824 = vadd.f32 0.0, %v1823
        %v1825 = vpop.f32.mrb[0].mxu0
        %v1826 = vpop.f32.mrb[0].mxu0
        %v1827 = vadd.f32 0.0, %v1826
        %v1828 = vpop.f32.mrb[0].mxu0
        %1829 = vmatprep.mubr.bf16.mxu0 0
        %1830 = vmatmul.mubr.bf16.gmra.mrb[0].mxu0 %v1696
        %v1831 = vpop.f32.mrb[0].mxu0
        %v1832 = vadd.f32 0.0, %v1831
        %v1833 = vpop.f32.mrb[0].mxu0
        %v1834 = vpop.f32.mrb[0].mxu0
        %v1835 = vadd.f32 0.0, %v1834
        %v1836 = vpop.f32.mrb[0].mxu0
        %1837 = vmatprep.mubr.bf16.mxu0 0
        %1838 = vmatmul.mubr.bf16.gmra.mrb[0].mxu0 %v1697
        %v1839 = vpop.f32.mrb[0].mxu0
        %v1840 = vadd.f32 0.0, %v1839
        %v1841 = vpop.f32.mrb[0].mxu0
        %v1842 = vpop.f32.mrb[0].mxu0
        %v1843 = vadd.f32 0.0, %v1842
        %v1844 = vpop.f32.mrb[0].mxu0
        %1845 = vmatprep.mubr.bf16.mxu0 0
        %1846 = vmatmul.mubr.bf16.gmra.mrb[0].mxu0 %v1698
        %v1847 = vpop.f32.mrb[0].mxu0
        %v1848 = vadd.f32 0.0, %v1847
        %v1849 = vpop.f32.mrb[0].mxu0
        %v1850 = vpop.f32.mrb[0].mxu0
        %v1851 = vadd.f32 0.0, %v1850
        %v1852 = vpop.f32.mrb[0].mxu0
        %1853 = vmatprep.mubr.bf16.mxu0 0
        %1854 = vmatmul.mubr.bf16.gmra.mrb[0].mxu0 %v1699
        %v1855 = vpop.f32.mrb[0].mxu0
        %v1856 = vadd.f32 0.0, %v1855
        %v1857 = vpop.f32.mrb[0].mxu0
        %v1858 = vpop.f32.mrb[0].mxu0
        %v1859 = vadd.f32 0.0, %v1858
        %v1860 = vpop.f32.mrb[0].mxu0
        %1861 = vmatprep.mubr.bf16.mxu0 0
        %1862 = vmatmul.mubr.bf16.gmra.mrb[0].mxu0 %v1700
        %v1863 = vpop.f32.mrb[0].mxu0
        %v1864 = vadd.f32 0.0, %v1863
        %v1865 = vpop.f32.mrb[0].mxu0
        %v1866 = vpop.f32.mrb[0].mxu0
        %v1867 = vadd.f32 0.0, %v1866
        %v1868 = vpop.f32.mrb[0].mxu0
        %1869 = vmatprep.mubr.bf16.mxu0 0
        %1870 = vmatmul.mubr.bf16.gmra.mrb[0].mxu0 %v1701
        %v1871 = vpop.f32.mrb[0].mxu0
        %v1872 = vadd.f32 0.0, %v1871
        %v1873 = vpop.f32.mrb[0].mxu0
        %v1874 = vpop.f32.mrb[0].mxu0
        %v1875 = vadd.f32 0.0, %v1874
        %v1876 = vpop.f32.mrb[0].mxu0
        %1877 = vmatprep.mubr.bf16.mxu0 0
        %1878 = vmatmul.mubr.bf16.gmra.mrb[0].mxu0 %v1702
        %v1879 = vpop.f32.mrb[0].mxu0
        %v1880 = vadd.f32 0.0, %v1879
        %v1881 = vpop.f32.mrb[0].mxu0
        %v1882 = vpop.f32.mrb[0].mxu0
        %v1883 = vadd.f32 0.0, %v1882
        %v1884 = vpop.f32.mrb[0].mxu0
        %1885 = vmatprep.mubr.bf16.mxu0 0
        %1886 = vmatmul.mubr.bf16.gmra.mrb[0].mxu0 %v1703
        %v1887 = vpop.f32.mrb[0].mxu0
        %v1888 = vadd.f32 0.0, %v1887
        %v1889 = vpop.f32.mrb[0].mxu0
        %v1890 = vpop.f32.mrb[0].mxu0
        %v1891 = vadd.f32 0.0, %v1890
        %v1892 = vpop.f32.mrb[0].mxu0
        %1893 = vmatprep.mubr.bf16.mxu0 0
        %1894 = vmatmul.mubr.bf16.gmra.mrb[0].mxu0 %v1704
        %v1895 = vpop.f32.mrb[0].mxu0
        %v1896 = vadd.f32 0.0, %v1895
        %v1897 = vpop.f32.mrb[0].mxu0
        %v1898 = vpop.f32.mrb[0].mxu0
        %v1899 = vadd.f32 0.0, %v1898
        %v1900 = vpop.f32.mrb[0].mxu0
        %1901 = vmatprep.mubr.bf16.mxu0 0
        %1902 = vmatmul.mubr.bf16.gmra.mrb[0].mxu0 %v1705
        %v1903 = vpop.f32.mrb[0].mxu0
        %v1904 = vadd.f32 0.0, %v1903
        %v1905 = vpop.f32.mrb[0].mxu0
        %v1906 = vpop.f32.mrb[0].mxu0
        %v1907 = vadd.f32 0.0, %v1906
        %v1908 = vpop.f32.mrb[0].mxu0
        %1909 = vmatprep.mubr.bf16.mxu0 0
        %1910 = vmatmul.mubr.bf16.gmra.mrb[0].mxu0 %v1706
        %v1911 = vpop.f32.mrb[0].mxu0
        %v1912 = vadd.f32 0.0, %v1911
        %v1913 = vpop.f32.mrb[0].mxu0
        %v1914 = vpop.f32.mrb[0].mxu0
        %v1915 = vadd.f32 0.0, %v1914
        %v1916 = vpop.f32.mrb[0].mxu0
        %1917 = vmatprep.mubr.bf16.mxu0 0
        %1918 = vmatmul.mubr.bf16.gmra.mrb[0].mxu0 %v1707
        %v1919 = vpop.f32.mrb[0].mxu0
        %v1920 = vadd.f32 0.0, %v1919
        %v1921 = vpop.f32.mrb[0].mxu0
        %v1922 = vpop.f32.mrb[0].mxu0
        %v1923 = vadd.f32 0.0, %v1922
        %v1924 = vpop.f32.mrb[0].mxu0
        %1925 = vmatprep.mubr.bf16.mxu0 0
        %1926 = vmatmul.mubr.bf16.gmra.mrb[0].mxu0 %v1708
        %v1927 = vpop.f32.mrb[0].mxu0
        %v1928 = vadd.f32 0.0, %v1927
        %v1929 = vpop.f32.mrb[0].mxu0
        %v1930 = vpop.f32.mrb[0].mxu0
        %v1931 = vadd.f32 0.0, %v1930
        %v1932 = vpop.f32.mrb[0].mxu0
        %1933 = vdwg.mxu0
        %v1966 = vunpack.c.l.b16 %v1193
        %v1967 = vunpack.c.l.b16 %v1194
        %v1968 = vunpack.c.l.b16 %v1195
        %v1969 = vunpack.c.l.b16 %v1196
        %v1970 = vunpack.c.l.b16 %v1197
        %v1971 = vunpack.c.l.b16 %v1198
        %v1972 = vunpack.c.l.b16 %v1199
        %v1973 = vunpack.c.l.b16 %v1200
        %v1974 = vunpack.c.l.b16 %v1201
        %v1975 = vunpack.c.l.b16 %v1202
        %v1976 = vunpack.c.l.b16 %v1203
        %v1977 = vunpack.c.l.b16 %v1204
        %v1978 = vunpack.c.l.b16 %v1205
        %v1979 = vunpack.c.l.b16 %v1206
        %v1980 = vunpack.c.l.b16 %v1207
        %v1981 = vunpack.c.l.b16 %v1208
        %v1982 = vunpack.c.l.b16 %v1209
        %v1983 = vunpack.c.l.b16 %v1210
        %v1984 = vunpack.c.l.b16 %v1211
        %v1985 = vunpack.c.l.b16 %v1212
        %v1986 = vunpack.c.l.b16 %v1213
        %v1987 = vunpack.c.l.b16 %v1214
        %v1988 = vunpack.c.l.b16 %v1215
        %v1989 = vunpack.c.l.b16 %v1216
        %v1990 = vunpack.c.l.b16 %v1217
        %v1991 = vunpack.c.l.b16 %v1218
        %v1992 = vunpack.c.l.b16 %v1219
        %v1993 = vunpack.c.l.b16 %v1220
        %v1994 = vunpack.c.l.b16 %v1221
        %v1995 = vunpack.c.l.b16 %v1222
        %v1996 = vunpack.c.l.b16 %v1223
        %v1997 = vunpack.c.l.b16 %v1224
        %v1998 = vpack.c.b16 %v1967, %v1966
        %v1999 = vpack.c.b16 %v1969, %v1968
        %v2000 = vpack.c.b16 %v1971, %v1970
        %v2001 = vpack.c.b16 %v1973, %v1972
        %v2002 = vpack.c.b16 %v1975, %v1974
        %v2003 = vpack.c.b16 %v1977, %v1976
        %v2004 = vpack.c.b16 %v1979, %v1978
        %v2005 = vpack.c.b16 %v1981, %v1980
        %v2006 = vpack.c.b16 %v1983, %v1982
        %v2007 = vpack.c.b16 %v1985, %v1984
        %v2008 = vpack.c.b16 %v1987, %v1986
        %v2009 = vpack.c.b16 %v1989, %v1988
        %v2010 = vpack.c.b16 %v1991, %v1990
        %v2011 = vpack.c.b16 %v1993, %v1992
        %v2012 = vpack.c.b16 %v1995, %v1994
        %v2013 = vpack.c.b16 %v1997, %v1996
        %v2046 = vunpack.c.l.b16 %v1225
        %v2047 = vunpack.c.l.b16 %v1226
        %v2048 = vunpack.c.l.b16 %v1227
        %v2049 = vunpack.c.l.b16 %v1228
        %v2050 = vunpack.c.l.b16 %v1229
        %v2051 = vunpack.c.l.b16 %v1230
        %v2052 = vunpack.c.l.b16 %v1231
        %v2053 = vunpack.c.l.b16 %v1232
        %v2054 = vunpack.c.l.b16 %v1233
        %v2055 = vunpack.c.l.b16 %v1234
        %v2056 = vunpack.c.l.b16 %v1235
        %v2057 = vunpack.c.l.b16 %v1236
        %v2058 = vunpack.c.l.b16 %v1237
        %v2059 = vunpack.c.l.b16 %v1238
        %v2060 = vunpack.c.l.b16 %v1239
        %v2061 = vunpack.c.l.b16 %v1240
        %v2062 = vpack.c.b16 %v2047, %v2046
        %v2063 = vpack.c.b16 %v2049, %v2048
        %v2064 = vpack.c.b16 %v2051, %v2050
        %v2065 = vpack.c.b16 %v2053, %v2052
        %v2066 = vpack.c.b16 %v2055, %v2054
        %v2067 = vpack.c.b16 %v2057, %v2056
        %v2068 = vpack.c.b16 %v2059, %v2058
        %v2069 = vpack.c.b16 %v2061, %v2060
        %2078 = vmatprep.subr.bf16.mxu0 0
        %2079 = vmatpush1.bf16.msra.mxu0 %v2062
        %2080 = vmatprep.subr.bf16.mxu0 0
        %2081 = vmatpush1.bf16.msra.mxu0 %v2063
        %2082 = vmatprep.subr.bf16.mxu0 0
        %2083 = vmatpush1.bf16.msra.mxu0 %v2064
        %2084 = vmatprep.subr.bf16.mxu0 0
        %2085 = vmatpush1.bf16.msra.mxu0 %v2065
        %2086 = vmatprep.subr.bf16.mxu0 0
        %2087 = vmatpush1.bf16.msra.mxu0 %v2066
        %2088 = vmatprep.subr.bf16.mxu0 0
        %2089 = vmatpush1.bf16.msra.mxu0 %v2067
        %2090 = vmatprep.subr.bf16.mxu0 0
        %2091 = vmatpush1.bf16.msra.mxu0 %v2068
        %2092 = vmatprep.subr.bf16.mxu0 0
        %2093 = vmatpush1.bf16.msra.mxu0 %v2069
        %2094 = vmatprep.subr.bf16.mxu0 0
        %2095 = vmatpush1.bf16.msra.mxu0 0
        %2096 = vmatprep.subr.bf16.mxu0 0
        %2097 = vmatpush1.bf16.msra.mxu0 0
        %2098 = vmatprep.subr.bf16.mxu0 0
        %2099 = vmatpush1.bf16.msra.mxu0 0
        %2100 = vmatprep.subr.bf16.mxu0 0
        %2101 = vmatpush1.bf16.msra.mxu0 0
        %2102 = vmatprep.subr.bf16.mxu0 0
        %2103 = vmatpush1.bf16.msra.mxu0 0
        %2104 = vmatprep.subr.bf16.mxu0 0
        %2105 = vmatpush1.bf16.msra.mxu0 0
        %2106 = vmatprep.subr.bf16.mxu0 0
        %2107 = vmatpush1.bf16.msra.mxu0 0
        %2108 = vmatprep.subr.bf16.mxu0 0
        %2109 = vmatpush1.bf16.msra.mxu0 0
        %2110 = vmatprep.mubr.bf16.mxu0 0
        %2111 = vmatmul.mubr.bf16.gmra.mrb[0].mxu0 %v1998
        %v2112 = vpop.f32.mrb[0].mxu0
        %v2113 = vadd.f32 %v1808, %v2112
        %v2114 = vpop.f32.mrb[0].mxu0
        %v2115 = vpop.f32.mrb[0].mxu0
        %v2116 = vadd.f32 %v1811, %v2115
        %v2117 = vpop.f32.mrb[0].mxu0
        %2118 = vmatprep.mubr.bf16.mxu0 0
        %2119 = vmatmul.mubr.bf16.gmra.mrb[0].mxu0 %v1999
        %v2120 = vpop.f32.mrb[0].mxu0
        %v2121 = vadd.f32 %v1816, %v2120
        %v2122 = vpop.f32.mrb[0].mxu0
        %v2123 = vpop.f32.mrb[0].mxu0
        %v2124 = vadd.f32 %v1819, %v2123
        %v2125 = vpop.f32.mrb[0].mxu0
        %2126 = vmatprep.mubr.bf16.mxu0 0
        %2127 = vmatmul.mubr.bf16.gmra.mrb[0].mxu0 %v2000
        %v2128 = vpop.f32.mrb[0].mxu0
        %v2129 = vadd.f32 %v1824, %v2128
        %v2130 = vpop.f32.mrb[0].mxu0
        %v2131 = vpop.f32.mrb[0].mxu0
        %v2132 = vadd.f32 %v1827, %v2131
        %v2133 = vpop.f32.mrb[0].mxu0
        %2134 = vmatprep.mubr.bf16.mxu0 0
        %2135 = vmatmul.mubr.bf16.gmra.mrb[0].mxu0 %v2001
        %v2136 = vpop.f32.mrb[0].mxu0
        %v2137 = vadd.f32 %v1832, %v2136
        %v2138 = vpop.f32.mrb[0].mxu0
        %v2139 = vpop.f32.mrb[0].mxu0
        %v2140 = vadd.f32 %v1835, %v2139
        %v2141 = vpop.f32.mrb[0].mxu0
        %2142 = vmatprep.mubr.bf16.mxu0 0
        %2143 = vmatmul.mubr.bf16.gmra.mrb[0].mxu0 %v2002
        %v2144 = vpop.f32.mrb[0].mxu0
        %v2145 = vadd.f32 %v1840, %v2144
        %v2146 = vpop.f32.mrb[0].mxu0
        %v2147 = vpop.f32.mrb[0].mxu0
        %v2148 = vadd.f32 %v1843, %v2147
        %v2149 = vpop.f32.mrb[0].mxu0
        %2150 = vmatprep.mubr.bf16.mxu0 0
        %2151 = vmatmul.mubr.bf16.gmra.mrb[0].mxu0 %v2003
        %v2152 = vpop.f32.mrb[0].mxu0
        %v2153 = vadd.f32 %v1848, %v2152
        %v2154 = vpop.f32.mrb[0].mxu0
        %v2155 = vpop.f32.mrb[0].mxu0
        %v2156 = vadd.f32 %v1851, %v2155
        %v2157 = vpop.f32.mrb[0].mxu0
        %2158 = vmatprep.mubr.bf16.mxu0 0
        %2159 = vmatmul.mubr.bf16.gmra.mrb[0].mxu0 %v2004
        %v2160 = vpop.f32.mrb[0].mxu0
        %v2161 = vadd.f32 %v1856, %v2160
        %v2162 = vpop.f32.mrb[0].mxu0
        %v2163 = vpop.f32.mrb[0].mxu0
        %v2164 = vadd.f32 %v1859, %v2163
        %v2165 = vpop.f32.mrb[0].mxu0
        %2166 = vmatprep.mubr.bf16.mxu0 0
        %2167 = vmatmul.mubr.bf16.gmra.mrb[0].mxu0 %v2005
        %v2168 = vpop.f32.mrb[0].mxu0
        %v2169 = vadd.f32 %v1864, %v2168
        %v2170 = vpop.f32.mrb[0].mxu0
        %v2171 = vpop.f32.mrb[0].mxu0
        %v2172 = vadd.f32 %v1867, %v2171
        %v2173 = vpop.f32.mrb[0].mxu0
        %2174 = vmatprep.mubr.bf16.mxu0 0
        %2175 = vmatmul.mubr.bf16.gmra.mrb[0].mxu0 %v2006
        %v2176 = vpop.f32.mrb[0].mxu0
        %v2177 = vadd.f32 %v1872, %v2176
        %v2178 = vpop.f32.mrb[0].mxu0
        %v2179 = vpop.f32.mrb[0].mxu0
        %v2180 = vadd.f32 %v1875, %v2179
        %v2181 = vpop.f32.mrb[0].mxu0
        %2182 = vmatprep.mubr.bf16.mxu0 0
        %2183 = vmatmul.mubr.bf16.gmra.mrb[0].mxu0 %v2007
        %v2184 = vpop.f32.mrb[0].mxu0
        %v2185 = vadd.f32 %v1880, %v2184
        %v2186 = vpop.f32.mrb[0].mxu0
        %v2187 = vpop.f32.mrb[0].mxu0
        %v2188 = vadd.f32 %v1883, %v2187
        %v2189 = vpop.f32.mrb[0].mxu0
        %2190 = vmatprep.mubr.bf16.mxu0 0
        %2191 = vmatmul.mubr.bf16.gmra.mrb[0].mxu0 %v2008
        %v2192 = vpop.f32.mrb[0].mxu0
        %v2193 = vadd.f32 %v1888, %v2192
        %v2194 = vpop.f32.mrb[0].mxu0
        %v2195 = vpop.f32.mrb[0].mxu0
        %v2196 = vadd.f32 %v1891, %v2195
        %v2197 = vpop.f32.mrb[0].mxu0
        %2198 = vmatprep.mubr.bf16.mxu0 0
        %2199 = vmatmul.mubr.bf16.gmra.mrb[0].mxu0 %v2009
        %v2200 = vpop.f32.mrb[0].mxu0
        %v2201 = vadd.f32 %v1896, %v2200
        %v2202 = vpop.f32.mrb[0].mxu0
        %v2203 = vpop.f32.mrb[0].mxu0
        %v2204 = vadd.f32 %v1899, %v2203
        %v2205 = vpop.f32.mrb[0].mxu0
        %2206 = vmatprep.mubr.bf16.mxu0 0
        %2207 = vmatmul.mubr.bf16.gmra.mrb[0].mxu0 %v2010
        %v2208 = vpop.f32.mrb[0].mxu0
        %v2209 = vadd.f32 %v1904, %v2208
        %v2210 = vpop.f32.mrb[0].mxu0
        %v2211 = vpop.f32.mrb[0].mxu0
        %v2212 = vadd.f32 %v1907, %v2211
        %v2213 = vpop.f32.mrb[0].mxu0
        %2214 = vmatprep.mubr.bf16.mxu0 0
        %2215 = vmatmul.mubr.bf16.gmra.mrb[0].mxu0 %v2011
        %v2216 = vpop.f32.mrb[0].mxu0
        %v2217 = vadd.f32 %v1912, %v2216
        %v2218 = vpop.f32.mrb[0].mxu0
        %v2219 = vpop.f32.mrb[0].mxu0
        %v2220 = vadd.f32 %v1915, %v2219
        %v2221 = vpop.f32.mrb[0].mxu0
        %2222 = vmatprep.mubr.bf16.mxu0 0
        %2223 = vmatmul.mubr.bf16.gmra.mrb[0].mxu0 %v2012
        %v2224 = vpop.f32.mrb[0].mxu0
        %v2225 = vadd.f32 %v1920, %v2224
        %v2226 = vpop.f32.mrb[0].mxu0
        %v2227 = vpop.f32.mrb[0].mxu0
        %v2228 = vadd.f32 %v1923, %v2227
        %v2229 = vpop.f32.mrb[0].mxu0
        %2230 = vmatprep.mubr.bf16.mxu0 0
        %2231 = vmatmul.mubr.bf16.gmra.mrb[0].mxu0 %v2013
        %v2232 = vpop.f32.mrb[0].mxu0
        %v2233 = vadd.f32 %v1928, %v2232
        %v2234 = vpop.f32.mrb[0].mxu0
        %v2235 = vpop.f32.mrb[0].mxu0
        %v2236 = vadd.f32 %v1931, %v2235
        %v2237 = vpop.f32.mrb[0].mxu0
        %2238 = vdwg.mxu0
        %v2239 = vld [vmem:[#allocation2] sm:$0xe]
        %v2240 = vld [vmem:[#allocation2 + $0xc] sm:$0xe]
        %v2241 = vld [vmem:[#allocation2 + $0x18] sm:$0xe]
        %v2242 = vld [vmem:[#allocation2 + $0x24] sm:$0xe]
        %v2243 = vld [vmem:[#allocation2 + $0x30] sm:$0xe]
        %v2244 = vld [vmem:[#allocation2 + $0x3c] sm:$0xe]
        %v2245 = vld [vmem:[#allocation2 + $0x48] sm:$0xe]
        %v2246 = vld [vmem:[#allocation2 + $0x54] sm:$0xe]
        %v2247 = vld [vmem:[#allocation2 + $0x60] sm:$0xe]
        %v2248 = vld [vmem:[#allocation2 + $0x6c] sm:$0xe]
        %v2249 = vld [vmem:[#allocation2 + $0x78] sm:$0xe]
        %v2250 = vld [vmem:[#allocation2 + $0x84] sm:$0xe]
        %v2251 = vld [vmem:[#allocation2 + $0x90] sm:$0xe]
        %v2252 = vld [vmem:[#allocation2 + $0x9c] sm:$0xe]
        %v2253 = vld [vmem:[#allocation2 + $0xa8] sm:$0xe]
        %v2254 = vld [vmem:[#allocation2 + $0xb4] sm:$0xe]
        %vm2287 = vcmask 1042432
        %vm2288 = vcmask 1046532
        %vm2289 = vmor %vm2287, %vm2288
        %v2290 = vrot.slane %v2239, 5
        %v2291 = vrot.slane %v2290, 4
        %v2292 = vrot.slane %v1194, 5
        %v2293 = vsel %vm2289, %v2291, %v2292
        %v2294 = vrot.slane %v2292, 4
        %v2295 = vrot.slane %v1241, 5
        %v2296 = vsel %vm2289, %v2294, %v2295
        %v2297 = vrot.slane %v2240, 5
        %v2298 = vrot.slane %v2297, 4
        %v2299 = vrot.slane %v1196, 5
        %v2300 = vsel %vm2289, %v2298, %v2299
        %v2301 = vrot.slane %v2299, 4
        %v2302 = vrot.slane %v1242, 5
        %v2303 = vsel %vm2289, %v2301, %v2302
        %v2304 = vrot.slane %v2241, 5
        %v2305 = vrot.slane %v2304, 4
        %v2306 = vrot.slane %v1198, 5
        %v2307 = vsel %vm2289, %v2305, %v2306
        %v2308 = vrot.slane %v2306, 4
        %v2309 = vrot.slane %v1243, 5
        %v2310 = vsel %vm2289, %v2308, %v2309
        %v2311 = vrot.slane %v2242, 5
        %v2312 = vrot.slane %v2311, 4
        %v2313 = vrot.slane %v1200, 5
        %v2314 = vsel %vm2289, %v2312, %v2313
        %v2315 = vrot.slane %v2313, 4
        %v2316 = vrot.slane %v1244, 5
        %v2317 = vsel %vm2289, %v2315, %v2316
        %v2318 = vrot.slane %v2243, 5
        %v2319 = vrot.slane %v2318, 4
        %v2320 = vrot.slane %v1202, 5
        %v2321 = vsel %vm2289, %v2319, %v2320
        %v2322 = vrot.slane %v2320, 4
        %v2323 = vrot.slane %v1245, 5
        %v2324 = vsel %vm2289, %v2322, %v2323
        %v2325 = vrot.slane %v2244, 5
        %v2326 = vrot.slane %v2325, 4
        %v2327 = vrot.slane %v1204, 5
        %v2328 = vsel %vm2289, %v2326, %v2327
        %v2329 = vrot.slane %v2327, 4
        %v2330 = vrot.slane %v1246, 5
        %v2331 = vsel %vm2289, %v2329, %v2330
        %v2332 = vrot.slane %v2245, 5
        %v2333 = vrot.slane %v2332, 4
        %v2334 = vrot.slane %v1206, 5
        %v2335 = vsel %vm2289, %v2333, %v2334
        %v2336 = vrot.slane %v2334, 4
        %v2337 = vrot.slane %v1247, 5
        %v2338 = vsel %vm2289, %v2336, %v2337
        %v2339 = vrot.slane %v2246, 5
        %v2340 = vrot.slane %v2339, 4
        %v2341 = vrot.slane %v1208, 5
        %v2342 = vsel %vm2289, %v2340, %v2341
        %v2343 = vrot.slane %v2341, 4
        %v2344 = vrot.slane %v1248, 5
        %v2345 = vsel %vm2289, %v2343, %v2344
        %v2346 = vrot.slane %v2247, 5
        %v2347 = vrot.slane %v2346, 4
        %v2348 = vrot.slane %v1210, 5
        %v2349 = vsel %vm2289, %v2347, %v2348
        %v2350 = vrot.slane %v2348, 4
        %v2351 = vrot.slane %v1249, 5
        %v2352 = vsel %vm2289, %v2350, %v2351
        %v2353 = vrot.slane %v2248, 5
        %v2354 = vrot.slane %v2353, 4
        %v2355 = vrot.slane %v1212, 5
        %v2356 = vsel %vm2289, %v2354, %v2355
        %v2357 = vrot.slane %v2355, 4
        %v2358 = vrot.slane %v1250, 5
        %v2359 = vsel %vm2289, %v2357, %v2358
        %v2360 = vrot.slane %v2249, 5
        %v2361 = vrot.slane %v2360, 4
        %v2362 = vrot.slane %v1214, 5
        %v2363 = vsel %vm2289, %v2361, %v2362
        %v2364 = vrot.slane %v2362, 4
        %v2365 = vrot.slane %v1251, 5
        %v2366 = vsel %vm2289, %v2364, %v2365
        %v2367 = vrot.slane %v2250, 5
        %v2368 = vrot.slane %v2367, 4
        %v2369 = vrot.slane %v1216, 5
        %v2370 = vsel %vm2289, %v2368, %v2369
        %v2371 = vrot.slane %v2369, 4
        %v2372 = vrot.slane %v1252, 5
        %v2373 = vsel %vm2289, %v2371, %v2372
        %v2374 = vrot.slane %v2251, 5
        %v2375 = vrot.slane %v2374, 4
        %v2376 = vrot.slane %v1218, 5
        %v2377 = vsel %vm2289, %v2375, %v2376
        %v2378 = vrot.slane %v2376, 4
        %v2379 = vrot.slane %v1253, 5
        %v2380 = vsel %vm2289, %v2378, %v2379
        %v2381 = vrot.slane %v2252, 5
        %v2382 = vrot.slane %v2381, 4
        %v2383 = vrot.slane %v1220, 5
        %v2384 = vsel %vm2289, %v2382, %v2383
        %v2385 = vrot.slane %v2383, 4
        %v2386 = vrot.slane %v1254, 5
        %v2387 = vsel %vm2289, %v2385, %v2386
        %v2388 = vrot.slane %v2253, 5
        %v2389 = vrot.slane %v2388, 4
        %v2390 = vrot.slane %v1222, 5
        %v2391 = vsel %vm2289, %v2389, %v2390
        %v2392 = vrot.slane %v2390, 4
        %v2393 = vrot.slane %v1255, 5
        %v2394 = vsel %vm2289, %v2392, %v2393
        %v2395 = vrot.slane %v2254, 5
        %v2396 = vrot.slane %v2395, 4
        %v2397 = vrot.slane %v1224, 5
        %v2398 = vsel %vm2289, %v2396, %v2397
        %v2399 = vrot.slane %v2397, 4
        %v2400 = vrot.slane %v1256, 5
        %v2401 = vsel %vm2289, %v2399, %v2400
        %s2402 = scalar_lea.vmem [#allocation9], 128
        %v2403 = vld [vmem:[%s2402] sm:$0xf]
        %v2404 = vld [vmem:[%s2402 + $0x4] sm:$0xf]
        %v2405 = vld [vmem:[%s2402 + $0x8] sm:$0xf]
        %v2406 = vld [vmem:[%s2402 + $0xc] sm:$0xf]
        %v2407 = vld [vmem:[%s2402 + $0x10] sm:$0xf]
        %v2408 = vld [vmem:[%s2402 + $0x14] sm:$0xf]
        %v2409 = vld [vmem:[%s2402 + $0x18] sm:$0xf]
        %v2410 = vld [vmem:[%s2402 + $0x1c] sm:$0xf]
        %v2411 = vld [vmem:[%s2402 + $0x20] sm:$0xf]
        %v2412 = vld [vmem:[%s2402 + $0x24] sm:$0xf]
        %v2413 = vld [vmem:[%s2402 + $0x28] sm:$0xf]
        %v2414 = vld [vmem:[%s2402 + $0x2c] sm:$0xf]
        %v2415 = vld [vmem:[%s2402 + $0x30] sm:$0xf]
        %v2416 = vld [vmem:[%s2402 + $0x34] sm:$0xf]
        %v2417 = vld [vmem:[%s2402 + $0x38] sm:$0xf]
        %v2418 = vld [vmem:[%s2402 + $0x3c] sm:$0xf]
        %v2419 = vunpack.c.l.b16 %v2293
        %v2420 = vunpack.c.l.b16 %v2296
        %v2421 = vunpack.c.l.b16 %v2300
        %v2422 = vunpack.c.l.b16 %v2303
        %v2423 = vunpack.c.l.b16 %v2307
        %v2424 = vunpack.c.l.b16 %v2310
        %v2425 = vunpack.c.l.b16 %v2314
        %v2426 = vunpack.c.l.b16 %v2317
        %v2427 = vunpack.c.l.b16 %v2321
        %v2428 = vunpack.c.l.b16 %v2324
        %v2429 = vunpack.c.l.b16 %v2328
        %v2430 = vunpack.c.l.b16 %v2331
        %v2431 = vunpack.c.l.b16 %v2335
        %v2432 = vunpack.c.l.b16 %v2338
        %v2433 = vunpack.c.l.b16 %v2342
        %v2434 = vunpack.c.l.b16 %v2345
        %v2435 = vunpack.c.l.b16 %v2349
        %v2436 = vunpack.c.l.b16 %v2352
        %v2437 = vunpack.c.l.b16 %v2356
        %v2438 = vunpack.c.l.b16 %v2359
        %v2439 = vunpack.c.l.b16 %v2363
        %v2440 = vunpack.c.l.b16 %v2366
        %v2441 = vunpack.c.l.b16 %v2370
        %v2442 = vunpack.c.l.b16 %v2373
        %v2443 = vunpack.c.l.b16 %v2377
        %v2444 = vunpack.c.l.b16 %v2380
        %v2445 = vunpack.c.l.b16 %v2384
        %v2446 = vunpack.c.l.b16 %v2387
        %v2447 = vunpack.c.l.b16 %v2391
        %v2448 = vunpack.c.l.b16 %v2394
        %v2449 = vunpack.c.l.b16 %v2398
        %v2450 = vunpack.c.l.b16 %v2401
        %v2451 = vpack.c.b16 %v2420, %v2419
        %v2452 = vpack.c.b16 %v2422, %v2421
        %v2453 = vpack.c.b16 %v2424, %v2423
        %v2454 = vpack.c.b16 %v2426, %v2425
        %v2455 = vpack.c.b16 %v2428, %v2427
        %v2456 = vpack.c.b16 %v2430, %v2429
        %v2457 = vpack.c.b16 %v2432, %v2431
        %v2458 = vpack.c.b16 %v2434, %v2433
        %v2459 = vpack.c.b16 %v2436, %v2435
        %v2460 = vpack.c.b16 %v2438, %v2437
        %v2461 = vpack.c.b16 %v2440, %v2439
        %v2462 = vpack.c.b16 %v2442, %v2441
        %v2463 = vpack.c.b16 %v2444, %v2443
        %v2464 = vpack.c.b16 %v2446, %v2445
        %v2465 = vpack.c.b16 %v2448, %v2447
        %v2466 = vpack.c.b16 %v2450, %v2449
        %v2499 = vunpack.c.l.b16 %v2403
        %v2500 = vunpack.c.l.b16 %v2404
        %v2501 = vunpack.c.l.b16 %v2405
        %v2502 = vunpack.c.l.b16 %v2406
        %v2503 = vunpack.c.l.b16 %v2407
        %v2504 = vunpack.c.l.b16 %v2408
        %v2505 = vunpack.c.l.b16 %v2409
        %v2506 = vunpack.c.l.b16 %v2410
        %v2507 = vunpack.c.l.b16 %v2411
        %v2508 = vunpack.c.l.b16 %v2412
        %v2509 = vunpack.c.l.b16 %v2413
        %v2510 = vunpack.c.l.b16 %v2414
        %v2511 = vunpack.c.l.b16 %v2415
        %v2512 = vunpack.c.l.b16 %v2416
        %v2513 = vunpack.c.l.b16 %v2417
        %v2514 = vunpack.c.l.b16 %v2418
        %v2515 = vpack.c.b16 %v2500, %v2499
        %v2516 = vpack.c.b16 %v2502, %v2501
        %v2517 = vpack.c.b16 %v2504, %v2503
        %v2518 = vpack.c.b16 %v2506, %v2505
        %v2519 = vpack.c.b16 %v2508, %v2507
        %v2520 = vpack.c.b16 %v2510, %v2509
        %v2521 = vpack.c.b16 %v2512, %v2511
        %v2522 = vpack.c.b16 %v2514, %v2513
        %2531 = vmatprep.subr.bf16.mxu0 0
        %2532 = vmatpush1.bf16.msra.mxu0 %v2515
        %2533 = vmatprep.subr.bf16.mxu0 0
        %2534 = vmatpush1.bf16.msra.mxu0 %v2516
        %2535 = vmatprep.subr.bf16.mxu0 0
        %2536 = vmatpush1.bf16.msra.mxu0 %v2517
        %2537 = vmatprep.subr.bf16.mxu0 0
        %2538 = vmatpush1.bf16.msra.mxu0 %v2518
        %2539 = vmatprep.subr.bf16.mxu0 0
        %2540 = vmatpush1.bf16.msra.mxu0 %v2519
        %2541 = vmatprep.subr.bf16.mxu0 0
        %2542 = vmatpush1.bf16.msra.mxu0 %v2520
        %2543 = vmatprep.subr.bf16.mxu0 0
        %2544 = vmatpush1.bf16.msra.mxu0 %v2521
        %2545 = vmatprep.subr.bf16.mxu0 0
        %2546 = vmatpush1.bf16.msra.mxu0 %v2522
        %2547 = vmatprep.subr.bf16.mxu0 0
        %2548 = vmatpush1.bf16.msra.mxu0 0
        %2549 = vmatprep.subr.bf16.mxu0 0
        %2550 = vmatpush1.bf16.msra.mxu0 0
        %2551 = vmatprep.subr.bf16.mxu0 0
        %2552 = vmatpush1.bf16.msra.mxu0 0
        %2553 = vmatprep.subr.bf16.mxu0 0
        %2554 = vmatpush1.bf16.msra.mxu0 0
        %2555 = vmatprep.subr.bf16.mxu0 0
        %2556 = vmatpush1.bf16.msra.mxu0 0
        %2557 = vmatprep.subr.bf16.mxu0 0
        %2558 = vmatpush1.bf16.msra.mxu0 0
        %2559 = vmatprep.subr.bf16.mxu0 0
        %2560 = vmatpush1.bf16.msra.mxu0 0
        %2561 = vmatprep.subr.bf16.mxu0 0
        %2562 = vmatpush1.bf16.msra.mxu0 0
        %2563 = vmatprep.mubr.bf16.mxu0 0
        %2564 = vmatmul.mubr.bf16.gmra.mrb[0].mxu0 %v2451
        %v2565 = vpop.f32.mrb[0].mxu0
        %v2566 = vadd.f32 0.0, %v2565
        %v2567 = vpop.f32.mrb[0].mxu0
        %v2568 = vpop.f32.mrb[0].mxu0
        %v2569 = vadd.f32 0.0, %v2568
        %v2570 = vpop.f32.mrb[0].mxu0
        %2571 = vmatprep.mubr.bf16.mxu0 0
        %2572 = vmatmul.mubr.bf16.gmra.mrb[0].mxu0 %v2452
        %v2573 = vpop.f32.mrb[0].mxu0
        %v2574 = vadd.f32 0.0, %v2573
        %v2575 = vpop.f32.mrb[0].mxu0
        %v2576 = vpop.f32.mrb[0].mxu0
        %v2577 = vadd.f32 0.0, %v2576
        %v2578 = vpop.f32.mrb[0].mxu0
        %2579 = vmatprep.mubr.bf16.mxu0 0
        %2580 = vmatmul.mubr.bf16.gmra.mrb[0].mxu0 %v2453
        %v2581 = vpop.f32.mrb[0].mxu0
        %v2582 = vadd.f32 0.0, %v2581
        %v2583 = vpop.f32.mrb[0].mxu0
        %v2584 = vpop.f32.mrb[0].mxu0
        %v2585 = vadd.f32 0.0, %v2584
        %v2586 = vpop.f32.mrb[0].mxu0
        %2587 = vmatprep.mubr.bf16.mxu0 0
        %2588 = vmatmul.mubr.bf16.gmra.mrb[0].mxu0 %v2454
        %v2589 = vpop.f32.mrb[0].mxu0
        %v2590 = vadd.f32 0.0, %v2589
        %v2591 = vpop.f32.mrb[0].mxu0
        %v2592 = vpop.f32.mrb[0].mxu0
        %v2593 = vadd.f32 0.0, %v2592
        %v2594 = vpop.f32.mrb[0].mxu0
        %2595 = vmatprep.mubr.bf16.mxu0 0
        %2596 = vmatmul.mubr.bf16.gmra.mrb[0].mxu0 %v2455
        %v2597 = vpop.f32.mrb[0].mxu0
        %v2598 = vadd.f32 0.0, %v2597
        %v2599 = vpop.f32.mrb[0].mxu0
        %v2600 = vpop.f32.mrb[0].mxu0
        %v2601 = vadd.f32 0.0, %v2600
        %v2602 = vpop.f32.mrb[0].mxu0
        %2603 = vmatprep.mubr.bf16.mxu0 0
        %2604 = vmatmul.mubr.bf16.gmra.mrb[0].mxu0 %v2456
        %v2605 = vpop.f32.mrb[0].mxu0
        %v2606 = vadd.f32 0.0, %v2605
        %v2607 = vpop.f32.mrb[0].mxu0
        %v2608 = vpop.f32.mrb[0].mxu0
        %v2609 = vadd.f32 0.0, %v2608
        %v2610 = vpop.f32.mrb[0].mxu0
        %2611 = vmatprep.mubr.bf16.mxu0 0
        %2612 = vmatmul.mubr.bf16.gmra.mrb[0].mxu0 %v2457
        %v2613 = vpop.f32.mrb[0].mxu0
        %v2614 = vadd.f32 0.0, %v2613
        %v2615 = vpop.f32.mrb[0].mxu0
        %v2616 = vpop.f32.mrb[0].mxu0
        %v2617 = vadd.f32 0.0, %v2616
        %v2618 = vpop.f32.mrb[0].mxu0
        %2619 = vmatprep.mubr.bf16.mxu0 0
        %2620 = vmatmul.mubr.bf16.gmra.mrb[0].mxu0 %v2458
        %v2621 = vpop.f32.mrb[0].mxu0
        %v2622 = vadd.f32 0.0, %v2621
        %v2623 = vpop.f32.mrb[0].mxu0
        %v2624 = vpop.f32.mrb[0].mxu0
        %v2625 = vadd.f32 0.0, %v2624
        %v2626 = vpop.f32.mrb[0].mxu0
        %2627 = vmatprep.mubr.bf16.mxu0 0
        %2628 = vmatmul.mubr.bf16.gmra.mrb[0].mxu0 %v2459
        %v2629 = vpop.f32.mrb[0].mxu0
        %v2630 = vadd.f32 0.0, %v2629
        %v2631 = vpop.f32.mrb[0].mxu0
        %v2632 = vpop.f32.mrb[0].mxu0
        %v2633 = vadd.f32 0.0, %v2632
        %v2634 = vpop.f32.mrb[0].mxu0
        %2635 = vmatprep.mubr.bf16.mxu0 0
        %2636 = vmatmul.mubr.bf16.gmra.mrb[0].mxu0 %v2460
        %v2637 = vpop.f32.mrb[0].mxu0
        %v2638 = vadd.f32 0.0, %v2637
        %v2639 = vpop.f32.mrb[0].mxu0
        %v2640 = vpop.f32.mrb[0].mxu0
        %v2641 = vadd.f32 0.0, %v2640
        %v2642 = vpop.f32.mrb[0].mxu0
        %2643 = vmatprep.mubr.bf16.mxu0 0
        %2644 = vmatmul.mubr.bf16.gmra.mrb[0].mxu0 %v2461
        %v2645 = vpop.f32.mrb[0].mxu0
        %v2646 = vadd.f32 0.0, %v2645
        %v2647 = vpop.f32.mrb[0].mxu0
        %v2648 = vpop.f32.mrb[0].mxu0
        %v2649 = vadd.f32 0.0, %v2648
        %v2650 = vpop.f32.mrb[0].mxu0
        %2651 = vmatprep.mubr.bf16.mxu0 0
        %2652 = vmatmul.mubr.bf16.gmra.mrb[0].mxu0 %v2462
        %v2653 = vpop.f32.mrb[0].mxu0
        %v2654 = vadd.f32 0.0, %v2653
        %v2655 = vpop.f32.mrb[0].mxu0
        %v2656 = vpop.f32.mrb[0].mxu0
        %v2657 = vadd.f32 0.0, %v2656
        %v2658 = vpop.f32.mrb[0].mxu0
        %2659 = vmatprep.mubr.bf16.mxu0 0
        %2660 = vmatmul.mubr.bf16.gmra.mrb[0].mxu0 %v2463
        %v2661 = vpop.f32.mrb[0].mxu0
        %v2662 = vadd.f32 0.0, %v2661
        %v2663 = vpop.f32.mrb[0].mxu0
        %v2664 = vpop.f32.mrb[0].mxu0
        %v2665 = vadd.f32 0.0, %v2664
        %v2666 = vpop.f32.mrb[0].mxu0
        %2667 = vmatprep.mubr.bf16.mxu0 0
        %2668 = vmatmul.mubr.bf16.gmra.mrb[0].mxu0 %v2464
        %v2669 = vpop.f32.mrb[0].mxu0
        %v2670 = vadd.f32 0.0, %v2669
        %v2671 = vpop.f32.mrb[0].mxu0
        %v2672 = vpop.f32.mrb[0].mxu0
        %v2673 = vadd.f32 0.0, %v2672
        %v2674 = vpop.f32.mrb[0].mxu0
        %2675 = vmatprep.mubr.bf16.mxu0 0
        %2676 = vmatmul.mubr.bf16.gmra.mrb[0].mxu0 %v2465
        %v2677 = vpop.f32.mrb[0].mxu0
        %v2678 = vadd.f32 0.0, %v2677
        %v2679 = vpop.f32.mrb[0].mxu0
        %v2680 = vpop.f32.mrb[0].mxu0
        %v2681 = vadd.f32 0.0, %v2680
        %v2682 = vpop.f32.mrb[0].mxu0
        %2683 = vmatprep.mubr.bf16.mxu0 0
        %2684 = vmatmul.mubr.bf16.gmra.mrb[0].mxu0 %v2466
        %v2685 = vpop.f32.mrb[0].mxu0
        %v2686 = vadd.f32 0.0, %v2685
        %v2687 = vpop.f32.mrb[0].mxu0
        %v2688 = vpop.f32.mrb[0].mxu0
        %v2689 = vadd.f32 0.0, %v2688
        %v2690 = vpop.f32.mrb[0].mxu0
        %2691 = vdwg.mxu0
        %v2692 = vadd.f32 %v2113, %v2566
        %v2693 = vadd.f32 %v2116, %v2569
        %v2694 = vadd.f32 %v2121, %v2574
        %v2695 = vadd.f32 %v2124, %v2577
        %v2696 = vadd.f32 %v2129, %v2582
        %v2697 = vadd.f32 %v2132, %v2585
        %v2698 = vadd.f32 %v2137, %v2590
        %v2699 = vadd.f32 %v2140, %v2593
        %v2700 = vadd.f32 %v2145, %v2598
        %v2701 = vadd.f32 %v2148, %v2601
        %v2702 = vadd.f32 %v2153, %v2606
        %v2703 = vadd.f32 %v2156, %v2609
        %v2704 = vadd.f32 %v2161, %v2614
        %v2705 = vadd.f32 %v2164, %v2617
        %v2706 = vadd.f32 %v2169, %v2622
        %v2707 = vadd.f32 %v2172, %v2625
        %v2708 = vadd.f32 %v2177, %v2630
        %v2709 = vadd.f32 %v2180, %v2633
        %v2710 = vadd.f32 %v2185, %v2638
        %v2711 = vadd.f32 %v2188, %v2641
        %v2712 = vadd.f32 %v2193, %v2646
        %v2713 = vadd.f32 %v2196, %v2649
        %v2714 = vadd.f32 %v2201, %v2654
        %v2715 = vadd.f32 %v2204, %v2657
        %v2716 = vadd.f32 %v2209, %v2662
        %v2717 = vadd.f32 %v2212, %v2665
        %v2718 = vadd.f32 %v2217, %v2670
        %v2719 = vadd.f32 %v2220, %v2673
        %v2720 = vadd.f32 %v2225, %v2678
        %v2721 = vadd.f32 %v2228, %v2681
        %v2722 = vadd.f32 %v2233, %v2686
        %v2723 = vadd.f32 %v2236, %v2689
        %v2724 = vld [vmem:[%s964] sm:$0xf]
        %v2725 = vld [vmem:[%s964 + $0x4] sm:$0xf]
        %v2726 = vld [vmem:[%s964 + $0xc] sm:$0xf]
        %v2727 = vld [vmem:[%s964 + $0x10] sm:$0xf]
        %v2728 = vld [vmem:[%s964 + $0x18] sm:$0xf]
        %v2729 = vld [vmem:[%s964 + $0x1c] sm:$0xf]
        %v2730 = vld [vmem:[%s964 + $0x24] sm:$0xf]
        %v2731 = vld [vmem:[%s964 + $0x28] sm:$0xf]
        %v2732 = vld [vmem:[%s964 + $0x30] sm:$0xf]
        %v2733 = vld [vmem:[%s964 + $0x34] sm:$0xf]
        %v2734 = vld [vmem:[%s964 + $0x3c] sm:$0xf]
        %v2735 = vld [vmem:[%s964 + $0x40] sm:$0xf]
        %v2736 = vld [vmem:[%s964 + $0x48] sm:$0xf]
        %v2737 = vld [vmem:[%s964 + $0x4c] sm:$0xf]
        %v2738 = vld [vmem:[%s964 + $0x54] sm:$0xf]
        %v2739 = vld [vmem:[%s964 + $0x58] sm:$0xf]
        %v2740 = vld [vmem:[%s964 + $0x60] sm:$0xf]
        %v2741 = vld [vmem:[%s964 + $0x64] sm:$0xf]
        %v2742 = vld [vmem:[%s964 + $0x6c] sm:$0xf]
        %v2743 = vld [vmem:[%s964 + $0x70] sm:$0xf]
        %v2744 = vld [vmem:[%s964 + $0x78] sm:$0xf]
        %v2745 = vld [vmem:[%s964 + $0x7c] sm:$0xf]
        %v2746 = vld [vmem:[%s964 + $0x84] sm:$0xf]
        %v2747 = vld [vmem:[%s964 + $0x88] sm:$0xf]
        %v2748 = vld [vmem:[%s964 + $0x90] sm:$0xf]
        %v2749 = vld [vmem:[%s964 + $0x94] sm:$0xf]
        %v2750 = vld [vmem:[%s964 + $0x9c] sm:$0xf]
        %v2751 = vld [vmem:[%s964 + $0xa0] sm:$0xf]
        %v2752 = vld [vmem:[%s964 + $0xa8] sm:$0xf]
        %v2753 = vld [vmem:[%s964 + $0xac] sm:$0xf]
        %v2754 = vld [vmem:[%s964 + $0xb4] sm:$0xf]
        %v2755 = vld [vmem:[%s964 + $0xb8] sm:$0xf]
        %s2756 = scalar_lea.vmem [#allocation9], 192
        %v2757 = vld [vmem:[%s2756] sm:$0xf]
        %v2758 = vld [vmem:[%s2756 + $0x4] sm:$0xf]
        %v2759 = vld [vmem:[%s2756 + $0x8] sm:$0xf]
        %v2760 = vld [vmem:[%s2756 + $0xc] sm:$0xf]
        %v2761 = vld [vmem:[%s2756 + $0x10] sm:$0xf]
        %v2762 = vld [vmem:[%s2756 + $0x14] sm:$0xf]
        %v2763 = vld [vmem:[%s2756 + $0x18] sm:$0xf]
        %v2764 = vld [vmem:[%s2756 + $0x1c] sm:$0xf]
        %v2765 = vld [vmem:[%s2756 + $0x20] sm:$0xf]
        %v2766 = vld [vmem:[%s2756 + $0x24] sm:$0xf]
        %v2767 = vld [vmem:[%s2756 + $0x28] sm:$0xf]
        %v2768 = vld [vmem:[%s2756 + $0x2c] sm:$0xf]
        %v2769 = vld [vmem:[%s2756 + $0x30] sm:$0xf]
        %v2770 = vld [vmem:[%s2756 + $0x34] sm:$0xf]
        %v2771 = vld [vmem:[%s2756 + $0x38] sm:$0xf]
        %v2772 = vld [vmem:[%s2756 + $0x3c] sm:$0xf]
        %v2805 = vunpack.c.l.b16 %v2724
        %v2806 = vunpack.c.l.b16 %v2725
        %v2807 = vunpack.c.l.b16 %v2726
        %v2808 = vunpack.c.l.b16 %v2727
        %v2809 = vunpack.c.l.b16 %v2728
        %v2810 = vunpack.c.l.b16 %v2729
        %v2811 = vunpack.c.l.b16 %v2730
        %v2812 = vunpack.c.l.b16 %v2731
        %v2813 = vunpack.c.l.b16 %v2732
        %v2814 = vunpack.c.l.b16 %v2733
        %v2815 = vunpack.c.l.b16 %v2734
        %v2816 = vunpack.c.l.b16 %v2735
        %v2817 = vunpack.c.l.b16 %v2736
        %v2818 = vunpack.c.l.b16 %v2737
        %v2819 = vunpack.c.l.b16 %v2738
        %v2820 = vunpack.c.l.b16 %v2739
        %v2821 = vunpack.c.l.b16 %v2740
        %v2822 = vunpack.c.l.b16 %v2741
        %v2823 = vunpack.c.l.b16 %v2742
        %v2824 = vunpack.c.l.b16 %v2743
        %v2825 = vunpack.c.l.b16 %v2744
        %v2826 = vunpack.c.l.b16 %v2745
        %v2827 = vunpack.c.l.b16 %v2746
        %v2828 = vunpack.c.l.b16 %v2747
        %v2829 = vunpack.c.l.b16 %v2748
        %v2830 = vunpack.c.l.b16 %v2749
        %v2831 = vunpack.c.l.b16 %v2750
        %v2832 = vunpack.c.l.b16 %v2751
        %v2833 = vunpack.c.l.b16 %v2752
        %v2834 = vunpack.c.l.b16 %v2753
        %v2835 = vunpack.c.l.b16 %v2754
        %v2836 = vunpack.c.l.b16 %v2755
        %v2837 = vpack.c.b16 %v2806, %v2805
        %v2838 = vpack.c.b16 %v2808, %v2807
        %v2839 = vpack.c.b16 %v2810, %v2809
        %v2840 = vpack.c.b16 %v2812, %v2811
        %v2841 = vpack.c.b16 %v2814, %v2813
        %v2842 = vpack.c.b16 %v2816, %v2815
        %v2843 = vpack.c.b16 %v2818, %v2817
        %v2844 = vpack.c.b16 %v2820, %v2819
        %v2845 = vpack.c.b16 %v2822, %v2821
        %v2846 = vpack.c.b16 %v2824, %v2823
        %v2847 = vpack.c.b16 %v2826, %v2825
        %v2848 = vpack.c.b16 %v2828, %v2827
        %v2849 = vpack.c.b16 %v2830, %v2829
        %v2850 = vpack.c.b16 %v2832, %v2831
        %v2851 = vpack.c.b16 %v2834, %v2833
        %v2852 = vpack.c.b16 %v2836, %v2835
        %v2885 = vunpack.c.l.b16 %v2757
        %v2886 = vunpack.c.l.b16 %v2758
        %v2887 = vunpack.c.l.b16 %v2759
        %v2888 = vunpack.c.l.b16 %v2760
        %v2889 = vunpack.c.l.b16 %v2761
        %v2890 = vunpack.c.l.b16 %v2762
        %v2891 = vunpack.c.l.b16 %v2763
        %v2892 = vunpack.c.l.b16 %v2764
        %v2893 = vunpack.c.l.b16 %v2765
        %v2894 = vunpack.c.l.b16 %v2766
        %v2895 = vunpack.c.l.b16 %v2767
        %v2896 = vunpack.c.l.b16 %v2768
        %v2897 = vunpack.c.l.b16 %v2769
        %v2898 = vunpack.c.l.b16 %v2770
        %v2899 = vunpack.c.l.b16 %v2771
        %v2900 = vunpack.c.l.b16 %v2772
        %v2901 = vpack.c.b16 %v2886, %v2885
        %v2902 = vpack.c.b16 %v2888, %v2887
        %v2903 = vpack.c.b16 %v2890, %v2889
        %v2904 = vpack.c.b16 %v2892, %v2891
        %v2905 = vpack.c.b16 %v2894, %v2893
        %v2906 = vpack.c.b16 %v2896, %v2895
        %v2907 = vpack.c.b16 %v2898, %v2897
        %v2908 = vpack.c.b16 %v2900, %v2899
        %2917 = vmatprep.subr.bf16.mxu0 0
        %2918 = vmatpush1.bf16.msra.mxu0 %v2901
        %2919 = vmatprep.subr.bf16.mxu0 0
        %2920 = vmatpush1.bf16.msra.mxu0 %v2902
        %2921 = vmatprep.subr.bf16.mxu0 0
        %2922 = vmatpush1.bf16.msra.mxu0 %v2903
        %2923 = vmatprep.subr.bf16.mxu0 0
        %2924 = vmatpush1.bf16.msra.mxu0 %v2904
        %2925 = vmatprep.subr.bf16.mxu0 0
        %2926 = vmatpush1.bf16.msra.mxu0 %v2905
        %2927 = vmatprep.subr.bf16.mxu0 0
        %2928 = vmatpush1.bf16.msra.mxu0 %v2906
        %2929 = vmatprep.subr.bf16.mxu0 0
        %2930 = vmatpush1.bf16.msra.mxu0 %v2907
        %2931 = vmatprep.subr.bf16.mxu0 0
        %2932 = vmatpush1.bf16.msra.mxu0 %v2908
        %2933 = vmatprep.subr.bf16.mxu0 0
        %2934 = vmatpush1.bf16.msra.mxu0 0
        %2935 = vmatprep.subr.bf16.mxu0 0
        %2936 = vmatpush1.bf16.msra.mxu0 0
        %2937 = vmatprep.subr.bf16.mxu0 0
        %2938 = vmatpush1.bf16.msra.mxu0 0
        %2939 = vmatprep.subr.bf16.mxu0 0
        %2940 = vmatpush1.bf16.msra.mxu0 0
        %2941 = vmatprep.subr.bf16.mxu0 0
        %2942 = vmatpush1.bf16.msra.mxu0 0
        %2943 = vmatprep.subr.bf16.mxu0 0
        %2944 = vmatpush1.bf16.msra.mxu0 0
        %2945 = vmatprep.subr.bf16.mxu0 0
        %2946 = vmatpush1.bf16.msra.mxu0 0
        %2947 = vmatprep.subr.bf16.mxu0 0
        %2948 = vmatpush1.bf16.msra.mxu0 0
        %2949 = vmatprep.mubr.bf16.mxu0 0
        %2950 = vmatmul.mubr.bf16.gmra.mrb[0].mxu0 %v2837
        %v2951 = vpop.f32.mrb[0].mxu0
        %v2952 = vadd.f32 0.0, %v2951
        %v2953 = vpop.f32.mrb[0].mxu0
        %v2954 = vpop.f32.mrb[0].mxu0
        %v2955 = vadd.f32 0.0, %v2954
        %v2956 = vpop.f32.mrb[0].mxu0
        %2957 = vmatprep.mubr.bf16.mxu0 0
        %2958 = vmatmul.mubr.bf16.gmra.mrb[0].mxu0 %v2838
        %v2959 = vpop.f32.mrb[0].mxu0
        %v2960 = vadd.f32 0.0, %v2959
        %v2961 = vpop.f32.mrb[0].mxu0
        %v2962 = vpop.f32.mrb[0].mxu0
        %v2963 = vadd.f32 0.0, %v2962
        %v2964 = vpop.f32.mrb[0].mxu0
        %2965 = vmatprep.mubr.bf16.mxu0 0
        %2966 = vmatmul.mubr.bf16.gmra.mrb[0].mxu0 %v2839
        %v2967 = vpop.f32.mrb[0].mxu0
        %v2968 = vadd.f32 0.0, %v2967
        %v2969 = vpop.f32.mrb[0].mxu0
        %v2970 = vpop.f32.mrb[0].mxu0
        %v2971 = vadd.f32 0.0, %v2970
        %v2972 = vpop.f32.mrb[0].mxu0
        %2973 = vmatprep.mubr.bf16.mxu0 0
        %2974 = vmatmul.mubr.bf16.gmra.mrb[0].mxu0 %v2840
        %v2975 = vpop.f32.mrb[0].mxu0
        %v2976 = vadd.f32 0.0, %v2975
        %v2977 = vpop.f32.mrb[0].mxu0
        %v2978 = vpop.f32.mrb[0].mxu0
        %v2979 = vadd.f32 0.0, %v2978
        %v2980 = vpop.f32.mrb[0].mxu0
        %2981 = vmatprep.mubr.bf16.mxu0 0
        %2982 = vmatmul.mubr.bf16.gmra.mrb[0].mxu0 %v2841
        %v2983 = vpop.f32.mrb[0].mxu0
        %v2984 = vadd.f32 0.0, %v2983
        %v2985 = vpop.f32.mrb[0].mxu0
        %v2986 = vpop.f32.mrb[0].mxu0
        %v2987 = vadd.f32 0.0, %v2986
        %v2988 = vpop.f32.mrb[0].mxu0
        %2989 = vmatprep.mubr.bf16.mxu0 0
        %2990 = vmatmul.mubr.bf16.gmra.mrb[0].mxu0 %v2842
        %v2991 = vpop.f32.mrb[0].mxu0
        %v2992 = vadd.f32 0.0, %v2991
        %v2993 = vpop.f32.mrb[0].mxu0
        %v2994 = vpop.f32.mrb[0].mxu0
        %v2995 = vadd.f32 0.0, %v2994
        %v2996 = vpop.f32.mrb[0].mxu0
        %2997 = vmatprep.mubr.bf16.mxu0 0
        %2998 = vmatmul.mubr.bf16.gmra.mrb[0].mxu0 %v2843
        %v2999 = vpop.f32.mrb[0].mxu0
        %v3000 = vadd.f32 0.0, %v2999
        %v3001 = vpop.f32.mrb[0].mxu0
        %v3002 = vpop.f32.mrb[0].mxu0
        %v3003 = vadd.f32 0.0, %v3002
        %v3004 = vpop.f32.mrb[0].mxu0
        %3005 = vmatprep.mubr.bf16.mxu0 0
        %3006 = vmatmul.mubr.bf16.gmra.mrb[0].mxu0 %v2844
        %v3007 = vpop.f32.mrb[0].mxu0
        %v3008 = vadd.f32 0.0, %v3007
        %v3009 = vpop.f32.mrb[0].mxu0
        %v3010 = vpop.f32.mrb[0].mxu0
        %v3011 = vadd.f32 0.0, %v3010
        %v3012 = vpop.f32.mrb[0].mxu0
        %3013 = vmatprep.mubr.bf16.mxu0 0
        %3014 = vmatmul.mubr.bf16.gmra.mrb[0].mxu0 %v2845
        %v3015 = vpop.f32.mrb[0].mxu0
        %v3016 = vadd.f32 0.0, %v3015
        %v3017 = vpop.f32.mrb[0].mxu0
        %v3018 = vpop.f32.mrb[0].mxu0
        %v3019 = vadd.f32 0.0, %v3018
        %v3020 = vpop.f32.mrb[0].mxu0
        %3021 = vmatprep.mubr.bf16.mxu0 0
        %3022 = vmatmul.mubr.bf16.gmra.mrb[0].mxu0 %v2846
        %v3023 = vpop.f32.mrb[0].mxu0
        %v3024 = vadd.f32 0.0, %v3023
        %v3025 = vpop.f32.mrb[0].mxu0
        %v3026 = vpop.f32.mrb[0].mxu0
        %v3027 = vadd.f32 0.0, %v3026
        %v3028 = vpop.f32.mrb[0].mxu0
        %3029 = vmatprep.mubr.bf16.mxu0 0
        %3030 = vmatmul.mubr.bf16.gmra.mrb[0].mxu0 %v2847
        %v3031 = vpop.f32.mrb[0].mxu0
        %v3032 = vadd.f32 0.0, %v3031
        %v3033 = vpop.f32.mrb[0].mxu0
        %v3034 = vpop.f32.mrb[0].mxu0
        %v3035 = vadd.f32 0.0, %v3034
        %v3036 = vpop.f32.mrb[0].mxu0
        %3037 = vmatprep.mubr.bf16.mxu0 0
        %3038 = vmatmul.mubr.bf16.gmra.mrb[0].mxu0 %v2848
        %v3039 = vpop.f32.mrb[0].mxu0
        %v3040 = vadd.f32 0.0, %v3039
        %v3041 = vpop.f32.mrb[0].mxu0
        %v3042 = vpop.f32.mrb[0].mxu0
        %v3043 = vadd.f32 0.0, %v3042
        %v3044 = vpop.f32.mrb[0].mxu0
        %3045 = vmatprep.mubr.bf16.mxu0 0
        %3046 = vmatmul.mubr.bf16.gmra.mrb[0].mxu0 %v2849
        %v3047 = vpop.f32.mrb[0].mxu0
        %v3048 = vadd.f32 0.0, %v3047
        %v3049 = vpop.f32.mrb[0].mxu0
        %v3050 = vpop.f32.mrb[0].mxu0
        %v3051 = vadd.f32 0.0, %v3050
        %v3052 = vpop.f32.mrb[0].mxu0
        %3053 = vmatprep.mubr.bf16.mxu0 0
        %3054 = vmatmul.mubr.bf16.gmra.mrb[0].mxu0 %v2850
        %v3055 = vpop.f32.mrb[0].mxu0
        %v3056 = vadd.f32 0.0, %v3055
        %v3057 = vpop.f32.mrb[0].mxu0
        %v3058 = vpop.f32.mrb[0].mxu0
        %v3059 = vadd.f32 0.0, %v3058
        %v3060 = vpop.f32.mrb[0].mxu0
        %3061 = vmatprep.mubr.bf16.mxu0 0
        %3062 = vmatmul.mubr.bf16.gmra.mrb[0].mxu0 %v2851
        %v3063 = vpop.f32.mrb[0].mxu0
        %v3064 = vadd.f32 0.0, %v3063
        %v3065 = vpop.f32.mrb[0].mxu0
        %v3066 = vpop.f32.mrb[0].mxu0
        %v3067 = vadd.f32 0.0, %v3066
        %v3068 = vpop.f32.mrb[0].mxu0
        %3069 = vmatprep.mubr.bf16.mxu0 0
        %3070 = vmatmul.mubr.bf16.gmra.mrb[0].mxu0 %v2852
        %v3071 = vpop.f32.mrb[0].mxu0
        %v3072 = vadd.f32 0.0, %v3071
        %v3073 = vpop.f32.mrb[0].mxu0
        %v3074 = vpop.f32.mrb[0].mxu0
        %v3075 = vadd.f32 0.0, %v3074
        %v3076 = vpop.f32.mrb[0].mxu0
        %3077 = vdwg.mxu0
        %v3078 = vadd.f32 %v2692, %v2952
        %v3079 = vadd.f32 %v2693, %v2955
        %v3080 = vadd.f32 %v2694, %v2960
        %v3081 = vadd.f32 %v2695, %v2963
        %v3082 = vadd.f32 %v2696, %v2968
        %v3083 = vadd.f32 %v2697, %v2971
        %v3084 = vadd.f32 %v2698, %v2976
        %v3085 = vadd.f32 %v2699, %v2979
        %v3086 = vadd.f32 %v2700, %v2984
        %v3087 = vadd.f32 %v2701, %v2987
        %v3088 = vadd.f32 %v2702, %v2992
        %v3089 = vadd.f32 %v2703, %v2995
        %v3090 = vadd.f32 %v2704, %v3000
        %v3091 = vadd.f32 %v2705, %v3003
        %v3092 = vadd.f32 %v2706, %v3008
        %v3093 = vadd.f32 %v2707, %v3011
        %v3094 = vadd.f32 %v2708, %v3016
        %v3095 = vadd.f32 %v2709, %v3019
        %v3096 = vadd.f32 %v2710, %v3024
        %v3097 = vadd.f32 %v2711, %v3027
        %v3098 = vadd.f32 %v2712, %v3032
        %v3099 = vadd.f32 %v2713, %v3035
        %v3100 = vadd.f32 %v2714, %v3040
        %v3101 = vadd.f32 %v2715, %v3043
        %v3102 = vadd.f32 %v2716, %v3048
        %v3103 = vadd.f32 %v2717, %v3051
        %v3104 = vadd.f32 %v2718, %v3056
        %v3105 = vadd.f32 %v2719, %v3059
        %v3106 = vadd.f32 %v2720, %v3064
        %v3107 = vadd.f32 %v2721, %v3067
        %v3108 = vadd.f32 %v2722, %v3072
        %v3109 = vadd.f32 %v2723, %v3075
        %v3110 = vld [vmem:[%s964] sm:$0xf]
        %v3111 = vld [vmem:[%s964 + $0x4] sm:$0xf]
        %v3112 = vld [vmem:[%s964 + $0x8] sm:$0x1]
        %v3113 = vld [vmem:[%s964 + $0xc] sm:$0xf]
        %v3114 = vld [vmem:[%s964 + $0x10] sm:$0xf]
        %v3115 = vld [vmem:[%s964 + $0x14] sm:$0x1]
        %v3116 = vld [vmem:[%s964 + $0x18] sm:$0xf]
        %v3117 = vld [vmem:[%s964 + $0x1c] sm:$0xf]
        %v3118 = vld [vmem:[%s964 + $0x20] sm:$0x1]
        %v3119 = vld [vmem:[%s964 + $0x24] sm:$0xf]
        %v3120 = vld [vmem:[%s964 + $0x28] sm:$0xf]
        %v3121 = vld [vmem:[%s964 + $0x2c] sm:$0x1]
        %v3122 = vld [vmem:[%s964 + $0x30] sm:$0xf]
        %v3123 = vld [vmem:[%s964 + $0x34] sm:$0xf]
        %v3124 = vld [vmem:[%s964 + $0x38] sm:$0x1]
        %v3125 = vld [vmem:[%s964 + $0x3c] sm:$0xf]
        %v3126 = vld [vmem:[%s964 + $0x40] sm:$0xf]
        %v3127 = vld [vmem:[%s964 + $0x44] sm:$0x1]
        %v3128 = vld [vmem:[%s964 + $0x48] sm:$0xf]
        %v3129 = vld [vmem:[%s964 + $0x4c] sm:$0xf]
        %v3130 = vld [vmem:[%s964 + $0x50] sm:$0x1]
        %v3131 = vld [vmem:[%s964 + $0x54] sm:$0xf]
        %v3132 = vld [vmem:[%s964 + $0x58] sm:$0xf]
        %v3133 = vld [vmem:[%s964 + $0x5c] sm:$0x1]
        %v3134 = vld [vmem:[%s964 + $0x60] sm:$0xf]
        %v3135 = vld [vmem:[%s964 + $0x64] sm:$0xf]
        %v3136 = vld [vmem:[%s964 + $0x68] sm:$0x1]
        %v3137 = vld [vmem:[%s964 + $0x6c] sm:$0xf]
        %v3138 = vld [vmem:[%s964 + $0x70] sm:$0xf]
        %v3139 = vld [vmem:[%s964 + $0x74] sm:$0x1]
        %v3140 = vld [vmem:[%s964 + $0x78] sm:$0xf]
        %v3141 = vld [vmem:[%s964 + $0x7c] sm:$0xf]
        %v3142 = vld [vmem:[%s964 + $0x80] sm:$0x1]
        %v3143 = vld [vmem:[%s964 + $0x84] sm:$0xf]
        %v3144 = vld [vmem:[%s964 + $0x88] sm:$0xf]
        %v3145 = vld [vmem:[%s964 + $0x8c] sm:$0x1]
        %v3146 = vld [vmem:[%s964 + $0x90] sm:$0xf]
        %v3147 = vld [vmem:[%s964 + $0x94] sm:$0xf]
        %v3148 = vld [vmem:[%s964 + $0x98] sm:$0x1]
        %v3149 = vld [vmem:[%s964 + $0x9c] sm:$0xf]
        %v3150 = vld [vmem:[%s964 + $0xa0] sm:$0xf]
        %v3151 = vld [vmem:[%s964 + $0xa4] sm:$0x1]
        %v3152 = vld [vmem:[%s964 + $0xa8] sm:$0xf]
        %v3153 = vld [vmem:[%s964 + $0xac] sm:$0xf]
        %v3154 = vld [vmem:[%s964 + $0xb0] sm:$0x1]
        %v3155 = vld [vmem:[%s964 + $0xb4] sm:$0xf]
        %v3156 = vld [vmem:[%s964 + $0xb8] sm:$0xf]
        %v3157 = vld [vmem:[%s964 + $0xbc] sm:$0x1]
        %v3159 = vshrl.u32 %v3110, 16
        %v3161 = vrot.slane %v3159, 4
        %v3162 = vshll.u32 %v3110, 16
        %v3164 = vrot.slane %v3162, 5
        %v3165 = vor.u32 %v3161, %v3164
        %v3166 = vrot.slane %v3165, 4
        %v3168 = vshll.u32 %v3111, 16
        %v3170 = vrot.slane %v3168, 5
        %v3171 = vsel %vm1259, %v3166, %v3170
        %v3172 = vshrl.u32 %v3111, 16
        %v3174 = vrot.slane %v3172, 4
        %v3175 = vor.u32 %v3174, %v3170
        %v3176 = vrot.slane %v3175, 4
        %v3178 = vshll.u32 %v3112, 16
        %v3180 = vrot.slane %v3178, 5
        %v3181 = vsel %vm1259, %v3176, %v3180
        %v3183 = vshrl.u32 %v3113, 16
        %v3185 = vrot.slane %v3183, 4
        %v3186 = vshll.u32 %v3113, 16
        %v3188 = vrot.slane %v3186, 5
        %v3189 = vor.u32 %v3185, %v3188
        %v3190 = vrot.slane %v3189, 4
        %v3192 = vshll.u32 %v3114, 16
        %v3194 = vrot.slane %v3192, 5
        %v3195 = vsel %vm1259, %v3190, %v3194
        %v3196 = vshrl.u32 %v3114, 16
        %v3198 = vrot.slane %v3196, 4
        %v3199 = vor.u32 %v3198, %v3194
        %v3200 = vrot.slane %v3199, 4
        %v3202 = vshll.u32 %v3115, 16
        %v3204 = vrot.slane %v3202, 5
        %v3205 = vsel %vm1259, %v3200, %v3204
        %v3207 = vshrl.u32 %v3116, 16
        %v3209 = vrot.slane %v3207, 4
        %v3210 = vshll.u32 %v3116, 16
        %v3212 = vrot.slane %v3210, 5
        %v3213 = vor.u32 %v3209, %v3212
        %v3214 = vrot.slane %v3213, 4
        %v3216 = vshll.u32 %v3117, 16
        %v3218 = vrot.slane %v3216, 5
        %v3219 = vsel %vm1259, %v3214, %v3218
        %v3220 = vshrl.u32 %v3117, 16
        %v3222 = vrot.slane %v3220, 4
        %v3223 = vor.u32 %v3222, %v3218
        %v3224 = vrot.slane %v3223, 4
        %v3226 = vshll.u32 %v3118, 16
        %v3228 = vrot.slane %v3226, 5
        %v3229 = vsel %vm1259, %v3224, %v3228
        %v3231 = vshrl.u32 %v3119, 16
        %v3233 = vrot.slane %v3231, 4
        %v3234 = vshll.u32 %v3119, 16
        %v3236 = vrot.slane %v3234, 5
        %v3237 = vor.u32 %v3233, %v3236
        %v3238 = vrot.slane %v3237, 4
        %v3240 = vshll.u32 %v3120, 16
        %v3242 = vrot.slane %v3240, 5
        %v3243 = vsel %vm1259, %v3238, %v3242
        %v3244 = vshrl.u32 %v3120, 16
        %v3246 = vrot.slane %v3244, 4
        %v3247 = vor.u32 %v3246, %v3242
        %v3248 = vrot.slane %v3247, 4
        %v3250 = vshll.u32 %v3121, 16
        %v3252 = vrot.slane %v3250, 5
        %v3253 = vsel %vm1259, %v3248, %v3252
        %v3255 = vshrl.u32 %v3122, 16
        %v3257 = vrot.slane %v3255, 4
        %v3258 = vshll.u32 %v3122, 16
        %v3260 = vrot.slane %v3258, 5
        %v3261 = vor.u32 %v3257, %v3260
        %v3262 = vrot.slane %v3261, 4
        %v3264 = vshll.u32 %v3123, 16
        %v3266 = vrot.slane %v3264, 5
        %v3267 = vsel %vm1259, %v3262, %v3266
        %v3268 = vshrl.u32 %v3123, 16
        %v3270 = vrot.slane %v3268, 4
        %v3271 = vor.u32 %v3270, %v3266
        %v3272 = vrot.slane %v3271, 4
        %v3274 = vshll.u32 %v3124, 16
        %v3276 = vrot.slane %v3274, 5
        %v3277 = vsel %vm1259, %v3272, %v3276
        %v3279 = vshrl.u32 %v3125, 16
        %v3281 = vrot.slane %v3279, 4
        %v3282 = vshll.u32 %v3125, 16
        %v3284 = vrot.slane %v3282, 5
        %v3285 = vor.u32 %v3281, %v3284
        %v3286 = vrot.slane %v3285, 4
        %v3288 = vshll.u32 %v3126, 16
        %v3290 = vrot.slane %v3288, 5
        %v3291 = vsel %vm1259, %v3286, %v3290
        %v3292 = vshrl.u32 %v3126, 16
        %v3294 = vrot.slane %v3292, 4
        %v3295 = vor.u32 %v3294, %v3290
        %v3296 = vrot.slane %v3295, 4
        %v3298 = vshll.u32 %v3127, 16
        %v3300 = vrot.slane %v3298, 5
        %v3301 = vsel %vm1259, %v3296, %v3300
        %v3303 = vshrl.u32 %v3128, 16
        %v3305 = vrot.slane %v3303, 4
        %v3306 = vshll.u32 %v3128, 16
        %v3308 = vrot.slane %v3306, 5
        %v3309 = vor.u32 %v3305, %v3308
        %v3310 = vrot.slane %v3309, 4
        %v3312 = vshll.u32 %v3129, 16
        %v3314 = vrot.slane %v3312, 5
        %v3315 = vsel %vm1259, %v3310, %v3314
        %v3316 = vshrl.u32 %v3129, 16
        %v3318 = vrot.slane %v3316, 4
        %v3319 = vor.u32 %v3318, %v3314
        %v3320 = vrot.slane %v3319, 4
        %v3322 = vshll.u32 %v3130, 16
        %v3324 = vrot.slane %v3322, 5
        %v3325 = vsel %vm1259, %v3320, %v3324
        %v3327 = vshrl.u32 %v3131, 16
        %v3329 = vrot.slane %v3327, 4
        %v3330 = vshll.u32 %v3131, 16
        %v3332 = vrot.slane %v3330, 5
        %v3333 = vor.u32 %v3329, %v3332
        %v3334 = vrot.slane %v3333, 4
        %v3336 = vshll.u32 %v3132, 16
        %v3338 = vrot.slane %v3336, 5
        %v3339 = vsel %vm1259, %v3334, %v3338
        %v3340 = vshrl.u32 %v3132, 16
        %v3342 = vrot.slane %v3340, 4
        %v3343 = vor.u32 %v3342, %v3338
        %v3344 = vrot.slane %v3343, 4
        %v3346 = vshll.u32 %v3133, 16
        %v3348 = vrot.slane %v3346, 5
        %v3349 = vsel %vm1259, %v3344, %v3348
        %v3351 = vshrl.u32 %v3134, 16
        %v3353 = vrot.slane %v3351, 4
        %v3354 = vshll.u32 %v3134, 16
        %v3356 = vrot.slane %v3354, 5
        %v3357 = vor.u32 %v3353, %v3356
        %v3358 = vrot.slane %v3357, 4
        %v3360 = vshll.u32 %v3135, 16
        %v3362 = vrot.slane %v3360, 5
        %v3363 = vsel %vm1259, %v3358, %v3362
        %v3364 = vshrl.u32 %v3135, 16
        %v3366 = vrot.slane %v3364, 4
        %v3367 = vor.u32 %v3366, %v3362
        %v3368 = vrot.slane %v3367, 4
        %v3370 = vshll.u32 %v3136, 16
        %v3372 = vrot.slane %v3370, 5
        %v3373 = vsel %vm1259, %v3368, %v3372
        %v3375 = vshrl.u32 %v3137, 16
        %v3377 = vrot.slane %v3375, 4
        %v3378 = vshll.u32 %v3137, 16
        %v3380 = vrot.slane %v3378, 5
        %v3381 = vor.u32 %v3377, %v3380
        %v3382 = vrot.slane %v3381, 4
        %v3384 = vshll.u32 %v3138, 16
        %v3386 = vrot.slane %v3384, 5
        %v3387 = vsel %vm1259, %v3382, %v3386
        %v3388 = vshrl.u32 %v3138, 16
        %v3390 = vrot.slane %v3388, 4
        %v3391 = vor.u32 %v3390, %v3386
        %v3392 = vrot.slane %v3391, 4
        %v3394 = vshll.u32 %v3139, 16
        %v3396 = vrot.slane %v3394, 5
        %v3397 = vsel %vm1259, %v3392, %v3396
        %v3399 = vshrl.u32 %v3140, 16
        %v3401 = vrot.slane %v3399, 4
        %v3402 = vshll.u32 %v3140, 16
        %v3404 = vrot.slane %v3402, 5
        %v3405 = vor.u32 %v3401, %v3404
        %v3406 = vrot.slane %v3405, 4
        %v3408 = vshll.u32 %v3141, 16
        %v3410 = vrot.slane %v3408, 5
        %v3411 = vsel %vm1259, %v3406, %v3410
        %v3412 = vshrl.u32 %v3141, 16
        %v3414 = vrot.slane %v3412, 4
        %v3415 = vor.u32 %v3414, %v3410
        %v3416 = vrot.slane %v3415, 4
        %v3418 = vshll.u32 %v3142, 16
        %v3420 = vrot.slane %v3418, 5
        %v3421 = vsel %vm1259, %v3416, %v3420
        %v3423 = vshrl.u32 %v3143, 16
        %v3425 = vrot.slane %v3423, 4
        %v3426 = vshll.u32 %v3143, 16
        %v3428 = vrot.slane %v3426, 5
        %v3429 = vor.u32 %v3425, %v3428
        %v3430 = vrot.slane %v3429, 4
        %v3432 = vshll.u32 %v3144, 16
        %v3434 = vrot.slane %v3432, 5
        %v3435 = vsel %vm1259, %v3430, %v3434
        %v3436 = vshrl.u32 %v3144, 16
        %v3438 = vrot.slane %v3436, 4
        %v3439 = vor.u32 %v3438, %v3434
        %v3440 = vrot.slane %v3439, 4
        %v3442 = vshll.u32 %v3145, 16
        %v3444 = vrot.slane %v3442, 5
        %v3445 = vsel %vm1259, %v3440, %v3444
        %v3447 = vshrl.u32 %v3146, 16
        %v3449 = vrot.slane %v3447, 4
        %v3450 = vshll.u32 %v3146, 16
        %v3452 = vrot.slane %v3450, 5
        %v3453 = vor.u32 %v3449, %v3452
        %v3454 = vrot.slane %v3453, 4
        %v3456 = vshll.u32 %v3147, 16
        %v3458 = vrot.slane %v3456, 5
        %v3459 = vsel %vm1259, %v3454, %v3458
        %v3460 = vshrl.u32 %v3147, 16
        %v3462 = vrot.slane %v3460, 4
        %v3463 = vor.u32 %v3462, %v3458
        %v3464 = vrot.slane %v3463, 4
        %v3466 = vshll.u32 %v3148, 16
        %v3468 = vrot.slane %v3466, 5
        %v3469 = vsel %vm1259, %v3464, %v3468
        %v3471 = vshrl.u32 %v3149, 16
        %v3473 = vrot.slane %v3471, 4
        %v3474 = vshll.u32 %v3149, 16
        %v3476 = vrot.slane %v3474, 5
        %v3477 = vor.u32 %v3473, %v3476
        %v3478 = vrot.slane %v3477, 4
        %v3480 = vshll.u32 %v3150, 16
        %v3482 = vrot.slane %v3480, 5
        %v3483 = vsel %vm1259, %v3478, %v3482
        %v3484 = vshrl.u32 %v3150, 16
        %v3486 = vrot.slane %v3484, 4
        %v3487 = vor.u32 %v3486, %v3482
        %v3488 = vrot.slane %v3487, 4
        %v3490 = vshll.u32 %v3151, 16
        %v3492 = vrot.slane %v3490, 5
        %v3493 = vsel %vm1259, %v3488, %v3492
        %v3495 = vshrl.u32 %v3152, 16
        %v3497 = vrot.slane %v3495, 4
        %v3498 = vshll.u32 %v3152, 16
        %v3500 = vrot.slane %v3498, 5
        %v3501 = vor.u32 %v3497, %v3500
        %v3502 = vrot.slane %v3501, 4
        %v3504 = vshll.u32 %v3153, 16
        %v3506 = vrot.slane %v3504, 5
        %v3507 = vsel %vm1259, %v3502, %v3506
        %v3508 = vshrl.u32 %v3153, 16
        %v3510 = vrot.slane %v3508, 4
        %v3511 = vor.u32 %v3510, %v3506
        %v3512 = vrot.slane %v3511, 4
        %v3514 = vshll.u32 %v3154, 16
        %v3516 = vrot.slane %v3514, 5
        %v3517 = vsel %vm1259, %v3512, %v3516
        %v3519 = vshrl.u32 %v3155, 16
        %v3521 = vrot.slane %v3519, 4
        %v3522 = vshll.u32 %v3155, 16
        %v3524 = vrot.slane %v3522, 5
        %v3525 = vor.u32 %v3521, %v3524
        %v3526 = vrot.slane %v3525, 4
        %v3528 = vshll.u32 %v3156, 16
        %v3530 = vrot.slane %v3528, 5
        %v3531 = vsel %vm1259, %v3526, %v3530
        %v3532 = vshrl.u32 %v3156, 16
        %v3534 = vrot.slane %v3532, 4
        %v3535 = vor.u32 %v3534, %v3530
        %v3536 = vrot.slane %v3535, 4
        %v3538 = vshll.u32 %v3157, 16
        %v3540 = vrot.slane %v3538, 5
        %v3541 = vsel %vm1259, %v3536, %v3540
        %s3542 = scalar_lea.vmem [#allocation9], 256
        %v3543 = vld [vmem:[%s3542] sm:$0xf]
        %v3544 = vld [vmem:[%s3542 + $0x4] sm:$0xf]
        %v3545 = vld [vmem:[%s3542 + $0x8] sm:$0xf]
        %v3546 = vld [vmem:[%s3542 + $0xc] sm:$0xf]
        %v3547 = vld [vmem:[%s3542 + $0x10] sm:$0xf]
        %v3548 = vld [vmem:[%s3542 + $0x14] sm:$0xf]
        %v3549 = vld [vmem:[%s3542 + $0x18] sm:$0xf]
        %v3550 = vld [vmem:[%s3542 + $0x1c] sm:$0xf]
        %v3551 = vld [vmem:[%s3542 + $0x20] sm:$0xf]
        %v3552 = vld [vmem:[%s3542 + $0x24] sm:$0xf]
        %v3553 = vld [vmem:[%s3542 + $0x28] sm:$0xf]
        %v3554 = vld [vmem:[%s3542 + $0x2c] sm:$0xf]
        %v3555 = vld [vmem:[%s3542 + $0x30] sm:$0xf]
        %v3556 = vld [vmem:[%s3542 + $0x34] sm:$0xf]
        %v3557 = vld [vmem:[%s3542 + $0x38] sm:$0xf]
        %v3558 = vld [vmem:[%s3542 + $0x3c] sm:$0xf]
        %v3559 = vunpack.c.l.b16 %v3171
        %v3560 = vunpack.c.l.b16 %v3181
        %v3561 = vunpack.c.l.b16 %v3195
        %v3562 = vunpack.c.l.b16 %v3205
        %v3563 = vunpack.c.l.b16 %v3219
        %v3564 = vunpack.c.l.b16 %v3229
        %v3565 = vunpack.c.l.b16 %v3243
        %v3566 = vunpack.c.l.b16 %v3253
        %v3567 = vunpack.c.l.b16 %v3267
        %v3568 = vunpack.c.l.b16 %v3277
        %v3569 = vunpack.c.l.b16 %v3291
        %v3570 = vunpack.c.l.b16 %v3301
        %v3571 = vunpack.c.l.b16 %v3315
        %v3572 = vunpack.c.l.b16 %v3325
        %v3573 = vunpack.c.l.b16 %v3339
        %v3574 = vunpack.c.l.b16 %v3349
        %v3575 = vunpack.c.l.b16 %v3363
        %v3576 = vunpack.c.l.b16 %v3373
        %v3577 = vunpack.c.l.b16 %v3387
        %v3578 = vunpack.c.l.b16 %v3397
        %v3579 = vunpack.c.l.b16 %v3411
        %v3580 = vunpack.c.l.b16 %v3421
        %v3581 = vunpack.c.l.b16 %v3435
        %v3582 = vunpack.c.l.b16 %v3445
        %v3583 = vunpack.c.l.b16 %v3459
        %v3584 = vunpack.c.l.b16 %v3469
        %v3585 = vunpack.c.l.b16 %v3483
        %v3586 = vunpack.c.l.b16 %v3493
        %v3587 = vunpack.c.l.b16 %v3507
        %v3588 = vunpack.c.l.b16 %v3517
        %v3589 = vunpack.c.l.b16 %v3531
        %v3590 = vunpack.c.l.b16 %v3541
        %v3591 = vpack.c.b16 %v3560, %v3559
        %v3592 = vpack.c.b16 %v3562, %v3561
        %v3593 = vpack.c.b16 %v3564, %v3563
        %v3594 = vpack.c.b16 %v3566, %v3565
        %v3595 = vpack.c.b16 %v3568, %v3567
        %v3596 = vpack.c.b16 %v3570, %v3569
        %v3597 = vpack.c.b16 %v3572, %v3571
        %v3598 = vpack.c.b16 %v3574, %v3573
        %v3599 = vpack.c.b16 %v3576, %v3575
        %v3600 = vpack.c.b16 %v3578, %v3577
        %v3601 = vpack.c.b16 %v3580, %v3579
        %v3602 = vpack.c.b16 %v3582, %v3581
        %v3603 = vpack.c.b16 %v3584, %v3583
        %v3604 = vpack.c.b16 %v3586, %v3585
        %v3605 = vpack.c.b16 %v3588, %v3587
        %v3606 = vpack.c.b16 %v3590, %v3589
        %v3639 = vunpack.c.l.b16 %v3543
        %v3640 = vunpack.c.l.b16 %v3544
        %v3641 = vunpack.c.l.b16 %v3545
        %v3642 = vunpack.c.l.b16 %v3546
        %v3643 = vunpack.c.l.b16 %v3547
        %v3644 = vunpack.c.l.b16 %v3548
        %v3645 = vunpack.c.l.b16 %v3549
        %v3646 = vunpack.c.l.b16 %v3550
        %v3647 = vunpack.c.l.b16 %v3551
        %v3648 = vunpack.c.l.b16 %v3552
        %v3649 = vunpack.c.l.b16 %v3553
        %v3650 = vunpack.c.l.b16 %v3554
        %v3651 = vunpack.c.l.b16 %v3555
        %v3652 = vunpack.c.l.b16 %v3556
        %v3653 = vunpack.c.l.b16 %v3557
        %v3654 = vunpack.c.l.b16 %v3558
        %v3655 = vpack.c.b16 %v3640, %v3639
        %v3656 = vpack.c.b16 %v3642, %v3641
        %v3657 = vpack.c.b16 %v3644, %v3643
        %v3658 = vpack.c.b16 %v3646, %v3645
        %v3659 = vpack.c.b16 %v3648, %v3647
        %v3660 = vpack.c.b16 %v3650, %v3649
        %v3661 = vpack.c.b16 %v3652, %v3651
        %v3662 = vpack.c.b16 %v3654, %v3653
        %3671 = vmatprep.subr.bf16.mxu0 0
        %3672 = vmatpush1.bf16.msra.mxu0 %v3655
        %3673 = vmatprep.subr.bf16.mxu0 0
        %3674 = vmatpush1.bf16.msra.mxu0 %v3656
        %3675 = vmatprep.subr.bf16.mxu0 0
        %3676 = vmatpush1.bf16.msra.mxu0 %v3657
        %3677 = vmatprep.subr.bf16.mxu0 0
        %3678 = vmatpush1.bf16.msra.mxu0 %v3658
        %3679 = vmatprep.subr.bf16.mxu0 0
        %3680 = vmatpush1.bf16.msra.mxu0 %v3659
        %3681 = vmatprep.subr.bf16.mxu0 0
        %3682 = vmatpush1.bf16.msra.mxu0 %v3660
        %3683 = vmatprep.subr.bf16.mxu0 0
        %3684 = vmatpush1.bf16.msra.mxu0 %v3661
        %3685 = vmatprep.subr.bf16.mxu0 0
        %3686 = vmatpush1.bf16.msra.mxu0 %v3662
        %3687 = vmatprep.subr.bf16.mxu0 0
        %3688 = vmatpush1.bf16.msra.mxu0 0
        %3689 = vmatprep.subr.bf16.mxu0 0
        %3690 = vmatpush1.bf16.msra.mxu0 0
        %3691 = vmatprep.subr.bf16.mxu0 0
        %3692 = vmatpush1.bf16.msra.mxu0 0
        %3693 = vmatprep.subr.bf16.mxu0 0
        %3694 = vmatpush1.bf16.msra.mxu0 0
        %3695 = vmatprep.subr.bf16.mxu0 0
        %3696 = vmatpush1.bf16.msra.mxu0 0
        %3697 = vmatprep.subr.bf16.mxu0 0
        %3698 = vmatpush1.bf16.msra.mxu0 0
        %3699 = vmatprep.subr.bf16.mxu0 0
        %3700 = vmatpush1.bf16.msra.mxu0 0
        %3701 = vmatprep.subr.bf16.mxu0 0
        %3702 = vmatpush1.bf16.msra.mxu0 0
        %3703 = vmatprep.mubr.bf16.mxu0 0
        %3704 = vmatmul.mubr.bf16.gmra.mrb[0].mxu0 %v3591
        %v3705 = vpop.f32.mrb[0].mxu0
        %v3706 = vadd.f32 0.0, %v3705
        %v3707 = vpop.f32.mrb[0].mxu0
        %v3708 = vpop.f32.mrb[0].mxu0
        %v3709 = vadd.f32 0.0, %v3708
        %v3710 = vpop.f32.mrb[0].mxu0
        %3711 = vmatprep.mubr.bf16.mxu0 0
        %3712 = vmatmul.mubr.bf16.gmra.mrb[0].mxu0 %v3592
        %v3713 = vpop.f32.mrb[0].mxu0
        %v3714 = vadd.f32 0.0, %v3713
        %v3715 = vpop.f32.mrb[0].mxu0
        %v3716 = vpop.f32.mrb[0].mxu0
        %v3717 = vadd.f32 0.0, %v3716
        %v3718 = vpop.f32.mrb[0].mxu0
        %3719 = vmatprep.mubr.bf16.mxu0 0
        %3720 = vmatmul.mubr.bf16.gmra.mrb[0].mxu0 %v3593
        %v3721 = vpop.f32.mrb[0].mxu0
        %v3722 = vadd.f32 0.0, %v3721
        %v3723 = vpop.f32.mrb[0].mxu0
        %v3724 = vpop.f32.mrb[0].mxu0
        %v3725 = vadd.f32 0.0, %v3724
        %v3726 = vpop.f32.mrb[0].mxu0
        %3727 = vmatprep.mubr.bf16.mxu0 0
        %3728 = vmatmul.mubr.bf16.gmra.mrb[0].mxu0 %v3594
        %v3729 = vpop.f32.mrb[0].mxu0
        %v3730 = vadd.f32 0.0, %v3729
        %v3731 = vpop.f32.mrb[0].mxu0
        %v3732 = vpop.f32.mrb[0].mxu0
        %v3733 = vadd.f32 0.0, %v3732
        %v3734 = vpop.f32.mrb[0].mxu0
        %3735 = vmatprep.mubr.bf16.mxu0 0
        %3736 = vmatmul.mubr.bf16.gmra.mrb[0].mxu0 %v3595
        %v3737 = vpop.f32.mrb[0].mxu0
        %v3738 = vadd.f32 0.0, %v3737
        %v3739 = vpop.f32.mrb[0].mxu0
        %v3740 = vpop.f32.mrb[0].mxu0
        %v3741 = vadd.f32 0.0, %v3740
        %v3742 = vpop.f32.mrb[0].mxu0
        %3743 = vmatprep.mubr.bf16.mxu0 0
        %3744 = vmatmul.mubr.bf16.gmra.mrb[0].mxu0 %v3596
        %v3745 = vpop.f32.mrb[0].mxu0
        %v3746 = vadd.f32 0.0, %v3745
        %v3747 = vpop.f32.mrb[0].mxu0
        %v3748 = vpop.f32.mrb[0].mxu0
        %v3749 = vadd.f32 0.0, %v3748
        %v3750 = vpop.f32.mrb[0].mxu0
        %3751 = vmatprep.mubr.bf16.mxu0 0
        %3752 = vmatmul.mubr.bf16.gmra.mrb[0].mxu0 %v3597
        %v3753 = vpop.f32.mrb[0].mxu0
        %v3754 = vadd.f32 0.0, %v3753
        %v3755 = vpop.f32.mrb[0].mxu0
        %v3756 = vpop.f32.mrb[0].mxu0
        %v3757 = vadd.f32 0.0, %v3756
        %v3758 = vpop.f32.mrb[0].mxu0
        %3759 = vmatprep.mubr.bf16.mxu0 0
        %3760 = vmatmul.mubr.bf16.gmra.mrb[0].mxu0 %v3598
        %v3761 = vpop.f32.mrb[0].mxu0
        %v3762 = vadd.f32 0.0, %v3761
        %v3763 = vpop.f32.mrb[0].mxu0
        %v3764 = vpop.f32.mrb[0].mxu0
        %v3765 = vadd.f32 0.0, %v3764
        %v3766 = vpop.f32.mrb[0].mxu0
        %3767 = vmatprep.mubr.bf16.mxu0 0
        %3768 = vmatmul.mubr.bf16.gmra.mrb[0].mxu0 %v3599
        %v3769 = vpop.f32.mrb[0].mxu0
        %v3770 = vadd.f32 0.0, %v3769
        %v3771 = vpop.f32.mrb[0].mxu0
        %v3772 = vpop.f32.mrb[0].mxu0
        %v3773 = vadd.f32 0.0, %v3772
        %v3774 = vpop.f32.mrb[0].mxu0
        %3775 = vmatprep.mubr.bf16.mxu0 0
        %3776 = vmatmul.mubr.bf16.gmra.mrb[0].mxu0 %v3600
        %v3777 = vpop.f32.mrb[0].mxu0
        %v3778 = vadd.f32 0.0, %v3777
        %v3779 = vpop.f32.mrb[0].mxu0
        %v3780 = vpop.f32.mrb[0].mxu0
        %v3781 = vadd.f32 0.0, %v3780
        %v3782 = vpop.f32.mrb[0].mxu0
        %3783 = vmatprep.mubr.bf16.mxu0 0
        %3784 = vmatmul.mubr.bf16.gmra.mrb[0].mxu0 %v3601
        %v3785 = vpop.f32.mrb[0].mxu0
        %v3786 = vadd.f32 0.0, %v3785
        %v3787 = vpop.f32.mrb[0].mxu0
        %v3788 = vpop.f32.mrb[0].mxu0
        %v3789 = vadd.f32 0.0, %v3788
        %v3790 = vpop.f32.mrb[0].mxu0
        %3791 = vmatprep.mubr.bf16.mxu0 0
        %3792 = vmatmul.mubr.bf16.gmra.mrb[0].mxu0 %v3602
        %v3793 = vpop.f32.mrb[0].mxu0
        %v3794 = vadd.f32 0.0, %v3793
        %v3795 = vpop.f32.mrb[0].mxu0
        %v3796 = vpop.f32.mrb[0].mxu0
        %v3797 = vadd.f32 0.0, %v3796
        %v3798 = vpop.f32.mrb[0].mxu0
        %3799 = vmatprep.mubr.bf16.mxu0 0
        %3800 = vmatmul.mubr.bf16.gmra.mrb[0].mxu0 %v3603
        %v3801 = vpop.f32.mrb[0].mxu0
        %v3802 = vadd.f32 0.0, %v3801
        %v3803 = vpop.f32.mrb[0].mxu0
        %v3804 = vpop.f32.mrb[0].mxu0
        %v3805 = vadd.f32 0.0, %v3804
        %v3806 = vpop.f32.mrb[0].mxu0
        %3807 = vmatprep.mubr.bf16.mxu0 0
        %3808 = vmatmul.mubr.bf16.gmra.mrb[0].mxu0 %v3604
        %v3809 = vpop.f32.mrb[0].mxu0
        %v3810 = vadd.f32 0.0, %v3809
        %v3811 = vpop.f32.mrb[0].mxu0
        %v3812 = vpop.f32.mrb[0].mxu0
        %v3813 = vadd.f32 0.0, %v3812
        %v3814 = vpop.f32.mrb[0].mxu0
        %3815 = vmatprep.mubr.bf16.mxu0 0
        %3816 = vmatmul.mubr.bf16.gmra.mrb[0].mxu0 %v3605
        %v3817 = vpop.f32.mrb[0].mxu0
        %v3818 = vadd.f32 0.0, %v3817
        %v3819 = vpop.f32.mrb[0].mxu0
        %v3820 = vpop.f32.mrb[0].mxu0
        %v3821 = vadd.f32 0.0, %v3820
        %v3822 = vpop.f32.mrb[0].mxu0
        %3823 = vmatprep.mubr.bf16.mxu0 0
        %3824 = vmatmul.mubr.bf16.gmra.mrb[0].mxu0 %v3606
        %v3825 = vpop.f32.mrb[0].mxu0
        %v3826 = vadd.f32 0.0, %v3825
        %v3827 = vpop.f32.mrb[0].mxu0
        %v3828 = vpop.f32.mrb[0].mxu0
        %v3829 = vadd.f32 0.0, %v3828
        %v3830 = vpop.f32.mrb[0].mxu0
        %3831 = vdwg.mxu0
        %v3832 = vadd.f32 %v3078, %v3706
        %v3833 = vadd.f32 %v3079, %v3709
        %v3834 = vadd.f32 %v3080, %v3714
        %v3835 = vadd.f32 %v3081, %v3717
        %v3836 = vadd.f32 %v3082, %v3722
        %v3837 = vadd.f32 %v3083, %v3725
        %v3838 = vadd.f32 %v3084, %v3730
        %v3839 = vadd.f32 %v3085, %v3733
        %v3840 = vadd.f32 %v3086, %v3738
        %v3841 = vadd.f32 %v3087, %v3741
        %v3842 = vadd.f32 %v3088, %v3746
        %v3843 = vadd.f32 %v3089, %v3749
        %v3844 = vadd.f32 %v3090, %v3754
        %v3845 = vadd.f32 %v3091, %v3757
        %v3846 = vadd.f32 %v3092, %v3762
        %v3847 = vadd.f32 %v3093, %v3765
        %v3848 = vadd.f32 %v3094, %v3770
        %v3849 = vadd.f32 %v3095, %v3773
        %v3850 = vadd.f32 %v3096, %v3778
        %v3851 = vadd.f32 %v3097, %v3781
        %v3852 = vadd.f32 %v3098, %v3786
        %v3853 = vadd.f32 %v3099, %v3789
        %v3854 = vadd.f32 %v3100, %v3794
        %v3855 = vadd.f32 %v3101, %v3797
        %v3856 = vadd.f32 %v3102, %v3802
        %v3857 = vadd.f32 %v3103, %v3805
        %v3858 = vadd.f32 %v3104, %v3810
        %v3859 = vadd.f32 %v3105, %v3813
        %v3860 = vadd.f32 %v3106, %v3818
        %v3861 = vadd.f32 %v3107, %v3821
        %v3862 = vadd.f32 %v3108, %v3826
        %v3863 = vadd.f32 %v3109, %v3829
        %v3864 = vld [vmem:[%s964] sm:$0xe]
        %v3865 = vld [vmem:[%s964 + $0xc] sm:$0xe]
        %v3866 = vld [vmem:[%s964 + $0x18] sm:$0xe]
        %v3867 = vld [vmem:[%s964 + $0x24] sm:$0xe]
        %v3868 = vld [vmem:[%s964 + $0x30] sm:$0xe]
        %v3869 = vld [vmem:[%s964 + $0x3c] sm:$0xe]
        %v3870 = vld [vmem:[%s964 + $0x48] sm:$0xe]
        %v3871 = vld [vmem:[%s964 + $0x54] sm:$0xe]
        %v3872 = vld [vmem:[%s964 + $0x60] sm:$0xe]
        %v3873 = vld [vmem:[%s964 + $0x6c] sm:$0xe]
        %v3874 = vld [vmem:[%s964 + $0x78] sm:$0xe]
        %v3875 = vld [vmem:[%s964 + $0x84] sm:$0xe]
        %v3876 = vld [vmem:[%s964 + $0x90] sm:$0xe]
        %v3877 = vld [vmem:[%s964 + $0x9c] sm:$0xe]
        %v3878 = vld [vmem:[%s964 + $0xa8] sm:$0xe]
        %v3879 = vld [vmem:[%s964 + $0xb4] sm:$0xe]
        %v3928 = vrot.slane %v3864, 5
        %v3929 = vrot.slane %v3928, 4
        %v3930 = vrot.slane %v3111, 5
        %v3931 = vsel %vm2289, %v3929, %v3930
        %v3932 = vrot.slane %v3930, 4
        %v3933 = vrot.slane %v3112, 5
        %v3934 = vsel %vm2289, %v3932, %v3933
        %v3935 = vrot.slane %v3865, 5
        %v3936 = vrot.slane %v3935, 4
        %v3937 = vrot.slane %v3114, 5
        %v3938 = vsel %vm2289, %v3936, %v3937
        %v3939 = vrot.slane %v3937, 4
        %v3940 = vrot.slane %v3115, 5
        %v3941 = vsel %vm2289, %v3939, %v3940
        %v3942 = vrot.slane %v3866, 5
        %v3943 = vrot.slane %v3942, 4
        %v3944 = vrot.slane %v3117, 5
        %v3945 = vsel %vm2289, %v3943, %v3944
        %v3946 = vrot.slane %v3944, 4
        %v3947 = vrot.slane %v3118, 5
        %v3948 = vsel %vm2289, %v3946, %v3947
        %v3949 = vrot.slane %v3867, 5
        %v3950 = vrot.slane %v3949, 4
        %v3951 = vrot.slane %v3120, 5
        %v3952 = vsel %vm2289, %v3950, %v3951
        %v3953 = vrot.slane %v3951, 4
        %v3954 = vrot.slane %v3121, 5
        %v3955 = vsel %vm2289, %v3953, %v3954
        %v3956 = vrot.slane %v3868, 5
        %v3957 = vrot.slane %v3956, 4
        %v3958 = vrot.slane %v3123, 5
        %v3959 = vsel %vm2289, %v3957, %v3958
        %v3960 = vrot.slane %v3958, 4
        %v3961 = vrot.slane %v3124, 5
        %v3962 = vsel %vm2289, %v3960, %v3961
        %v3963 = vrot.slane %v3869, 5
        %v3964 = vrot.slane %v3963, 4
        %v3965 = vrot.slane %v3126, 5
        %v3966 = vsel %vm2289, %v3964, %v3965
        %v3967 = vrot.slane %v3965, 4
        %v3968 = vrot.slane %v3127, 5
        %v3969 = vsel %vm2289, %v3967, %v3968
        %v3970 = vrot.slane %v3870, 5
        %v3971 = vrot.slane %v3970, 4
        %v3972 = vrot.slane %v3129, 5
        %v3973 = vsel %vm2289, %v3971, %v3972
        %v3974 = vrot.slane %v3972, 4
        %v3975 = vrot.slane %v3130, 5
        %v3976 = vsel %vm2289, %v3974, %v3975
        %v3977 = vrot.slane %v3871, 5
        %v3978 = vrot.slane %v3977, 4
        %v3979 = vrot.slane %v3132, 5
        %v3980 = vsel %vm2289, %v3978, %v3979
        %v3981 = vrot.slane %v3979, 4
        %v3982 = vrot.slane %v3133, 5
        %v3983 = vsel %vm2289, %v3981, %v3982
        %v3984 = vrot.slane %v3872, 5
        %v3985 = vrot.slane %v3984, 4
        %v3986 = vrot.slane %v3135, 5
        %v3987 = vsel %vm2289, %v3985, %v3986
        %v3988 = vrot.slane %v3986, 4
        %v3989 = vrot.slane %v3136, 5
        %v3990 = vsel %vm2289, %v3988, %v3989
        %v3991 = vrot.slane %v3873, 5
        %v3992 = vrot.slane %v3991, 4
        %v3993 = vrot.slane %v3138, 5
        %v3994 = vsel %vm2289, %v3992, %v3993
        %v3995 = vrot.slane %v3993, 4
        %v3996 = vrot.slane %v3139, 5
        %v3997 = vsel %vm2289, %v3995, %v3996
        %v3998 = vrot.slane %v3874, 5
        %v3999 = vrot.slane %v3998, 4
        %v4000 = vrot.slane %v3141, 5
        %v4001 = vsel %vm2289, %v3999, %v4000
        %v4002 = vrot.slane %v4000, 4
        %v4003 = vrot.slane %v3142, 5
        %v4004 = vsel %vm2289, %v4002, %v4003
        %v4005 = vrot.slane %v3875, 5
        %v4006 = vrot.slane %v4005, 4
        %v4007 = vrot.slane %v3144, 5
        %v4008 = vsel %vm2289, %v4006, %v4007
        %v4009 = vrot.slane %v4007, 4
        %v4010 = vrot.slane %v3145, 5
        %v4011 = vsel %vm2289, %v4009, %v4010
        %v4012 = vrot.slane %v3876, 5
        %v4013 = vrot.slane %v4012, 4
        %v4014 = vrot.slane %v3147, 5
        %v4015 = vsel %vm2289, %v4013, %v4014
        %v4016 = vrot.slane %v4014, 4
        %v4017 = vrot.slane %v3148, 5
        %v4018 = vsel %vm2289, %v4016, %v4017
        %v4019 = vrot.slane %v3877, 5
        %v4020 = vrot.slane %v4019, 4
        %v4021 = vrot.slane %v3150, 5
        %v4022 = vsel %vm2289, %v4020, %v4021
        %v4023 = vrot.slane %v4021, 4
        %v4024 = vrot.slane %v3151, 5
        %v4025 = vsel %vm2289, %v4023, %v4024
        %v4026 = vrot.slane %v3878, 5
        %v4027 = vrot.slane %v4026, 4
        %v4028 = vrot.slane %v3153, 5
        %v4029 = vsel %vm2289, %v4027, %v4028
        %v4030 = vrot.slane %v4028, 4
        %v4031 = vrot.slane %v3154, 5
        %v4032 = vsel %vm2289, %v4030, %v4031
        %v4033 = vrot.slane %v3879, 5
        %v4034 = vrot.slane %v4033, 4
        %v4035 = vrot.slane %v3156, 5
        %v4036 = vsel %vm2289, %v4034, %v4035
        %v4037 = vrot.slane %v4035, 4
        %v4038 = vrot.slane %v3157, 5
        %v4039 = vsel %vm2289, %v4037, %v4038
        %s4040 = scalar_lea.vmem [#allocation9], 320
        %v4041 = vld [vmem:[%s4040] sm:$0xf]
        %v4042 = vld [vmem:[%s4040 + $0x4] sm:$0xf]
        %v4043 = vld [vmem:[%s4040 + $0x8] sm:$0xf]
        %v4044 = vld [vmem:[%s4040 + $0xc] sm:$0xf]
        %v4045 = vld [vmem:[%s4040 + $0x10] sm:$0xf]
        %v4046 = vld [vmem:[%s4040 + $0x14] sm:$0xf]
        %v4047 = vld [vmem:[%s4040 + $0x18] sm:$0xf]
        %v4048 = vld [vmem:[%s4040 + $0x1c] sm:$0xf]
        %v4049 = vld [vmem:[%s4040 + $0x20] sm:$0xf]
        %v4050 = vld [vmem:[%s4040 + $0x24] sm:$0xf]
        %v4051 = vld [vmem:[%s4040 + $0x28] sm:$0xf]
        %v4052 = vld [vmem:[%s4040 + $0x2c] sm:$0xf]
        %v4053 = vld [vmem:[%s4040 + $0x30] sm:$0xf]
        %v4054 = vld [vmem:[%s4040 + $0x34] sm:$0xf]
        %v4055 = vld [vmem:[%s4040 + $0x38] sm:$0xf]
        %v4056 = vld [vmem:[%s4040 + $0x3c] sm:$0xf]
        %v4057 = vunpack.c.l.b16 %v3931
        %v4058 = vunpack.c.l.b16 %v3934
        %v4059 = vunpack.c.l.b16 %v3938
        %v4060 = vunpack.c.l.b16 %v3941
        %v4061 = vunpack.c.l.b16 %v3945
        %v4062 = vunpack.c.l.b16 %v3948
        %v4063 = vunpack.c.l.b16 %v3952
        %v4064 = vunpack.c.l.b16 %v3955
        %v4065 = vunpack.c.l.b16 %v3959
        %v4066 = vunpack.c.l.b16 %v3962
        %v4067 = vunpack.c.l.b16 %v3966
        %v4068 = vunpack.c.l.b16 %v3969
        %v4069 = vunpack.c.l.b16 %v3973
        %v4070 = vunpack.c.l.b16 %v3976
        %v4071 = vunpack.c.l.b16 %v3980
        %v4072 = vunpack.c.l.b16 %v3983
        %v4073 = vunpack.c.l.b16 %v3987
        %v4074 = vunpack.c.l.b16 %v3990
        %v4075 = vunpack.c.l.b16 %v3994
        %v4076 = vunpack.c.l.b16 %v3997
        %v4077 = vunpack.c.l.b16 %v4001
        %v4078 = vunpack.c.l.b16 %v4004
        %v4079 = vunpack.c.l.b16 %v4008
        %v4080 = vunpack.c.l.b16 %v4011
        %v4081 = vunpack.c.l.b16 %v4015
        %v4082 = vunpack.c.l.b16 %v4018
        %v4083 = vunpack.c.l.b16 %v4022
        %v4084 = vunpack.c.l.b16 %v4025
        %v4085 = vunpack.c.l.b16 %v4029
        %v4086 = vunpack.c.l.b16 %v4032
        %v4087 = vunpack.c.l.b16 %v4036
        %v4088 = vunpack.c.l.b16 %v4039
        %v4089 = vpack.c.b16 %v4058, %v4057
        %v4090 = vpack.c.b16 %v4060, %v4059
        %v4091 = vpack.c.b16 %v4062, %v4061
        %v4092 = vpack.c.b16 %v4064, %v4063
        %v4093 = vpack.c.b16 %v4066, %v4065
        %v4094 = vpack.c.b16 %v4068, %v4067
        %v4095 = vpack.c.b16 %v4070, %v4069
        %v4096 = vpack.c.b16 %v4072, %v4071
        %v4097 = vpack.c.b16 %v4074, %v4073
        %v4098 = vpack.c.b16 %v4076, %v4075
        %v4099 = vpack.c.b16 %v4078, %v4077
        %v4100 = vpack.c.b16 %v4080, %v4079
        %v4101 = vpack.c.b16 %v4082, %v4081
        %v4102 = vpack.c.b16 %v4084, %v4083
        %v4103 = vpack.c.b16 %v4086, %v4085
        %v4104 = vpack.c.b16 %v4088, %v4087
        %v4137 = vunpack.c.l.b16 %v4041
        %v4138 = vunpack.c.l.b16 %v4042
        %v4139 = vunpack.c.l.b16 %v4043
        %v4140 = vunpack.c.l.b16 %v4044
        %v4141 = vunpack.c.l.b16 %v4045
        %v4142 = vunpack.c.l.b16 %v4046
        %v4143 = vunpack.c.l.b16 %v4047
        %v4144 = vunpack.c.l.b16 %v4048
        %v4145 = vunpack.c.l.b16 %v4049
        %v4146 = vunpack.c.l.b16 %v4050
        %v4147 = vunpack.c.l.b16 %v4051
        %v4148 = vunpack.c.l.b16 %v4052
        %v4149 = vunpack.c.l.b16 %v4053
        %v4150 = vunpack.c.l.b16 %v4054
        %v4151 = vunpack.c.l.b16 %v4055
        %v4152 = vunpack.c.l.b16 %v4056
        %v4153 = vpack.c.b16 %v4138, %v4137
        %v4154 = vpack.c.b16 %v4140, %v4139
        %v4155 = vpack.c.b16 %v4142, %v4141
        %v4156 = vpack.c.b16 %v4144, %v4143
        %v4157 = vpack.c.b16 %v4146, %v4145
        %v4158 = vpack.c.b16 %v4148, %v4147
        %v4159 = vpack.c.b16 %v4150, %v4149
        %v4160 = vpack.c.b16 %v4152, %v4151
        %4169 = vmatprep.subr.bf16.mxu0 0
        %4170 = vmatpush1.bf16.msra.mxu0 %v4153
        %4171 = vmatprep.subr.bf16.mxu0 0
        %4172 = vmatpush1.bf16.msra.mxu0 %v4154
        %4173 = vmatprep.subr.bf16.mxu0 0
        %4174 = vmatpush1.bf16.msra.mxu0 %v4155
        %4175 = vmatprep.subr.bf16.mxu0 0
        %4176 = vmatpush1.bf16.msra.mxu0 %v4156
        %4177 = vmatprep.subr.bf16.mxu0 0
        %4178 = vmatpush1.bf16.msra.mxu0 %v4157
        %4179 = vmatprep.subr.bf16.mxu0 0
        %4180 = vmatpush1.bf16.msra.mxu0 %v4158
        %4181 = vmatprep.subr.bf16.mxu0 0
        %4182 = vmatpush1.bf16.msra.mxu0 %v4159
        %4183 = vmatprep.subr.bf16.mxu0 0
        %4184 = vmatpush1.bf16.msra.mxu0 %v4160
        %4185 = vmatprep.subr.bf16.mxu0 0
        %4186 = vmatpush1.bf16.msra.mxu0 0
        %4187 = vmatprep.subr.bf16.mxu0 0
        %4188 = vmatpush1.bf16.msra.mxu0 0
        %4189 = vmatprep.subr.bf16.mxu0 0
        %4190 = vmatpush1.bf16.msra.mxu0 0
        %4191 = vmatprep.subr.bf16.mxu0 0
        %4192 = vmatpush1.bf16.msra.mxu0 0
        %4193 = vmatprep.subr.bf16.mxu0 0
        %4194 = vmatpush1.bf16.msra.mxu0 0
        %4195 = vmatprep.subr.bf16.mxu0 0
        %4196 = vmatpush1.bf16.msra.mxu0 0
        %4197 = vmatprep.subr.bf16.mxu0 0
        %4198 = vmatpush1.bf16.msra.mxu0 0
        %4199 = vmatprep.subr.bf16.mxu0 0
        %4200 = vmatpush1.bf16.msra.mxu0 0
        %4201 = vmatprep.mubr.bf16.mxu0 0
        %4202 = vmatmul.mubr.bf16.gmra.mrb[0].mxu0 %v4089
        %v4203 = vpop.f32.mrb[0].mxu0
        %v4204 = vadd.f32 0.0, %v4203
        %v4205 = vpop.f32.mrb[0].mxu0
        %v4206 = vpop.f32.mrb[0].mxu0
        %v4207 = vadd.f32 0.0, %v4206
        %v4208 = vpop.f32.mrb[0].mxu0
        %4209 = vmatprep.mubr.bf16.mxu0 0
        %4210 = vmatmul.mubr.bf16.gmra.mrb[0].mxu0 %v4090
        %v4211 = vpop.f32.mrb[0].mxu0
        %v4212 = vadd.f32 0.0, %v4211
        %v4213 = vpop.f32.mrb[0].mxu0
        %v4214 = vpop.f32.mrb[0].mxu0
        %v4215 = vadd.f32 0.0, %v4214
        %v4216 = vpop.f32.mrb[0].mxu0
        %4217 = vmatprep.mubr.bf16.mxu0 0
        %4218 = vmatmul.mubr.bf16.gmra.mrb[0].mxu0 %v4091
        %v4219 = vpop.f32.mrb[0].mxu0
        %v4220 = vadd.f32 0.0, %v4219
        %v4221 = vpop.f32.mrb[0].mxu0
        %v4222 = vpop.f32.mrb[0].mxu0
        %v4223 = vadd.f32 0.0, %v4222
        %v4224 = vpop.f32.mrb[0].mxu0
        %4225 = vmatprep.mubr.bf16.mxu0 0
        %4226 = vmatmul.mubr.bf16.gmra.mrb[0].mxu0 %v4092
        %v4227 = vpop.f32.mrb[0].mxu0
        %v4228 = vadd.f32 0.0, %v4227
        %v4229 = vpop.f32.mrb[0].mxu0
        %v4230 = vpop.f32.mrb[0].mxu0
        %v4231 = vadd.f32 0.0, %v4230
        %v4232 = vpop.f32.mrb[0].mxu0
        %4233 = vmatprep.mubr.bf16.mxu0 0
        %4234 = vmatmul.mubr.bf16.gmra.mrb[0].mxu0 %v4093
        %v4235 = vpop.f32.mrb[0].mxu0
        %v4236 = vadd.f32 0.0, %v4235
        %v4237 = vpop.f32.mrb[0].mxu0
        %v4238 = vpop.f32.mrb[0].mxu0
        %v4239 = vadd.f32 0.0, %v4238
        %v4240 = vpop.f32.mrb[0].mxu0
        %4241 = vmatprep.mubr.bf16.mxu0 0
        %4242 = vmatmul.mubr.bf16.gmra.mrb[0].mxu0 %v4094
        %v4243 = vpop.f32.mrb[0].mxu0
        %v4244 = vadd.f32 0.0, %v4243
        %v4245 = vpop.f32.mrb[0].mxu0
        %v4246 = vpop.f32.mrb[0].mxu0
        %v4247 = vadd.f32 0.0, %v4246
        %v4248 = vpop.f32.mrb[0].mxu0
        %4249 = vmatprep.mubr.bf16.mxu0 0
        %4250 = vmatmul.mubr.bf16.gmra.mrb[0].mxu0 %v4095
        %v4251 = vpop.f32.mrb[0].mxu0
        %v4252 = vadd.f32 0.0, %v4251
        %v4253 = vpop.f32.mrb[0].mxu0
        %v4254 = vpop.f32.mrb[0].mxu0
        %v4255 = vadd.f32 0.0, %v4254
        %v4256 = vpop.f32.mrb[0].mxu0
        %4257 = vmatprep.mubr.bf16.mxu0 0
        %4258 = vmatmul.mubr.bf16.gmra.mrb[0].mxu0 %v4096
        %v4259 = vpop.f32.mrb[0].mxu0
        %v4260 = vadd.f32 0.0, %v4259
        %v4261 = vpop.f32.mrb[0].mxu0
        %v4262 = vpop.f32.mrb[0].mxu0
        %v4263 = vadd.f32 0.0, %v4262
        %v4264 = vpop.f32.mrb[0].mxu0
        %4265 = vmatprep.mubr.bf16.mxu0 0
        %4266 = vmatmul.mubr.bf16.gmra.mrb[0].mxu0 %v4097
        %v4267 = vpop.f32.mrb[0].mxu0
        %v4268 = vadd.f32 0.0, %v4267
        %v4269 = vpop.f32.mrb[0].mxu0
        %v4270 = vpop.f32.mrb[0].mxu0
        %v4271 = vadd.f32 0.0, %v4270
        %v4272 = vpop.f32.mrb[0].mxu0
        %4273 = vmatprep.mubr.bf16.mxu0 0
        %4274 = vmatmul.mubr.bf16.gmra.mrb[0].mxu0 %v4098
        %v4275 = vpop.f32.mrb[0].mxu0
        %v4276 = vadd.f32 0.0, %v4275
        %v4277 = vpop.f32.mrb[0].mxu0
        %v4278 = vpop.f32.mrb[0].mxu0
        %v4279 = vadd.f32 0.0, %v4278
        %v4280 = vpop.f32.mrb[0].mxu0
        %4281 = vmatprep.mubr.bf16.mxu0 0
        %4282 = vmatmul.mubr.bf16.gmra.mrb[0].mxu0 %v4099
        %v4283 = vpop.f32.mrb[0].mxu0
        %v4284 = vadd.f32 0.0, %v4283
        %v4285 = vpop.f32.mrb[0].mxu0
        %v4286 = vpop.f32.mrb[0].mxu0
        %v4287 = vadd.f32 0.0, %v4286
        %v4288 = vpop.f32.mrb[0].mxu0
        %4289 = vmatprep.mubr.bf16.mxu0 0
        %4290 = vmatmul.mubr.bf16.gmra.mrb[0].mxu0 %v4100
        %v4291 = vpop.f32.mrb[0].mxu0
        %v4292 = vadd.f32 0.0, %v4291
        %v4293 = vpop.f32.mrb[0].mxu0
        %v4294 = vpop.f32.mrb[0].mxu0
        %v4295 = vadd.f32 0.0, %v4294
        %v4296 = vpop.f32.mrb[0].mxu0
        %4297 = vmatprep.mubr.bf16.mxu0 0
        %4298 = vmatmul.mubr.bf16.gmra.mrb[0].mxu0 %v4101
        %v4299 = vpop.f32.mrb[0].mxu0
        %v4300 = vadd.f32 0.0, %v4299
        %v4301 = vpop.f32.mrb[0].mxu0
        %v4302 = vpop.f32.mrb[0].mxu0
        %v4303 = vadd.f32 0.0, %v4302
        %v4304 = vpop.f32.mrb[0].mxu0
        %4305 = vmatprep.mubr.bf16.mxu0 0
        %4306 = vmatmul.mubr.bf16.gmra.mrb[0].mxu0 %v4102
        %v4307 = vpop.f32.mrb[0].mxu0
        %v4308 = vadd.f32 0.0, %v4307
        %v4309 = vpop.f32.mrb[0].mxu0
        %v4310 = vpop.f32.mrb[0].mxu0
        %v4311 = vadd.f32 0.0, %v4310
        %v4312 = vpop.f32.mrb[0].mxu0
        %4313 = vmatprep.mubr.bf16.mxu0 0
        %4314 = vmatmul.mubr.bf16.gmra.mrb[0].mxu0 %v4103
        %v4315 = vpop.f32.mrb[0].mxu0
        %v4316 = vadd.f32 0.0, %v4315
        %v4317 = vpop.f32.mrb[0].mxu0
        %v4318 = vpop.f32.mrb[0].mxu0
        %v4319 = vadd.f32 0.0, %v4318
        %v4320 = vpop.f32.mrb[0].mxu0
        %4321 = vmatprep.mubr.bf16.mxu0 0
        %4322 = vmatmul.mubr.bf16.gmra.mrb[0].mxu0 %v4104
        %v4323 = vpop.f32.mrb[0].mxu0
        %v4324 = vadd.f32 0.0, %v4323
        %v4325 = vpop.f32.mrb[0].mxu0
        %v4326 = vpop.f32.mrb[0].mxu0
        %v4327 = vadd.f32 0.0, %v4326
        %v4328 = vpop.f32.mrb[0].mxu0
        %4329 = vdwg.mxu0
        %v4330 = vadd.f32 %v3832, %v4204
        %v4331 = vadd.f32 %v3833, %v4207
        %v4332 = vadd.f32 %v3834, %v4212
        %v4333 = vadd.f32 %v3835, %v4215
        %v4334 = vadd.f32 %v3836, %v4220
        %v4335 = vadd.f32 %v3837, %v4223
        %v4336 = vadd.f32 %v3838, %v4228
        %v4337 = vadd.f32 %v3839, %v4231
        %v4338 = vadd.f32 %v3840, %v4236
        %v4339 = vadd.f32 %v3841, %v4239
        %v4340 = vadd.f32 %v3842, %v4244
        %v4341 = vadd.f32 %v3843, %v4247
        %v4342 = vadd.f32 %v3844, %v4252
        %v4343 = vadd.f32 %v3845, %v4255
        %v4344 = vadd.f32 %v3846, %v4260
        %v4345 = vadd.f32 %v3847, %v4263
        %v4346 = vadd.f32 %v3848, %v4268
        %v4347 = vadd.f32 %v3849, %v4271
        %v4348 = vadd.f32 %v3850, %v4276
        %v4349 = vadd.f32 %v3851, %v4279
        %v4350 = vadd.f32 %v3852, %v4284
        %v4351 = vadd.f32 %v3853, %v4287
        %v4352 = vadd.f32 %v3854, %v4292
        %v4353 = vadd.f32 %v3855, %v4295
        %v4354 = vadd.f32 %v3856, %v4300
        %v4355 = vadd.f32 %v3857, %v4303
        %v4356 = vadd.f32 %v3858, %v4308
        %v4357 = vadd.f32 %v3859, %v4311
        %v4358 = vadd.f32 %v3860, %v4316
        %v4359 = vadd.f32 %v3861, %v4319
        %v4360 = vadd.f32 %v3862, %v4324
        %v4361 = vadd.f32 %v3863, %v4327
        %s4362 = scalar_lea.vmem [#allocation2], 24
        %v4363 = vld [vmem:[%s4362] sm:$0xf]
        %v4364 = vld [vmem:[%s4362 + $0x4] sm:$0xf]
        %v4365 = vld [vmem:[%s4362 + $0xc] sm:$0xf]
        %v4366 = vld [vmem:[%s4362 + $0x10] sm:$0xf]
        %v4367 = vld [vmem:[%s4362 + $0x18] sm:$0xf]
        %v4368 = vld [vmem:[%s4362 + $0x1c] sm:$0xf]
        %v4369 = vld [vmem:[%s4362 + $0x24] sm:$0xf]
        %v4370 = vld [vmem:[%s4362 + $0x28] sm:$0xf]
        %v4371 = vld [vmem:[%s4362 + $0x30] sm:$0xf]
        %v4372 = vld [vmem:[%s4362 + $0x34] sm:$0xf]
        %v4373 = vld [vmem:[%s4362 + $0x3c] sm:$0xf]
        %v4374 = vld [vmem:[%s4362 + $0x40] sm:$0xf]
        %v4375 = vld [vmem:[%s4362 + $0x48] sm:$0xf]
        %v4376 = vld [vmem:[%s4362 + $0x4c] sm:$0xf]
        %v4377 = vld [vmem:[%s4362 + $0x54] sm:$0xf]
        %v4378 = vld [vmem:[%s4362 + $0x58] sm:$0xf]
        %v4379 = vld [vmem:[%s4362 + $0x60] sm:$0xf]
        %v4380 = vld [vmem:[%s4362 + $0x64] sm:$0xf]
        %v4381 = vld [vmem:[%s4362 + $0x6c] sm:$0xf]
        %v4382 = vld [vmem:[%s4362 + $0x70] sm:$0xf]
        %v4383 = vld [vmem:[%s4362 + $0x78] sm:$0xf]
        %v4384 = vld [vmem:[%s4362 + $0x7c] sm:$0xf]
        %v4385 = vld [vmem:[%s4362 + $0x84] sm:$0xf]
        %v4386 = vld [vmem:[%s4362 + $0x88] sm:$0xf]
        %v4387 = vld [vmem:[%s4362 + $0x90] sm:$0xf]
        %v4388 = vld [vmem:[%s4362 + $0x94] sm:$0xf]
        %v4389 = vld [vmem:[%s4362 + $0x9c] sm:$0xf]
        %v4390 = vld [vmem:[%s4362 + $0xa0] sm:$0xf]
        %v4391 = vld [vmem:[%s4362 + $0xa8] sm:$0xf]
        %v4392 = vld [vmem:[%s4362 + $0xac] sm:$0xf]
        %v4393 = vld [vmem:[%s4362 + $0xb4] sm:$0xf]
        %v4394 = vld [vmem:[%s4362 + $0xb8] sm:$0xf]
        %s4395 = scalar_lea.vmem [#allocation9], 384
        %v4396 = vld [vmem:[%s4395] sm:$0xf]
        %v4397 = vld [vmem:[%s4395 + $0x4] sm:$0xf]
        %v4398 = vld [vmem:[%s4395 + $0x8] sm:$0xf]
        %v4399 = vld [vmem:[%s4395 + $0xc] sm:$0xf]
        %v4400 = vld [vmem:[%s4395 + $0x10] sm:$0xf]
        %v4401 = vld [vmem:[%s4395 + $0x14] sm:$0xf]
        %v4402 = vld [vmem:[%s4395 + $0x18] sm:$0xf]
        %v4403 = vld [vmem:[%s4395 + $0x1c] sm:$0xf]
        %v4404 = vld [vmem:[%s4395 + $0x20] sm:$0xf]
        %v4405 = vld [vmem:[%s4395 + $0x24] sm:$0xf]
        %v4406 = vld [vmem:[%s4395 + $0x28] sm:$0xf]
        %v4407 = vld [vmem:[%s4395 + $0x2c] sm:$0xf]
        %v4408 = vld [vmem:[%s4395 + $0x30] sm:$0xf]
        %v4409 = vld [vmem:[%s4395 + $0x34] sm:$0xf]
        %v4410 = vld [vmem:[%s4395 + $0x38] sm:$0xf]
        %v4411 = vld [vmem:[%s4395 + $0x3c] sm:$0xf]
        %v4444 = vunpack.c.l.b16 %v4363
        %v4445 = vunpack.c.l.b16 %v4364
        %v4446 = vunpack.c.l.b16 %v4365
        %v4447 = vunpack.c.l.b16 %v4366
        %v4448 = vunpack.c.l.b16 %v4367
        %v4449 = vunpack.c.l.b16 %v4368
        %v4450 = vunpack.c.l.b16 %v4369
        %v4451 = vunpack.c.l.b16 %v4370
        %v4452 = vunpack.c.l.b16 %v4371
        %v4453 = vunpack.c.l.b16 %v4372
        %v4454 = vunpack.c.l.b16 %v4373
        %v4455 = vunpack.c.l.b16 %v4374
        %v4456 = vunpack.c.l.b16 %v4375
        %v4457 = vunpack.c.l.b16 %v4376
        %v4458 = vunpack.c.l.b16 %v4377
        %v4459 = vunpack.c.l.b16 %v4378
        %v4460 = vunpack.c.l.b16 %v4379
        %v4461 = vunpack.c.l.b16 %v4380
        %v4462 = vunpack.c.l.b16 %v4381
        %v4463 = vunpack.c.l.b16 %v4382
        %v4464 = vunpack.c.l.b16 %v4383
        %v4465 = vunpack.c.l.b16 %v4384
        %v4466 = vunpack.c.l.b16 %v4385
        %v4467 = vunpack.c.l.b16 %v4386
        %v4468 = vunpack.c.l.b16 %v4387
        %v4469 = vunpack.c.l.b16 %v4388
        %v4470 = vunpack.c.l.b16 %v4389
        %v4471 = vunpack.c.l.b16 %v4390
        %v4472 = vunpack.c.l.b16 %v4391
        %v4473 = vunpack.c.l.b16 %v4392
        %v4474 = vunpack.c.l.b16 %v4393
        %v4475 = vunpack.c.l.b16 %v4394
        %v4476 = vpack.c.b16 %v4445, %v4444
        %v4477 = vpack.c.b16 %v4447, %v4446
        %v4478 = vpack.c.b16 %v4449, %v4448
        %v4479 = vpack.c.b16 %v4451, %v4450
        %v4480 = vpack.c.b16 %v4453, %v4452
        %v4481 = vpack.c.b16 %v4455, %v4454
        %v4482 = vpack.c.b16 %v4457, %v4456
        %v4483 = vpack.c.b16 %v4459, %v4458
        %v4484 = vpack.c.b16 %v4461, %v4460
        %v4485 = vpack.c.b16 %v4463, %v4462
        %v4486 = vpack.c.b16 %v4465, %v4464
        %v4487 = vpack.c.b16 %v4467, %v4466
        %v4488 = vpack.c.b16 %v4469, %v4468
        %v4489 = vpack.c.b16 %v4471, %v4470
        %v4490 = vpack.c.b16 %v4473, %v4472
        %v4491 = vpack.c.b16 %v4475, %v4474
        %v4524 = vunpack.c.l.b16 %v4396
        %v4525 = vunpack.c.l.b16 %v4397
        %v4526 = vunpack.c.l.b16 %v4398
        %v4527 = vunpack.c.l.b16 %v4399
        %v4528 = vunpack.c.l.b16 %v4400
        %v4529 = vunpack.c.l.b16 %v4401
        %v4530 = vunpack.c.l.b16 %v4402
        %v4531 = vunpack.c.l.b16 %v4403
        %v4532 = vunpack.c.l.b16 %v4404
        %v4533 = vunpack.c.l.b16 %v4405
        %v4534 = vunpack.c.l.b16 %v4406
        %v4535 = vunpack.c.l.b16 %v4407
        %v4536 = vunpack.c.l.b16 %v4408
        %v4537 = vunpack.c.l.b16 %v4409
        %v4538 = vunpack.c.l.b16 %v4410
        %v4539 = vunpack.c.l.b16 %v4411
        %v4540 = vpack.c.b16 %v4525, %v4524
        %v4541 = vpack.c.b16 %v4527, %v4526
        %v4542 = vpack.c.b16 %v4529, %v4528
        %v4543 = vpack.c.b16 %v4531, %v4530
        %v4544 = vpack.c.b16 %v4533, %v4532
        %v4545 = vpack.c.b16 %v4535, %v4534
        %v4546 = vpack.c.b16 %v4537, %v4536
        %v4547 = vpack.c.b16 %v4539, %v4538
        %4556 = vmatprep.subr.bf16.mxu0 0
        %4557 = vmatpush1.bf16.msra.mxu0 %v4540
        %4558 = vmatprep.subr.bf16.mxu0 0
        %4559 = vmatpush1.bf16.msra.mxu0 %v4541
        %4560 = vmatprep.subr.bf16.mxu0 0
        %4561 = vmatpush1.bf16.msra.mxu0 %v4542
        %4562 = vmatprep.subr.bf16.mxu0 0
        %4563 = vmatpush1.bf16.msra.mxu0 %v4543
        %4564 = vmatprep.subr.bf16.mxu0 0
        %4565 = vmatpush1.bf16.msra.mxu0 %v4544
        %4566 = vmatprep.subr.bf16.mxu0 0
        %4567 = vmatpush1.bf16.msra.mxu0 %v4545
        %4568 = vmatprep.subr.bf16.mxu0 0
        %4569 = vmatpush1.bf16.msra.mxu0 %v4546
        %4570 = vmatprep.subr.bf16.mxu0 0
        %4571 = vmatpush1.bf16.msra.mxu0 %v4547
        %4572 = vmatprep.subr.bf16.mxu0 0
        %4573 = vmatpush1.bf16.msra.mxu0 0
        %4574 = vmatprep.subr.bf16.mxu0 0
        %4575 = vmatpush1.bf16.msra.mxu0 0
        %4576 = vmatprep.subr.bf16.mxu0 0
        %4577 = vmatpush1.bf16.msra.mxu0 0
        %4578 = vmatprep.subr.bf16.mxu0 0
        %4579 = vmatpush1.bf16.msra.mxu0 0
        %4580 = vmatprep.subr.bf16.mxu0 0
        %4581 = vmatpush1.bf16.msra.mxu0 0
        %4582 = vmatprep.subr.bf16.mxu0 0
        %4583 = vmatpush1.bf16.msra.mxu0 0
        %4584 = vmatprep.subr.bf16.mxu0 0
        %4585 = vmatpush1.bf16.msra.mxu0 0
        %4586 = vmatprep.subr.bf16.mxu0 0
        %4587 = vmatpush1.bf16.msra.mxu0 0
        %4588 = vmatprep.mubr.bf16.mxu0 0
        %4589 = vmatmul.mubr.bf16.gmra.mrb[0].mxu0 %v4476
        %v4590 = vpop.f32.mrb[0].mxu0
        %v4591 = vadd.f32 0.0, %v4590
        %v4592 = vpop.f32.mrb[0].mxu0
        %v4593 = vpop.f32.mrb[0].mxu0
        %v4594 = vadd.f32 0.0, %v4593
        %v4595 = vpop.f32.mrb[0].mxu0
        %4596 = vmatprep.mubr.bf16.mxu0 0
        %4597 = vmatmul.mubr.bf16.gmra.mrb[0].mxu0 %v4477
        %v4598 = vpop.f32.mrb[0].mxu0
        %v4599 = vadd.f32 0.0, %v4598
        %v4600 = vpop.f32.mrb[0].mxu0
        %v4601 = vpop.f32.mrb[0].mxu0
        %v4602 = vadd.f32 0.0, %v4601
        %v4603 = vpop.f32.mrb[0].mxu0
        %4604 = vmatprep.mubr.bf16.mxu0 0
        %4605 = vmatmul.mubr.bf16.gmra.mrb[0].mxu0 %v4478
        %v4606 = vpop.f32.mrb[0].mxu0
        %v4607 = vadd.f32 0.0, %v4606
        %v4608 = vpop.f32.mrb[0].mxu0
        %v4609 = vpop.f32.mrb[0].mxu0
        %v4610 = vadd.f32 0.0, %v4609
        %v4611 = vpop.f32.mrb[0].mxu0
        %4612 = vmatprep.mubr.bf16.mxu0 0
        %4613 = vmatmul.mubr.bf16.gmra.mrb[0].mxu0 %v4479
        %v4614 = vpop.f32.mrb[0].mxu0
        %v4615 = vadd.f32 0.0, %v4614
        %v4616 = vpop.f32.mrb[0].mxu0
        %v4617 = vpop.f32.mrb[0].mxu0
        %v4618 = vadd.f32 0.0, %v4617
        %v4619 = vpop.f32.mrb[0].mxu0
        %4620 = vmatprep.mubr.bf16.mxu0 0
        %4621 = vmatmul.mubr.bf16.gmra.mrb[0].mxu0 %v4480
        %v4622 = vpop.f32.mrb[0].mxu0
        %v4623 = vadd.f32 0.0, %v4622
        %v4624 = vpop.f32.mrb[0].mxu0
        %v4625 = vpop.f32.mrb[0].mxu0
        %v4626 = vadd.f32 0.0, %v4625
        %v4627 = vpop.f32.mrb[0].mxu0
        %4628 = vmatprep.mubr.bf16.mxu0 0
        %4629 = vmatmul.mubr.bf16.gmra.mrb[0].mxu0 %v4481
        %v4630 = vpop.f32.mrb[0].mxu0
        %v4631 = vadd.f32 0.0, %v4630
        %v4632 = vpop.f32.mrb[0].mxu0
        %v4633 = vpop.f32.mrb[0].mxu0
        %v4634 = vadd.f32 0.0, %v4633
        %v4635 = vpop.f32.mrb[0].mxu0
        %4636 = vmatprep.mubr.bf16.mxu0 0
        %4637 = vmatmul.mubr.bf16.gmra.mrb[0].mxu0 %v4482
        %v4638 = vpop.f32.mrb[0].mxu0
        %v4639 = vadd.f32 0.0, %v4638
        %v4640 = vpop.f32.mrb[0].mxu0
        %v4641 = vpop.f32.mrb[0].mxu0
        %v4642 = vadd.f32 0.0, %v4641
        %v4643 = vpop.f32.mrb[0].mxu0
        %4644 = vmatprep.mubr.bf16.mxu0 0
        %4645 = vmatmul.mubr.bf16.gmra.mrb[0].mxu0 %v4483
        %v4646 = vpop.f32.mrb[0].mxu0
        %v4647 = vadd.f32 0.0, %v4646
        %v4648 = vpop.f32.mrb[0].mxu0
        %v4649 = vpop.f32.mrb[0].mxu0
        %v4650 = vadd.f32 0.0, %v4649
        %v4651 = vpop.f32.mrb[0].mxu0
        %4652 = vmatprep.mubr.bf16.mxu0 0
        %4653 = vmatmul.mubr.bf16.gmra.mrb[0].mxu0 %v4484
        %v4654 = vpop.f32.mrb[0].mxu0
        %v4655 = vadd.f32 0.0, %v4654
        %v4656 = vpop.f32.mrb[0].mxu0
        %v4657 = vpop.f32.mrb[0].mxu0
        %v4658 = vadd.f32 0.0, %v4657
        %v4659 = vpop.f32.mrb[0].mxu0
        %4660 = vmatprep.mubr.bf16.mxu0 0
        %4661 = vmatmul.mubr.bf16.gmra.mrb[0].mxu0 %v4485
        %v4662 = vpop.f32.mrb[0].mxu0
        %v4663 = vadd.f32 0.0, %v4662
        %v4664 = vpop.f32.mrb[0].mxu0
        %v4665 = vpop.f32.mrb[0].mxu0
        %v4666 = vadd.f32 0.0, %v4665
        %v4667 = vpop.f32.mrb[0].mxu0
        %4668 = vmatprep.mubr.bf16.mxu0 0
        %4669 = vmatmul.mubr.bf16.gmra.mrb[0].mxu0 %v4486
        %v4670 = vpop.f32.mrb[0].mxu0
        %v4671 = vadd.f32 0.0, %v4670
        %v4672 = vpop.f32.mrb[0].mxu0
        %v4673 = vpop.f32.mrb[0].mxu0
        %v4674 = vadd.f32 0.0, %v4673
        %v4675 = vpop.f32.mrb[0].mxu0
        %4676 = vmatprep.mubr.bf16.mxu0 0
        %4677 = vmatmul.mubr.bf16.gmra.mrb[0].mxu0 %v4487
        %v4678 = vpop.f32.mrb[0].mxu0
        %v4679 = vadd.f32 0.0, %v4678
        %v4680 = vpop.f32.mrb[0].mxu0
        %v4681 = vpop.f32.mrb[0].mxu0
        %v4682 = vadd.f32 0.0, %v4681
        %v4683 = vpop.f32.mrb[0].mxu0
        %4684 = vmatprep.mubr.bf16.mxu0 0
        %4685 = vmatmul.mubr.bf16.gmra.mrb[0].mxu0 %v4488
        %v4686 = vpop.f32.mrb[0].mxu0
        %v4687 = vadd.f32 0.0, %v4686
        %v4688 = vpop.f32.mrb[0].mxu0
        %v4689 = vpop.f32.mrb[0].mxu0
        %v4690 = vadd.f32 0.0, %v4689
        %v4691 = vpop.f32.mrb[0].mxu0
        %4692 = vmatprep.mubr.bf16.mxu0 0
        %4693 = vmatmul.mubr.bf16.gmra.mrb[0].mxu0 %v4489
        %v4694 = vpop.f32.mrb[0].mxu0
        %v4695 = vadd.f32 0.0, %v4694
        %v4696 = vpop.f32.mrb[0].mxu0
        %v4697 = vpop.f32.mrb[0].mxu0
        %v4698 = vadd.f32 0.0, %v4697
        %v4699 = vpop.f32.mrb[0].mxu0
        %4700 = vmatprep.mubr.bf16.mxu0 0
        %4701 = vmatmul.mubr.bf16.gmra.mrb[0].mxu0 %v4490
        %v4702 = vpop.f32.mrb[0].mxu0
        %v4703 = vadd.f32 0.0, %v4702
        %v4704 = vpop.f32.mrb[0].mxu0
        %v4705 = vpop.f32.mrb[0].mxu0
        %v4706 = vadd.f32 0.0, %v4705
        %v4707 = vpop.f32.mrb[0].mxu0
        %4708 = vmatprep.mubr.bf16.mxu0 0
        %4709 = vmatmul.mubr.bf16.gmra.mrb[0].mxu0 %v4491
        %v4710 = vpop.f32.mrb[0].mxu0
        %v4711 = vadd.f32 0.0, %v4710
        %v4712 = vpop.f32.mrb[0].mxu0
        %v4713 = vpop.f32.mrb[0].mxu0
        %v4714 = vadd.f32 0.0, %v4713
        %v4715 = vpop.f32.mrb[0].mxu0
        %4716 = vdwg.mxu0
        %v4717 = vadd.f32 %v4330, %v4591
        %v4718 = vadd.f32 %v4331, %v4594
        %v4719 = vadd.f32 %v4332, %v4599
        %v4720 = vadd.f32 %v4333, %v4602
        %v4721 = vadd.f32 %v4334, %v4607
        %v4722 = vadd.f32 %v4335, %v4610
        %v4723 = vadd.f32 %v4336, %v4615
        %v4724 = vadd.f32 %v4337, %v4618
        %v4725 = vadd.f32 %v4338, %v4623
        %v4726 = vadd.f32 %v4339, %v4626
        %v4727 = vadd.f32 %v4340, %v4631
        %v4728 = vadd.f32 %v4341, %v4634
        %v4729 = vadd.f32 %v4342, %v4639
        %v4730 = vadd.f32 %v4343, %v4642
        %v4731 = vadd.f32 %v4344, %v4647
        %v4732 = vadd.f32 %v4345, %v4650
        %v4733 = vadd.f32 %v4346, %v4655
        %v4734 = vadd.f32 %v4347, %v4658
        %v4735 = vadd.f32 %v4348, %v4663
        %v4736 = vadd.f32 %v4349, %v4666
        %v4737 = vadd.f32 %v4350, %v4671
        %v4738 = vadd.f32 %v4351, %v4674
        %v4739 = vadd.f32 %v4352, %v4679
        %v4740 = vadd.f32 %v4353, %v4682
        %v4741 = vadd.f32 %v4354, %v4687
        %v4742 = vadd.f32 %v4355, %v4690
        %v4743 = vadd.f32 %v4356, %v4695
        %v4744 = vadd.f32 %v4357, %v4698
        %v4745 = vadd.f32 %v4358, %v4703
        %v4746 = vadd.f32 %v4359, %v4706
        %v4747 = vadd.f32 %v4360, %v4711
        %v4748 = vadd.f32 %v4361, %v4714
        %v4749 = vld [vmem:[%s4362] sm:$0xf]
        %v4750 = vld [vmem:[%s4362 + $0x4] sm:$0xf]
        %v4751 = vld [vmem:[%s4362 + $0x8] sm:$0x1]
        %v4752 = vld [vmem:[%s4362 + $0xc] sm:$0xf]
        %v4753 = vld [vmem:[%s4362 + $0x10] sm:$0xf]
        %v4754 = vld [vmem:[%s4362 + $0x14] sm:$0x1]
        %v4755 = vld [vmem:[%s4362 + $0x18] sm:$0xf]
        %v4756 = vld [vmem:[%s4362 + $0x1c] sm:$0xf]
        %v4757 = vld [vmem:[%s4362 + $0x20] sm:$0x1]
        %v4758 = vld [vmem:[%s4362 + $0x24] sm:$0xf]
        %v4759 = vld [vmem:[%s4362 + $0x28] sm:$0xf]
        %v4760 = vld [vmem:[%s4362 + $0x2c] sm:$0x1]
        %v4761 = vld [vmem:[%s4362 + $0x30] sm:$0xf]
        %v4762 = vld [vmem:[%s4362 + $0x34] sm:$0xf]
        %v4763 = vld [vmem:[%s4362 + $0x38] sm:$0x1]
        %v4764 = vld [vmem:[%s4362 + $0x3c] sm:$0xf]
        %v4765 = vld [vmem:[%s4362 + $0x40] sm:$0xf]
        %v4766 = vld [vmem:[%s4362 + $0x44] sm:$0x1]
        %v4767 = vld [vmem:[%s4362 + $0x48] sm:$0xf]
        %v4768 = vld [vmem:[%s4362 + $0x4c] sm:$0xf]
        %v4769 = vld [vmem:[%s4362 + $0x50] sm:$0x1]
        %v4770 = vld [vmem:[%s4362 + $0x54] sm:$0xf]
        %v4771 = vld [vmem:[%s4362 + $0x58] sm:$0xf]
        %v4772 = vld [vmem:[%s4362 + $0x5c] sm:$0x1]
        %v4773 = vld [vmem:[%s4362 + $0x60] sm:$0xf]
        %v4774 = vld [vmem:[%s4362 + $0x64] sm:$0xf]
        %v4775 = vld [vmem:[%s4362 + $0x68] sm:$0x1]
        %v4776 = vld [vmem:[%s4362 + $0x6c] sm:$0xf]
        %v4777 = vld [vmem:[%s4362 + $0x70] sm:$0xf]
        %v4778 = vld [vmem:[%s4362 + $0x74] sm:$0x1]
        %v4779 = vld [vmem:[%s4362 + $0x78] sm:$0xf]
        %v4780 = vld [vmem:[%s4362 + $0x7c] sm:$0xf]
        %v4781 = vld [vmem:[%s4362 + $0x80] sm:$0x1]
        %v4782 = vld [vmem:[%s4362 + $0x84] sm:$0xf]
        %v4783 = vld [vmem:[%s4362 + $0x88] sm:$0xf]
        %v4784 = vld [vmem:[%s4362 + $0x8c] sm:$0x1]
        %v4785 = vld [vmem:[%s4362 + $0x90] sm:$0xf]
        %v4786 = vld [vmem:[%s4362 + $0x94] sm:$0xf]
        %v4787 = vld [vmem:[%s4362 + $0x98] sm:$0x1]
        %v4788 = vld [vmem:[%s4362 + $0x9c] sm:$0xf]
        %v4789 = vld [vmem:[%s4362 + $0xa0] sm:$0xf]
        %v4790 = vld [vmem:[%s4362 + $0xa4] sm:$0x1]
        %v4791 = vld [vmem:[%s4362 + $0xa8] sm:$0xf]
        %v4792 = vld [vmem:[%s4362 + $0xac] sm:$0xf]
        %v4793 = vld [vmem:[%s4362 + $0xb0] sm:$0x1]
        %v4794 = vld [vmem:[%s4362 + $0xb4] sm:$0xf]
        %v4795 = vld [vmem:[%s4362 + $0xb8] sm:$0xf]
        %v4796 = vld [vmem:[%s4362 + $0xbc] sm:$0x1]
        %v4798 = vshrl.u32 %v4749, 16
        %v4800 = vrot.slane %v4798, 4
        %v4801 = vshll.u32 %v4749, 16
        %v4803 = vrot.slane %v4801, 5
        %v4804 = vor.u32 %v4800, %v4803
        %v4805 = vrot.slane %v4804, 4
        %v4807 = vshll.u32 %v4750, 16
        %v4809 = vrot.slane %v4807, 5
        %v4810 = vsel %vm1259, %v4805, %v4809
        %v4811 = vshrl.u32 %v4750, 16
        %v4813 = vrot.slane %v4811, 4
        %v4814 = vor.u32 %v4813, %v4809
        %v4815 = vrot.slane %v4814, 4
        %v4817 = vshll.u32 %v4751, 16
        %v4819 = vrot.slane %v4817, 5
        %v4820 = vsel %vm1259, %v4815, %v4819
        %v4822 = vshrl.u32 %v4752, 16
        %v4824 = vrot.slane %v4822, 4
        %v4825 = vshll.u32 %v4752, 16
        %v4827 = vrot.slane %v4825, 5
        %v4828 = vor.u32 %v4824, %v4827
        %v4829 = vrot.slane %v4828, 4
        %v4831 = vshll.u32 %v4753, 16
        %v4833 = vrot.slane %v4831, 5
        %v4834 = vsel %vm1259, %v4829, %v4833
        %v4835 = vshrl.u32 %v4753, 16
        %v4837 = vrot.slane %v4835, 4
        %v4838 = vor.u32 %v4837, %v4833
        %v4839 = vrot.slane %v4838, 4
        %v4841 = vshll.u32 %v4754, 16
        %v4843 = vrot.slane %v4841, 5
        %v4844 = vsel %vm1259, %v4839, %v4843
        %v4846 = vshrl.u32 %v4755, 16
        %v4848 = vrot.slane %v4846, 4
        %v4849 = vshll.u32 %v4755, 16
        %v4851 = vrot.slane %v4849, 5
        %v4852 = vor.u32 %v4848, %v4851
        %v4853 = vrot.slane %v4852, 4
        %v4855 = vshll.u32 %v4756, 16
        %v4857 = vrot.slane %v4855, 5
        %v4858 = vsel %vm1259, %v4853, %v4857
        %v4859 = vshrl.u32 %v4756, 16
        %v4861 = vrot.slane %v4859, 4
        %v4862 = vor.u32 %v4861, %v4857
        %v4863 = vrot.slane %v4862, 4
        %v4865 = vshll.u32 %v4757, 16
        %v4867 = vrot.slane %v4865, 5
        %v4868 = vsel %vm1259, %v4863, %v4867
        %v4870 = vshrl.u32 %v4758, 16
        %v4872 = vrot.slane %v4870, 4
        %v4873 = vshll.u32 %v4758, 16
        %v4875 = vrot.slane %v4873, 5
        %v4876 = vor.u32 %v4872, %v4875
        %v4877 = vrot.slane %v4876, 4
        %v4879 = vshll.u32 %v4759, 16
        %v4881 = vrot.slane %v4879, 5
        %v4882 = vsel %vm1259, %v4877, %v4881
        %v4883 = vshrl.u32 %v4759, 16
        %v4885 = vrot.slane %v4883, 4
        %v4886 = vor.u32 %v4885, %v4881
        %v4887 = vrot.slane %v4886, 4
        %v4889 = vshll.u32 %v4760, 16
        %v4891 = vrot.slane %v4889, 5
        %v4892 = vsel %vm1259, %v4887, %v4891
        %v4894 = vshrl.u32 %v4761, 16
        %v4896 = vrot.slane %v4894, 4
        %v4897 = vshll.u32 %v4761, 16
        %v4899 = vrot.slane %v4897, 5
        %v4900 = vor.u32 %v4896, %v4899
        %v4901 = vrot.slane %v4900, 4
        %v4903 = vshll.u32 %v4762, 16
        %v4905 = vrot.slane %v4903, 5
        %v4906 = vsel %vm1259, %v4901, %v4905
        %v4907 = vshrl.u32 %v4762, 16
        %v4909 = vrot.slane %v4907, 4
        %v4910 = vor.u32 %v4909, %v4905
        %v4911 = vrot.slane %v4910, 4
        %v4913 = vshll.u32 %v4763, 16
        %v4915 = vrot.slane %v4913, 5
        %v4916 = vsel %vm1259, %v4911, %v4915
        %v4918 = vshrl.u32 %v4764, 16
        %v4920 = vrot.slane %v4918, 4
        %v4921 = vshll.u32 %v4764, 16
        %v4923 = vrot.slane %v4921, 5
        %v4924 = vor.u32 %v4920, %v4923
        %v4925 = vrot.slane %v4924, 4
        %v4927 = vshll.u32 %v4765, 16
        %v4929 = vrot.slane %v4927, 5
        %v4930 = vsel %vm1259, %v4925, %v4929
        %v4931 = vshrl.u32 %v4765, 16
        %v4933 = vrot.slane %v4931, 4
        %v4934 = vor.u32 %v4933, %v4929
        %v4935 = vrot.slane %v4934, 4
        %v4937 = vshll.u32 %v4766, 16
        %v4939 = vrot.slane %v4937, 5
        %v4940 = vsel %vm1259, %v4935, %v4939
        %v4942 = vshrl.u32 %v4767, 16
        %v4944 = vrot.slane %v4942, 4
        %v4945 = vshll.u32 %v4767, 16
        %v4947 = vrot.slane %v4945, 5
        %v4948 = vor.u32 %v4944, %v4947
        %v4949 = vrot.slane %v4948, 4
        %v4951 = vshll.u32 %v4768, 16
        %v4953 = vrot.slane %v4951, 5
        %v4954 = vsel %vm1259, %v4949, %v4953
        %v4955 = vshrl.u32 %v4768, 16
        %v4957 = vrot.slane %v4955, 4
        %v4958 = vor.u32 %v4957, %v4953
        %v4959 = vrot.slane %v4958, 4
        %v4961 = vshll.u32 %v4769, 16
        %v4963 = vrot.slane %v4961, 5
        %v4964 = vsel %vm1259, %v4959, %v4963
        %v4966 = vshrl.u32 %v4770, 16
        %v4968 = vrot.slane %v4966, 4
        %v4969 = vshll.u32 %v4770, 16
        %v4971 = vrot.slane %v4969, 5
        %v4972 = vor.u32 %v4968, %v4971
        %v4973 = vrot.slane %v4972, 4
        %v4975 = vshll.u32 %v4771, 16
        %v4977 = vrot.slane %v4975, 5
        %v4978 = vsel %vm1259, %v4973, %v4977
        %v4979 = vshrl.u32 %v4771, 16
        %v4981 = vrot.slane %v4979, 4
        %v4982 = vor.u32 %v4981, %v4977
        %v4983 = vrot.slane %v4982, 4
        %v4985 = vshll.u32 %v4772, 16
        %v4987 = vrot.slane %v4985, 5
        %v4988 = vsel %vm1259, %v4983, %v4987
        %v4990 = vshrl.u32 %v4773, 16
        %v4992 = vrot.slane %v4990, 4
        %v4993 = vshll.u32 %v4773, 16
        %v4995 = vrot.slane %v4993, 5
        %v4996 = vor.u32 %v4992, %v4995
        %v4997 = vrot.slane %v4996, 4
        %v4999 = vshll.u32 %v4774, 16
        %v5001 = vrot.slane %v4999, 5
        %v5002 = vsel %vm1259, %v4997, %v5001
        %v5003 = vshrl.u32 %v4774, 16
        %v5005 = vrot.slane %v5003, 4
        %v5006 = vor.u32 %v5005, %v5001
        %v5007 = vrot.slane %v5006, 4
        %v5009 = vshll.u32 %v4775, 16
        %v5011 = vrot.slane %v5009, 5
        %v5012 = vsel %vm1259, %v5007, %v5011
        %v5014 = vshrl.u32 %v4776, 16
        %v5016 = vrot.slane %v5014, 4
        %v5017 = vshll.u32 %v4776, 16
        %v5019 = vrot.slane %v5017, 5
        %v5020 = vor.u32 %v5016, %v5019
        %v5021 = vrot.slane %v5020, 4
        %v5023 = vshll.u32 %v4777, 16
        %v5025 = vrot.slane %v5023, 5
        %v5026 = vsel %vm1259, %v5021, %v5025
        %v5027 = vshrl.u32 %v4777, 16
        %v5029 = vrot.slane %v5027, 4
        %v5030 = vor.u32 %v5029, %v5025
        %v5031 = vrot.slane %v5030, 4
        %v5033 = vshll.u32 %v4778, 16
        %v5035 = vrot.slane %v5033, 5
        %v5036 = vsel %vm1259, %v5031, %v5035
        %v5038 = vshrl.u32 %v4779, 16
        %v5040 = vrot.slane %v5038, 4
        %v5041 = vshll.u32 %v4779, 16
        %v5043 = vrot.slane %v5041, 5
        %v5044 = vor.u32 %v5040, %v5043
        %v5045 = vrot.slane %v5044, 4
        %v5047 = vshll.u32 %v4780, 16
        %v5049 = vrot.slane %v5047, 5
        %v5050 = vsel %vm1259, %v5045, %v5049
        %v5051 = vshrl.u32 %v4780, 16
        %v5053 = vrot.slane %v5051, 4
        %v5054 = vor.u32 %v5053, %v5049
        %v5055 = vrot.slane %v5054, 4
        %v5057 = vshll.u32 %v4781, 16
        %v5059 = vrot.slane %v5057, 5
        %v5060 = vsel %vm1259, %v5055, %v5059
        %v5062 = vshrl.u32 %v4782, 16
        %v5064 = vrot.slane %v5062, 4
        %v5065 = vshll.u32 %v4782, 16
        %v5067 = vrot.slane %v5065, 5
        %v5068 = vor.u32 %v5064, %v5067
        %v5069 = vrot.slane %v5068, 4
        %v5071 = vshll.u32 %v4783, 16
        %v5073 = vrot.slane %v5071, 5
        %v5074 = vsel %vm1259, %v5069, %v5073
        %v5075 = vshrl.u32 %v4783, 16
        %v5077 = vrot.slane %v5075, 4
        %v5078 = vor.u32 %v5077, %v5073
        %v5079 = vrot.slane %v5078, 4
        %v5081 = vshll.u32 %v4784, 16
        %v5083 = vrot.slane %v5081, 5
        %v5084 = vsel %vm1259, %v5079, %v5083
        %v5086 = vshrl.u32 %v4785, 16
        %v5088 = vrot.slane %v5086, 4
        %v5089 = vshll.u32 %v4785, 16
        %v5091 = vrot.slane %v5089, 5
        %v5092 = vor.u32 %v5088, %v5091
        %v5093 = vrot.slane %v5092, 4
        %v5095 = vshll.u32 %v4786, 16
        %v5097 = vrot.slane %v5095, 5
        %v5098 = vsel %vm1259, %v5093, %v5097
        %v5099 = vshrl.u32 %v4786, 16
        %v5101 = vrot.slane %v5099, 4
        %v5102 = vor.u32 %v5101, %v5097
        %v5103 = vrot.slane %v5102, 4
        %v5105 = vshll.u32 %v4787, 16
        %v5107 = vrot.slane %v5105, 5
        %v5108 = vsel %vm1259, %v5103, %v5107
        %v5110 = vshrl.u32 %v4788, 16
        %v5112 = vrot.slane %v5110, 4
        %v5113 = vshll.u32 %v4788, 16
        %v5115 = vrot.slane %v5113, 5
        %v5116 = vor.u32 %v5112, %v5115
        %v5117 = vrot.slane %v5116, 4
        %v5119 = vshll.u32 %v4789, 16
        %v5121 = vrot.slane %v5119, 5
        %v5122 = vsel %vm1259, %v5117, %v5121
        %v5123 = vshrl.u32 %v4789, 16
        %v5125 = vrot.slane %v5123, 4
        %v5126 = vor.u32 %v5125, %v5121
        %v5127 = vrot.slane %v5126, 4
        %v5129 = vshll.u32 %v4790, 16
        %v5131 = vrot.slane %v5129, 5
        %v5132 = vsel %vm1259, %v5127, %v5131
        %v5134 = vshrl.u32 %v4791, 16
        %v5136 = vrot.slane %v5134, 4
        %v5137 = vshll.u32 %v4791, 16
        %v5139 = vrot.slane %v5137, 5
        %v5140 = vor.u32 %v5136, %v5139
        %v5141 = vrot.slane %v5140, 4
        %v5143 = vshll.u32 %v4792, 16
        %v5145 = vrot.slane %v5143, 5
        %v5146 = vsel %vm1259, %v5141, %v5145
        %v5147 = vshrl.u32 %v4792, 16
        %v5149 = vrot.slane %v5147, 4
        %v5150 = vor.u32 %v5149, %v5145
        %v5151 = vrot.slane %v5150, 4
        %v5153 = vshll.u32 %v4793, 16
        %v5155 = vrot.slane %v5153, 5
        %v5156 = vsel %vm1259, %v5151, %v5155
        %v5158 = vshrl.u32 %v4794, 16
        %v5160 = vrot.slane %v5158, 4
        %v5161 = vshll.u32 %v4794, 16
        %v5163 = vrot.slane %v5161, 5
        %v5164 = vor.u32 %v5160, %v5163
        %v5165 = vrot.slane %v5164, 4
        %v5167 = vshll.u32 %v4795, 16
        %v5169 = vrot.slane %v5167, 5
        %v5170 = vsel %vm1259, %v5165, %v5169
        %v5171 = vshrl.u32 %v4795, 16
        %v5173 = vrot.slane %v5171, 4
        %v5174 = vor.u32 %v5173, %v5169
        %v5175 = vrot.slane %v5174, 4
        %v5177 = vshll.u32 %v4796, 16
        %v5179 = vrot.slane %v5177, 5
        %v5180 = vsel %vm1259, %v5175, %v5179
        %s5181 = scalar_lea.vmem [#allocation9], 448
        %v5182 = vld [vmem:[%s5181] sm:$0xf]
        %v5183 = vld [vmem:[%s5181 + $0x4] sm:$0xf]
        %v5184 = vld [vmem:[%s5181 + $0x8] sm:$0xf]
        %v5185 = vld [vmem:[%s5181 + $0xc] sm:$0xf]
        %v5186 = vld [vmem:[%s5181 + $0x10] sm:$0xf]
        %v5187 = vld [vmem:[%s5181 + $0x14] sm:$0xf]
        %v5188 = vld [vmem:[%s5181 + $0x18] sm:$0xf]
        %v5189 = vld [vmem:[%s5181 + $0x1c] sm:$0xf]
        %v5190 = vld [vmem:[%s5181 + $0x20] sm:$0xf]
        %v5191 = vld [vmem:[%s5181 + $0x24] sm:$0xf]
        %v5192 = vld [vmem:[%s5181 + $0x28] sm:$0xf]
        %v5193 = vld [vmem:[%s5181 + $0x2c] sm:$0xf]
        %v5194 = vld [vmem:[%s5181 + $0x30] sm:$0xf]
        %v5195 = vld [vmem:[%s5181 + $0x34] sm:$0xf]
        %v5196 = vld [vmem:[%s5181 + $0x38] sm:$0xf]
        %v5197 = vld [vmem:[%s5181 + $0x3c] sm:$0xf]
        %v5198 = vunpack.c.l.b16 %v4810
        %v5199 = vunpack.c.l.b16 %v4820
        %v5200 = vunpack.c.l.b16 %v4834
        %v5201 = vunpack.c.l.b16 %v4844
        %v5202 = vunpack.c.l.b16 %v4858
        %v5203 = vunpack.c.l.b16 %v4868
        %v5204 = vunpack.c.l.b16 %v4882
        %v5205 = vunpack.c.l.b16 %v4892
        %v5206 = vunpack.c.l.b16 %v4906
        %v5207 = vunpack.c.l.b16 %v4916
        %v5208 = vunpack.c.l.b16 %v4930
        %v5209 = vunpack.c.l.b16 %v4940
        %v5210 = vunpack.c.l.b16 %v4954
        %v5211 = vunpack.c.l.b16 %v4964
        %v5212 = vunpack.c.l.b16 %v4978
        %v5213 = vunpack.c.l.b16 %v4988
        %v5214 = vunpack.c.l.b16 %v5002
        %v5215 = vunpack.c.l.b16 %v5012
        %v5216 = vunpack.c.l.b16 %v5026
        %v5217 = vunpack.c.l.b16 %v5036
        %v5218 = vunpack.c.l.b16 %v5050
        %v5219 = vunpack.c.l.b16 %v5060
        %v5220 = vunpack.c.l.b16 %v5074
        %v5221 = vunpack.c.l.b16 %v5084
        %v5222 = vunpack.c.l.b16 %v5098
        %v5223 = vunpack.c.l.b16 %v5108
        %v5224 = vunpack.c.l.b16 %v5122
        %v5225 = vunpack.c.l.b16 %v5132
        %v5226 = vunpack.c.l.b16 %v5146
        %v5227 = vunpack.c.l.b16 %v5156
        %v5228 = vunpack.c.l.b16 %v5170
        %v5229 = vunpack.c.l.b16 %v5180
        %v5230 = vpack.c.b16 %v5199, %v5198
        %v5231 = vpack.c.b16 %v5201, %v5200
        %v5232 = vpack.c.b16 %v5203, %v5202
        %v5233 = vpack.c.b16 %v5205, %v5204
        %v5234 = vpack.c.b16 %v5207, %v5206
        %v5235 = vpack.c.b16 %v5209, %v5208
        %v5236 = vpack.c.b16 %v5211, %v5210
        %v5237 = vpack.c.b16 %v5213, %v5212
        %v5238 = vpack.c.b16 %v5215, %v5214
        %v5239 = vpack.c.b16 %v5217, %v5216
        %v5240 = vpack.c.b16 %v5219, %v5218
        %v5241 = vpack.c.b16 %v5221, %v5220
        %v5242 = vpack.c.b16 %v5223, %v5222
        %v5243 = vpack.c.b16 %v5225, %v5224
        %v5244 = vpack.c.b16 %v5227, %v5226
        %v5245 = vpack.c.b16 %v5229, %v5228
        %v5278 = vunpack.c.l.b16 %v5182
        %v5279 = vunpack.c.l.b16 %v5183
        %v5280 = vunpack.c.l.b16 %v5184
        %v5281 = vunpack.c.l.b16 %v5185
        %v5282 = vunpack.c.l.b16 %v5186
        %v5283 = vunpack.c.l.b16 %v5187
        %v5284 = vunpack.c.l.b16 %v5188
        %v5285 = vunpack.c.l.b16 %v5189
        %v5286 = vunpack.c.l.b16 %v5190
        %v5287 = vunpack.c.l.b16 %v5191
        %v5288 = vunpack.c.l.b16 %v5192
        %v5289 = vunpack.c.l.b16 %v5193
        %v5290 = vunpack.c.l.b16 %v5194
        %v5291 = vunpack.c.l.b16 %v5195
        %v5292 = vunpack.c.l.b16 %v5196
        %v5293 = vunpack.c.l.b16 %v5197
        %v5294 = vpack.c.b16 %v5279, %v5278
        %v5295 = vpack.c.b16 %v5281, %v5280
        %v5296 = vpack.c.b16 %v5283, %v5282
        %v5297 = vpack.c.b16 %v5285, %v5284
        %v5298 = vpack.c.b16 %v5287, %v5286
        %v5299 = vpack.c.b16 %v5289, %v5288
        %v5300 = vpack.c.b16 %v5291, %v5290
        %v5301 = vpack.c.b16 %v5293, %v5292
        %5310 = vmatprep.subr.bf16.mxu0 0
        %5311 = vmatpush1.bf16.msra.mxu0 %v5294
        %5312 = vmatprep.subr.bf16.mxu0 0
        %5313 = vmatpush1.bf16.msra.mxu0 %v5295
        %5314 = vmatprep.subr.bf16.mxu0 0
        %5315 = vmatpush1.bf16.msra.mxu0 %v5296
        %5316 = vmatprep.subr.bf16.mxu0 0
        %5317 = vmatpush1.bf16.msra.mxu0 %v5297
        %5318 = vmatprep.subr.bf16.mxu0 0
        %5319 = vmatpush1.bf16.msra.mxu0 %v5298
        %5320 = vmatprep.subr.bf16.mxu0 0
        %5321 = vmatpush1.bf16.msra.mxu0 %v5299
        %5322 = vmatprep.subr.bf16.mxu0 0
        %5323 = vmatpush1.bf16.msra.mxu0 %v5300
        %5324 = vmatprep.subr.bf16.mxu0 0
        %5325 = vmatpush1.bf16.msra.mxu0 %v5301
        %5326 = vmatprep.subr.bf16.mxu0 0
        %5327 = vmatpush1.bf16.msra.mxu0 0
        %5328 = vmatprep.subr.bf16.mxu0 0
        %5329 = vmatpush1.bf16.msra.mxu0 0
        %5330 = vmatprep.subr.bf16.mxu0 0
        %5331 = vmatpush1.bf16.msra.mxu0 0
        %5332 = vmatprep.subr.bf16.mxu0 0
        %5333 = vmatpush1.bf16.msra.mxu0 0
        %5334 = vmatprep.subr.bf16.mxu0 0
        %5335 = vmatpush1.bf16.msra.mxu0 0
        %5336 = vmatprep.subr.bf16.mxu0 0
        %5337 = vmatpush1.bf16.msra.mxu0 0
        %5338 = vmatprep.subr.bf16.mxu0 0
        %5339 = vmatpush1.bf16.msra.mxu0 0
        %5340 = vmatprep.subr.bf16.mxu0 0
        %5341 = vmatpush1.bf16.msra.mxu0 0
        %5342 = vmatprep.mubr.bf16.mxu0 0
        %5343 = vmatmul.mubr.bf16.gmra.mrb[0].mxu0 %v5230
        %v5344 = vpop.f32.mrb[0].mxu0
        %v5345 = vadd.f32 0.0, %v5344
        %v5346 = vpop.f32.mrb[0].mxu0
        %v5347 = vpop.f32.mrb[0].mxu0
        %v5348 = vadd.f32 0.0, %v5347
        %v5349 = vpop.f32.mrb[0].mxu0
        %5350 = vmatprep.mubr.bf16.mxu0 0
        %5351 = vmatmul.mubr.bf16.gmra.mrb[0].mxu0 %v5231
        %v5352 = vpop.f32.mrb[0].mxu0
        %v5353 = vadd.f32 0.0, %v5352
        %v5354 = vpop.f32.mrb[0].mxu0
        %v5355 = vpop.f32.mrb[0].mxu0
        %v5356 = vadd.f32 0.0, %v5355
        %v5357 = vpop.f32.mrb[0].mxu0
        %5358 = vmatprep.mubr.bf16.mxu0 0
        %5359 = vmatmul.mubr.bf16.gmra.mrb[0].mxu0 %v5232
        %v5360 = vpop.f32.mrb[0].mxu0
        %v5361 = vadd.f32 0.0, %v5360
        %v5362 = vpop.f32.mrb[0].mxu0
        %v5363 = vpop.f32.mrb[0].mxu0
        %v5364 = vadd.f32 0.0, %v5363
        %v5365 = vpop.f32.mrb[0].mxu0
        %5366 = vmatprep.mubr.bf16.mxu0 0
        %5367 = vmatmul.mubr.bf16.gmra.mrb[0].mxu0 %v5233
        %v5368 = vpop.f32.mrb[0].mxu0
        %v5369 = vadd.f32 0.0, %v5368
        %v5370 = vpop.f32.mrb[0].mxu0
        %v5371 = vpop.f32.mrb[0].mxu0
        %v5372 = vadd.f32 0.0, %v5371
        %v5373 = vpop.f32.mrb[0].mxu0
        %5374 = vmatprep.mubr.bf16.mxu0 0
        %5375 = vmatmul.mubr.bf16.gmra.mrb[0].mxu0 %v5234
        %v5376 = vpop.f32.mrb[0].mxu0
        %v5377 = vadd.f32 0.0, %v5376
        %v5378 = vpop.f32.mrb[0].mxu0
        %v5379 = vpop.f32.mrb[0].mxu0
        %v5380 = vadd.f32 0.0, %v5379
        %v5381 = vpop.f32.mrb[0].mxu0
        %5382 = vmatprep.mubr.bf16.mxu0 0
        %5383 = vmatmul.mubr.bf16.gmra.mrb[0].mxu0 %v5235
        %v5384 = vpop.f32.mrb[0].mxu0
        %v5385 = vadd.f32 0.0, %v5384
        %v5386 = vpop.f32.mrb[0].mxu0
        %v5387 = vpop.f32.mrb[0].mxu0
        %v5388 = vadd.f32 0.0, %v5387
        %v5389 = vpop.f32.mrb[0].mxu0
        %5390 = vmatprep.mubr.bf16.mxu0 0
        %5391 = vmatmul.mubr.bf16.gmra.mrb[0].mxu0 %v5236
        %v5392 = vpop.f32.mrb[0].mxu0
        %v5393 = vadd.f32 0.0, %v5392
        %v5394 = vpop.f32.mrb[0].mxu0
        %v5395 = vpop.f32.mrb[0].mxu0
        %v5396 = vadd.f32 0.0, %v5395
        %v5397 = vpop.f32.mrb[0].mxu0
        %5398 = vmatprep.mubr.bf16.mxu0 0
        %5399 = vmatmul.mubr.bf16.gmra.mrb[0].mxu0 %v5237
        %v5400 = vpop.f32.mrb[0].mxu0
        %v5401 = vadd.f32 0.0, %v5400
        %v5402 = vpop.f32.mrb[0].mxu0
        %v5403 = vpop.f32.mrb[0].mxu0
        %v5404 = vadd.f32 0.0, %v5403
        %v5405 = vpop.f32.mrb[0].mxu0
        %5406 = vmatprep.mubr.bf16.mxu0 0
        %5407 = vmatmul.mubr.bf16.gmra.mrb[0].mxu0 %v5238
        %v5408 = vpop.f32.mrb[0].mxu0
        %v5409 = vadd.f32 0.0, %v5408
        %v5410 = vpop.f32.mrb[0].mxu0
        %v5411 = vpop.f32.mrb[0].mxu0
        %v5412 = vadd.f32 0.0, %v5411
        %v5413 = vpop.f32.mrb[0].mxu0
        %5414 = vmatprep.mubr.bf16.mxu0 0
        %5415 = vmatmul.mubr.bf16.gmra.mrb[0].mxu0 %v5239
        %v5416 = vpop.f32.mrb[0].mxu0
        %v5417 = vadd.f32 0.0, %v5416
        %v5418 = vpop.f32.mrb[0].mxu0
        %v5419 = vpop.f32.mrb[0].mxu0
        %v5420 = vadd.f32 0.0, %v5419
        %v5421 = vpop.f32.mrb[0].mxu0
        %5422 = vmatprep.mubr.bf16.mxu0 0
        %5423 = vmatmul.mubr.bf16.gmra.mrb[0].mxu0 %v5240
        %v5424 = vpop.f32.mrb[0].mxu0
        %v5425 = vadd.f32 0.0, %v5424
        %v5426 = vpop.f32.mrb[0].mxu0
        %v5427 = vpop.f32.mrb[0].mxu0
        %v5428 = vadd.f32 0.0, %v5427
        %v5429 = vpop.f32.mrb[0].mxu0
        %5430 = vmatprep.mubr.bf16.mxu0 0
        %5431 = vmatmul.mubr.bf16.gmra.mrb[0].mxu0 %v5241
        %v5432 = vpop.f32.mrb[0].mxu0
        %v5433 = vadd.f32 0.0, %v5432
        %v5434 = vpop.f32.mrb[0].mxu0
        %v5435 = vpop.f32.mrb[0].mxu0
        %v5436 = vadd.f32 0.0, %v5435
        %v5437 = vpop.f32.mrb[0].mxu0
        %5438 = vmatprep.mubr.bf16.mxu0 0
        %5439 = vmatmul.mubr.bf16.gmra.mrb[0].mxu0 %v5242
        %v5440 = vpop.f32.mrb[0].mxu0
        %v5441 = vadd.f32 0.0, %v5440
        %v5442 = vpop.f32.mrb[0].mxu0
        %v5443 = vpop.f32.mrb[0].mxu0
        %v5444 = vadd.f32 0.0, %v5443
        %v5445 = vpop.f32.mrb[0].mxu0
        %5446 = vmatprep.mubr.bf16.mxu0 0
        %5447 = vmatmul.mubr.bf16.gmra.mrb[0].mxu0 %v5243
        %v5448 = vpop.f32.mrb[0].mxu0
        %v5449 = vadd.f32 0.0, %v5448
        %v5450 = vpop.f32.mrb[0].mxu0
        %v5451 = vpop.f32.mrb[0].mxu0
        %v5452 = vadd.f32 0.0, %v5451
        %v5453 = vpop.f32.mrb[0].mxu0
        %5454 = vmatprep.mubr.bf16.mxu0 0
        %5455 = vmatmul.mubr.bf16.gmra.mrb[0].mxu0 %v5244
        %v5456 = vpop.f32.mrb[0].mxu0
        %v5457 = vadd.f32 0.0, %v5456
        %v5458 = vpop.f32.mrb[0].mxu0
        %v5459 = vpop.f32.mrb[0].mxu0
        %v5460 = vadd.f32 0.0, %v5459
        %v5461 = vpop.f32.mrb[0].mxu0
        %5462 = vmatprep.mubr.bf16.mxu0 0
        %5463 = vmatmul.mubr.bf16.gmra.mrb[0].mxu0 %v5245
        %v5464 = vpop.f32.mrb[0].mxu0
        %v5465 = vadd.f32 0.0, %v5464
        %v5466 = vpop.f32.mrb[0].mxu0
        %v5467 = vpop.f32.mrb[0].mxu0
        %v5468 = vadd.f32 0.0, %v5467
        %v5469 = vpop.f32.mrb[0].mxu0
        %5470 = vdwg.mxu0
        %v5471 = vadd.f32 %v4717, %v5345
        %v5472 = vadd.f32 %v4718, %v5348
        %v5473 = vadd.f32 %v4719, %v5353
        %v5474 = vadd.f32 %v4720, %v5356
        %v5475 = vadd.f32 %v4721, %v5361
        %v5476 = vadd.f32 %v4722, %v5364
        %v5477 = vadd.f32 %v4723, %v5369
        %v5478 = vadd.f32 %v4724, %v5372
        %v5479 = vadd.f32 %v4725, %v5377
        %v5480 = vadd.f32 %v4726, %v5380
        %v5481 = vadd.f32 %v4727, %v5385
        %v5482 = vadd.f32 %v4728, %v5388
        %v5483 = vadd.f32 %v4729, %v5393
        %v5484 = vadd.f32 %v4730, %v5396
        %v5485 = vadd.f32 %v4731, %v5401
        %v5486 = vadd.f32 %v4732, %v5404
        %v5487 = vadd.f32 %v4733, %v5409
        %v5488 = vadd.f32 %v4734, %v5412
        %v5489 = vadd.f32 %v4735, %v5417
        %v5490 = vadd.f32 %v4736, %v5420
        %v5491 = vadd.f32 %v4737, %v5425
        %v5492 = vadd.f32 %v4738, %v5428
        %v5493 = vadd.f32 %v4739, %v5433
        %v5494 = vadd.f32 %v4740, %v5436
        %v5495 = vadd.f32 %v4741, %v5441
        %v5496 = vadd.f32 %v4742, %v5444
        %v5497 = vadd.f32 %v4743, %v5449
        %v5498 = vadd.f32 %v4744, %v5452
        %v5499 = vadd.f32 %v4745, %v5457
        %v5500 = vadd.f32 %v4746, %v5460
        %v5501 = vadd.f32 %v4747, %v5465
        %v5502 = vadd.f32 %v4748, %v5468
        %v5503 = vld [vmem:[%s4362] sm:$0xe]
        %v5504 = vld [vmem:[%s4362 + $0xc] sm:$0xe]
        %v5505 = vld [vmem:[%s4362 + $0x18] sm:$0xe]
        %v5506 = vld [vmem:[%s4362 + $0x24] sm:$0xe]
        %v5507 = vld [vmem:[%s4362 + $0x30] sm:$0xe]
        %v5508 = vld [vmem:[%s4362 + $0x3c] sm:$0xe]
        %v5509 = vld [vmem:[%s4362 + $0x48] sm:$0xe]
        %v5510 = vld [vmem:[%s4362 + $0x54] sm:$0xe]
        %v5511 = vld [vmem:[%s4362 + $0x60] sm:$0xe]
        %v5512 = vld [vmem:[%s4362 + $0x6c] sm:$0xe]
        %v5513 = vld [vmem:[%s4362 + $0x78] sm:$0xe]
        %v5514 = vld [vmem:[%s4362 + $0x84] sm:$0xe]
        %v5515 = vld [vmem:[%s4362 + $0x90] sm:$0xe]
        %v5516 = vld [vmem:[%s4362 + $0x9c] sm:$0xe]
        %v5517 = vld [vmem:[%s4362 + $0xa8] sm:$0xe]
        %v5518 = vld [vmem:[%s4362 + $0xb4] sm:$0xe]
        %v5567 = vrot.slane %v5503, 5
        %v5568 = vrot.slane %v5567, 4
        %v5569 = vrot.slane %v4750, 5
        %v5570 = vsel %vm2289, %v5568, %v5569
        %v5571 = vrot.slane %v5569, 4
        %v5572 = vrot.slane %v4751, 5
        %v5573 = vsel %vm2289, %v5571, %v5572
        %v5574 = vrot.slane %v5504, 5
        %v5575 = vrot.slane %v5574, 4
        %v5576 = vrot.slane %v4753, 5
        %v5577 = vsel %vm2289, %v5575, %v5576
        %v5578 = vrot.slane %v5576, 4
        %v5579 = vrot.slane %v4754, 5
        %v5580 = vsel %vm2289, %v5578, %v5579
        %v5581 = vrot.slane %v5505, 5
        %v5582 = vrot.slane %v5581, 4
        %v5583 = vrot.slane %v4756, 5
        %v5584 = vsel %vm2289, %v5582, %v5583
        %v5585 = vrot.slane %v5583, 4
        %v5586 = vrot.slane %v4757, 5
        %v5587 = vsel %vm2289, %v5585, %v5586
        %v5588 = vrot.slane %v5506, 5
        %v5589 = vrot.slane %v5588, 4
        %v5590 = vrot.slane %v4759, 5
        %v5591 = vsel %vm2289, %v5589, %v5590
        %v5592 = vrot.slane %v5590, 4
        %v5593 = vrot.slane %v4760, 5
        %v5594 = vsel %vm2289, %v5592, %v5593
        %v5595 = vrot.slane %v5507, 5
        %v5596 = vrot.slane %v5595, 4
        %v5597 = vrot.slane %v4762, 5
        %v5598 = vsel %vm2289, %v5596, %v5597
        %v5599 = vrot.slane %v5597, 4
        %v5600 = vrot.slane %v4763, 5
        %v5601 = vsel %vm2289, %v5599, %v5600
        %v5602 = vrot.slane %v5508, 5
        %v5603 = vrot.slane %v5602, 4
        %v5604 = vrot.slane %v4765, 5
        %v5605 = vsel %vm2289, %v5603, %v5604
        %v5606 = vrot.slane %v5604, 4
        %v5607 = vrot.slane %v4766, 5
        %v5608 = vsel %vm2289, %v5606, %v5607
        %v5609 = vrot.slane %v5509, 5
        %v5610 = vrot.slane %v5609, 4
        %v5611 = vrot.slane %v4768, 5
        %v5612 = vsel %vm2289, %v5610, %v5611
        %v5613 = vrot.slane %v5611, 4
        %v5614 = vrot.slane %v4769, 5
        %v5615 = vsel %vm2289, %v5613, %v5614
        %v5616 = vrot.slane %v5510, 5
        %v5617 = vrot.slane %v5616, 4
        %v5618 = vrot.slane %v4771, 5
        %v5619 = vsel %vm2289, %v5617, %v5618
        %v5620 = vrot.slane %v5618, 4
        %v5621 = vrot.slane %v4772, 5
        %v5622 = vsel %vm2289, %v5620, %v5621
        %v5623 = vrot.slane %v5511, 5
        %v5624 = vrot.slane %v5623, 4
        %v5625 = vrot.slane %v4774, 5
        %v5626 = vsel %vm2289, %v5624, %v5625
        %v5627 = vrot.slane %v5625, 4
        %v5628 = vrot.slane %v4775, 5
        %v5629 = vsel %vm2289, %v5627, %v5628
        %v5630 = vrot.slane %v5512, 5
        %v5631 = vrot.slane %v5630, 4
        %v5632 = vrot.slane %v4777, 5
        %v5633 = vsel %vm2289, %v5631, %v5632
        %v5634 = vrot.slane %v5632, 4
        %v5635 = vrot.slane %v4778, 5
        %v5636 = vsel %vm2289, %v5634, %v5635
        %v5637 = vrot.slane %v5513, 5
        %v5638 = vrot.slane %v5637, 4
        %v5639 = vrot.slane %v4780, 5
        %v5640 = vsel %vm2289, %v5638, %v5639
        %v5641 = vrot.slane %v5639, 4
        %v5642 = vrot.slane %v4781, 5
        %v5643 = vsel %vm2289, %v5641, %v5642
        %v5644 = vrot.slane %v5514, 5
        %v5645 = vrot.slane %v5644, 4
        %v5646 = vrot.slane %v4783, 5
        %v5647 = vsel %vm2289, %v5645, %v5646
        %v5648 = vrot.slane %v5646, 4
        %v5649 = vrot.slane %v4784, 5
        %v5650 = vsel %vm2289, %v5648, %v5649
        %v5651 = vrot.slane %v5515, 5
        %v5652 = vrot.slane %v5651, 4
        %v5653 = vrot.slane %v4786, 5
        %v5654 = vsel %vm2289, %v5652, %v5653
        %v5655 = vrot.slane %v5653, 4
        %v5656 = vrot.slane %v4787, 5
        %v5657 = vsel %vm2289, %v5655, %v5656
        %v5658 = vrot.slane %v5516, 5
        %v5659 = vrot.slane %v5658, 4
        %v5660 = vrot.slane %v4789, 5
        %v5661 = vsel %vm2289, %v5659, %v5660
        %v5662 = vrot.slane %v5660, 4
        %v5663 = vrot.slane %v4790, 5
        %v5664 = vsel %vm2289, %v5662, %v5663
        %v5665 = vrot.slane %v5517, 5
        %v5666 = vrot.slane %v5665, 4
        %v5667 = vrot.slane %v4792, 5
        %v5668 = vsel %vm2289, %v5666, %v5667
        %v5669 = vrot.slane %v5667, 4
        %v5670 = vrot.slane %v4793, 5
        %v5671 = vsel %vm2289, %v5669, %v5670
        %v5672 = vrot.slane %v5518, 5
        %v5673 = vrot.slane %v5672, 4
        %v5674 = vrot.slane %v4795, 5
        %v5675 = vsel %vm2289, %v5673, %v5674
        %v5676 = vrot.slane %v5674, 4
        %v5677 = vrot.slane %v4796, 5
        %v5678 = vsel %vm2289, %v5676, %v5677
        %s5679 = scalar_lea.vmem [#allocation9], 512
        %v5680 = vld [vmem:[%s5679] sm:$0xf]
        %v5681 = vld [vmem:[%s5679 + $0x4] sm:$0xf]
        %v5682 = vld [vmem:[%s5679 + $0x8] sm:$0xf]
        %v5683 = vld [vmem:[%s5679 + $0xc] sm:$0xf]
        %v5684 = vld [vmem:[%s5679 + $0x10] sm:$0xf]
        %v5685 = vld [vmem:[%s5679 + $0x14] sm:$0xf]
        %v5686 = vld [vmem:[%s5679 + $0x18] sm:$0xf]
        %v5687 = vld [vmem:[%s5679 + $0x1c] sm:$0xf]
        %v5688 = vld [vmem:[%s5679 + $0x20] sm:$0xf]
        %v5689 = vld [vmem:[%s5679 + $0x24] sm:$0xf]
        %v5690 = vld [vmem:[%s5679 + $0x28] sm:$0xf]
        %v5691 = vld [vmem:[%s5679 + $0x2c] sm:$0xf]
        %v5692 = vld [vmem:[%s5679 + $0x30] sm:$0xf]
        %v5693 = vld [vmem:[%s5679 + $0x34] sm:$0xf]
        %v5694 = vld [vmem:[%s5679 + $0x38] sm:$0xf]
        %v5695 = vld [vmem:[%s5679 + $0x3c] sm:$0xf]
        %v5696 = vunpack.c.l.b16 %v5570
        %v5697 = vunpack.c.l.b16 %v5573
        %v5698 = vunpack.c.l.b16 %v5577
        %v5699 = vunpack.c.l.b16 %v5580
        %v5700 = vunpack.c.l.b16 %v5584
        %v5701 = vunpack.c.l.b16 %v5587
        %v5702 = vunpack.c.l.b16 %v5591
        %v5703 = vunpack.c.l.b16 %v5594
        %v5704 = vunpack.c.l.b16 %v5598
        %v5705 = vunpack.c.l.b16 %v5601
        %v5706 = vunpack.c.l.b16 %v5605
        %v5707 = vunpack.c.l.b16 %v5608
        %v5708 = vunpack.c.l.b16 %v5612
        %v5709 = vunpack.c.l.b16 %v5615
        %v5710 = vunpack.c.l.b16 %v5619
        %v5711 = vunpack.c.l.b16 %v5622
        %v5712 = vunpack.c.l.b16 %v5626
        %v5713 = vunpack.c.l.b16 %v5629
        %v5714 = vunpack.c.l.b16 %v5633
        %v5715 = vunpack.c.l.b16 %v5636
        %v5716 = vunpack.c.l.b16 %v5640
        %v5717 = vunpack.c.l.b16 %v5643
        %v5718 = vunpack.c.l.b16 %v5647
        %v5719 = vunpack.c.l.b16 %v5650
        %v5720 = vunpack.c.l.b16 %v5654
        %v5721 = vunpack.c.l.b16 %v5657
        %v5722 = vunpack.c.l.b16 %v5661
        %v5723 = vunpack.c.l.b16 %v5664
        %v5724 = vunpack.c.l.b16 %v5668
        %v5725 = vunpack.c.l.b16 %v5671
        %v5726 = vunpack.c.l.b16 %v5675
        %v5727 = vunpack.c.l.b16 %v5678
        %v5728 = vpack.c.b16 %v5697, %v5696
        %v5729 = vpack.c.b16 %v5699, %v5698
        %v5730 = vpack.c.b16 %v5701, %v5700
        %v5731 = vpack.c.b16 %v5703, %v5702
        %v5732 = vpack.c.b16 %v5705, %v5704
        %v5733 = vpack.c.b16 %v5707, %v5706
        %v5734 = vpack.c.b16 %v5709, %v5708
        %v5735 = vpack.c.b16 %v5711, %v5710
        %v5736 = vpack.c.b16 %v5713, %v5712
        %v5737 = vpack.c.b16 %v5715, %v5714
        %v5738 = vpack.c.b16 %v5717, %v5716
        %v5739 = vpack.c.b16 %v5719, %v5718
        %v5740 = vpack.c.b16 %v5721, %v5720
        %v5741 = vpack.c.b16 %v5723, %v5722
        %v5742 = vpack.c.b16 %v5725, %v5724
        %v5743 = vpack.c.b16 %v5727, %v5726
        %v5776 = vunpack.c.l.b16 %v5680
        %v5777 = vunpack.c.l.b16 %v5681
        %v5778 = vunpack.c.l.b16 %v5682
        %v5779 = vunpack.c.l.b16 %v5683
        %v5780 = vunpack.c.l.b16 %v5684
        %v5781 = vunpack.c.l.b16 %v5685
        %v5782 = vunpack.c.l.b16 %v5686
        %v5783 = vunpack.c.l.b16 %v5687
        %v5784 = vunpack.c.l.b16 %v5688
        %v5785 = vunpack.c.l.b16 %v5689
        %v5786 = vunpack.c.l.b16 %v5690
        %v5787 = vunpack.c.l.b16 %v5691
        %v5788 = vunpack.c.l.b16 %v5692
        %v5789 = vunpack.c.l.b16 %v5693
        %v5790 = vunpack.c.l.b16 %v5694
        %v5791 = vunpack.c.l.b16 %v5695
        %v5792 = vpack.c.b16 %v5777, %v5776
        %v5793 = vpack.c.b16 %v5779, %v5778
        %v5794 = vpack.c.b16 %v5781, %v5780
        %v5795 = vpack.c.b16 %v5783, %v5782
        %v5796 = vpack.c.b16 %v5785, %v5784
        %v5797 = vpack.c.b16 %v5787, %v5786
        %v5798 = vpack.c.b16 %v5789, %v5788
        %v5799 = vpack.c.b16 %v5791, %v5790
        %5808 = vmatprep.subr.bf16.mxu0 0
        %5809 = vmatpush1.bf16.msra.mxu0 %v5792
        %5810 = vmatprep.subr.bf16.mxu0 0
        %5811 = vmatpush1.bf16.msra.mxu0 %v5793
        %5812 = vmatprep.subr.bf16.mxu0 0
        %5813 = vmatpush1.bf16.msra.mxu0 %v5794
        %5814 = vmatprep.subr.bf16.mxu0 0
        %5815 = vmatpush1.bf16.msra.mxu0 %v5795
        %5816 = vmatprep.subr.bf16.mxu0 0
        %5817 = vmatpush1.bf16.msra.mxu0 %v5796
        %5818 = vmatprep.subr.bf16.mxu0 0
        %5819 = vmatpush1.bf16.msra.mxu0 %v5797
        %5820 = vmatprep.subr.bf16.mxu0 0
        %5821 = vmatpush1.bf16.msra.mxu0 %v5798
        %5822 = vmatprep.subr.bf16.mxu0 0
        %5823 = vmatpush1.bf16.msra.mxu0 %v5799
        %5824 = vmatprep.subr.bf16.mxu0 0
        %5825 = vmatpush1.bf16.msra.mxu0 0
        %5826 = vmatprep.subr.bf16.mxu0 0
        %5827 = vmatpush1.bf16.msra.mxu0 0
        %5828 = vmatprep.subr.bf16.mxu0 0
        %5829 = vmatpush1.bf16.msra.mxu0 0
        %5830 = vmatprep.subr.bf16.mxu0 0
        %5831 = vmatpush1.bf16.msra.mxu0 0
        %5832 = vmatprep.subr.bf16.mxu0 0
        %5833 = vmatpush1.bf16.msra.mxu0 0
        %5834 = vmatprep.subr.bf16.mxu0 0
        %5835 = vmatpush1.bf16.msra.mxu0 0
        %5836 = vmatprep.subr.bf16.mxu0 0
        %5837 = vmatpush1.bf16.msra.mxu0 0
        %5838 = vmatprep.subr.bf16.mxu0 0
        %5839 = vmatpush1.bf16.msra.mxu0 0
        %5840 = vmatprep.mubr.bf16.mxu0 0
        %5841 = vmatmul.mubr.bf16.gmra.mrb[0].mxu0 %v5728
        %v5842 = vpop.f32.mrb[0].mxu0
        %v5843 = vadd.f32 0.0, %v5842
        %v5844 = vpop.f32.mrb[0].mxu0
        %v5845 = vpop.f32.mrb[0].mxu0
        %v5846 = vadd.f32 0.0, %v5845
        %v5847 = vpop.f32.mrb[0].mxu0
        %5848 = vmatprep.mubr.bf16.mxu0 0
        %5849 = vmatmul.mubr.bf16.gmra.mrb[0].mxu0 %v5729
        %v5850 = vpop.f32.mrb[0].mxu0
        %v5851 = vadd.f32 0.0, %v5850
        %v5852 = vpop.f32.mrb[0].mxu0
        %v5853 = vpop.f32.mrb[0].mxu0
        %v5854 = vadd.f32 0.0, %v5853
        %v5855 = vpop.f32.mrb[0].mxu0
        %5856 = vmatprep.mubr.bf16.mxu0 0
        %5857 = vmatmul.mubr.bf16.gmra.mrb[0].mxu0 %v5730
        %v5858 = vpop.f32.mrb[0].mxu0
        %v5859 = vadd.f32 0.0, %v5858
        %v5860 = vpop.f32.mrb[0].mxu0
        %v5861 = vpop.f32.mrb[0].mxu0
        %v5862 = vadd.f32 0.0, %v5861
        %v5863 = vpop.f32.mrb[0].mxu0
        %5864 = vmatprep.mubr.bf16.mxu0 0
        %5865 = vmatmul.mubr.bf16.gmra.mrb[0].mxu0 %v5731
        %v5866 = vpop.f32.mrb[0].mxu0
        %v5867 = vadd.f32 0.0, %v5866
        %v5868 = vpop.f32.mrb[0].mxu0
        %v5869 = vpop.f32.mrb[0].mxu0
        %v5870 = vadd.f32 0.0, %v5869
        %v5871 = vpop.f32.mrb[0].mxu0
        %5872 = vmatprep.mubr.bf16.mxu0 0
        %5873 = vmatmul.mubr.bf16.gmra.mrb[0].mxu0 %v5732
        %v5874 = vpop.f32.mrb[0].mxu0
        %v5875 = vadd.f32 0.0, %v5874
        %v5876 = vpop.f32.mrb[0].mxu0
        %v5877 = vpop.f32.mrb[0].mxu0
        %v5878 = vadd.f32 0.0, %v5877
        %v5879 = vpop.f32.mrb[0].mxu0
        %5880 = vmatprep.mubr.bf16.mxu0 0
        %5881 = vmatmul.mubr.bf16.gmra.mrb[0].mxu0 %v5733
        %v5882 = vpop.f32.mrb[0].mxu0
        %v5883 = vadd.f32 0.0, %v5882
        %v5884 = vpop.f32.mrb[0].mxu0
        %v5885 = vpop.f32.mrb[0].mxu0
        %v5886 = vadd.f32 0.0, %v5885
        %v5887 = vpop.f32.mrb[0].mxu0
        %5888 = vmatprep.mubr.bf16.mxu0 0
        %5889 = vmatmul.mubr.bf16.gmra.mrb[0].mxu0 %v5734
        %v5890 = vpop.f32.mrb[0].mxu0
        %v5891 = vadd.f32 0.0, %v5890
        %v5892 = vpop.f32.mrb[0].mxu0
        %v5893 = vpop.f32.mrb[0].mxu0
        %v5894 = vadd.f32 0.0, %v5893
        %v5895 = vpop.f32.mrb[0].mxu0
        %5896 = vmatprep.mubr.bf16.mxu0 0
        %5897 = vmatmul.mubr.bf16.gmra.mrb[0].mxu0 %v5735
        %v5898 = vpop.f32.mrb[0].mxu0
        %v5899 = vadd.f32 0.0, %v5898
        %v5900 = vpop.f32.mrb[0].mxu0
        %v5901 = vpop.f32.mrb[0].mxu0
        %v5902 = vadd.f32 0.0, %v5901
        %v5903 = vpop.f32.mrb[0].mxu0
        %5904 = vmatprep.mubr.bf16.mxu0 0
        %5905 = vmatmul.mubr.bf16.gmra.mrb[0].mxu0 %v5736
        %v5906 = vpop.f32.mrb[0].mxu0
        %v5907 = vadd.f32 0.0, %v5906
        %v5908 = vpop.f32.mrb[0].mxu0
        %v5909 = vpop.f32.mrb[0].mxu0
        %v5910 = vadd.f32 0.0, %v5909
        %v5911 = vpop.f32.mrb[0].mxu0
        %5912 = vmatprep.mubr.bf16.mxu0 0
        %5913 = vmatmul.mubr.bf16.gmra.mrb[0].mxu0 %v5737
        %v5914 = vpop.f32.mrb[0].mxu0
        %v5915 = vadd.f32 0.0, %v5914
        %v5916 = vpop.f32.mrb[0].mxu0
        %v5917 = vpop.f32.mrb[0].mxu0
        %v5918 = vadd.f32 0.0, %v5917
        %v5919 = vpop.f32.mrb[0].mxu0
        %5920 = vmatprep.mubr.bf16.mxu0 0
        %5921 = vmatmul.mubr.bf16.gmra.mrb[0].mxu0 %v5738
        %v5922 = vpop.f32.mrb[0].mxu0
        %v5923 = vadd.f32 0.0, %v5922
        %v5924 = vpop.f32.mrb[0].mxu0
        %v5925 = vpop.f32.mrb[0].mxu0
        %v5926 = vadd.f32 0.0, %v5925
        %v5927 = vpop.f32.mrb[0].mxu0
        %5928 = vmatprep.mubr.bf16.mxu0 0
        %5929 = vmatmul.mubr.bf16.gmra.mrb[0].mxu0 %v5739
        %v5930 = vpop.f32.mrb[0].mxu0
        %v5931 = vadd.f32 0.0, %v5930
        %v5932 = vpop.f32.mrb[0].mxu0
        %v5933 = vpop.f32.mrb[0].mxu0
        %v5934 = vadd.f32 0.0, %v5933
        %v5935 = vpop.f32.mrb[0].mxu0
        %5936 = vmatprep.mubr.bf16.mxu0 0
        %5937 = vmatmul.mubr.bf16.gmra.mrb[0].mxu0 %v5740
        %v5938 = vpop.f32.mrb[0].mxu0
        %v5939 = vadd.f32 0.0, %v5938
        %v5940 = vpop.f32.mrb[0].mxu0
        %v5941 = vpop.f32.mrb[0].mxu0
        %v5942 = vadd.f32 0.0, %v5941
        %v5943 = vpop.f32.mrb[0].mxu0
        %5944 = vmatprep.mubr.bf16.mxu0 0
        %5945 = vmatmul.mubr.bf16.gmra.mrb[0].mxu0 %v5741
        %v5946 = vpop.f32.mrb[0].mxu0
        %v5947 = vadd.f32 0.0, %v5946
        %v5948 = vpop.f32.mrb[0].mxu0
        %v5949 = vpop.f32.mrb[0].mxu0
        %v5950 = vadd.f32 0.0, %v5949
        %v5951 = vpop.f32.mrb[0].mxu0
        %5952 = vmatprep.mubr.bf16.mxu0 0
        %5953 = vmatmul.mubr.bf16.gmra.mrb[0].mxu0 %v5742
        %v5954 = vpop.f32.mrb[0].mxu0
        %v5955 = vadd.f32 0.0, %v5954
        %v5956 = vpop.f32.mrb[0].mxu0
        %v5957 = vpop.f32.mrb[0].mxu0
        %v5958 = vadd.f32 0.0, %v5957
        %v5959 = vpop.f32.mrb[0].mxu0
        %5960 = vmatprep.mubr.bf16.mxu0 0
        %5961 = vmatmul.mubr.bf16.gmra.mrb[0].mxu0 %v5743
        %v5962 = vpop.f32.mrb[0].mxu0
        %v5963 = vadd.f32 0.0, %v5962
        %v5964 = vpop.f32.mrb[0].mxu0
        %v5965 = vpop.f32.mrb[0].mxu0
        %v5966 = vadd.f32 0.0, %v5965
        %v5967 = vpop.f32.mrb[0].mxu0
        %5968 = vdwg.mxu0
        %v5969 = vadd.f32 %v5471, %v5843
        %v5970 = vadd.f32 %v5472, %v5846
        %v5971 = vadd.f32 %v5473, %v5851
        %v5972 = vadd.f32 %v5474, %v5854
        %v5973 = vadd.f32 %v5475, %v5859
        %v5974 = vadd.f32 %v5476, %v5862
        %v5975 = vadd.f32 %v5477, %v5867
        %v5976 = vadd.f32 %v5478, %v5870
        %v5977 = vadd.f32 %v5479, %v5875
        %v5978 = vadd.f32 %v5480, %v5878
        %v5979 = vadd.f32 %v5481, %v5883
        %v5980 = vadd.f32 %v5482, %v5886
        %v5981 = vadd.f32 %v5483, %v5891
        %v5982 = vadd.f32 %v5484, %v5894
        %v5983 = vadd.f32 %v5485, %v5899
        %v5984 = vadd.f32 %v5486, %v5902
        %v5985 = vadd.f32 %v5487, %v5907
        %v5986 = vadd.f32 %v5488, %v5910
        %v5987 = vadd.f32 %v5489, %v5915
        %v5988 = vadd.f32 %v5490, %v5918
        %v5989 = vadd.f32 %v5491, %v5923
        %v5990 = vadd.f32 %v5492, %v5926
        %v5991 = vadd.f32 %v5493, %v5931
        %v5992 = vadd.f32 %v5494, %v5934
        %v5993 = vadd.f32 %v5495, %v5939
        %v5994 = vadd.f32 %v5496, %v5942
        %v5995 = vadd.f32 %v5497, %v5947
        %v5996 = vadd.f32 %v5498, %v5950
        %v5997 = vadd.f32 %v5499, %v5955
        %v5998 = vadd.f32 %v5500, %v5958
        %v5999 = vadd.f32 %v5501, %v5963
        %v6000 = vadd.f32 %v5502, %v5966
        %v6001 = vpack.c.bf16 %v5970, %v5969
        %v6002 = vpack.c.bf16 %v5972, %v5971
        %v6003 = vpack.c.bf16 %v5974, %v5973
        %v6004 = vpack.c.bf16 %v5976, %v5975
        %v6005 = vpack.c.bf16 %v5978, %v5977
        %v6006 = vpack.c.bf16 %v5980, %v5979
        %v6007 = vpack.c.bf16 %v5982, %v5981
        %v6008 = vpack.c.bf16 %v5984, %v5983
        %v6009 = vpack.c.bf16 %v5986, %v5985
        %v6010 = vpack.c.bf16 %v5988, %v5987
        %v6011 = vpack.c.bf16 %v5990, %v5989
        %v6012 = vpack.c.bf16 %v5992, %v5991
        %v6013 = vpack.c.bf16 %v5994, %v5993
        %v6014 = vpack.c.bf16 %v5996, %v5995
        %v6015 = vpack.c.bf16 %v5998, %v5997
        %v6016 = vpack.c.bf16 %v6000, %v5999
        %v6033 = vunpack.c.l.b16 %v6001
        %v6034 = vunpack.c.h.b16 %v6001
        %v6035 = vunpack.c.l.b16 %v6002
        %v6036 = vunpack.c.h.b16 %v6002
        %v6037 = vunpack.c.l.b16 %v6003
        %v6038 = vunpack.c.h.b16 %v6003
        %v6039 = vunpack.c.l.b16 %v6004
        %v6040 = vunpack.c.h.b16 %v6004
        %v6041 = vunpack.c.l.b16 %v6005
        %v6042 = vunpack.c.h.b16 %v6005
        %v6043 = vunpack.c.l.b16 %v6006
        %v6044 = vunpack.c.h.b16 %v6006
        %v6045 = vunpack.c.l.b16 %v6007
        %v6046 = vunpack.c.h.b16 %v6007
        %v6047 = vunpack.c.l.b16 %v6008
        %v6048 = vunpack.c.h.b16 %v6008
        %v6049 = vunpack.c.l.b16 %v6009
        %v6050 = vunpack.c.h.b16 %v6009
        %v6051 = vunpack.c.l.b16 %v6010
        %v6052 = vunpack.c.h.b16 %v6010
        %v6053 = vunpack.c.l.b16 %v6011
        %v6054 = vunpack.c.h.b16 %v6011
        %v6055 = vunpack.c.l.b16 %v6012
        %v6056 = vunpack.c.h.b16 %v6012
        %v6057 = vunpack.c.l.b16 %v6013
        %v6058 = vunpack.c.h.b16 %v6013
        %v6059 = vunpack.c.l.b16 %v6014
        %v6060 = vunpack.c.h.b16 %v6014
        %v6061 = vunpack.c.l.b16 %v6015
        %v6062 = vunpack.c.h.b16 %v6015
        %v6063 = vunpack.c.l.b16 %v6016
        %v6064 = vunpack.c.h.b16 %v6016
        %v6065 = vpack.c.b16 %v6033, %v6033
        %v6066 = vpack.c.b16 %v6034, %v6034
        %v6067 = vpack.c.b16 %v6035, %v6035
        %v6068 = vpack.c.b16 %v6036, %v6036
        %v6069 = vpack.c.b16 %v6037, %v6037
        %v6070 = vpack.c.b16 %v6038, %v6038
        %v6071 = vpack.c.b16 %v6039, %v6039
        %v6072 = vpack.c.b16 %v6040, %v6040
        %v6073 = vpack.c.b16 %v6041, %v6041
        %v6074 = vpack.c.b16 %v6042, %v6042
        %v6075 = vpack.c.b16 %v6043, %v6043
        %v6076 = vpack.c.b16 %v6044, %v6044
        %v6077 = vpack.c.b16 %v6045, %v6045
        %v6078 = vpack.c.b16 %v6046, %v6046
        %v6079 = vpack.c.b16 %v6047, %v6047
        %v6080 = vpack.c.b16 %v6048, %v6048
        %v6081 = vpack.c.b16 %v6049, %v6049
        %v6082 = vpack.c.b16 %v6050, %v6050
        %v6083 = vpack.c.b16 %v6051, %v6051
        %v6084 = vpack.c.b16 %v6052, %v6052
        %v6085 = vpack.c.b16 %v6053, %v6053
        %v6086 = vpack.c.b16 %v6054, %v6054
        %v6087 = vpack.c.b16 %v6055, %v6055
        %v6088 = vpack.c.b16 %v6056, %v6056
        %v6089 = vpack.c.b16 %v6057, %v6057
        %v6090 = vpack.c.b16 %v6058, %v6058
        %v6091 = vpack.c.b16 %v6059, %v6059
        %v6092 = vpack.c.b16 %v6060, %v6060
        %v6093 = vpack.c.b16 %v6061, %v6061
        %v6094 = vpack.c.b16 %v6062, %v6062
        %v6095 = vpack.c.b16 %v6063, %v6063
        %v6096 = vpack.c.b16 %v6064, %v6064
        %6129 = vst [vmem:[%s302] sm:$0xf] %v6065
        %6130 = vst [vmem:[%s302 + $0x4] sm:$0xf] %v6066
        %6131 = vst [vmem:[%s302 + $0x8] sm:$0xf] %v6067
        %6132 = vst [vmem:[%s302 + $0xc] sm:$0xf] %v6068
        %6133 = vst [vmem:[%s302 + $0x10] sm:$0xf] %v6069
        %6134 = vst [vmem:[%s302 + $0x14] sm:$0xf] %v6070
        %6135 = vst [vmem:[%s302 + $0x18] sm:$0xf] %v6071
        %6136 = vst [vmem:[%s302 + $0x1c] sm:$0xf] %v6072
        %6137 = vst [vmem:[%s302 + $0x20] sm:$0xf] %v6073
        %6138 = vst [vmem:[%s302 + $0x24] sm:$0xf] %v6074
        %6139 = vst [vmem:[%s302 + $0x28] sm:$0xf] %v6075
        %6140 = vst [vmem:[%s302 + $0x2c] sm:$0xf] %v6076
        %6141 = vst [vmem:[%s302 + $0x30] sm:$0xf] %v6077
        %6142 = vst [vmem:[%s302 + $0x34] sm:$0xf] %v6078
        %6143 = vst [vmem:[%s302 + $0x38] sm:$0xf] %v6079
        %6144 = vst [vmem:[%s302 + $0x3c] sm:$0xf] %v6080
        %6145 = vst [vmem:[%s302 + $0x40] sm:$0xf] %v6081
        %6146 = vst [vmem:[%s302 + $0x44] sm:$0xf] %v6082
        %6147 = vst [vmem:[%s302 + $0x48] sm:$0xf] %v6083
        %6148 = vst [vmem:[%s302 + $0x4c] sm:$0xf] %v6084
        %6149 = vst [vmem:[%s302 + $0x50] sm:$0xf] %v6085
        %6150 = vst [vmem:[%s302 + $0x54] sm:$0xf] %v6086
        %6151 = vst [vmem:[%s302 + $0x58] sm:$0xf] %v6087
        %6152 = vst [vmem:[%s302 + $0x5c] sm:$0xf] %v6088
        %6153 = vst [vmem:[%s302 + $0x60] sm:$0xf] %v6089
        %6154 = vst [vmem:[%s302 + $0x64] sm:$0xf] %v6090
        %6155 = vst [vmem:[%s302 + $0x68] sm:$0xf] %v6091
        %6156 = vst [vmem:[%s302 + $0x6c] sm:$0xf] %v6092
        %6157 = vst [vmem:[%s302 + $0x70] sm:$0xf] %v6093
        %6158 = vst [vmem:[%s302 + $0x74] sm:$0xf] %v6094
        %6159 = vst [vmem:[%s302 + $0x78] sm:$0xf] %v6095
        %6160 = vst [vmem:[%s302 + $0x7c] sm:$0xf] %v6096
        %v6161 = vunpack.c.l.bf16 %v6001
        %v6162 = vunpack.c.h.bf16 %v6001
        %v6163 = vunpack.c.l.bf16 %v6002
        %v6164 = vunpack.c.h.bf16 %v6002
        %v6165 = vunpack.c.l.bf16 %v6003
        %v6166 = vunpack.c.h.bf16 %v6003
        %v6167 = vunpack.c.l.bf16 %v6004
        %v6168 = vunpack.c.h.bf16 %v6004
        %v6169 = vunpack.c.l.bf16 %v6005
        %v6170 = vunpack.c.h.bf16 %v6005
        %v6171 = vunpack.c.l.bf16 %v6006
        %v6172 = vunpack.c.h.bf16 %v6006
        %v6173 = vunpack.c.l.bf16 %v6007
        %v6174 = vunpack.c.h.bf16 %v6007
        %v6175 = vunpack.c.l.bf16 %v6008
        %v6176 = vunpack.c.h.bf16 %v6008
        %v6177 = vunpack.c.l.bf16 %v6009
        %v6178 = vunpack.c.h.bf16 %v6009
        %v6179 = vunpack.c.l.bf16 %v6010
        %v6180 = vunpack.c.h.bf16 %v6010
        %v6181 = vunpack.c.l.bf16 %v6011
        %v6182 = vunpack.c.h.bf16 %v6011
        %v6183 = vunpack.c.l.bf16 %v6012
        %v6184 = vunpack.c.h.bf16 %v6012
        %v6185 = vunpack.c.l.bf16 %v6013
        %v6186 = vunpack.c.h.bf16 %v6013
        %v6187 = vunpack.c.l.bf16 %v6014
        %v6188 = vunpack.c.h.bf16 %v6014
        %v6189 = vunpack.c.l.bf16 %v6015
        %v6190 = vunpack.c.h.bf16 %v6015
        %v6191 = vunpack.c.l.bf16 %v6016
        %v6192 = vunpack.c.h.bf16 %v6016
        %v6193 = vadd.f32 %v6161, %v6162
        %v6194 = vadd.f32 %v6193, %v6163
        %v6195 = vadd.f32 %v6194, %v6164
        %v6196 = vadd.f32 %v6195, %v6165
        %v6197 = vadd.f32 %v6196, %v6166
        %v6198 = vadd.f32 %v6197, %v6167
        %v6199 = vadd.f32 %v6198, %v6168
        %v6200 = vadd.f32 %v6199, %v6169
        %v6201 = vadd.f32 %v6200, %v6170
        %v6202 = vadd.f32 %v6201, %v6171
        %v6203 = vadd.f32 %v6202, %v6172
        %v6204 = vadd.f32 %v6203, %v6173
        %v6205 = vadd.f32 %v6204, %v6174
        %v6206 = vadd.f32 %v6205, %v6175
        %v6207 = vadd.f32 %v6206, %v6176
        %v6208 = vadd.f32 %v6207, %v6177
        %v6209 = vadd.f32 %v6208, %v6178
        %v6210 = vadd.f32 %v6209, %v6179
        %v6211 = vadd.f32 %v6210, %v6180
        %v6212 = vadd.f32 %v6211, %v6181
        %v6213 = vadd.f32 %v6212, %v6182
        %v6214 = vadd.f32 %v6213, %v6183
        %v6215 = vadd.f32 %v6214, %v6184
        %v6216 = vadd.f32 %v6215, %v6185
        %v6217 = vadd.f32 %v6216, %v6186
        %v6218 = vadd.f32 %v6217, %v6187
        %v6219 = vadd.f32 %v6218, %v6188
        %v6220 = vadd.f32 %v6219, %v6189
        %v6221 = vadd.f32 %v6220, %v6190
        %v6222 = vadd.f32 %v6221, %v6191
        %v6223 = vadd.f32 %v6222, %v6192
        %v6224 = vrot.slane %v6223, 4
        %v6225 = vadd.f32 %v6223, %v6224
        %v6226 = vrot.slane %v6225, 2
        %v6227 = vadd.f32 %v6225, %v6226
        %v6228 = vrot.slane %v6227, 1
        %v6229 = vadd.f32 %v6227, %v6228
        %v6230 = vmul.f32 %v6161, %v6161
        %v6231 = vmul.f32 %v6162, %v6162
        %v6232 = vmul.f32 %v6163, %v6163
        %v6233 = vmul.f32 %v6164, %v6164
        %v6234 = vmul.f32 %v6165, %v6165
        %v6235 = vmul.f32 %v6166, %v6166
        %v6236 = vmul.f32 %v6167, %v6167
        %v6237 = vmul.f32 %v6168, %v6168
        %v6238 = vmul.f32 %v6169, %v6169
        %v6239 = vmul.f32 %v6170, %v6170
        %v6240 = vmul.f32 %v6171, %v6171
        %v6241 = vmul.f32 %v6172, %v6172
        %v6242 = vmul.f32 %v6173, %v6173
        %v6243 = vmul.f32 %v6174, %v6174
        %v6244 = vmul.f32 %v6175, %v6175
        %v6245 = vmul.f32 %v6176, %v6176
        %v6246 = vmul.f32 %v6177, %v6177
        %v6247 = vmul.f32 %v6178, %v6178
        %v6248 = vmul.f32 %v6179, %v6179
        %v6249 = vmul.f32 %v6180, %v6180
        %v6250 = vmul.f32 %v6181, %v6181
        %v6251 = vmul.f32 %v6182, %v6182
        %v6252 = vmul.f32 %v6183, %v6183
        %v6253 = vmul.f32 %v6184, %v6184
        %v6254 = vmul.f32 %v6185, %v6185
        %v6255 = vmul.f32 %v6186, %v6186
        %v6256 = vmul.f32 %v6187, %v6187
        %v6257 = vmul.f32 %v6188, %v6188
        %v6258 = vmul.f32 %v6189, %v6189
        %v6259 = vmul.f32 %v6190, %v6190
        %v6260 = vmul.f32 %v6191, %v6191
        %v6261 = vmul.f32 %v6192, %v6192
        %v6262 = vadd.f32 %v6230, %v6231
        %v6263 = vadd.f32 %v6262, %v6232
        %v6264 = vadd.f32 %v6263, %v6233
        %v6265 = vadd.f32 %v6264, %v6234
        %v6266 = vadd.f32 %v6265, %v6235
        %v6267 = vadd.f32 %v6266, %v6236
        %v6268 = vadd.f32 %v6267, %v6237
        %v6269 = vadd.f32 %v6268, %v6238
        %v6270 = vadd.f32 %v6269, %v6239
        %v6271 = vadd.f32 %v6270, %v6240
        %v6272 = vadd.f32 %v6271, %v6241
        %v6273 = vadd.f32 %v6272, %v6242
        %v6274 = vadd.f32 %v6273, %v6243
        %v6275 = vadd.f32 %v6274, %v6244
        %v6276 = vadd.f32 %v6275, %v6245
        %v6277 = vadd.f32 %v6276, %v6246
        %v6278 = vadd.f32 %v6277, %v6247
        %v6279 = vadd.f32 %v6278, %v6248
        %v6280 = vadd.f32 %v6279, %v6249
        %v6281 = vadd.f32 %v6280, %v6250
        %v6282 = vadd.f32 %v6281, %v6251
        %v6283 = vadd.f32 %v6282, %v6252
        %v6284 = vadd.f32 %v6283, %v6253
        %v6285 = vadd.f32 %v6284, %v6254
        %v6286 = vadd.f32 %v6285, %v6255
        %v6287 = vadd.f32 %v6286, %v6256
        %v6288 = vadd.f32 %v6287, %v6257
        %v6289 = vadd.f32 %v6288, %v6258
        %v6290 = vadd.f32 %v6289, %v6259
        %v6291 = vadd.f32 %v6290, %v6260
        %v6292 = vadd.f32 %v6291, %v6261
        %v6293 = vrot.slane %v6292, 4
        %v6294 = vadd.f32 %v6292, %v6293
        %v6295 = vrot.slane %v6294, 2
        %v6296 = vadd.f32 %v6294, %v6295
        %v6297 = vrot.slane %v6296, 1
        %v6298 = vadd.f32 %v6296, %v6297
        %vm6299 = vcmask 1040384
        %v6300 = vsel %vm6299, %v6229, %v6298
        %6301 = vst [vmem:[%s309] sm:$0x3] %v6300
        %s6302 = sand.u32 %s139, 1
        %s6303 = scalar_lea.sflag [#allocation5], %s6302
        %s6304 = sand.u32 %s139, 1
        %s6305 = smul.addr %s6304, 128
        %s6306 = scalar_lea.vmem [#allocation11], %s6305
        %s6307 = sand.u32 %s167, 1
        %s6308 = scalar_lea.sflag [#allocation13], %s6307
        %s6309 = sand.u32 %s167, 1
        %s6310 = smul.addr %s6309, 2
        %s6311 = scalar_lea.vmem [#allocation12], %s6310
        // Predicated region
        $region53: #{bottleneck_forward.5} parent=35 // pred_check
          %p6312 = pneg %p149
        $region54: #{bottleneck_forward.5} parent=35 // pred_check_branch
          %6314 = sbr.rel (%p6312) target = $region56
        $region55: #{bottleneck_forward.5} parent=35 // pred_region
          %s6315 = smul.u32 16, %s33
          %s6317 = ssub.s32 2048, 2048
          %6318 = vsyncadd %s6303, %s6317
          %s6319 = smul.addr %s6315, 2
          %s6320 = smul.addr %s32, 32
          %s6321 = sadd.s32 %s6319, %s6320
          %s6322 = smul.addr %s6321, 64
          %s6323 = scalar_lea.hbm %s4, %s6322
          %s6324 = sshll.u32 %s6306, 4
          %s6325 = int_to_ptr.vmem [resolvable:$true] %s6324
          %6330 = dma.vmem_to_hbm [thread:$0]  %s6325, 2048, %s6323, %s6303, 64, 64, 4
        $region56: #{bottleneck_forward.5} parent=35 // pred_fallthru
          _
        // Predicated region
        $region57: #{bottleneck_forward.5} parent=35 // pred_check
          %p6331 = pneg %p177
        $region58: #{bottleneck_forward.5} parent=35 // pred_check_branch
          %6333 = sbr.rel (%p6331) target = $region60
        $region59: #{bottleneck_forward.5} parent=35 // pred_region
          %s6334 = sadd.s32 %s32, %s33
          %s6336 = ssub.s32 32, 32
          %6337 = vsyncadd %s6308, %s6336
          %s6338 = smul.addr %s6334, 32
          %s6339 = scalar_lea.hbm %s5, %s6338
          %s6341 = sshll.u32 %s6311, 4
          %s6342 = int_to_ptr.vmem [resolvable:$true] %s6341
          %6344 = dma.vmem_to_hbm [thread:$0]  %s6342, 32, %s6339, %s6308
        $region60: #{bottleneck_forward.5} parent=35 // pred_fallthru
          _
      $region36: #{bottleneck_forward.5} parent=5 // pred_fallthru
        _
      %p6345 = scmp.le.s32.totalorder 2, %s23
      // Predicated region
      $region61: #{bottleneck_forward.5} parent=5 // pred_check
        %p6346 = pneg %p6345
      $region62: #{bottleneck_forward.5} parent=5 // pred_check_branch
        %6348 = sbr.rel (%p6346) target = $region64
      $region63: #{bottleneck_forward.5} parent=5 // pred_region
        %s6349 = ssub.s32 %s23, 2
        // Predicated region
        $region65: #{bottleneck_forward.5} parent=63 // pred_check
          %p6350 = pneg %p155
        $region66: #{bottleneck_forward.5} parent=63 // pred_check_branch
          %6352 = sbr.rel (%p6350) target = $region68
        $region67: #{bottleneck_forward.5} parent=63 // pred_region
          %s6353 = sand.u32 %s140, 1
          %s6354 = scalar_lea.sflag [#allocation5], %s6353
          %s6355 = sand.u32 %s140, 1
          %s6356 = smul.addr %s6355, 128
          %s6357 = scalar_lea.vmem [#allocation11], %s6356
          %6358 = dma.done %s6354, 2048
        $region68: #{bottleneck_forward.5} parent=63 // pred_fallthru
          _
        // Predicated region
        $region69: #{bottleneck_forward.5} parent=63 // pred_check
          %p6359 = pneg %p183
        $region70: #{bottleneck_forward.5} parent=63 // pred_check_branch
          %6361 = sbr.rel (%p6359) target = $region72
        $region71: #{bottleneck_forward.5} parent=63 // pred_region
          %s6362 = sand.u32 %s168, 1
          %s6363 = scalar_lea.sflag [#allocation13], %s6362
          %s6364 = sand.u32 %s168, 1
          %s6365 = smul.addr %s6364, 2
          %s6366 = scalar_lea.vmem [#allocation12], %s6365
          %6367 = dma.done %s6363, 32
        $region72: #{bottleneck_forward.5} parent=63 // pred_fallthru
          _
      $region64: #{bottleneck_forward.5} parent=5 // pred_fallthru
        _
    $region6: #{bottleneck_forward.5} parent=1 // loop_footer
      %s27 = sadd.s32 1, %s23
    $region7: #{bottleneck_forward.5} parent=1 // loop_footer_branch
      %22 = sbr.rel target = $region3
    $region8: #{bottleneck_forward.5} parent=1 // loop_exit
      _
    %6368 = vsyncpa [#allocation4], 1
    %s6369 = scalar_lea.sflag [#allocation4], 1
    %6370 = vsyncpa %s6369, 1
    %6371 = vsyncpa [#allocation7], 1
    %6372 = vsyncpa [#allocation10], 1
    %6373 = vsyncpa [#allocation5], 1
    %s6374 = scalar_lea.sflag [#allocation5], 1
    %6375 = vsyncpa %s6374, 1
    %6376 = vsyncpa [#allocation13], 1
    %s6377 = scalar_lea.sflag [#allocation13], 1
    %6378 = vsyncpa %s6377, 1

</llo_original>
